<compile_context>
chip_gen: v6e
topology: v6e:2x2x1
jax: 0.10.0
libtpu: 0.0.40
codegen_flags: <defaults>
</compile_context>

<pallas_src>
import math
from functools import partial

import jax
import jax.numpy as jnp
from jax.experimental import pallas as pl
from jax.experimental.pallas import tpu as pltpu

# ----------------------------- model config --------------------------------
D_MODEL = 32
NUM_HEADS = 4
D_FF = 64
VOCAB = 50
MAX_LEN = 64
LN_EPS = 1e-6


# ------------------------- in-kernel building blocks ------------------------
def _ln(x, g, b):
    """LayerNorm over the last (lane) axis. g, b: (1, D)."""
    mu = jnp.mean(x, axis=-1, keepdims=True)
    var = jnp.mean((x - mu) ** 2, axis=-1, keepdims=True)
    return (x - mu) * jax.lax.rsqrt(var + LN_EPS) * g + b


def _mha(xq, xkv, bias, wqkv, bqkv, wo, bo, num_heads, scale):
    """Fused multi-head attention on one batch element.

    xq: (Lq, D), xkv: (Lk, D), bias: additive mask bias (Lq, Lk),
    wqkv: (D, 3D), bqkv: (1, 3D), wo: (D, D), bo: (1, D).
    """
    lq, d = xq.shape
    dh = d // num_heads

    # One fused QKV matmul per input stream (shared when self-attention).
    qkv_q = jnp.dot(xq, wqkv, preferred_element_type=jnp.float32) + bqkv
    if xq is xkv:
        qkv_kv = qkv_q
    else:
        qkv_kv = jnp.dot(xkv, wqkv, preferred_element_type=jnp.float32) + bqkv

    # Per-head attention; output projection folded in per head so no concat
    # (sum_h ctx_h @ wo[h*dh:(h+1)*dh, :] == concat_h(ctx_h) @ wo).
    acc = jnp.zeros((lq, d), jnp.float32)
    for h in range(num_heads):
        q = qkv_q[:, h * dh:(h + 1) * dh]
        k = qkv_kv[:, d + h * dh: d + (h + 1) * dh]
        v = qkv_kv[:, 2 * d + h * dh: 2 * d + (h + 1) * dh]
        s = jnp.dot(q, k.T, preferred_element_type=jnp.float32) * scale + bias
        s = s - jnp.max(s, axis=-1, keepdims=True)
        p = jnp.exp(s)
        p = p / jnp.sum(p, axis=-1, keepdims=True)
        ctx = jnp.dot(p, v, preferred_element_type=jnp.float32)          # (Lq, dh)
        acc = acc + jnp.dot(ctx, wo[h * dh:(h + 1) * dh, :],
                            preferred_element_type=jnp.float32)
    return acc + bo


def _ffn(x, w1, b1, w2, b2):
    h = jnp.maximum(jnp.dot(x, w1, preferred_element_type=jnp.float32) + b1, 0.0)
    return jnp.dot(h, w2, preferred_element_type=jnp.float32) + b2


# ------------------------------ fused kernels --------------------------------
def _encoder_kernel(x_ref, bias_fw_ref, bias_bi_ref,
                    fw_wqkv, fw_bqkv, fw_wo, fw_bo,
                    bi_wqkv, bi_bqkv, bi_wo, bi_bo,
                    ln1_g, ln1_b, ln2_g, ln2_b, ln3_g, ln3_b, lno_g, lno_b,
                    w1, b1, w2, b2,
                    o_ref, *, num_heads, scale):
    """Entire DiSAN-style encoder (directional attn, bidirectional attn, FFN)
    for one batch element, pre-norm residuals."""
    x = x_ref[0]                                            # (Ls, D)

    h = _ln(x, ln1_g[...], ln1_b[...])
    x = x + _mha(h, h, bias_fw_ref[0], fw_wqkv[...], fw_bqkv[...],
                 fw_wo[...], fw_bo[...], num_heads, scale)

    h = _ln(x, ln2_g[...], ln2_b[...])
    x = x + _mha(h, h, bias_bi_ref[0], bi_wqkv[...], bi_bqkv[...],
                 bi_wo[...], bi_bo[...], num_heads, scale)

    x = x + _ffn(_ln(x, ln3_g[...], ln3_b[...]),
                 w1[...], b1[...], w2[...], b2[...])

    o_ref[0] = _ln(x, lno_g[...], lno_b[...])


def _decoder_kernel(x_ref, mem_ref, bias_tgt_ref, bias_src_ref,
                    sa_wqkv, sa_bqkv, sa_wo, sa_bo,
                    ca_wqkv, ca_bqkv, ca_wo, ca_bo,
                    ln1_g, ln1_b, ln2_g, ln2_b, ln3_g, ln3_b, lno_g, lno_b,
                    w1, b1, w2, b2,
                    o_ref, *, num_heads, scale):
    """Entire decoder (masked self-attn, cross-attn over memory, FFN) for one
    batch element, pre-norm residuals."""
    x = x_ref[0]                                            # (Lt, D)
    mem = mem_ref[0]                                        # (Ls, D)

    h = _ln(x, ln1_g[...], ln1_b[...])
    x = x + _mha(h, h, bias_tgt_ref[0], sa_wqkv[...], sa_bqkv[...],
                 sa_wo[...], sa_bo[...], num_heads, scale)

    h = _ln(x, ln2_g[...], ln2_b[...])
    x = x + _mha(h, mem, bias_src_ref[0], ca_wqkv[...], ca_bqkv[...],
                 ca_wo[...], ca_bo[...], num_heads, scale)

    x = x + _ffn(_ln(x, ln3_g[...], ln3_b[...]),
                 w1[...], b1[...], w2[...], b2[...])

    o_ref[0] = _ln(x, lno_g[...], lno_b[...])


# ----------------------------- plain-JAX glue -------------------------------
def sinusoidal_pe(max_len, d):
    pos = jnp.arange(max_len, dtype=jnp.float32)[:, None]
    div = jnp.exp(jnp.arange(0, d, 2, dtype=jnp.float32) * (-math.log(10000.0) / d))
    pe = jnp.zeros((max_len, d), jnp.float32)
    pe = pe.at[:, 0::2].set(jnp.sin(pos * div))
    pe = pe.at[:, 1::2].set(jnp.cos(pos * div))
    return pe


def embed(emb_p, tokens):
    # Embedding gather + positional encoding: plain JAX glue.
    D = emb_p["table"].shape[1]
    x = emb_p["table"][tokens] * math.sqrt(D)               # (B, L, D)
    return x + emb_p["pe"][: tokens.shape[1]]


def _mask_bias(mask):
    # 1.0 = attend -> 0.0 ; 0.0 = masked -> -1e9 (additive bias).
    return (mask.astype(jnp.float32) - 1.0) * 1e9


# ----------------------------- encoder / decoder ----------------------------
def encode(params, src, src_mask, src_mask_bi):
    """encoder(src_embed(src), src_mask, src_mask_bi) — one fused pallas_call."""
    x = embed(params["src_emb"], src)                        # (B, Ls, D)
    B, Ls, D = x.shape
    bias_fw = _mask_bias(src_mask)
    bias_bi = _mask_bias(src_mask_bi)

    fw, bi = params["enc_attn_fw"], params["enc_attn_bi"]
    fp = params["enc_ffn"]
    weights = [
        fw["wqkv"], fw["bqkv"], fw["wo"], fw["bo"],
        bi["wqkv"], bi["bqkv"], bi["wo"], bi["bo"],
        params["enc_ln1"]["g"], params["enc_ln1"]["b"],
        params["enc_ln2"]["g"], params["enc_ln2"]["b"],
        params["enc_ln3"]["g"], params["enc_ln3"]["b"],
        params["enc_ln_out"]["g"], params["enc_ln_out"]["b"],
        fp["w1"], fp["b1"], fp["w2"], fp["b2"],
    ]
    # All parameters are 2-D; constant index_map keeps them VMEM-resident
    # across grid iterations.
    resident = [pl.BlockSpec(wgt.shape, lambda b: (0, 0)) for wgt in weights]

    return pl.pallas_call(
        partial(_encoder_kernel, num_heads=NUM_HEADS,
                scale=1.0 / math.sqrt(D // NUM_HEADS)),
        out_shape=jax.ShapeDtypeStruct((B, Ls, D), jnp.float32),
        grid=(B,),
        in_specs=[
            pl.BlockSpec((1, Ls, D), lambda b: (b, 0, 0)),
            pl.BlockSpec((1, Ls, Ls), lambda b: (b, 0, 0)),
            pl.BlockSpec((1, Ls, Ls), lambda b: (b, 0, 0)),
        ] + resident,
        out_specs=pl.BlockSpec((1, Ls, D), lambda b: (b, 0, 0)),
        compiler_params=pltpu.CompilerParams(dimension_semantics=("parallel",)),
    )(x, bias_fw, bias_bi, *weights)


def decode(params, memory, src_mask, tgt, tgt_mask):
    """decoder(tgt_embed(tgt), memory, src_mask, tgt_mask) — one fused pallas_call."""
    x = embed(params["tgt_emb"], tgt)                        # (B, Lt, D)
    B, Lt, D = x.shape
    Ls = memory.shape[1]
    bias_tgt = _mask_bias(tgt_mask)                          # (B, Lt, Lt)
    bias_src = _mask_bias(src_mask)                          # (B, Lt, Ls)

    sa, ca = params["dec_self"], params["dec_cross"]
    fp = params["dec_ffn"]
    weights = [
        sa["wqkv"], sa["bqkv"], sa["wo"], sa["bo"],
        ca["wqkv"], ca["bqkv"], ca["wo"], ca["bo"],
        params["dec_ln1"]["g"], params["dec_ln1"]["b"],
        params["dec_ln2"]["g"], params["dec_ln2"]["b"],
        params["dec_ln3"]["g"], params["dec_ln3"]["b"],
        params["dec_ln_out"]["g"], params["dec_ln_out"]["b"],
        fp["w1"], fp["b1"], fp["w2"], fp["b2"],
    ]
    resident = [pl.BlockSpec(wgt.shape, lambda b: (0, 0)) for wgt in weights]

    return pl.pallas_call(
        partial(_decoder_kernel, num_heads=NUM_HEADS,
                scale=1.0 / math.sqrt(D // NUM_HEADS)),
        out_shape=jax.ShapeDtypeStruct((B, Lt, D), jnp.float32),
        grid=(B,),
        in_specs=[
            pl.BlockSpec((1, Lt, D), lambda b: (b, 0, 0)),
            pl.BlockSpec((1, Ls, D), lambda b: (b, 0, 0)),
            pl.BlockSpec((1, Lt, Lt), lambda b: (b, 0, 0)),
            pl.BlockSpec((1, Lt, Ls), lambda b: (b, 0, 0)),
        ] + resident,
        out_specs=pl.BlockSpec((1, Lt, D), lambda b: (b, 0, 0)),
        compiler_params=pltpu.CompilerParams(dimension_semantics=("parallel",)),
    )(x, memory, bias_tgt, bias_src, *weights)


def forward(params, src, tgt, src_mask_enc, src_mask_dec, tgt_mask, src_mask_bi=None):
    # NOTE: `generator` is held by the PyTorch module but not used in forward().
    memory = encode(params, src, src_mask_enc, src_mask_bi)
    return decode(params, memory, src_mask_dec, tgt, tgt_mask)


# ----------------------------- deterministic init ---------------------------
def init_params(key):
    D, DFF, V = D_MODEL, D_FF, VOCAB
    keys = iter(jax.random.split(key, 64))

    def w(shape):
        return jax.random.normal(next(keys), shape, jnp.float32) * 0.02

    def attn():
        # Q, K, V projections fused into a single (D, 3D) weight.
        return dict(
            wqkv=w((D, 3 * D)), bqkv=jnp.zeros((1, 3 * D), jnp.float32),
            wo=w((D, D)), bo=jnp.zeros((1, D), jnp.float32),
        )

    def ln():
        return dict(g=jnp.ones((1, D), jnp.float32), b=jnp.zeros((1, D), jnp.float32))

    def ffn_p():
        return dict(
            w1=w((D, DFF)), b1=jnp.zeros((1, DFF), jnp.float32),
            w2=w((DFF, D)), b2=jnp.zeros((1, D), jnp.float32),
        )

    pe = sinusoidal_pe(MAX_LEN, D)
    return dict(
        src_emb=dict(table=w((V, D)), pe=pe),
        tgt_emb=dict(table=w((V, D)), pe=pe),
        enc_attn_fw=attn(), enc_attn_bi=attn(),
        enc_ln1=ln(), enc_ln2=ln(), enc_ln3=ln(), enc_ln_out=ln(),
        enc_ffn=ffn_p(),
        dec_self=attn(), dec_cross=attn(),
        dec_ln1=ln(), dec_ln2=ln(), dec_ln3=ln(), dec_ln_out=ln(),
        dec_ffn=ffn_p(),
    )


# ----------------------------- main -----------------------------------------
if __name__ == "__main__":
    key = jax.random.PRNGKey(0)
    pkey, skey, tkey = jax.random.split(key, 3)
    params = init_params(pkey)

    B, Ls, Lt = 2, 8, 8
    src = jax.random.randint(skey, (B, Ls), 0, VOCAB)
    tgt = jax.random.randint(tkey, (B, Lt), 0, VOCAB)

    # masks: 1.0 = attend, 0.0 = masked
    src_mask_enc = jnp.broadcast_to(
        jnp.tril(jnp.ones((Ls, Ls), jnp.float32)), (B, Ls, Ls)
    )                                                   # forward-directional src mask
    src_mask_bi = jnp.ones((B, Ls, Ls), jnp.float32)    # bidirectional src mask
    src_mask_dec = jnp.ones((B, Lt, Ls), jnp.float32)   # cross-attn mask (tgt -> src)
    tgt_mask = jnp.broadcast_to(
        jnp.tril(jnp.ones((Lt, Lt), jnp.float32)), (B, Lt, Lt)
    )                                                   # causal tgt mask

    fwd = jax.jit(forward)
    out = fwd(params, src, tgt, src_mask_enc, src_mask_dec, tgt_mask, src_mask_bi)
    jax.block_until_ready(out)
    assert out.shape == (B, Lt, D_MODEL) and out.dtype == jnp.float32
    print("KERNEL_OK")
</pallas_src>

<mosaic_0001>
module attributes {stable_mosaic.version = 11 : i64} {
  func.func @_decoder_kernel(%arg0: i32, %arg1: memref<1x8x32xf32, #tpu.memory_space<vmem>>, %arg2: memref<1x8x32xf32, #tpu.memory_space<vmem>>, %arg3: memref<1x8x8xf32, #tpu.memory_space<vmem>>, %arg4: memref<1x8x8xf32, #tpu.memory_space<vmem>>, %arg5: memref<32x96xf32, #tpu.memory_space<vmem>>, %arg6: memref<1x96xf32, #tpu.memory_space<vmem>>, %arg7: memref<32x32xf32, #tpu.memory_space<vmem>>, %arg8: memref<1x32xf32, #tpu.memory_space<vmem>>, %arg9: memref<32x96xf32, #tpu.memory_space<vmem>>, %arg10: memref<1x96xf32, #tpu.memory_space<vmem>>, %arg11: memref<32x32xf32, #tpu.memory_space<vmem>>, %arg12: memref<1x32xf32, #tpu.memory_space<vmem>>, %arg13: memref<1x32xf32, #tpu.memory_space<vmem>>, %arg14: memref<1x32xf32, #tpu.memory_space<vmem>>, %arg15: memref<1x32xf32, #tpu.memory_space<vmem>>, %arg16: memref<1x32xf32, #tpu.memory_space<vmem>>, %arg17: memref<1x32xf32, #tpu.memory_space<vmem>>, %arg18: memref<1x32xf32, #tpu.memory_space<vmem>>, %arg19: memref<1x32xf32, #tpu.memory_space<vmem>>, %arg20: memref<1x32xf32, #tpu.memory_space<vmem>>, %arg21: memref<32x64xf32, #tpu.memory_space<vmem>>, %arg22: memref<1x64xf32, #tpu.memory_space<vmem>>, %arg23: memref<64x32xf32, #tpu.memory_space<vmem>>, %arg24: memref<1x32xf32, #tpu.memory_space<vmem>>, %arg25: memref<1x8x32xf32, #tpu.memory_space<vmem>>) attributes {dimension_semantics = [#tpu.dimension_semantics<parallel>], iteration_bounds = array<i64: 2>, scalar_prefetch = 0 : i64, scratch_operands = 0 : i64, tpu.core_type = #tpu.core_type<tc>, window_params = [{transform_indices = @transform_0, window_bounds = array<i64: 1, 8, 32>}, {transform_indices = @transform_1, window_bounds = array<i64: 1, 8, 32>}, {transform_indices = @transform_2, window_bounds = array<i64: 1, 8, 8>}, {transform_indices = @transform_3, window_bounds = array<i64: 1, 8, 8>}, {pipeline_mode = #tpu.pipeline_mode<synchronous>, transform_indices = @transform_4, window_bounds = array<i64: 32, 96>}, {pipeline_mode = #tpu.pipeline_mode<synchronous>, transform_indices = @transform_5, window_bounds = array<i64: 1, 96>}, {pipeline_mode = #tpu.pipeline_mode<synchronous>, transform_indices = @transform_6, window_bounds = array<i64: 32, 32>}, {pipeline_mode = #tpu.pipeline_mode<synchronous>, transform_indices = @transform_7, window_bounds = array<i64: 1, 32>}, {pipeline_mode = #tpu.pipeline_mode<synchronous>, transform_indices = @transform_8, window_bounds = array<i64: 32, 96>}, {pipeline_mode = #tpu.pipeline_mode<synchronous>, transform_indices = @transform_9, window_bounds = array<i64: 1, 96>}, {pipeline_mode = #tpu.pipeline_mode<synchronous>, transform_indices = @transform_10, window_bounds = array<i64: 32, 32>}, {pipeline_mode = #tpu.pipeline_mode<synchronous>, transform_indices = @transform_11, window_bounds = array<i64: 1, 32>}, {pipeline_mode = #tpu.pipeline_mode<synchronous>, transform_indices = @transform_12, window_bounds = array<i64: 1, 32>}, {pipeline_mode = #tpu.pipeline_mode<synchronous>, transform_indices = @transform_13, window_bounds = array<i64: 1, 32>}, {pipeline_mode = #tpu.pipeline_mode<synchronous>, transform_indices = @transform_14, window_bounds = array<i64: 1, 32>}, {pipeline_mode = #tpu.pipeline_mode<synchronous>, transform_indices = @transform_15, window_bounds = array<i64: 1, 32>}, {pipeline_mode = #tpu.pipeline_mode<synchronous>, transform_indices = @transform_16, window_bounds = array<i64: 1, 32>}, {pipeline_mode = #tpu.pipeline_mode<synchronous>, transform_indices = @transform_17, window_bounds = array<i64: 1, 32>}, {pipeline_mode = #tpu.pipeline_mode<synchronous>, transform_indices = @transform_18, window_bounds = array<i64: 1, 32>}, {pipeline_mode = #tpu.pipeline_mode<synchronous>, transform_indices = @transform_19, window_bounds = array<i64: 1, 32>}, {pipeline_mode = #tpu.pipeline_mode<synchronous>, transform_indices = @transform_20, window_bounds = array<i64: 32, 64>}, {pipeline_mode = #tpu.pipeline_mode<synchronous>, transform_indices = @transform_21, window_bounds = array<i64: 1, 64>}, {pipeline_mode = #tpu.pipeline_mode<synchronous>, transform_indices = @transform_22, window_bounds = array<i64: 64, 32>}, {pipeline_mode = #tpu.pipeline_mode<synchronous>, transform_indices = @transform_23, window_bounds = array<i64: 1, 32>}, {transform_indices = @transform_24, window_bounds = array<i64: 1, 8, 32>}]} {
    %c0 = arith.constant 0 : index
    %c0_0 = arith.constant 0 : index
    %c0_1 = arith.constant 0 : index
    %0 = vector.load %arg1[%c0, %c0_0, %c0_1] : memref<1x8x32xf32, #tpu.memory_space<vmem>>, vector<1x8x32xf32>
    %1 = vector.shape_cast %0 : vector<1x8x32xf32> to vector<8x32xf32>
    %c0_2 = arith.constant 0 : index
    %c0_3 = arith.constant 0 : index
    %c0_4 = arith.constant 0 : index
    %2 = vector.load %arg2[%c0_2, %c0_3, %c0_4] : memref<1x8x32xf32, #tpu.memory_space<vmem>>, vector<1x8x32xf32>
    %3 = vector.shape_cast %2 : vector<1x8x32xf32> to vector<8x32xf32>
    %c0_5 = arith.constant 0 : index
    %c0_6 = arith.constant 0 : index
    %4 = vector.load %arg13[%c0_5, %c0_6] : memref<1x32xf32, #tpu.memory_space<vmem>>, vector<1x32xf32>
    %c0_7 = arith.constant 0 : index
    %c0_8 = arith.constant 0 : index
    %5 = vector.load %arg14[%c0_7, %c0_8] : memref<1x32xf32, #tpu.memory_space<vmem>>, vector<1x32xf32>
    %cst = arith.constant dense<0.000000e+00> : vector<8xf32>
    %6 = vector.multi_reduction <add>, %1, %cst [1] : vector<8x32xf32> to vector<8xf32>
    %7 = vector.shape_cast %6 : vector<8xf32> to vector<8x1xf32>
    %cst_9 = arith.constant 3.200000e+01 : f32
    %8 = vector.broadcast %cst_9 : f32 to vector<8x1xf32>
    %9 = arith.divf %7, %8 : vector<8x1xf32>
    %10 = vector.broadcast %9 : vector<8x1xf32> to vector<8x32xf32>
    %11 = arith.subf %1, %10 : vector<8x32xf32>
    %12 = arith.mulf %11, %11 : vector<8x32xf32>
    %cst_10 = arith.constant dense<0.000000e+00> : vector<8xf32>
    %13 = vector.multi_reduction <add>, %12, %cst_10 [1] : vector<8x32xf32> to vector<8xf32>
    %14 = vector.shape_cast %13 : vector<8xf32> to vector<8x1xf32>
    %cst_11 = arith.constant 3.200000e+01 : f32
    %15 = vector.broadcast %cst_11 : f32 to vector<8x1xf32>
    %16 = arith.divf %14, %15 : vector<8x1xf32>
    %17 = vector.broadcast %9 : vector<8x1xf32> to vector<8x32xf32>
    %18 = arith.subf %1, %17 : vector<8x32xf32>
    %cst_12 = arith.constant 9.99999997E-7 : f32
    %19 = vector.broadcast %cst_12 : f32 to vector<8x1xf32>
    %20 = arith.addf %16, %19 : vector<8x1xf32>
    %21 = math.rsqrt %20 : vector<8x1xf32>
    %22 = vector.broadcast %21 : vector<8x1xf32> to vector<8x32xf32>
    %23 = arith.mulf %18, %22 : vector<8x32xf32>
    %24 = vector.broadcast %4 : vector<1x32xf32> to vector<8x32xf32>
    %25 = arith.mulf %23, %24 : vector<8x32xf32>
    %26 = vector.broadcast %5 : vector<1x32xf32> to vector<8x32xf32>
    %27 = arith.addf %25, %26 : vector<8x32xf32>
    %c0_13 = arith.constant 0 : index
    %c0_14 = arith.constant 0 : index
    %c0_15 = arith.constant 0 : index
    %28 = vector.load %arg3[%c0_13, %c0_14, %c0_15] : memref<1x8x8xf32, #tpu.memory_space<vmem>>, vector<1x8x8xf32>
    %29 = vector.shape_cast %28 : vector<1x8x8xf32> to vector<8x8xf32>
    %c0_16 = arith.constant 0 : index
    %c0_17 = arith.constant 0 : index
    %30 = vector.load %arg5[%c0_16, %c0_17] : memref<32x96xf32, #tpu.memory_space<vmem>>, vector<32x96xf32>
    %c0_18 = arith.constant 0 : index
    %c0_19 = arith.constant 0 : index
    %31 = vector.load %arg6[%c0_18, %c0_19] : memref<1x96xf32, #tpu.memory_space<vmem>>, vector<1x96xf32>
    %c0_20 = arith.constant 0 : index
    %c0_21 = arith.constant 0 : index
    %32 = vector.load %arg7[%c0_20, %c0_21] : memref<32x32xf32, #tpu.memory_space<vmem>>, vector<32x32xf32>
    %c0_22 = arith.constant 0 : index
    %c0_23 = arith.constant 0 : index
    %33 = vector.load %arg8[%c0_22, %c0_23] : memref<1x32xf32, #tpu.memory_space<vmem>>, vector<1x32xf32>
    %cst_24 = arith.constant dense<0.000000e+00> : vector<8x96xf32>
    %34 = tpu.matmul %27, %30, %cst_24 {dimension_numbers = #tpu.dot_dimension_numbers<[1], [0], [0], [1], [0, 0, 1, 1], [], []>} : vector<8x32xf32>, vector<32x96xf32>, vector<8x96xf32> -> vector<8x96xf32>
    %35 = vector.broadcast %31 : vector<1x96xf32> to vector<8x96xf32>
    %36 = arith.addf %34, %35 : vector<8x96xf32>
    %cst_25 = arith.constant 0.000000e+00 : f32
    %37 = vector.broadcast %cst_25 : f32 to vector<8x32xf32>
    %38 = vector.extract_strided_slice %36 {offsets = [0, 0], sizes = [8, 8], strides = [1, 1]} : vector<8x96xf32> to vector<8x8xf32>
    %39 = vector.extract_strided_slice %36 {offsets = [0, 32], sizes = [8, 8], strides = [1, 1]} : vector<8x96xf32> to vector<8x8xf32>
    %40 = vector.extract_strided_slice %36 {offsets = [0, 64], sizes = [8, 8], strides = [1, 1]} : vector<8x96xf32> to vector<8x8xf32>
    %41 = tpu.transpose %39, [1, 0] : vector<8x8xf32> -> vector<8x8xf32>
    %cst_26 = arith.constant dense<0.000000e+00> : vector<8x8xf32>
    %42 = tpu.matmul %38, %41, %cst_26 {dimension_numbers = #tpu.dot_dimension_numbers<[1], [0], [0], [1], [0, 0, 1, 1], [], []>} : vector<8x8xf32>, vector<8x8xf32>, vector<8x8xf32> -> vector<8x8xf32>
    %cst_27 = arith.constant 0.353553385 : f32
    %43 = vector.broadcast %cst_27 : f32 to vector<8x8xf32>
    %44 = arith.mulf %42, %43 : vector<8x8xf32>
    %45 = arith.addf %44, %29 : vector<8x8xf32>
    %cst_28 = arith.constant dense<0xFF800000> : vector<8xf32>
    %46 = vector.multi_reduction <maximumf>, %45, %cst_28 [1] : vector<8x8xf32> to vector<8xf32>
    %47 = vector.shape_cast %46 : vector<8xf32> to vector<8x1xf32>
    %48 = vector.broadcast %47 : vector<8x1xf32> to vector<8x8xf32>
    %49 = arith.subf %45, %48 : vector<8x8xf32>
    %50 = math.exp %49 : vector<8x8xf32>
    %cst_29 = arith.constant dense<0.000000e+00> : vector<8xf32>
    %51 = vector.multi_reduction <add>, %50, %cst_29 [1] : vector<8x8xf32> to vector<8xf32>
    %52 = vector.shape_cast %51 : vector<8xf32> to vector<8x1xf32>
    %53 = vector.broadcast %52 : vector<8x1xf32> to vector<8x8xf32>
    %54 = arith.divf %50, %53 : vector<8x8xf32>
    %cst_30 = arith.constant dense<0.000000e+00> : vector<8x8xf32>
    %55 = tpu.matmul %54, %40, %cst_30 {dimension_numbers = #tpu.dot_dimension_numbers<[1], [0], [0], [1], [0, 0, 1, 1], [], []>} : vector<8x8xf32>, vector<8x8xf32>, vector<8x8xf32> -> vector<8x8xf32>
    %56 = vector.extract_strided_slice %32 {offsets = [0, 0], sizes = [8, 32], strides = [1, 1]} : vector<32x32xf32> to vector<8x32xf32>
    %cst_31 = arith.constant dense<0.000000e+00> : vector<8x32xf32>
    %57 = tpu.matmul %55, %56, %cst_31 {dimension_numbers = #tpu.dot_dimension_numbers<[1], [0], [0], [1], [0, 0, 1, 1], [], []>} : vector<8x8xf32>, vector<8x32xf32>, vector<8x32xf32> -> vector<8x32xf32>
    %58 = arith.addf %37, %57 : vector<8x32xf32>
    %59 = vector.extract_strided_slice %36 {offsets = [0, 8], sizes = [8, 8], strides = [1, 1]} : vector<8x96xf32> to vector<8x8xf32>
    %60 = vector.extract_strided_slice %36 {offsets = [0, 40], sizes = [8, 8], strides = [1, 1]} : vector<8x96xf32> to vector<8x8xf32>
    %61 = vector.extract_strided_slice %36 {offsets = [0, 72], sizes = [8, 8], strides = [1, 1]} : vector<8x96xf32> to vector<8x8xf32>
    %62 = tpu.transpose %60, [1, 0] : vector<8x8xf32> -> vector<8x8xf32>
    %cst_32 = arith.constant dense<0.000000e+00> : vector<8x8xf32>
    %63 = tpu.matmul %59, %62, %cst_32 {dimension_numbers = #tpu.dot_dimension_numbers<[1], [0], [0], [1], [0, 0, 1, 1], [], []>} : vector<8x8xf32>, vector<8x8xf32>, vector<8x8xf32> -> vector<8x8xf32>
    %cst_33 = arith.constant 0.353553385 : f32
    %64 = vector.broadcast %cst_33 : f32 to vector<8x8xf32>
    %65 = arith.mulf %63, %64 : vector<8x8xf32>
    %66 = arith.addf %65, %29 : vector<8x8xf32>
    %cst_34 = arith.constant dense<0xFF800000> : vector<8xf32>
    %67 = vector.multi_reduction <maximumf>, %66, %cst_34 [1] : vector<8x8xf32> to vector<8xf32>
    %68 = vector.shape_cast %67 : vector<8xf32> to vector<8x1xf32>
    %69 = vector.broadcast %68 : vector<8x1xf32> to vector<8x8xf32>
    %70 = arith.subf %66, %69 : vector<8x8xf32>
    %71 = math.exp %70 : vector<8x8xf32>
    %cst_35 = arith.constant dense<0.000000e+00> : vector<8xf32>
    %72 = vector.multi_reduction <add>, %71, %cst_35 [1] : vector<8x8xf32> to vector<8xf32>
    %73 = vector.shape_cast %72 : vector<8xf32> to vector<8x1xf32>
    %74 = vector.broadcast %73 : vector<8x1xf32> to vector<8x8xf32>
    %75 = arith.divf %71, %74 : vector<8x8xf32>
    %cst_36 = arith.constant dense<0.000000e+00> : vector<8x8xf32>
    %76 = tpu.matmul %75, %61, %cst_36 {dimension_numbers = #tpu.dot_dimension_numbers<[1], [0], [0], [1], [0, 0, 1, 1], [], []>} : vector<8x8xf32>, vector<8x8xf32>, vector<8x8xf32> -> vector<8x8xf32>
    %77 = vector.extract_strided_slice %32 {offsets = [8, 0], sizes = [8, 32], strides = [1, 1]} : vector<32x32xf32> to vector<8x32xf32>
    %cst_37 = arith.constant dense<0.000000e+00> : vector<8x32xf32>
    %78 = tpu.matmul %76, %77, %cst_37 {dimension_numbers = #tpu.dot_dimension_numbers<[1], [0], [0], [1], [0, 0, 1, 1], [], []>} : vector<8x8xf32>, vector<8x32xf32>, vector<8x32xf32> -> vector<8x32xf32>
    %79 = arith.addf %58, %78 : vector<8x32xf32>
    %80 = vector.extract_strided_slice %36 {offsets = [0, 16], sizes = [8, 8], strides = [1, 1]} : vector<8x96xf32> to vector<8x8xf32>
    %81 = vector.extract_strided_slice %36 {offsets = [0, 48], sizes = [8, 8], strides = [1, 1]} : vector<8x96xf32> to vector<8x8xf32>
    %82 = vector.extract_strided_slice %36 {offsets = [0, 80], sizes = [8, 8], strides = [1, 1]} : vector<8x96xf32> to vector<8x8xf32>
    %83 = tpu.transpose %81, [1, 0] : vector<8x8xf32> -> vector<8x8xf32>
    %cst_38 = arith.constant dense<0.000000e+00> : vector<8x8xf32>
    %84 = tpu.matmul %80, %83, %cst_38 {dimension_numbers = #tpu.dot_dimension_numbers<[1], [0], [0], [1], [0, 0, 1, 1], [], []>} : vector<8x8xf32>, vector<8x8xf32>, vector<8x8xf32> -> vector<8x8xf32>
    %cst_39 = arith.constant 0.353553385 : f32
    %85 = vector.broadcast %cst_39 : f32 to vector<8x8xf32>
    %86 = arith.mulf %84, %85 : vector<8x8xf32>
    %87 = arith.addf %86, %29 : vector<8x8xf32>
    %cst_40 = arith.constant dense<0xFF800000> : vector<8xf32>
    %88 = vector.multi_reduction <maximumf>, %87, %cst_40 [1] : vector<8x8xf32> to vector<8xf32>
    %89 = vector.shape_cast %88 : vector<8xf32> to vector<8x1xf32>
    %90 = vector.broadcast %89 : vector<8x1xf32> to vector<8x8xf32>
    %91 = arith.subf %87, %90 : vector<8x8xf32>
    %92 = math.exp %91 : vector<8x8xf32>
    %cst_41 = arith.constant dense<0.000000e+00> : vector<8xf32>
    %93 = vector.multi_reduction <add>, %92, %cst_41 [1] : vector<8x8xf32> to vector<8xf32>
    %94 = vector.shape_cast %93 : vector<8xf32> to vector<8x1xf32>
    %95 = vector.broadcast %94 : vector<8x1xf32> to vector<8x8xf32>
    %96 = arith.divf %92, %95 : vector<8x8xf32>
    %cst_42 = arith.constant dense<0.000000e+00> : vector<8x8xf32>
    %97 = tpu.matmul %96, %82, %cst_42 {dimension_numbers = #tpu.dot_dimension_numbers<[1], [0], [0], [1], [0, 0, 1, 1], [], []>} : vector<8x8xf32>, vector<8x8xf32>, vector<8x8xf32> -> vector<8x8xf32>
    %98 = vector.extract_strided_slice %32 {offsets = [16, 0], sizes = [8, 32], strides = [1, 1]} : vector<32x32xf32> to vector<8x32xf32>
    %cst_43 = arith.constant dense<0.000000e+00> : vector<8x32xf32>
    %99 = tpu.matmul %97, %98, %cst_43 {dimension_numbers = #tpu.dot_dimension_numbers<[1], [0], [0], [1], [0, 0, 1, 1], [], []>} : vector<8x8xf32>, vector<8x32xf32>, vector<8x32xf32> -> vector<8x32xf32>
    %100 = arith.addf %79, %99 : vector<8x32xf32>
    %101 = vector.extract_strided_slice %36 {offsets = [0, 24], sizes = [8, 8], strides = [1, 1]} : vector<8x96xf32> to vector<8x8xf32>
    %102 = vector.extract_strided_slice %36 {offsets = [0, 56], sizes = [8, 8], strides = [1, 1]} : vector<8x96xf32> to vector<8x8xf32>
    %103 = vector.extract_strided_slice %36 {offsets = [0, 88], sizes = [8, 8], strides = [1, 1]} : vector<8x96xf32> to vector<8x8xf32>
    %104 = tpu.transpose %102, [1, 0] : vector<8x8xf32> -> vector<8x8xf32>
    %cst_44 = arith.constant dense<0.000000e+00> : vector<8x8xf32>
    %105 = tpu.matmul %101, %104, %cst_44 {dimension_numbers = #tpu.dot_dimension_numbers<[1], [0], [0], [1], [0, 0, 1, 1], [], []>} : vector<8x8xf32>, vector<8x8xf32>, vector<8x8xf32> -> vector<8x8xf32>
    %cst_45 = arith.constant 0.353553385 : f32
    %106 = vector.broadcast %cst_45 : f32 to vector<8x8xf32>
    %107 = arith.mulf %105, %106 : vector<8x8xf32>
    %108 = arith.addf %107, %29 : vector<8x8xf32>
    %cst_46 = arith.constant dense<0xFF800000> : vector<8xf32>
    %109 = vector.multi_reduction <maximumf>, %108, %cst_46 [1] : vector<8x8xf32> to vector<8xf32>
    %110 = vector.shape_cast %109 : vector<8xf32> to vector<8x1xf32>
    %111 = vector.broadcast %110 : vector<8x1xf32> to vector<8x8xf32>
    %112 = arith.subf %108, %111 : vector<8x8xf32>
    %113 = math.exp %112 : vector<8x8xf32>
    %cst_47 = arith.constant dense<0.000000e+00> : vector<8xf32>
    %114 = vector.multi_reduction <add>, %113, %cst_47 [1] : vector<8x8xf32> to vector<8xf32>
    %115 = vector.shape_cast %114 : vector<8xf32> to vector<8x1xf32>
    %116 = vector.broadcast %115 : vector<8x1xf32> to vector<8x8xf32>
    %117 = arith.divf %113, %116 : vector<8x8xf32>
    %cst_48 = arith.constant dense<0.000000e+00> : vector<8x8xf32>
    %118 = tpu.matmul %117, %103, %cst_48 {dimension_numbers = #tpu.dot_dimension_numbers<[1], [0], [0], [1], [0, 0, 1, 1], [], []>} : vector<8x8xf32>, vector<8x8xf32>, vector<8x8xf32> -> vector<8x8xf32>
    %119 = vector.extract_strided_slice %32 {offsets = [24, 0], sizes = [8, 32], strides = [1, 1]} : vector<32x32xf32> to vector<8x32xf32>
    %cst_49 = arith.constant dense<0.000000e+00> : vector<8x32xf32>
    %120 = tpu.matmul %118, %119, %cst_49 {dimension_numbers = #tpu.dot_dimension_numbers<[1], [0], [0], [1], [0, 0, 1, 1], [], []>} : vector<8x8xf32>, vector<8x32xf32>, vector<8x32xf32> -> vector<8x32xf32>
    %121 = arith.addf %100, %120 : vector<8x32xf32>
    %122 = vector.broadcast %33 : vector<1x32xf32> to vector<8x32xf32>
    %123 = arith.addf %121, %122 : vector<8x32xf32>
    %124 = arith.addf %1, %123 : vector<8x32xf32>
    %c0_50 = arith.constant 0 : index
    %c0_51 = arith.constant 0 : index
    %125 = vector.load %arg15[%c0_50, %c0_51] : memref<1x32xf32, #tpu.memory_space<vmem>>, vector<1x32xf32>
    %c0_52 = arith.constant 0 : index
    %c0_53 = arith.constant 0 : index
    %126 = vector.load %arg16[%c0_52, %c0_53] : memref<1x32xf32, #tpu.memory_space<vmem>>, vector<1x32xf32>
    %cst_54 = arith.constant dense<0.000000e+00> : vector<8xf32>
    %127 = vector.multi_reduction <add>, %124, %cst_54 [1] : vector<8x32xf32> to vector<8xf32>
    %128 = vector.shape_cast %127 : vector<8xf32> to vector<8x1xf32>
    %cst_55 = arith.constant 3.200000e+01 : f32
    %129 = vector.broadcast %cst_55 : f32 to vector<8x1xf32>
    %130 = arith.divf %128, %129 : vector<8x1xf32>
    %131 = vector.broadcast %130 : vector<8x1xf32> to vector<8x32xf32>
    %132 = arith.subf %124, %131 : vector<8x32xf32>
    %133 = arith.mulf %132, %132 : vector<8x32xf32>
    %cst_56 = arith.constant dense<0.000000e+00> : vector<8xf32>
    %134 = vector.multi_reduction <add>, %133, %cst_56 [1] : vector<8x32xf32> to vector<8xf32>
    %135 = vector.shape_cast %134 : vector<8xf32> to vector<8x1xf32>
    %cst_57 = arith.constant 3.200000e+01 : f32
    %136 = vector.broadcast %cst_57 : f32 to vector<8x1xf32>
    %137 = arith.divf %135, %136 : vector<8x1xf32>
    %138 = vector.broadcast %130 : vector<8x1xf32> to vector<8x32xf32>
    %139 = arith.subf %124, %138 : vector<8x32xf32>
    %cst_58 = arith.constant 9.99999997E-7 : f32
    %140 = vector.broadcast %cst_58 : f32 to vector<8x1xf32>
    %141 = arith.addf %137, %140 : vector<8x1xf32>
    %142 = math.rsqrt %141 : vector<8x1xf32>
    %143 = vector.broadcast %142 : vector<8x1xf32> to vector<8x32xf32>
    %144 = arith.mulf %139, %143 : vector<8x32xf32>
    %145 = vector.broadcast %125 : vector<1x32xf32> to vector<8x32xf32>
    %146 = arith.mulf %144, %145 : vector<8x32xf32>
    %147 = vector.broadcast %126 : vector<1x32xf32> to vector<8x32xf32>
    %148 = arith.addf %146, %147 : vector<8x32xf32>
    %c0_59 = arith.constant 0 : index
    %c0_60 = arith.constant 0 : index
    %c0_61 = arith.constant 0 : index
    %149 = vector.load %arg4[%c0_59, %c0_60, %c0_61] : memref<1x8x8xf32, #tpu.memory_space<vmem>>, vector<1x8x8xf32>
    %150 = vector.shape_cast %149 : vector<1x8x8xf32> to vector<8x8xf32>
    %c0_62 = arith.constant 0 : index
    %c0_63 = arith.constant 0 : index
    %151 = vector.load %arg9[%c0_62, %c0_63] : memref<32x96xf32, #tpu.memory_space<vmem>>, vector<32x96xf32>
    %c0_64 = arith.constant 0 : index
    %c0_65 = arith.constant 0 : index
    %152 = vector.load %arg10[%c0_64, %c0_65] : memref<1x96xf32, #tpu.memory_space<vmem>>, vector<1x96xf32>
    %c0_66 = arith.constant 0 : index
    %c0_67 = arith.constant 0 : index
    %153 = vector.load %arg11[%c0_66, %c0_67] : memref<32x32xf32, #tpu.memory_space<vmem>>, vector<32x32xf32>
    %c0_68 = arith.constant 0 : index
    %c0_69 = arith.constant 0 : index
    %154 = vector.load %arg12[%c0_68, %c0_69] : memref<1x32xf32, #tpu.memory_space<vmem>>, vector<1x32xf32>
    %cst_70 = arith.constant dense<0.000000e+00> : vector<8x96xf32>
    %155 = tpu.matmul %148, %151, %cst_70 {dimension_numbers = #tpu.dot_dimension_numbers<[1], [0], [0], [1], [0, 0, 1, 1], [], []>} : vector<8x32xf32>, vector<32x96xf32>, vector<8x96xf32> -> vector<8x96xf32>
    %156 = vector.broadcast %152 : vector<1x96xf32> to vector<8x96xf32>
    %157 = arith.addf %155, %156 : vector<8x96xf32>
    %cst_71 = arith.constant dense<0.000000e+00> : vector<8x96xf32>
    %158 = tpu.matmul %3, %151, %cst_71 {dimension_numbers = #tpu.dot_dimension_numbers<[1], [0], [0], [1], [0, 0, 1, 1], [], []>} : vector<8x32xf32>, vector<32x96xf32>, vector<8x96xf32> -> vector<8x96xf32>
    %159 = vector.broadcast %152 : vector<1x96xf32> to vector<8x96xf32>
    %160 = arith.addf %158, %159 : vector<8x96xf32>
    %cst_72 = arith.constant 0.000000e+00 : f32
    %161 = vector.broadcast %cst_72 : f32 to vector<8x32xf32>
    %162 = vector.extract_strided_slice %157 {offsets = [0, 0], sizes = [8, 8], strides = [1, 1]} : vector<8x96xf32> to vector<8x8xf32>
    %163 = vector.extract_strided_slice %160 {offsets = [0, 32], sizes = [8, 8], strides = [1, 1]} : vector<8x96xf32> to vector<8x8xf32>
    %164 = vector.extract_strided_slice %160 {offsets = [0, 64], sizes = [8, 8], strides = [1, 1]} : vector<8x96xf32> to vector<8x8xf32>
    %165 = tpu.transpose %163, [1, 0] : vector<8x8xf32> -> vector<8x8xf32>
    %cst_73 = arith.constant dense<0.000000e+00> : vector<8x8xf32>
    %166 = tpu.matmul %162, %165, %cst_73 {dimension_numbers = #tpu.dot_dimension_numbers<[1], [0], [0], [1], [0, 0, 1, 1], [], []>} : vector<8x8xf32>, vector<8x8xf32>, vector<8x8xf32> -> vector<8x8xf32>
    %cst_74 = arith.constant 0.353553385 : f32
    %167 = vector.broadcast %cst_74 : f32 to vector<8x8xf32>
    %168 = arith.mulf %166, %167 : vector<8x8xf32>
    %169 = arith.addf %168, %150 : vector<8x8xf32>
    %cst_75 = arith.constant dense<0xFF800000> : vector<8xf32>
    %170 = vector.multi_reduction <maximumf>, %169, %cst_75 [1] : vector<8x8xf32> to vector<8xf32>
    %171 = vector.shape_cast %170 : vector<8xf32> to vector<8x1xf32>
    %172 = vector.broadcast %171 : vector<8x1xf32> to vector<8x8xf32>
    %173 = arith.subf %169, %172 : vector<8x8xf32>
    %174 = math.exp %173 : vector<8x8xf32>
    %cst_76 = arith.constant dense<0.000000e+00> : vector<8xf32>
    %175 = vector.multi_reduction <add>, %174, %cst_76 [1] : vector<8x8xf32> to vector<8xf32>
    %176 = vector.shape_cast %175 : vector<8xf32> to vector<8x1xf32>
    %177 = vector.broadcast %176 : vector<8x1xf32> to vector<8x8xf32>
    %178 = arith.divf %174, %177 : vector<8x8xf32>
    %cst_77 = arith.constant dense<0.000000e+00> : vector<8x8xf32>
    %179 = tpu.matmul %178, %164, %cst_77 {dimension_numbers = #tpu.dot_dimension_numbers<[1], [0], [0], [1], [0, 0, 1, 1], [], []>} : vector<8x8xf32>, vector<8x8xf32>, vector<8x8xf32> -> vector<8x8xf32>
    %180 = vector.extract_strided_slice %153 {offsets = [0, 0], sizes = [8, 32], strides = [1, 1]} : vector<32x32xf32> to vector<8x32xf32>
    %cst_78 = arith.constant dense<0.000000e+00> : vector<8x32xf32>
    %181 = tpu.matmul %179, %180, %cst_78 {dimension_numbers = #tpu.dot_dimension_numbers<[1], [0], [0], [1], [0, 0, 1, 1], [], []>} : vector<8x8xf32>, vector<8x32xf32>, vector<8x32xf32> -> vector<8x32xf32>
    %182 = arith.addf %161, %181 : vector<8x32xf32>
    %183 = vector.extract_strided_slice %157 {offsets = [0, 8], sizes = [8, 8], strides = [1, 1]} : vector<8x96xf32> to vector<8x8xf32>
    %184 = vector.extract_strided_slice %160 {offsets = [0, 40], sizes = [8, 8], strides = [1, 1]} : vector<8x96xf32> to vector<8x8xf32>
    %185 = vector.extract_strided_slice %160 {offsets = [0, 72], sizes = [8, 8], strides = [1, 1]} : vector<8x96xf32> to vector<8x8xf32>
    %186 = tpu.transpose %184, [1, 0] : vector<8x8xf32> -> vector<8x8xf32>
    %cst_79 = arith.constant dense<0.000000e+00> : vector<8x8xf32>
    %187 = tpu.matmul %183, %186, %cst_79 {dimension_numbers = #tpu.dot_dimension_numbers<[1], [0], [0], [1], [0, 0, 1, 1], [], []>} : vector<8x8xf32>, vector<8x8xf32>, vector<8x8xf32> -> vector<8x8xf32>
    %cst_80 = arith.constant 0.353553385 : f32
    %188 = vector.broadcast %cst_80 : f32 to vector<8x8xf32>
    %189 = arith.mulf %187, %188 : vector<8x8xf32>
    %190 = arith.addf %189, %150 : vector<8x8xf32>
    %cst_81 = arith.constant dense<0xFF800000> : vector<8xf32>
    %191 = vector.multi_reduction <maximumf>, %190, %cst_81 [1] : vector<8x8xf32> to vector<8xf32>
    %192 = vector.shape_cast %191 : vector<8xf32> to vector<8x1xf32>
    %193 = vector.broadcast %192 : vector<8x1xf32> to vector<8x8xf32>
    %194 = arith.subf %190, %193 : vector<8x8xf32>
    %195 = math.exp %194 : vector<8x8xf32>
    %cst_82 = arith.constant dense<0.000000e+00> : vector<8xf32>
    %196 = vector.multi_reduction <add>, %195, %cst_82 [1] : vector<8x8xf32> to vector<8xf32>
    %197 = vector.shape_cast %196 : vector<8xf32> to vector<8x1xf32>
    %198 = vector.broadcast %197 : vector<8x1xf32> to vector<8x8xf32>
    %199 = arith.divf %195, %198 : vector<8x8xf32>
    %cst_83 = arith.constant dense<0.000000e+00> : vector<8x8xf32>
    %200 = tpu.matmul %199, %185, %cst_83 {dimension_numbers = #tpu.dot_dimension_numbers<[1], [0], [0], [1], [0, 0, 1, 1], [], []>} : vector<8x8xf32>, vector<8x8xf32>, vector<8x8xf32> -> vector<8x8xf32>
    %201 = vector.extract_strided_slice %153 {offsets = [8, 0], sizes = [8, 32], strides = [1, 1]} : vector<32x32xf32> to vector<8x32xf32>
    %cst_84 = arith.constant dense<0.000000e+00> : vector<8x32xf32>
    %202 = tpu.matmul %200, %201, %cst_84 {dimension_numbers = #tpu.dot_dimension_numbers<[1], [0], [0], [1], [0, 0, 1, 1], [], []>} : vector<8x8xf32>, vector<8x32xf32>, vector<8x32xf32> -> vector<8x32xf32>
    %203 = arith.addf %182, %202 : vector<8x32xf32>
    %204 = vector.extract_strided_slice %157 {offsets = [0, 16], sizes = [8, 8], strides = [1, 1]} : vector<8x96xf32> to vector<8x8xf32>
    %205 = vector.extract_strided_slice %160 {offsets = [0, 48], sizes = [8, 8], strides = [1, 1]} : vector<8x96xf32> to vector<8x8xf32>
    %206 = vector.extract_strided_slice %160 {offsets = [0, 80], sizes = [8, 8], strides = [1, 1]} : vector<8x96xf32> to vector<8x8xf32>
    %207 = tpu.transpose %205, [1, 0] : vector<8x8xf32> -> vector<8x8xf32>
    %cst_85 = arith.constant dense<0.000000e+00> : vector<8x8xf32>
    %208 = tpu.matmul %204, %207, %cst_85 {dimension_numbers = #tpu.dot_dimension_numbers<[1], [0], [0], [1], [0, 0, 1, 1], [], []>} : vector<8x8xf32>, vector<8x8xf32>, vector<8x8xf32> -> vector<8x8xf32>
    %cst_86 = arith.constant 0.353553385 : f32
    %209 = vector.broadcast %cst_86 : f32 to vector<8x8xf32>
    %210 = arith.mulf %208, %209 : vector<8x8xf32>
    %211 = arith.addf %210, %150 : vector<8x8xf32>
    %cst_87 = arith.constant dense<0xFF800000> : vector<8xf32>
    %212 = vector.multi_reduction <maximumf>, %211, %cst_87 [1] : vector<8x8xf32> to vector<8xf32>
    %213 = vector.shape_cast %212 : vector<8xf32> to vector<8x1xf32>
    %214 = vector.broadcast %213 : vector<8x1xf32> to vector<8x8xf32>
    %215 = arith.subf %211, %214 : vector<8x8xf32>
    %216 = math.exp %215 : vector<8x8xf32>
    %cst_88 = arith.constant dense<0.000000e+00> : vector<8xf32>
    %217 = vector.multi_reduction <add>, %216, %cst_88 [1] : vector<8x8xf32> to vector<8xf32>
    %218 = vector.shape_cast %217 : vector<8xf32> to vector<8x1xf32>
    %219 = vector.broadcast %218 : vector<8x1xf32> to vector<8x8xf32>
    %220 = arith.divf %216, %219 : vector<8x8xf32>
    %cst_89 = arith.constant dense<0.000000e+00> : vector<8x8xf32>
    %221 = tpu.matmul %220, %206, %cst_89 {dimension_numbers = #tpu.dot_dimension_numbers<[1], [0], [0], [1], [0, 0, 1, 1], [], []>} : vector<8x8xf32>, vector<8x8xf32>, vector<8x8xf32> -> vector<8x8xf32>
    %222 = vector.extract_strided_slice %153 {offsets = [16, 0], sizes = [8, 32], strides = [1, 1]} : vector<32x32xf32> to vector<8x32xf32>
    %cst_90 = arith.constant dense<0.000000e+00> : vector<8x32xf32>
    %223 = tpu.matmul %221, %222, %cst_90 {dimension_numbers = #tpu.dot_dimension_numbers<[1], [0], [0], [1], [0, 0, 1, 1], [], []>} : vector<8x8xf32>, vector<8x32xf32>, vector<8x32xf32> -> vector<8x32xf32>
    %224 = arith.addf %203, %223 : vector<8x32xf32>
    %225 = vector.extract_strided_slice %157 {offsets = [0, 24], sizes = [8, 8], strides = [1, 1]} : vector<8x96xf32> to vector<8x8xf32>
    %226 = vector.extract_strided_slice %160 {offsets = [0, 56], sizes = [8, 8], strides = [1, 1]} : vector<8x96xf32> to vector<8x8xf32>
    %227 = vector.extract_strided_slice %160 {offsets = [0, 88], sizes = [8, 8], strides = [1, 1]} : vector<8x96xf32> to vector<8x8xf32>
    %228 = tpu.transpose %226, [1, 0] : vector<8x8xf32> -> vector<8x8xf32>
    %cst_91 = arith.constant dense<0.000000e+00> : vector<8x8xf32>
    %229 = tpu.matmul %225, %228, %cst_91 {dimension_numbers = #tpu.dot_dimension_numbers<[1], [0], [0], [1], [0, 0, 1, 1], [], []>} : vector<8x8xf32>, vector<8x8xf32>, vector<8x8xf32> -> vector<8x8xf32>
    %cst_92 = arith.constant 0.353553385 : f32
    %230 = vector.broadcast %cst_92 : f32 to vector<8x8xf32>
    %231 = arith.mulf %229, %230 : vector<8x8xf32>
    %232 = arith.addf %231, %150 : vector<8x8xf32>
    %cst_93 = arith.constant dense<0xFF800000> : vector<8xf32>
    %233 = vector.multi_reduction <maximumf>, %232, %cst_93 [1] : vector<8x8xf32> to vector<8xf32>
    %234 = vector.shape_cast %233 : vector<8xf32> to vector<8x1xf32>
    %235 = vector.broadcast %234 : vector<8x1xf32> to vector<8x8xf32>
    %236 = arith.subf %232, %235 : vector<8x8xf32>
    %237 = math.exp %236 : vector<8x8xf32>
    %cst_94 = arith.constant dense<0.000000e+00> : vector<8xf32>
    %238 = vector.multi_reduction <add>, %237, %cst_94 [1] : vector<8x8xf32> to vector<8xf32>
    %239 = vector.shape_cast %238 : vector<8xf32> to vector<8x1xf32>
    %240 = vector.broadcast %239 : vector<8x1xf32> to vector<8x8xf32>
    %241 = arith.divf %237, %240 : vector<8x8xf32>
    %cst_95 = arith.constant dense<0.000000e+00> : vector<8x8xf32>
    %242 = tpu.matmul %241, %227, %cst_95 {dimension_numbers = #tpu.dot_dimension_numbers<[1], [0], [0], [1], [0, 0, 1, 1], [], []>} : vector<8x8xf32>, vector<8x8xf32>, vector<8x8xf32> -> vector<8x8xf32>
    %243 = vector.extract_strided_slice %153 {offsets = [24, 0], sizes = [8, 32], strides = [1, 1]} : vector<32x32xf32> to vector<8x32xf32>
    %cst_96 = arith.constant dense<0.000000e+00> : vector<8x32xf32>
    %244 = tpu.matmul %242, %243, %cst_96 {dimension_numbers = #tpu.dot_dimension_numbers<[1], [0], [0], [1], [0, 0, 1, 1], [], []>} : vector<8x8xf32>, vector<8x32xf32>, vector<8x32xf32> -> vector<8x32xf32>
    %245 = arith.addf %224, %244 : vector<8x32xf32>
    %246 = vector.broadcast %154 : vector<1x32xf32> to vector<8x32xf32>
    %247 = arith.addf %245, %246 : vector<8x32xf32>
    %248 = arith.addf %124, %247 : vector<8x32xf32>
    %c0_97 = arith.constant 0 : index
    %c0_98 = arith.constant 0 : index
    %249 = vector.load %arg17[%c0_97, %c0_98] : memref<1x32xf32, #tpu.memory_space<vmem>>, vector<1x32xf32>
    %c0_99 = arith.constant 0 : index
    %c0_100 = arith.constant 0 : index
    %250 = vector.load %arg18[%c0_99, %c0_100] : memref<1x32xf32, #tpu.memory_space<vmem>>, vector<1x32xf32>
    %cst_101 = arith.constant dense<0.000000e+00> : vector<8xf32>
    %251 = vector.multi_reduction <add>, %248, %cst_101 [1] : vector<8x32xf32> to vector<8xf32>
    %252 = vector.shape_cast %251 : vector<8xf32> to vector<8x1xf32>
    %cst_102 = arith.constant 3.200000e+01 : f32
    %253 = vector.broadcast %cst_102 : f32 to vector<8x1xf32>
    %254 = arith.divf %252, %253 : vector<8x1xf32>
    %255 = vector.broadcast %254 : vector<8x1xf32> to vector<8x32xf32>
    %256 = arith.subf %248, %255 : vector<8x32xf32>
    %257 = arith.mulf %256, %256 : vector<8x32xf32>
    %cst_103 = arith.constant dense<0.000000e+00> : vector<8xf32>
    %258 = vector.multi_reduction <add>, %257, %cst_103 [1] : vector<8x32xf32> to vector<8xf32>
    %259 = vector.shape_cast %258 : vector<8xf32> to vector<8x1xf32>
    %cst_104 = arith.constant 3.200000e+01 : f32
    %260 = vector.broadcast %cst_104 : f32 to vector<8x1xf32>
    %261 = arith.divf %259, %260 : vector<8x1xf32>
    %262 = vector.broadcast %254 : vector<8x1xf32> to vector<8x32xf32>
    %263 = arith.subf %248, %262 : vector<8x32xf32>
    %cst_105 = arith.constant 9.99999997E-7 : f32
    %264 = vector.broadcast %cst_105 : f32 to vector<8x1xf32>
    %265 = arith.addf %261, %264 : vector<8x1xf32>
    %266 = math.rsqrt %265 : vector<8x1xf32>
    %267 = vector.broadcast %266 : vector<8x1xf32> to vector<8x32xf32>
    %268 = arith.mulf %263, %267 : vector<8x32xf32>
    %269 = vector.broadcast %249 : vector<1x32xf32> to vector<8x32xf32>
    %270 = arith.mulf %268, %269 : vector<8x32xf32>
    %271 = vector.broadcast %250 : vector<1x32xf32> to vector<8x32xf32>
    %272 = arith.addf %270, %271 : vector<8x32xf32>
    %c0_106 = arith.constant 0 : index
    %c0_107 = arith.constant 0 : index
    %273 = vector.load %arg21[%c0_106, %c0_107] : memref<32x64xf32, #tpu.memory_space<vmem>>, vector<32x64xf32>
    %c0_108 = arith.constant 0 : index
    %c0_109 = arith.constant 0 : index
    %274 = vector.load %arg22[%c0_108, %c0_109] : memref<1x64xf32, #tpu.memory_space<vmem>>, vector<1x64xf32>
    %c0_110 = arith.constant 0 : index
    %c0_111 = arith.constant 0 : index
    %275 = vector.load %arg23[%c0_110, %c0_111] : memref<64x32xf32, #tpu.memory_space<vmem>>, vector<64x32xf32>
    %c0_112 = arith.constant 0 : index
    %c0_113 = arith.constant 0 : index
    %276 = vector.load %arg24[%c0_112, %c0_113] : memref<1x32xf32, #tpu.memory_space<vmem>>, vector<1x32xf32>
    %cst_114 = arith.constant dense<0.000000e+00> : vector<8x64xf32>
    %277 = tpu.matmul %272, %273, %cst_114 {dimension_numbers = #tpu.dot_dimension_numbers<[1], [0], [0], [1], [0, 0, 1, 1], [], []>} : vector<8x32xf32>, vector<32x64xf32>, vector<8x64xf32> -> vector<8x64xf32>
    %278 = vector.broadcast %274 : vector<1x64xf32> to vector<8x64xf32>
    %279 = arith.addf %277, %278 : vector<8x64xf32>
    %cst_115 = arith.constant 0.000000e+00 : f32
    %280 = vector.broadcast %cst_115 : f32 to vector<8x64xf32>
    %281 = arith.maximumf %279, %280 : vector<8x64xf32>
    %cst_116 = arith.constant dense<0.000000e+00> : vector<8x32xf32>
    %282 = tpu.matmul %281, %275, %cst_116 {dimension_numbers = #tpu.dot_dimension_numbers<[1], [0], [0], [1], [0, 0, 1, 1], [], []>} : vector<8x64xf32>, vector<64x32xf32>, vector<8x32xf32> -> vector<8x32xf32>
    %283 = vector.broadcast %276 : vector<1x32xf32> to vector<8x32xf32>
    %284 = arith.addf %282, %283 : vector<8x32xf32>
    %285 = arith.addf %248, %284 : vector<8x32xf32>
    %c0_117 = arith.constant 0 : index
    %c0_118 = arith.constant 0 : index
    %286 = vector.load %arg19[%c0_117, %c0_118] : memref<1x32xf32, #tpu.memory_space<vmem>>, vector<1x32xf32>
    %c0_119 = arith.constant 0 : index
    %c0_120 = arith.constant 0 : index
    %287 = vector.load %arg20[%c0_119, %c0_120] : memref<1x32xf32, #tpu.memory_space<vmem>>, vector<1x32xf32>
    %cst_121 = arith.constant dense<0.000000e+00> : vector<8xf32>
    %288 = vector.multi_reduction <add>, %285, %cst_121 [1] : vector<8x32xf32> to vector<8xf32>
    %289 = vector.shape_cast %288 : vector<8xf32> to vector<8x1xf32>
    %cst_122 = arith.constant 3.200000e+01 : f32
    %290 = vector.broadcast %cst_122 : f32 to vector<8x1xf32>
    %291 = arith.divf %289, %290 : vector<8x1xf32>
    %292 = vector.broadcast %291 : vector<8x1xf32> to vector<8x32xf32>
    %293 = arith.subf %285, %292 : vector<8x32xf32>
    %294 = arith.mulf %293, %293 : vector<8x32xf32>
    %cst_123 = arith.constant dense<0.000000e+00> : vector<8xf32>
    %295 = vector.multi_reduction <add>, %294, %cst_123 [1] : vector<8x32xf32> to vector<8xf32>
    %296 = vector.shape_cast %295 : vector<8xf32> to vector<8x1xf32>
    %cst_124 = arith.constant 3.200000e+01 : f32
    %297 = vector.broadcast %cst_124 : f32 to vector<8x1xf32>
    %298 = arith.divf %296, %297 : vector<8x1xf32>
    %299 = vector.broadcast %291 : vector<8x1xf32> to vector<8x32xf32>
    %300 = arith.subf %285, %299 : vector<8x32xf32>
    %cst_125 = arith.constant 9.99999997E-7 : f32
    %301 = vector.broadcast %cst_125 : f32 to vector<8x1xf32>
    %302 = arith.addf %298, %301 : vector<8x1xf32>
    %303 = math.rsqrt %302 : vector<8x1xf32>
    %304 = vector.broadcast %303 : vector<8x1xf32> to vector<8x32xf32>
    %305 = arith.mulf %300, %304 : vector<8x32xf32>
    %306 = vector.broadcast %286 : vector<1x32xf32> to vector<8x32xf32>
    %307 = arith.mulf %305, %306 : vector<8x32xf32>
    %308 = vector.broadcast %287 : vector<1x32xf32> to vector<8x32xf32>
    %309 = arith.addf %307, %308 : vector<8x32xf32>
    %c0_126 = arith.constant 0 : index
    %c0_127 = arith.constant 0 : index
    %c0_128 = arith.constant 0 : index
    %310 = vector.load %arg25[%c0_126, %c0_127, %c0_128] : memref<1x8x32xf32, #tpu.memory_space<vmem>>, vector<1x8x32xf32>
    %311 = vector.shape_cast %310 : vector<1x8x32xf32> to vector<8x32xf32>
    %312 = vector.shape_cast %309 : vector<8x32xf32> to vector<1x8x32xf32>
    tpu.vector_store %arg25[%c0_126, %c0_127, %c0_128], %312 {strides = array<i32>} : memref<1x8x32xf32, #tpu.memory_space<vmem>>, vector<1x8x32xf32>,
    return
  }
  func.func @transform_0(%arg0: i32) -> (i32, i32, i32) {
    %c0_i32 = arith.constant 0 : i32
    %c0_i32_0 = arith.constant 0 : i32
    %c0_i32_1 = arith.constant 0 : i32
    return %arg0, %c0_i32, %c0_i32_0 : i32, i32, i32
  }
  func.func @transform_1(%arg0: i32) -> (i32, i32, i32) {
    %c0_i32 = arith.constant 0 : i32
    %c0_i32_0 = arith.constant 0 : i32
    %c0_i32_1 = arith.constant 0 : i32
    return %arg0, %c0_i32, %c0_i32_0 : i32, i32, i32
  }
  func.func @transform_2(%arg0: i32) -> (i32, i32, i32) {
    %c0_i32 = arith.constant 0 : i32
    %c0_i32_0 = arith.constant 0 : i32
    %c0_i32_1 = arith.constant 0 : i32
    return %arg0, %c0_i32, %c0_i32_0 : i32, i32, i32
  }
  func.func @transform_3(%arg0: i32) -> (i32, i32, i32) {
    %c0_i32 = arith.constant 0 : i32
    %c0_i32_0 = arith.constant 0 : i32
    %c0_i32_1 = arith.constant 0 : i32
    return %arg0, %c0_i32, %c0_i32_0 : i32, i32, i32
  }
  func.func @transform_4(%arg0: i32) -> (i32, i32) {
    %c0_i32 = arith.constant 0 : i32
    %c0_i32_0 = arith.constant 0 : i32
    %c0_i32_1 = arith.constant 0 : i32
    return %c0_i32, %c0_i32_0 : i32, i32
  }
  func.func @transform_5(%arg0: i32) -> (i32, i32) {
    %c0_i32 = arith.constant 0 : i32
    %c0_i32_0 = arith.constant 0 : i32
    %c0_i32_1 = arith.constant 0 : i32
    return %c0_i32, %c0_i32_0 : i32, i32
  }
  func.func @transform_6(%arg0: i32) -> (i32, i32) {
    %c0_i32 = arith.constant 0 : i32
    %c0_i32_0 = arith.constant 0 : i32
    %c0_i32_1 = arith.constant 0 : i32
    return %c0_i32, %c0_i32_0 : i32, i32
  }
  func.func @transform_7(%arg0: i32) -> (i32, i32) {
    %c0_i32 = arith.constant 0 : i32
    %c0_i32_0 = arith.constant 0 : i32
    %c0_i32_1 = arith.constant 0 : i32
    return %c0_i32, %c0_i32_0 : i32, i32
  }
  func.func @transform_8(%arg0: i32) -> (i32, i32) {
    %c0_i32 = arith.constant 0 : i32
    %c0_i32_0 = arith.constant 0 : i32
    %c0_i32_1 = arith.constant 0 : i32
    return %c0_i32, %c0_i32_0 : i32, i32
  }
  func.func @transform_9(%arg0: i32) -> (i32, i32) {
    %c0_i32 = arith.constant 0 : i32
    %c0_i32_0 = arith.constant 0 : i32
    %c0_i32_1 = arith.constant 0 : i32
    return %c0_i32, %c0_i32_0 : i32, i32
  }
  func.func @transform_10(%arg0: i32) -> (i32, i32) {
    %c0_i32 = arith.constant 0 : i32
    %c0_i32_0 = arith.constant 0 : i32
    %c0_i32_1 = arith.constant 0 : i32
    return %c0_i32, %c0_i32_0 : i32, i32
  }
  func.func @transform_11(%arg0: i32) -> (i32, i32) {
    %c0_i32 = arith.constant 0 : i32
    %c0_i32_0 = arith.constant 0 : i32
    %c0_i32_1 = arith.constant 0 : i32
    return %c0_i32, %c0_i32_0 : i32, i32
  }
  func.func @transform_12(%arg0: i32) -> (i32, i32) {
    %c0_i32 = arith.constant 0 : i32
    %c0_i32_0 = arith.constant 0 : i32
    %c0_i32_1 = arith.constant 0 : i32
    return %c0_i32, %c0_i32_0 : i32, i32
  }
  func.func @transform_13(%arg0: i32) -> (i32, i32) {
    %c0_i32 = arith.constant 0 : i32
    %c0_i32_0 = arith.constant 0 : i32
    %c0_i32_1 = arith.constant 0 : i32
    return %c0_i32, %c0_i32_0 : i32, i32
  }
  func.func @transform_14(%arg0: i32) -> (i32, i32) {
    %c0_i32 = arith.constant 0 : i32
    %c0_i32_0 = arith.constant 0 : i32
    %c0_i32_1 = arith.constant 0 : i32
    return %c0_i32, %c0_i32_0 : i32, i32
  }
  func.func @transform_15(%arg0: i32) -> (i32, i32) {
    %c0_i32 = arith.constant 0 : i32
    %c0_i32_0 = arith.constant 0 : i32
    %c0_i32_1 = arith.constant 0 : i32
    return %c0_i32, %c0_i32_0 : i32, i32
  }
  func.func @transform_16(%arg0: i32) -> (i32, i32) {
    %c0_i32 = arith.constant 0 : i32
    %c0_i32_0 = arith.constant 0 : i32
    %c0_i32_1 = arith.constant 0 : i32
    return %c0_i32, %c0_i32_0 : i32, i32
  }
  func.func @transform_17(%arg0: i32) -> (i32, i32) {
    %c0_i32 = arith.constant 0 : i32
    %c0_i32_0 = arith.constant 0 : i32
    %c0_i32_1 = arith.constant 0 : i32
    return %c0_i32, %c0_i32_0 : i32, i32
  }
  func.func @transform_18(%arg0: i32) -> (i32, i32) {
    %c0_i32 = arith.constant 0 : i32
    %c0_i32_0 = arith.constant 0 : i32
    %c0_i32_1 = arith.constant 0 : i32
    return %c0_i32, %c0_i32_0 : i32, i32
  }
  func.func @transform_19(%arg0: i32) -> (i32, i32) {
    %c0_i32 = arith.constant 0 : i32
    %c0_i32_0 = arith.constant 0 : i32
    %c0_i32_1 = arith.constant 0 : i32
    return %c0_i32, %c0_i32_0 : i32, i32
  }
  func.func @transform_20(%arg0: i32) -> (i32, i32) {
    %c0_i32 = arith.constant 0 : i32
    %c0_i32_0 = arith.constant 0 : i32
    %c0_i32_1 = arith.constant 0 : i32
    return %c0_i32, %c0_i32_0 : i32, i32
  }
  func.func @transform_21(%arg0: i32) -> (i32, i32) {
    %c0_i32 = arith.constant 0 : i32
    %c0_i32_0 = arith.constant 0 : i32
    %c0_i32_1 = arith.constant 0 : i32
    return %c0_i32, %c0_i32_0 : i32, i32
  }
  func.func @transform_22(%arg0: i32) -> (i32, i32) {
    %c0_i32 = arith.constant 0 : i32
    %c0_i32_0 = arith.constant 0 : i32
    %c0_i32_1 = arith.constant 0 : i32
    return %c0_i32, %c0_i32_0 : i32, i32
  }
  func.func @transform_23(%arg0: i32) -> (i32, i32) {
    %c0_i32 = arith.constant 0 : i32
    %c0_i32_0 = arith.constant 0 : i32
    %c0_i32_1 = arith.constant 0 : i32
    return %c0_i32, %c0_i32_0 : i32, i32
  }
  func.func @transform_24(%arg0: i32) -> (i32, i32, i32) {
    %c0_i32 = arith.constant 0 : i32
    %c0_i32_0 = arith.constant 0 : i32
    %c0_i32_1 = arith.constant 0 : i32
    return %arg0, %c0_i32, %c0_i32_0 : i32, i32, i32
  }
}

module attributes {stable_mosaic.version = 11 : i64} {
  func.func @_encoder_kernel(%arg0: i32, %arg1: memref<1x8x32xf32, #tpu.memory_space<vmem>>, %arg2: memref<1x8x8xf32, #tpu.memory_space<vmem>>, %arg3: memref<1x8x8xf32, #tpu.memory_space<vmem>>, %arg4: memref<32x96xf32, #tpu.memory_space<vmem>>, %arg5: memref<1x96xf32, #tpu.memory_space<vmem>>, %arg6: memref<32x32xf32, #tpu.memory_space<vmem>>, %arg7: memref<1x32xf32, #tpu.memory_space<vmem>>, %arg8: memref<32x96xf32, #tpu.memory_space<vmem>>, %arg9: memref<1x96xf32, #tpu.memory_space<vmem>>, %arg10: memref<32x32xf32, #tpu.memory_space<vmem>>, %arg11: memref<1x32xf32, #tpu.memory_space<vmem>>, %arg12: memref<1x32xf32, #tpu.memory_space<vmem>>, %arg13: memref<1x32xf32, #tpu.memory_space<vmem>>, %arg14: memref<1x32xf32, #tpu.memory_space<vmem>>, %arg15: memref<1x32xf32, #tpu.memory_space<vmem>>, %arg16: memref<1x32xf32, #tpu.memory_space<vmem>>, %arg17: memref<1x32xf32, #tpu.memory_space<vmem>>, %arg18: memref<1x32xf32, #tpu.memory_space<vmem>>, %arg19: memref<1x32xf32, #tpu.memory_space<vmem>>, %arg20: memref<32x64xf32, #tpu.memory_space<vmem>>, %arg21: memref<1x64xf32, #tpu.memory_space<vmem>>, %arg22: memref<64x32xf32, #tpu.memory_space<vmem>>, %arg23: memref<1x32xf32, #tpu.memory_space<vmem>>, %arg24: memref<1x8x32xf32, #tpu.memory_space<vmem>>) attributes {dimension_semantics = [#tpu.dimension_semantics<parallel>], iteration_bounds = array<i64: 2>, scalar_prefetch = 0 : i64, scratch_operands = 0 : i64, tpu.core_type = #tpu.core_type<tc>, window_params = [{transform_indices = @transform_0, window_bounds = array<i64: 1, 8, 32>}, {transform_indices = @transform_1, window_bounds = array<i64: 1, 8, 8>}, {transform_indices = @transform_2, window_bounds = array<i64: 1, 8, 8>}, {pipeline_mode = #tpu.pipeline_mode<synchronous>, transform_indices = @transform_3, window_bounds = array<i64: 32, 96>}, {pipeline_mode = #tpu.pipeline_mode<synchronous>, transform_indices = @transform_4, window_bounds = array<i64: 1, 96>}, {pipeline_mode = #tpu.pipeline_mode<synchronous>, transform_indices = @transform_5, window_bounds = array<i64: 32, 32>}, {pipeline_mode = #tpu.pipeline_mode<synchronous>, transform_indices = @transform_6, window_bounds = array<i64: 1, 32>}, {pipeline_mode = #tpu.pipeline_mode<synchronous>, transform_indices = @transform_7, window_bounds = array<i64: 32, 96>}, {pipeline_mode = #tpu.pipeline_mode<synchronous>, transform_indices = @transform_8, window_bounds = array<i64: 1, 96>}, {pipeline_mode = #tpu.pipeline_mode<synchronous>, transform_indices = @transform_9, window_bounds = array<i64: 32, 32>}, {pipeline_mode = #tpu.pipeline_mode<synchronous>, transform_indices = @transform_10, window_bounds = array<i64: 1, 32>}, {pipeline_mode = #tpu.pipeline_mode<synchronous>, transform_indices = @transform_11, window_bounds = array<i64: 1, 32>}, {pipeline_mode = #tpu.pipeline_mode<synchronous>, transform_indices = @transform_12, window_bounds = array<i64: 1, 32>}, {pipeline_mode = #tpu.pipeline_mode<synchronous>, transform_indices = @transform_13, window_bounds = array<i64: 1, 32>}, {pipeline_mode = #tpu.pipeline_mode<synchronous>, transform_indices = @transform_14, window_bounds = array<i64: 1, 32>}, {pipeline_mode = #tpu.pipeline_mode<synchronous>, transform_indices = @transform_15, window_bounds = array<i64: 1, 32>}, {pipeline_mode = #tpu.pipeline_mode<synchronous>, transform_indices = @transform_16, window_bounds = array<i64: 1, 32>}, {pipeline_mode = #tpu.pipeline_mode<synchronous>, transform_indices = @transform_17, window_bounds = array<i64: 1, 32>}, {pipeline_mode = #tpu.pipeline_mode<synchronous>, transform_indices = @transform_18, window_bounds = array<i64: 1, 32>}, {pipeline_mode = #tpu.pipeline_mode<synchronous>, transform_indices = @transform_19, window_bounds = array<i64: 32, 64>}, {pipeline_mode = #tpu.pipeline_mode<synchronous>, transform_indices = @transform_20, window_bounds = array<i64: 1, 64>}, {pipeline_mode = #tpu.pipeline_mode<synchronous>, transform_indices = @transform_21, window_bounds = array<i64: 64, 32>}, {pipeline_mode = #tpu.pipeline_mode<synchronous>, transform_indices = @transform_22, window_bounds = array<i64: 1, 32>}, {transform_indices = @transform_23, window_bounds = array<i64: 1, 8, 32>}]} {
    %c0 = arith.constant 0 : index
    %c0_0 = arith.constant 0 : index
    %c0_1 = arith.constant 0 : index
    %0 = vector.load %arg1[%c0, %c0_0, %c0_1] : memref<1x8x32xf32, #tpu.memory_space<vmem>>, vector<1x8x32xf32>
    %1 = vector.shape_cast %0 : vector<1x8x32xf32> to vector<8x32xf32>
    %c0_2 = arith.constant 0 : index
    %c0_3 = arith.constant 0 : index
    %2 = vector.load %arg12[%c0_2, %c0_3] : memref<1x32xf32, #tpu.memory_space<vmem>>, vector<1x32xf32>
    %c0_4 = arith.constant 0 : index
    %c0_5 = arith.constant 0 : index
    %3 = vector.load %arg13[%c0_4, %c0_5] : memref<1x32xf32, #tpu.memory_space<vmem>>, vector<1x32xf32>
    %cst = arith.constant dense<0.000000e+00> : vector<8xf32>
    %4 = vector.multi_reduction <add>, %1, %cst [1] : vector<8x32xf32> to vector<8xf32>
    %5 = vector.shape_cast %4 : vector<8xf32> to vector<8x1xf32>
    %cst_6 = arith.constant 3.200000e+01 : f32
    %6 = vector.broadcast %cst_6 : f32 to vector<8x1xf32>
    %7 = arith.divf %5, %6 : vector<8x1xf32>
    %8 = vector.broadcast %7 : vector<8x1xf32> to vector<8x32xf32>
    %9 = arith.subf %1, %8 : vector<8x32xf32>
    %10 = arith.mulf %9, %9 : vector<8x32xf32>
    %cst_7 = arith.constant dense<0.000000e+00> : vector<8xf32>
    %11 = vector.multi_reduction <add>, %10, %cst_7 [1] : vector<8x32xf32> to vector<8xf32>
    %12 = vector.shape_cast %11 : vector<8xf32> to vector<8x1xf32>
    %cst_8 = arith.constant 3.200000e+01 : f32
    %13 = vector.broadcast %cst_8 : f32 to vector<8x1xf32>
    %14 = arith.divf %12, %13 : vector<8x1xf32>
    %15 = vector.broadcast %7 : vector<8x1xf32> to vector<8x32xf32>
    %16 = arith.subf %1, %15 : vector<8x32xf32>
    %cst_9 = arith.constant 9.99999997E-7 : f32
    %17 = vector.broadcast %cst_9 : f32 to vector<8x1xf32>
    %18 = arith.addf %14, %17 : vector<8x1xf32>
    %19 = math.rsqrt %18 : vector<8x1xf32>
    %20 = vector.broadcast %19 : vector<8x1xf32> to vector<8x32xf32>
    %21 = arith.mulf %16, %20 : vector<8x32xf32>
    %22 = vector.broadcast %2 : vector<1x32xf32> to vector<8x32xf32>
    %23 = arith.mulf %21, %22 : vector<8x32xf32>
    %24 = vector.broadcast %3 : vector<1x32xf32> to vector<8x32xf32>
    %25 = arith.addf %23, %24 : vector<8x32xf32>
    %c0_10 = arith.constant 0 : index
    %c0_11 = arith.constant 0 : index
    %c0_12 = arith.constant 0 : index
    %26 = vector.load %arg2[%c0_10, %c0_11, %c0_12] : memref<1x8x8xf32, #tpu.memory_space<vmem>>, vector<1x8x8xf32>
    %27 = vector.shape_cast %26 : vector<1x8x8xf32> to vector<8x8xf32>
    %c0_13 = arith.constant 0 : index
    %c0_14 = arith.constant 0 : index
    %28 = vector.load %arg4[%c0_13, %c0_14] : memref<32x96xf32, #tpu.memory_space<vmem>>, vector<32x96xf32>
    %c0_15 = arith.constant 0 : index
    %c0_16 = arith.constant 0 : index
    %29 = vector.load %arg5[%c0_15, %c0_16] : memref<1x96xf32, #tpu.memory_space<vmem>>, vector<1x96xf32>
    %c0_17 = arith.constant 0 : index
    %c0_18 = arith.constant 0 : index
    %30 = vector.load %arg6[%c0_17, %c0_18] : memref<32x32xf32, #tpu.memory_space<vmem>>, vector<32x32xf32>
    %c0_19 = arith.constant 0 : index
    %c0_20 = arith.constant 0 : index
    %31 = vector.load %arg7[%c0_19, %c0_20] : memref<1x32xf32, #tpu.memory_space<vmem>>, vector<1x32xf32>
    %cst_21 = arith.constant dense<0.000000e+00> : vector<8x96xf32>
    %32 = tpu.matmul %25, %28, %cst_21 {dimension_numbers = #tpu.dot_dimension_numbers<[1], [0], [0], [1], [0, 0, 1, 1], [], []>} : vector<8x32xf32>, vector<32x96xf32>, vector<8x96xf32> -> vector<8x96xf32>
    %33 = vector.broadcast %29 : vector<1x96xf32> to vector<8x96xf32>
    %34 = arith.addf %32, %33 : vector<8x96xf32>
    %cst_22 = arith.constant 0.000000e+00 : f32
    %35 = vector.broadcast %cst_22 : f32 to vector<8x32xf32>
    %36 = vector.extract_strided_slice %34 {offsets = [0, 0], sizes = [8, 8], strides = [1, 1]} : vector<8x96xf32> to vector<8x8xf32>
    %37 = vector.extract_strided_slice %34 {offsets = [0, 32], sizes = [8, 8], strides = [1, 1]} : vector<8x96xf32> to vector<8x8xf32>
    %38 = vector.extract_strided_slice %34 {offsets = [0, 64], sizes = [8, 8], strides = [1, 1]} : vector<8x96xf32> to vector<8x8xf32>
    %39 = tpu.transpose %37, [1, 0] : vector<8x8xf32> -> vector<8x8xf32>
    %cst_23 = arith.constant dense<0.000000e+00> : vector<8x8xf32>
    %40 = tpu.matmul %36, %39, %cst_23 {dimension_numbers = #tpu.dot_dimension_numbers<[1], [0], [0], [1], [0, 0, 1, 1], [], []>} : vector<8x8xf32>, vector<8x8xf32>, vector<8x8xf32> -> vector<8x8xf32>
    %cst_24 = arith.constant 0.353553385 : f32
    %41 = vector.broadcast %cst_24 : f32 to vector<8x8xf32>
    %42 = arith.mulf %40, %41 : vector<8x8xf32>
    %43 = arith.addf %42, %27 : vector<8x8xf32>
    %cst_25 = arith.constant dense<0xFF800000> : vector<8xf32>
    %44 = vector.multi_reduction <maximumf>, %43, %cst_25 [1] : vector<8x8xf32> to vector<8xf32>
    %45 = vector.shape_cast %44 : vector<8xf32> to vector<8x1xf32>
    %46 = vector.broadcast %45 : vector<8x1xf32> to vector<8x8xf32>
    %47 = arith.subf %43, %46 : vector<8x8xf32>
    %48 = math.exp %47 : vector<8x8xf32>
    %cst_26 = arith.constant dense<0.000000e+00> : vector<8xf32>
    %49 = vector.multi_reduction <add>, %48, %cst_26 [1] : vector<8x8xf32> to vector<8xf32>
    %50 = vector.shape_cast %49 : vector<8xf32> to vector<8x1xf32>
    %51 = vector.broadcast %50 : vector<8x1xf32> to vector<8x8xf32>
    %52 = arith.divf %48, %51 : vector<8x8xf32>
    %cst_27 = arith.constant dense<0.000000e+00> : vector<8x8xf32>
    %53 = tpu.matmul %52, %38, %cst_27 {dimension_numbers = #tpu.dot_dimension_numbers<[1], [0], [0], [1], [0, 0, 1, 1], [], []>} : vector<8x8xf32>, vector<8x8xf32>, vector<8x8xf32> -> vector<8x8xf32>
    %54 = vector.extract_strided_slice %30 {offsets = [0, 0], sizes = [8, 32], strides = [1, 1]} : vector<32x32xf32> to vector<8x32xf32>
    %cst_28 = arith.constant dense<0.000000e+00> : vector<8x32xf32>
    %55 = tpu.matmul %53, %54, %cst_28 {dimension_numbers = #tpu.dot_dimension_numbers<[1], [0], [0], [1], [0, 0, 1, 1], [], []>} : vector<8x8xf32>, vector<8x32xf32>, vector<8x32xf32> -> vector<8x32xf32>
    %56 = arith.addf %35, %55 : vector<8x32xf32>
    %57 = vector.extract_strided_slice %34 {offsets = [0, 8], sizes = [8, 8], strides = [1, 1]} : vector<8x96xf32> to vector<8x8xf32>
    %58 = vector.extract_strided_slice %34 {offsets = [0, 40], sizes = [8, 8], strides = [1, 1]} : vector<8x96xf32> to vector<8x8xf32>
    %59 = vector.extract_strided_slice %34 {offsets = [0, 72], sizes = [8, 8], strides = [1, 1]} : vector<8x96xf32> to vector<8x8xf32>
    %60 = tpu.transpose %58, [1, 0] : vector<8x8xf32> -> vector<8x8xf32>
    %cst_29 = arith.constant dense<0.000000e+00> : vector<8x8xf32>
    %61 = tpu.matmul %57, %60, %cst_29 {dimension_numbers = #tpu.dot_dimension_numbers<[1], [0], [0], [1], [0, 0, 1, 1], [], []>} : vector<8x8xf32>, vector<8x8xf32>, vector<8x8xf32> -> vector<8x8xf32>
    %cst_30 = arith.constant 0.353553385 : f32
    %62 = vector.broadcast %cst_30 : f32 to vector<8x8xf32>
    %63 = arith.mulf %61, %62 : vector<8x8xf32>
    %64 = arith.addf %63, %27 : vector<8x8xf32>
    %cst_31 = arith.constant dense<0xFF800000> : vector<8xf32>
    %65 = vector.multi_reduction <maximumf>, %64, %cst_31 [1] : vector<8x8xf32> to vector<8xf32>
    %66 = vector.shape_cast %65 : vector<8xf32> to vector<8x1xf32>
    %67 = vector.broadcast %66 : vector<8x1xf32> to vector<8x8xf32>
    %68 = arith.subf %64, %67 : vector<8x8xf32>
    %69 = math.exp %68 : vector<8x8xf32>
    %cst_32 = arith.constant dense<0.000000e+00> : vector<8xf32>
    %70 = vector.multi_reduction <add>, %69, %cst_32 [1] : vector<8x8xf32> to vector<8xf32>
    %71 = vector.shape_cast %70 : vector<8xf32> to vector<8x1xf32>
    %72 = vector.broadcast %71 : vector<8x1xf32> to vector<8x8xf32>
    %73 = arith.divf %69, %72 : vector<8x8xf32>
    %cst_33 = arith.constant dense<0.000000e+00> : vector<8x8xf32>
    %74 = tpu.matmul %73, %59, %cst_33 {dimension_numbers = #tpu.dot_dimension_numbers<[1], [0], [0], [1], [0, 0, 1, 1], [], []>} : vector<8x8xf32>, vector<8x8xf32>, vector<8x8xf32> -> vector<8x8xf32>
    %75 = vector.extract_strided_slice %30 {offsets = [8, 0], sizes = [8, 32], strides = [1, 1]} : vector<32x32xf32> to vector<8x32xf32>
    %cst_34 = arith.constant dense<0.000000e+00> : vector<8x32xf32>
    %76 = tpu.matmul %74, %75, %cst_34 {dimension_numbers = #tpu.dot_dimension_numbers<[1], [0], [0], [1], [0, 0, 1, 1], [], []>} : vector<8x8xf32>, vector<8x32xf32>, vector<8x32xf32> -> vector<8x32xf32>
    %77 = arith.addf %56, %76 : vector<8x32xf32>
    %78 = vector.extract_strided_slice %34 {offsets = [0, 16], sizes = [8, 8], strides = [1, 1]} : vector<8x96xf32> to vector<8x8xf32>
    %79 = vector.extract_strided_slice %34 {offsets = [0, 48], sizes = [8, 8], strides = [1, 1]} : vector<8x96xf32> to vector<8x8xf32>
    %80 = vector.extract_strided_slice %34 {offsets = [0, 80], sizes = [8, 8], strides = [1, 1]} : vector<8x96xf32> to vector<8x8xf32>
    %81 = tpu.transpose %79, [1, 0] : vector<8x8xf32> -> vector<8x8xf32>
    %cst_35 = arith.constant dense<0.000000e+00> : vector<8x8xf32>
    %82 = tpu.matmul %78, %81, %cst_35 {dimension_numbers = #tpu.dot_dimension_numbers<[1], [0], [0], [1], [0, 0, 1, 1], [], []>} : vector<8x8xf32>, vector<8x8xf32>, vector<8x8xf32> -> vector<8x8xf32>
    %cst_36 = arith.constant 0.353553385 : f32
    %83 = vector.broadcast %cst_36 : f32 to vector<8x8xf32>
    %84 = arith.mulf %82, %83 : vector<8x8xf32>
    %85 = arith.addf %84, %27 : vector<8x8xf32>
    %cst_37 = arith.constant dense<0xFF800000> : vector<8xf32>
    %86 = vector.multi_reduction <maximumf>, %85, %cst_37 [1] : vector<8x8xf32> to vector<8xf32>
    %87 = vector.shape_cast %86 : vector<8xf32> to vector<8x1xf32>
    %88 = vector.broadcast %87 : vector<8x1xf32> to vector<8x8xf32>
    %89 = arith.subf %85, %88 : vector<8x8xf32>
    %90 = math.exp %89 : vector<8x8xf32>
    %cst_38 = arith.constant dense<0.000000e+00> : vector<8xf32>
    %91 = vector.multi_reduction <add>, %90, %cst_38 [1] : vector<8x8xf32> to vector<8xf32>
    %92 = vector.shape_cast %91 : vector<8xf32> to vector<8x1xf32>
    %93 = vector.broadcast %92 : vector<8x1xf32> to vector<8x8xf32>
    %94 = arith.divf %90, %93 : vector<8x8xf32>
    %cst_39 = arith.constant dense<0.000000e+00> : vector<8x8xf32>
    %95 = tpu.matmul %94, %80, %cst_39 {dimension_numbers = #tpu.dot_dimension_numbers<[1], [0], [0], [1], [0, 0, 1, 1], [], []>} : vector<8x8xf32>, vector<8x8xf32>, vector<8x8xf32> -> vector<8x8xf32>
    %96 = vector.extract_strided_slice %30 {offsets = [16, 0], sizes = [8, 32], strides = [1, 1]} : vector<32x32xf32> to vector<8x32xf32>
    %cst_40 = arith.constant dense<0.000000e+00> : vector<8x32xf32>
    %97 = tpu.matmul %95, %96, %cst_40 {dimension_numbers = #tpu.dot_dimension_numbers<[1], [0], [0], [1], [0, 0, 1, 1], [], []>} : vector<8x8xf32>, vector<8x32xf32>, vector<8x32xf32> -> vector<8x32xf32>
    %98 = arith.addf %77, %97 : vector<8x32xf32>
    %99 = vector.extract_strided_slice %34 {offsets = [0, 24], sizes = [8, 8], strides = [1, 1]} : vector<8x96xf32> to vector<8x8xf32>
    %100 = vector.extract_strided_slice %34 {offsets = [0, 56], sizes = [8, 8], strides = [1, 1]} : vector<8x96xf32> to vector<8x8xf32>
    %101 = vector.extract_strided_slice %34 {offsets = [0, 88], sizes = [8, 8], strides = [1, 1]} : vector<8x96xf32> to vector<8x8xf32>
    %102 = tpu.transpose %100, [1, 0] : vector<8x8xf32> -> vector<8x8xf32>
    %cst_41 = arith.constant dense<0.000000e+00> : vector<8x8xf32>
    %103 = tpu.matmul %99, %102, %cst_41 {dimension_numbers = #tpu.dot_dimension_numbers<[1], [0], [0], [1], [0, 0, 1, 1], [], []>} : vector<8x8xf32>, vector<8x8xf32>, vector<8x8xf32> -> vector<8x8xf32>
    %cst_42 = arith.constant 0.353553385 : f32
    %104 = vector.broadcast %cst_42 : f32 to vector<8x8xf32>
    %105 = arith.mulf %103, %104 : vector<8x8xf32>
    %106 = arith.addf %105, %27 : vector<8x8xf32>
    %cst_43 = arith.constant dense<0xFF800000> : vector<8xf32>
    %107 = vector.multi_reduction <maximumf>, %106, %cst_43 [1] : vector<8x8xf32> to vector<8xf32>
    %108 = vector.shape_cast %107 : vector<8xf32> to vector<8x1xf32>
    %109 = vector.broadcast %108 : vector<8x1xf32> to vector<8x8xf32>
    %110 = arith.subf %106, %109 : vector<8x8xf32>
    %111 = math.exp %110 : vector<8x8xf32>
    %cst_44 = arith.constant dense<0.000000e+00> : vector<8xf32>
    %112 = vector.multi_reduction <add>, %111, %cst_44 [1] : vector<8x8xf32> to vector<8xf32>
    %113 = vector.shape_cast %112 : vector<8xf32> to vector<8x1xf32>
    %114 = vector.broadcast %113 : vector<8x1xf32> to vector<8x8xf32>
    %115 = arith.divf %111, %114 : vector<8x8xf32>
    %cst_45 = arith.constant dense<0.000000e+00> : vector<8x8xf32>
    %116 = tpu.matmul %115, %101, %cst_45 {dimension_numbers = #tpu.dot_dimension_numbers<[1], [0], [0], [1], [0, 0, 1, 1], [], []>} : vector<8x8xf32>, vector<8x8xf32>, vector<8x8xf32> -> vector<8x8xf32>
    %117 = vector.extract_strided_slice %30 {offsets = [24, 0], sizes = [8, 32], strides = [1, 1]} : vector<32x32xf32> to vector<8x32xf32>
    %cst_46 = arith.constant dense<0.000000e+00> : vector<8x32xf32>
    %118 = tpu.matmul %116, %117, %cst_46 {dimension_numbers = #tpu.dot_dimension_numbers<[1], [0], [0], [1], [0, 0, 1, 1], [], []>} : vector<8x8xf32>, vector<8x32xf32>, vector<8x32xf32> -> vector<8x32xf32>
    %119 = arith.addf %98, %118 : vector<8x32xf32>
    %120 = vector.broadcast %31 : vector<1x32xf32> to vector<8x32xf32>
    %121 = arith.addf %119, %120 : vector<8x32xf32>
    %122 = arith.addf %1, %121 : vector<8x32xf32>
    %c0_47 = arith.constant 0 : index
    %c0_48 = arith.constant 0 : index
    %123 = vector.load %arg14[%c0_47, %c0_48] : memref<1x32xf32, #tpu.memory_space<vmem>>, vector<1x32xf32>
    %c0_49 = arith.constant 0 : index
    %c0_50 = arith.constant 0 : index
    %124 = vector.load %arg15[%c0_49, %c0_50] : memref<1x32xf32, #tpu.memory_space<vmem>>, vector<1x32xf32>
    %cst_51 = arith.constant dense<0.000000e+00> : vector<8xf32>
    %125 = vector.multi_reduction <add>, %122, %cst_51 [1] : vector<8x32xf32> to vector<8xf32>
    %126 = vector.shape_cast %125 : vector<8xf32> to vector<8x1xf32>
    %cst_52 = arith.constant 3.200000e+01 : f32
    %127 = vector.broadcast %cst_52 : f32 to vector<8x1xf32>
    %128 = arith.divf %126, %127 : vector<8x1xf32>
    %129 = vector.broadcast %128 : vector<8x1xf32> to vector<8x32xf32>
    %130 = arith.subf %122, %129 : vector<8x32xf32>
    %131 = arith.mulf %130, %130 : vector<8x32xf32>
    %cst_53 = arith.constant dense<0.000000e+00> : vector<8xf32>
    %132 = vector.multi_reduction <add>, %131, %cst_53 [1] : vector<8x32xf32> to vector<8xf32>
    %133 = vector.shape_cast %132 : vector<8xf32> to vector<8x1xf32>
    %cst_54 = arith.constant 3.200000e+01 : f32
    %134 = vector.broadcast %cst_54 : f32 to vector<8x1xf32>
    %135 = arith.divf %133, %134 : vector<8x1xf32>
    %136 = vector.broadcast %128 : vector<8x1xf32> to vector<8x32xf32>
    %137 = arith.subf %122, %136 : vector<8x32xf32>
    %cst_55 = arith.constant 9.99999997E-7 : f32
    %138 = vector.broadcast %cst_55 : f32 to vector<8x1xf32>
    %139 = arith.addf %135, %138 : vector<8x1xf32>
    %140 = math.rsqrt %139 : vector<8x1xf32>
    %141 = vector.broadcast %140 : vector<8x1xf32> to vector<8x32xf32>
    %142 = arith.mulf %137, %141 : vector<8x32xf32>
    %143 = vector.broadcast %123 : vector<1x32xf32> to vector<8x32xf32>
    %144 = arith.mulf %142, %143 : vector<8x32xf32>
    %145 = vector.broadcast %124 : vector<1x32xf32> to vector<8x32xf32>
    %146 = arith.addf %144, %145 : vector<8x32xf32>
    %c0_56 = arith.constant 0 : index
    %c0_57 = arith.constant 0 : index
    %c0_58 = arith.constant 0 : index
    %147 = vector.load %arg3[%c0_56, %c0_57, %c0_58] : memref<1x8x8xf32, #tpu.memory_space<vmem>>, vector<1x8x8xf32>
    %148 = vector.shape_cast %147 : vector<1x8x8xf32> to vector<8x8xf32>
    %c0_59 = arith.constant 0 : index
    %c0_60 = arith.constant 0 : index
    %149 = vector.load %arg8[%c0_59, %c0_60] : memref<32x96xf32, #tpu.memory_space<vmem>>, vector<32x96xf32>
    %c0_61 = arith.constant 0 : index
    %c0_62 = arith.constant 0 : index
    %150 = vector.load %arg9[%c0_61, %c0_62] : memref<1x96xf32, #tpu.memory_space<vmem>>, vector<1x96xf32>
    %c0_63 = arith.constant 0 : index
    %c0_64 = arith.constant 0 : index
    %151 = vector.load %arg10[%c0_63, %c0_64] : memref<32x32xf32, #tpu.memory_space<vmem>>, vector<32x32xf32>
    %c0_65 = arith.constant 0 : index
    %c0_66 = arith.constant 0 : index
    %152 = vector.load %arg11[%c0_65, %c0_66] : memref<1x32xf32, #tpu.memory_space<vmem>>, vector<1x32xf32>
    %cst_67 = arith.constant dense<0.000000e+00> : vector<8x96xf32>
    %153 = tpu.matmul %146, %149, %cst_67 {dimension_numbers = #tpu.dot_dimension_numbers<[1], [0], [0], [1], [0, 0, 1, 1], [], []>} : vector<8x32xf32>, vector<32x96xf32>, vector<8x96xf32> -> vector<8x96xf32>
    %154 = vector.broadcast %150 : vector<1x96xf32> to vector<8x96xf32>
    %155 = arith.addf %153, %154 : vector<8x96xf32>
    %cst_68 = arith.constant 0.000000e+00 : f32
    %156 = vector.broadcast %cst_68 : f32 to vector<8x32xf32>
    %157 = vector.extract_strided_slice %155 {offsets = [0, 0], sizes = [8, 8], strides = [1, 1]} : vector<8x96xf32> to vector<8x8xf32>
    %158 = vector.extract_strided_slice %155 {offsets = [0, 32], sizes = [8, 8], strides = [1, 1]} : vector<8x96xf32> to vector<8x8xf32>
    %159 = vector.extract_strided_slice %155 {offsets = [0, 64], sizes = [8, 8], strides = [1, 1]} : vector<8x96xf32> to vector<8x8xf32>
    %160 = tpu.transpose %158, [1, 0] : vector<8x8xf32> -> vector<8x8xf32>
    %cst_69 = arith.constant dense<0.000000e+00> : vector<8x8xf32>
    %161 = tpu.matmul %157, %160, %cst_69 {dimension_numbers = #tpu.dot_dimension_numbers<[1], [0], [0], [1], [0, 0, 1, 1], [], []>} : vector<8x8xf32>, vector<8x8xf32>, vector<8x8xf32> -> vector<8x8xf32>
    %cst_70 = arith.constant 0.353553385 : f32
    %162 = vector.broadcast %cst_70 : f32 to vector<8x8xf32>
    %163 = arith.mulf %161, %162 : vector<8x8xf32>
    %164 = arith.addf %163, %148 : vector<8x8xf32>
    %cst_71 = arith.constant dense<0xFF800000> : vector<8xf32>
    %165 = vector.multi_reduction <maximumf>, %164, %cst_71 [1] : vector<8x8xf32> to vector<8xf32>
    %166 = vector.shape_cast %165 : vector<8xf32> to vector<8x1xf32>
    %167 = vector.broadcast %166 : vector<8x1xf32> to vector<8x8xf32>
    %168 = arith.subf %164, %167 : vector<8x8xf32>
    %169 = math.exp %168 : vector<8x8xf32>
    %cst_72 = arith.constant dense<0.000000e+00> : vector<8xf32>
    %170 = vector.multi_reduction <add>, %169, %cst_72 [1] : vector<8x8xf32> to vector<8xf32>
    %171 = vector.shape_cast %170 : vector<8xf32> to vector<8x1xf32>
    %172 = vector.broadcast %171 : vector<8x1xf32> to vector<8x8xf32>
    %173 = arith.divf %169, %172 : vector<8x8xf32>
    %cst_73 = arith.constant dense<0.000000e+00> : vector<8x8xf32>
    %174 = tpu.matmul %173, %159, %cst_73 {dimension_numbers = #tpu.dot_dimension_numbers<[1], [0], [0], [1], [0, 0, 1, 1], [], []>} : vector<8x8xf32>, vector<8x8xf32>, vector<8x8xf32> -> vector<8x8xf32>
    %175 = vector.extract_strided_slice %151 {offsets = [0, 0], sizes = [8, 32], strides = [1, 1]} : vector<32x32xf32> to vector<8x32xf32>
    %cst_74 = arith.constant dense<0.000000e+00> : vector<8x32xf32>
    %176 = tpu.matmul %174, %175, %cst_74 {dimension_numbers = #tpu.dot_dimension_numbers<[1], [0], [0], [1], [0, 0, 1, 1], [], []>} : vector<8x8xf32>, vector<8x32xf32>, vector<8x32xf32> -> vector<8x32xf32>
    %177 = arith.addf %156, %176 : vector<8x32xf32>
    %178 = vector.extract_strided_slice %155 {offsets = [0, 8], sizes = [8, 8], strides = [1, 1]} : vector<8x96xf32> to vector<8x8xf32>
    %179 = vector.extract_strided_slice %155 {offsets = [0, 40], sizes = [8, 8], strides = [1, 1]} : vector<8x96xf32> to vector<8x8xf32>
    %180 = vector.extract_strided_slice %155 {offsets = [0, 72], sizes = [8, 8], strides = [1, 1]} : vector<8x96xf32> to vector<8x8xf32>
    %181 = tpu.transpose %179, [1, 0] : vector<8x8xf32> -> vector<8x8xf32>
    %cst_75 = arith.constant dense<0.000000e+00> : vector<8x8xf32>
    %182 = tpu.matmul %178, %181, %cst_75 {dimension_numbers = #tpu.dot_dimension_numbers<[1], [0], [0], [1], [0, 0, 1, 1], [], []>} : vector<8x8xf32>, vector<8x8xf32>, vector<8x8xf32> -> vector<8x8xf32>
    %cst_76 = arith.constant 0.353553385 : f32
    %183 = vector.broadcast %cst_76 : f32 to vector<8x8xf32>
    %184 = arith.mulf %182, %183 : vector<8x8xf32>
    %185 = arith.addf %184, %148 : vector<8x8xf32>
    %cst_77 = arith.constant dense<0xFF800000> : vector<8xf32>
    %186 = vector.multi_reduction <maximumf>, %185, %cst_77 [1] : vector<8x8xf32> to vector<8xf32>
    %187 = vector.shape_cast %186 : vector<8xf32> to vector<8x1xf32>
    %188 = vector.broadcast %187 : vector<8x1xf32> to vector<8x8xf32>
    %189 = arith.subf %185, %188 : vector<8x8xf32>
    %190 = math.exp %189 : vector<8x8xf32>
    %cst_78 = arith.constant dense<0.000000e+00> : vector<8xf32>
    %191 = vector.multi_reduction <add>, %190, %cst_78 [1] : vector<8x8xf32> to vector<8xf32>
    %192 = vector.shape_cast %191 : vector<8xf32> to vector<8x1xf32>
    %193 = vector.broadcast %192 : vector<8x1xf32> to vector<8x8xf32>
    %194 = arith.divf %190, %193 : vector<8x8xf32>
    %cst_79 = arith.constant dense<0.000000e+00> : vector<8x8xf32>
    %195 = tpu.matmul %194, %180, %cst_79 {dimension_numbers = #tpu.dot_dimension_numbers<[1], [0], [0], [1], [0, 0, 1, 1], [], []>} : vector<8x8xf32>, vector<8x8xf32>, vector<8x8xf32> -> vector<8x8xf32>
    %196 = vector.extract_strided_slice %151 {offsets = [8, 0], sizes = [8, 32], strides = [1, 1]} : vector<32x32xf32> to vector<8x32xf32>
    %cst_80 = arith.constant dense<0.000000e+00> : vector<8x32xf32>
    %197 = tpu.matmul %195, %196, %cst_80 {dimension_numbers = #tpu.dot_dimension_numbers<[1], [0], [0], [1], [0, 0, 1, 1], [], []>} : vector<8x8xf32>, vector<8x32xf32>, vector<8x32xf32> -> vector<8x32xf32>
    %198 = arith.addf %177, %197 : vector<8x32xf32>
    %199 = vector.extract_strided_slice %155 {offsets = [0, 16], sizes = [8, 8], strides = [1, 1]} : vector<8x96xf32> to vector<8x8xf32>
    %200 = vector.extract_strided_slice %155 {offsets = [0, 48], sizes = [8, 8], strides = [1, 1]} : vector<8x96xf32> to vector<8x8xf32>
    %201 = vector.extract_strided_slice %155 {offsets = [0, 80], sizes = [8, 8], strides = [1, 1]} : vector<8x96xf32> to vector<8x8xf32>
    %202 = tpu.transpose %200, [1, 0] : vector<8x8xf32> -> vector<8x8xf32>
    %cst_81 = arith.constant dense<0.000000e+00> : vector<8x8xf32>
    %203 = tpu.matmul %199, %202, %cst_81 {dimension_numbers = #tpu.dot_dimension_numbers<[1], [0], [0], [1], [0, 0, 1, 1], [], []>} : vector<8x8xf32>, vector<8x8xf32>, vector<8x8xf32> -> vector<8x8xf32>
    %cst_82 = arith.constant 0.353553385 : f32
    %204 = vector.broadcast %cst_82 : f32 to vector<8x8xf32>
    %205 = arith.mulf %203, %204 : vector<8x8xf32>
    %206 = arith.addf %205, %148 : vector<8x8xf32>
    %cst_83 = arith.constant dense<0xFF800000> : vector<8xf32>
    %207 = vector.multi_reduction <maximumf>, %206, %cst_83 [1] : vector<8x8xf32> to vector<8xf32>
    %208 = vector.shape_cast %207 : vector<8xf32> to vector<8x1xf32>
    %209 = vector.broadcast %208 : vector<8x1xf32> to vector<8x8xf32>
    %210 = arith.subf %206, %209 : vector<8x8xf32>
    %211 = math.exp %210 : vector<8x8xf32>
    %cst_84 = arith.constant dense<0.000000e+00> : vector<8xf32>
    %212 = vector.multi_reduction <add>, %211, %cst_84 [1] : vector<8x8xf32> to vector<8xf32>
    %213 = vector.shape_cast %212 : vector<8xf32> to vector<8x1xf32>
    %214 = vector.broadcast %213 : vector<8x1xf32> to vector<8x8xf32>
    %215 = arith.divf %211, %214 : vector<8x8xf32>
    %cst_85 = arith.constant dense<0.000000e+00> : vector<8x8xf32>
    %216 = tpu.matmul %215, %201, %cst_85 {dimension_numbers = #tpu.dot_dimension_numbers<[1], [0], [0], [1], [0, 0, 1, 1], [], []>} : vector<8x8xf32>, vector<8x8xf32>, vector<8x8xf32> -> vector<8x8xf32>
    %217 = vector.extract_strided_slice %151 {offsets = [16, 0], sizes = [8, 32], strides = [1, 1]} : vector<32x32xf32> to vector<8x32xf32>
    %cst_86 = arith.constant dense<0.000000e+00> : vector<8x32xf32>
    %218 = tpu.matmul %216, %217, %cst_86 {dimension_numbers = #tpu.dot_dimension_numbers<[1], [0], [0], [1], [0, 0, 1, 1], [], []>} : vector<8x8xf32>, vector<8x32xf32>, vector<8x32xf32> -> vector<8x32xf32>
    %219 = arith.addf %198, %218 : vector<8x32xf32>
    %220 = vector.extract_strided_slice %155 {offsets = [0, 24], sizes = [8, 8], strides = [1, 1]} : vector<8x96xf32> to vector<8x8xf32>
    %221 = vector.extract_strided_slice %155 {offsets = [0, 56], sizes = [8, 8], strides = [1, 1]} : vector<8x96xf32> to vector<8x8xf32>
    %222 = vector.extract_strided_slice %155 {offsets = [0, 88], sizes = [8, 8], strides = [1, 1]} : vector<8x96xf32> to vector<8x8xf32>
    %223 = tpu.transpose %221, [1, 0] : vector<8x8xf32> -> vector<8x8xf32>
    %cst_87 = arith.constant dense<0.000000e+00> : vector<8x8xf32>
    %224 = tpu.matmul %220, %223, %cst_87 {dimension_numbers = #tpu.dot_dimension_numbers<[1], [0], [0], [1], [0, 0, 1, 1], [], []>} : vector<8x8xf32>, vector<8x8xf32>, vector<8x8xf32> -> vector<8x8xf32>
    %cst_88 = arith.constant 0.353553385 : f32
    %225 = vector.broadcast %cst_88 : f32 to vector<8x8xf32>
    %226 = arith.mulf %224, %225 : vector<8x8xf32>
    %227 = arith.addf %226, %148 : vector<8x8xf32>
    %cst_89 = arith.constant dense<0xFF800000> : vector<8xf32>
    %228 = vector.multi_reduction <maximumf>, %227, %cst_89 [1] : vector<8x8xf32> to vector<8xf32>
    %229 = vector.shape_cast %228 : vector<8xf32> to vector<8x1xf32>
    %230 = vector.broadcast %229 : vector<8x1xf32> to vector<8x8xf32>
    %231 = arith.subf %227, %230 : vector<8x8xf32>
    %232 = math.exp %231 : vector<8x8xf32>
    %cst_90 = arith.constant dense<0.000000e+00> : vector<8xf32>
    %233 = vector.multi_reduction <add>, %232, %cst_90 [1] : vector<8x8xf32> to vector<8xf32>
    %234 = vector.shape_cast %233 : vector<8xf32> to vector<8x1xf32>
    %235 = vector.broadcast %234 : vector<8x1xf32> to vector<8x8xf32>
    %236 = arith.divf %232, %235 : vector<8x8xf32>
    %cst_91 = arith.constant dense<0.000000e+00> : vector<8x8xf32>
    %237 = tpu.matmul %236, %222, %cst_91 {dimension_numbers = #tpu.dot_dimension_numbers<[1], [0], [0], [1], [0, 0, 1, 1], [], []>} : vector<8x8xf32>, vector<8x8xf32>, vector<8x8xf32> -> vector<8x8xf32>
    %238 = vector.extract_strided_slice %151 {offsets = [24, 0], sizes = [8, 32], strides = [1, 1]} : vector<32x32xf32> to vector<8x32xf32>
    %cst_92 = arith.constant dense<0.000000e+00> : vector<8x32xf32>
    %239 = tpu.matmul %237, %238, %cst_92 {dimension_numbers = #tpu.dot_dimension_numbers<[1], [0], [0], [1], [0, 0, 1, 1], [], []>} : vector<8x8xf32>, vector<8x32xf32>, vector<8x32xf32> -> vector<8x32xf32>
    %240 = arith.addf %219, %239 : vector<8x32xf32>
    %241 = vector.broadcast %152 : vector<1x32xf32> to vector<8x32xf32>
    %242 = arith.addf %240, %241 : vector<8x32xf32>
    %243 = arith.addf %122, %242 : vector<8x32xf32>
    %c0_93 = arith.constant 0 : index
    %c0_94 = arith.constant 0 : index
    %244 = vector.load %arg16[%c0_93, %c0_94] : memref<1x32xf32, #tpu.memory_space<vmem>>, vector<1x32xf32>
    %c0_95 = arith.constant 0 : index
    %c0_96 = arith.constant 0 : index
    %245 = vector.load %arg17[%c0_95, %c0_96] : memref<1x32xf32, #tpu.memory_space<vmem>>, vector<1x32xf32>
    %cst_97 = arith.constant dense<0.000000e+00> : vector<8xf32>
    %246 = vector.multi_reduction <add>, %243, %cst_97 [1] : vector<8x32xf32> to vector<8xf32>
    %247 = vector.shape_cast %246 : vector<8xf32> to vector<8x1xf32>
    %cst_98 = arith.constant 3.200000e+01 : f32
    %248 = vector.broadcast %cst_98 : f32 to vector<8x1xf32>
    %249 = arith.divf %247, %248 : vector<8x1xf32>
    %250 = vector.broadcast %249 : vector<8x1xf32> to vector<8x32xf32>
    %251 = arith.subf %243, %250 : vector<8x32xf32>
    %252 = arith.mulf %251, %251 : vector<8x32xf32>
    %cst_99 = arith.constant dense<0.000000e+00> : vector<8xf32>
    %253 = vector.multi_reduction <add>, %252, %cst_99 [1] : vector<8x32xf32> to vector<8xf32>
    %254 = vector.shape_cast %253 : vector<8xf32> to vector<8x1xf32>
    %cst_100 = arith.constant 3.200000e+01 : f32
    %255 = vector.broadcast %cst_100 : f32 to vector<8x1xf32>
    %256 = arith.divf %254, %255 : vector<8x1xf32>
    %257 = vector.broadcast %249 : vector<8x1xf32> to vector<8x32xf32>
    %258 = arith.subf %243, %257 : vector<8x32xf32>
    %cst_101 = arith.constant 9.99999997E-7 : f32
    %259 = vector.broadcast %cst_101 : f32 to vector<8x1xf32>
    %260 = arith.addf %256, %259 : vector<8x1xf32>
    %261 = math.rsqrt %260 : vector<8x1xf32>
    %262 = vector.broadcast %261 : vector<8x1xf32> to vector<8x32xf32>
    %263 = arith.mulf %258, %262 : vector<8x32xf32>
    %264 = vector.broadcast %244 : vector<1x32xf32> to vector<8x32xf32>
    %265 = arith.mulf %263, %264 : vector<8x32xf32>
    %266 = vector.broadcast %245 : vector<1x32xf32> to vector<8x32xf32>
    %267 = arith.addf %265, %266 : vector<8x32xf32>
    %c0_102 = arith.constant 0 : index
    %c0_103 = arith.constant 0 : index
    %268 = vector.load %arg20[%c0_102, %c0_103] : memref<32x64xf32, #tpu.memory_space<vmem>>, vector<32x64xf32>
    %c0_104 = arith.constant 0 : index
    %c0_105 = arith.constant 0 : index
    %269 = vector.load %arg21[%c0_104, %c0_105] : memref<1x64xf32, #tpu.memory_space<vmem>>, vector<1x64xf32>
    %c0_106 = arith.constant 0 : index
    %c0_107 = arith.constant 0 : index
    %270 = vector.load %arg22[%c0_106, %c0_107] : memref<64x32xf32, #tpu.memory_space<vmem>>, vector<64x32xf32>
    %c0_108 = arith.constant 0 : index
    %c0_109 = arith.constant 0 : index
    %271 = vector.load %arg23[%c0_108, %c0_109] : memref<1x32xf32, #tpu.memory_space<vmem>>, vector<1x32xf32>
    %cst_110 = arith.constant dense<0.000000e+00> : vector<8x64xf32>
    %272 = tpu.matmul %267, %268, %cst_110 {dimension_numbers = #tpu.dot_dimension_numbers<[1], [0], [0], [1], [0, 0, 1, 1], [], []>} : vector<8x32xf32>, vector<32x64xf32>, vector<8x64xf32> -> vector<8x64xf32>
    %273 = vector.broadcast %269 : vector<1x64xf32> to vector<8x64xf32>
    %274 = arith.addf %272, %273 : vector<8x64xf32>
    %cst_111 = arith.constant 0.000000e+00 : f32
    %275 = vector.broadcast %cst_111 : f32 to vector<8x64xf32>
    %276 = arith.maximumf %274, %275 : vector<8x64xf32>
    %cst_112 = arith.constant dense<0.000000e+00> : vector<8x32xf32>
    %277 = tpu.matmul %276, %270, %cst_112 {dimension_numbers = #tpu.dot_dimension_numbers<[1], [0], [0], [1], [0, 0, 1, 1], [], []>} : vector<8x64xf32>, vector<64x32xf32>, vector<8x32xf32> -> vector<8x32xf32>
    %278 = vector.broadcast %271 : vector<1x32xf32> to vector<8x32xf32>
    %279 = arith.addf %277, %278 : vector<8x32xf32>
    %280 = arith.addf %243, %279 : vector<8x32xf32>
    %c0_113 = arith.constant 0 : index
    %c0_114 = arith.constant 0 : index
    %281 = vector.load %arg18[%c0_113, %c0_114] : memref<1x32xf32, #tpu.memory_space<vmem>>, vector<1x32xf32>
    %c0_115 = arith.constant 0 : index
    %c0_116 = arith.constant 0 : index
    %282 = vector.load %arg19[%c0_115, %c0_116] : memref<1x32xf32, #tpu.memory_space<vmem>>, vector<1x32xf32>
    %cst_117 = arith.constant dense<0.000000e+00> : vector<8xf32>
    %283 = vector.multi_reduction <add>, %280, %cst_117 [1] : vector<8x32xf32> to vector<8xf32>
    %284 = vector.shape_cast %283 : vector<8xf32> to vector<8x1xf32>
    %cst_118 = arith.constant 3.200000e+01 : f32
    %285 = vector.broadcast %cst_118 : f32 to vector<8x1xf32>
    %286 = arith.divf %284, %285 : vector<8x1xf32>
    %287 = vector.broadcast %286 : vector<8x1xf32> to vector<8x32xf32>
    %288 = arith.subf %280, %287 : vector<8x32xf32>
    %289 = arith.mulf %288, %288 : vector<8x32xf32>
    %cst_119 = arith.constant dense<0.000000e+00> : vector<8xf32>
    %290 = vector.multi_reduction <add>, %289, %cst_119 [1] : vector<8x32xf32> to vector<8xf32>
    %291 = vector.shape_cast %290 : vector<8xf32> to vector<8x1xf32>
    %cst_120 = arith.constant 3.200000e+01 : f32
    %292 = vector.broadcast %cst_120 : f32 to vector<8x1xf32>
    %293 = arith.divf %291, %292 : vector<8x1xf32>
    %294 = vector.broadcast %286 : vector<8x1xf32> to vector<8x32xf32>
    %295 = arith.subf %280, %294 : vector<8x32xf32>
    %cst_121 = arith.constant 9.99999997E-7 : f32
    %296 = vector.broadcast %cst_121 : f32 to vector<8x1xf32>
    %297 = arith.addf %293, %296 : vector<8x1xf32>
    %298 = math.rsqrt %297 : vector<8x1xf32>
    %299 = vector.broadcast %298 : vector<8x1xf32> to vector<8x32xf32>
    %300 = arith.mulf %295, %299 : vector<8x32xf32>
    %301 = vector.broadcast %281 : vector<1x32xf32> to vector<8x32xf32>
    %302 = arith.mulf %300, %301 : vector<8x32xf32>
    %303 = vector.broadcast %282 : vector<1x32xf32> to vector<8x32xf32>
    %304 = arith.addf %302, %303 : vector<8x32xf32>
    %c0_122 = arith.constant 0 : index
    %c0_123 = arith.constant 0 : index
    %c0_124 = arith.constant 0 : index
    %305 = vector.load %arg24[%c0_122, %c0_123, %c0_124] : memref<1x8x32xf32, #tpu.memory_space<vmem>>, vector<1x8x32xf32>
    %306 = vector.shape_cast %305 : vector<1x8x32xf32> to vector<8x32xf32>
    %307 = vector.shape_cast %304 : vector<8x32xf32> to vector<1x8x32xf32>
    tpu.vector_store %arg24[%c0_122, %c0_123, %c0_124], %307 {strides = array<i32>} : memref<1x8x32xf32, #tpu.memory_space<vmem>>, vector<1x8x32xf32>,
    return
  }
  func.func @transform_0(%arg0: i32) -> (i32, i32, i32) {
    %c0_i32 = arith.constant 0 : i32
    %c0_i32_0 = arith.constant 0 : i32
    %c0_i32_1 = arith.constant 0 : i32
    return %arg0, %c0_i32, %c0_i32_0 : i32, i32, i32
  }
  func.func @transform_1(%arg0: i32) -> (i32, i32, i32) {
    %c0_i32 = arith.constant 0 : i32
    %c0_i32_0 = arith.constant 0 : i32
    %c0_i32_1 = arith.constant 0 : i32
    return %arg0, %c0_i32, %c0_i32_0 : i32, i32, i32
  }
  func.func @transform_2(%arg0: i32) -> (i32, i32, i32) {
    %c0_i32 = arith.constant 0 : i32
    %c0_i32_0 = arith.constant 0 : i32
    %c0_i32_1 = arith.constant 0 : i32
    return %arg0, %c0_i32, %c0_i32_0 : i32, i32, i32
  }
  func.func @transform_3(%arg0: i32) -> (i32, i32) {
    %c0_i32 = arith.constant 0 : i32
    %c0_i32_0 = arith.constant 0 : i32
    %c0_i32_1 = arith.constant 0 : i32
    return %c0_i32, %c0_i32_0 : i32, i32
  }
  func.func @transform_4(%arg0: i32) -> (i32, i32) {
    %c0_i32 = arith.constant 0 : i32
    %c0_i32_0 = arith.constant 0 : i32
    %c0_i32_1 = arith.constant 0 : i32
    return %c0_i32, %c0_i32_0 : i32, i32
  }
  func.func @transform_5(%arg0: i32) -> (i32, i32) {
    %c0_i32 = arith.constant 0 : i32
    %c0_i32_0 = arith.constant 0 : i32
    %c0_i32_1 = arith.constant 0 : i32
    return %c0_i32, %c0_i32_0 : i32, i32
  }
  func.func @transform_6(%arg0: i32) -> (i32, i32) {
    %c0_i32 = arith.constant 0 : i32
    %c0_i32_0 = arith.constant 0 : i32
    %c0_i32_1 = arith.constant 0 : i32
    return %c0_i32, %c0_i32_0 : i32, i32
  }
  func.func @transform_7(%arg0: i32) -> (i32, i32) {
    %c0_i32 = arith.constant 0 : i32
    %c0_i32_0 = arith.constant 0 : i32
    %c0_i32_1 = arith.constant 0 : i32
    return %c0_i32, %c0_i32_0 : i32, i32
  }
  func.func @transform_8(%arg0: i32) -> (i32, i32) {
    %c0_i32 = arith.constant 0 : i32
    %c0_i32_0 = arith.constant 0 : i32
    %c0_i32_1 = arith.constant 0 : i32
    return %c0_i32, %c0_i32_0 : i32, i32
  }
  func.func @transform_9(%arg0: i32) -> (i32, i32) {
    %c0_i32 = arith.constant 0 : i32
    %c0_i32_0 = arith.constant 0 : i32
    %c0_i32_1 = arith.constant 0 : i32
    return %c0_i32, %c0_i32_0 : i32, i32
  }
  func.func @transform_10(%arg0: i32) -> (i32, i32) {
    %c0_i32 = arith.constant 0 : i32
    %c0_i32_0 = arith.constant 0 : i32
    %c0_i32_1 = arith.constant 0 : i32
    return %c0_i32, %c0_i32_0 : i32, i32
  }
  func.func @transform_11(%arg0: i32) -> (i32, i32) {
    %c0_i32 = arith.constant 0 : i32
    %c0_i32_0 = arith.constant 0 : i32
    %c0_i32_1 = arith.constant 0 : i32
    return %c0_i32, %c0_i32_0 : i32, i32
  }
  func.func @transform_12(%arg0: i32) -> (i32, i32) {
    %c0_i32 = arith.constant 0 : i32
    %c0_i32_0 = arith.constant 0 : i32
    %c0_i32_1 = arith.constant 0 : i32
    return %c0_i32, %c0_i32_0 : i32, i32
  }
  func.func @transform_13(%arg0: i32) -> (i32, i32) {
    %c0_i32 = arith.constant 0 : i32
    %c0_i32_0 = arith.constant 0 : i32
    %c0_i32_1 = arith.constant 0 : i32
    return %c0_i32, %c0_i32_0 : i32, i32
  }
  func.func @transform_14(%arg0: i32) -> (i32, i32) {
    %c0_i32 = arith.constant 0 : i32
    %c0_i32_0 = arith.constant 0 : i32
    %c0_i32_1 = arith.constant 0 : i32
    return %c0_i32, %c0_i32_0 : i32, i32
  }
  func.func @transform_15(%arg0: i32) -> (i32, i32) {
    %c0_i32 = arith.constant 0 : i32
    %c0_i32_0 = arith.constant 0 : i32
    %c0_i32_1 = arith.constant 0 : i32
    return %c0_i32, %c0_i32_0 : i32, i32
  }
  func.func @transform_16(%arg0: i32) -> (i32, i32) {
    %c0_i32 = arith.constant 0 : i32
    %c0_i32_0 = arith.constant 0 : i32
    %c0_i32_1 = arith.constant 0 : i32
    return %c0_i32, %c0_i32_0 : i32, i32
  }
  func.func @transform_17(%arg0: i32) -> (i32, i32) {
    %c0_i32 = arith.constant 0 : i32
    %c0_i32_0 = arith.constant 0 : i32
    %c0_i32_1 = arith.constant 0 : i32
    return %c0_i32, %c0_i32_0 : i32, i32
  }
  func.func @transform_18(%arg0: i32) -> (i32, i32) {
    %c0_i32 = arith.constant 0 : i32
    %c0_i32_0 = arith.constant 0 : i32
    %c0_i32_1 = arith.constant 0 : i32
    return %c0_i32, %c0_i32_0 : i32, i32
  }
  func.func @transform_19(%arg0: i32) -> (i32, i32) {
    %c0_i32 = arith.constant 0 : i32
    %c0_i32_0 = arith.constant 0 : i32
    %c0_i32_1 = arith.constant 0 : i32
    return %c0_i32, %c0_i32_0 : i32, i32
  }
  func.func @transform_20(%arg0: i32) -> (i32, i32) {
    %c0_i32 = arith.constant 0 : i32
    %c0_i32_0 = arith.constant 0 : i32
    %c0_i32_1 = arith.constant 0 : i32
    return %c0_i32, %c0_i32_0 : i32, i32
  }
  func.func @transform_21(%arg0: i32) -> (i32, i32) {
    %c0_i32 = arith.constant 0 : i32
    %c0_i32_0 = arith.constant 0 : i32
    %c0_i32_1 = arith.constant 0 : i32
    return %c0_i32, %c0_i32_0 : i32, i32
  }
  func.func @transform_22(%arg0: i32) -> (i32, i32) {
    %c0_i32 = arith.constant 0 : i32
    %c0_i32_0 = arith.constant 0 : i32
    %c0_i32_1 = arith.constant 0 : i32
    return %c0_i32, %c0_i32_0 : i32, i32
  }
  func.func @transform_23(%arg0: i32) -> (i32, i32, i32) {
    %c0_i32 = arith.constant 0 : i32
    %c0_i32_0 = arith.constant 0 : i32
    %c0_i32_1 = arith.constant 0 : i32
    return %arg0, %c0_i32, %c0_i32_0 : i32, i32, i32
  }
}

</mosaic_0001>

<llo_original>
// kernel: forward.3
$region0: #{forward.3}
  #allocation0 [shape = 'u32[]', space=smem, size = 0x4, offset = 0x4, fixed_abs, tag = 'smem constant byte address 0x4 - core index']
  #allocation1 [shape = 'u32[144,128]{1,0:T(1,128)}', space=vmem, size = 0x12000, scoped, tag = 'internal scratch']
  %s0 = inlined_call_operand.vmem [shape: f32[2,8,32], index: 0, kind: input, shape index: {}]
  %s1 = inlined_call_operand.vmem [shape: f32[2,8,32], index: 1, kind: input, shape index: {}]
  %s2 = inlined_call_operand.vmem [shape: f32[2,8,8], index: 2, kind: input, shape index: {}]
  %s3 = inlined_call_operand.vmem [shape: f32[2,8,8], index: 3, kind: input, shape index: {}]
  %s4 = inlined_call_operand.vmem [shape: f32[32,96], index: 4, kind: input, shape index: {}]
  %s5 = inlined_call_operand.vmem [shape: f32[1,96], index: 5, kind: input, shape index: {}]
  %s6 = inlined_call_operand.vmem [shape: f32[32,32], index: 6, kind: input, shape index: {}]
  %s7 = inlined_call_operand.vmem [shape: f32[1,32], index: 7, kind: input, shape index: {}]
  %s8 = inlined_call_operand.vmem [shape: f32[32,96], index: 8, kind: input, shape index: {}]
  %s9 = inlined_call_operand.vmem [shape: f32[1,96], index: 9, kind: input, shape index: {}]
  %s10 = inlined_call_operand.vmem [shape: f32[32,32], index: 10, kind: input, shape index: {}]
  %s11 = inlined_call_operand.vmem [shape: f32[1,32], index: 11, kind: input, shape index: {}]
  %s12 = inlined_call_operand.vmem [shape: f32[1,32], index: 12, kind: input, shape index: {}]
  %s13 = inlined_call_operand.vmem [shape: f32[1,32], index: 13, kind: input, shape index: {}]
  %s14 = inlined_call_operand.vmem [shape: f32[1,32], index: 14, kind: input, shape index: {}]
  %s15 = inlined_call_operand.vmem [shape: f32[1,32], index: 15, kind: input, shape index: {}]
  %s16 = inlined_call_operand.vmem [shape: f32[1,32], index: 16, kind: input, shape index: {}]
  %s17 = inlined_call_operand.vmem [shape: f32[1,32], index: 17, kind: input, shape index: {}]
  %s18 = inlined_call_operand.vmem [shape: f32[1,32], index: 18, kind: input, shape index: {}]
  %s19 = inlined_call_operand.vmem [shape: f32[1,32], index: 19, kind: input, shape index: {}]
  %s20 = inlined_call_operand.vmem [shape: f32[32,64], index: 20, kind: input, shape index: {}]
  %s21 = inlined_call_operand.vmem [shape: f32[1,64], index: 21, kind: input, shape index: {}]
  %s22 = inlined_call_operand.vmem [shape: f32[64,32], index: 22, kind: input, shape index: {}]
  %s23 = inlined_call_operand.vmem [shape: f32[1,32], index: 23, kind: input, shape index: {}]
  %s24 = inlined_call_operand.hbm [shape: f32[2,8,32], index: 24, kind: output, shape index: {}]
  %s25 = sld [smem:[#allocation0]]
  $region129: #{forward.3} parent=0
    _
  %s27 = ssub.s32 1, %s25
  %s28 = scalar_select 0, %s27, %s25
  $region1: #{forward.3} parent=0
    #allocation2 [shape = 'u8[8192]{0}', space=vmem, size = 0x2000, scoped, tag = 'output window, operand 0']
    #allocation3 [shape = 's32[2]{0}', space=sflag, size = 0x8, scoped, tag = 'scoped memory for forward.3']
    %29 = vsyncpa [#allocation3], 0
    %s30 = scalar_lea.sflag [#allocation3], 1
    %31 = vsyncpa %s30, 0
    loop: start=0, step=1, limit=4
    $region2: #{forward.3} parent=1 // loop_pre_header
      _
    $region3: #{forward.3} parent=1 // loop_header
      %s33 = sphi 0, %s37
      %p34 = scmp.ge.s32.totalorder %s33, 4
      %s43 = sphi 0, %s45
      %s46 = sphi 0, %s43
      %s47 = sphi 0, %s46
      %s63 = sphi 0, %s47
      %s69 = sphi 0, %s71
      %s72 = sphi 0, %s69
      %s73 = sphi 0, %s72
      %s89 = sphi 0, %s73
      %s95 = sphi 0, %s97
      %s98 = sphi 0, %s95
      %s99 = sphi 0, %s98
      %s115 = sphi 0, %s99
      %s121 = sphi 0, %s123
      %s124 = sphi 0, %s121
      %s125 = sphi 0, %s124
      %s141 = sphi 0, %s125
      %s145 = sphi 0, %s145
      %s147 = sphi 0, %s145
      %s148 = sphi 0, %s147
      %s162 = sphi 0, %s148
      %s166 = sphi 0, %s166
      %s168 = sphi 0, %s166
      %s169 = sphi 0, %s168
      %s183 = sphi 0, %s169
      %s187 = sphi 0, %s187
      %s189 = sphi 0, %s187
      %s190 = sphi 0, %s189
      %s204 = sphi 0, %s190
      %s208 = sphi 0, %s208
      %s210 = sphi 0, %s208
      %s211 = sphi 0, %s210
      %s225 = sphi 0, %s211
      %s229 = sphi 0, %s229
      %s231 = sphi 0, %s229
      %s232 = sphi 0, %s231
      %s246 = sphi 0, %s232
      %s250 = sphi 0, %s250
      %s252 = sphi 0, %s250
      %s253 = sphi 0, %s252
      %s267 = sphi 0, %s253
      %s271 = sphi 0, %s271
      %s273 = sphi 0, %s271
      %s274 = sphi 0, %s273
      %s288 = sphi 0, %s274
      %s292 = sphi 0, %s292
      %s294 = sphi 0, %s292
      %s295 = sphi 0, %s294
      %s309 = sphi 0, %s295
      %s313 = sphi 0, %s313
      %s315 = sphi 0, %s313
      %s316 = sphi 0, %s315
      %s330 = sphi 0, %s316
      %s334 = sphi 0, %s334
      %s336 = sphi 0, %s334
      %s337 = sphi 0, %s336
      %s351 = sphi 0, %s337
      %s355 = sphi 0, %s355
      %s357 = sphi 0, %s355
      %s358 = sphi 0, %s357
      %s372 = sphi 0, %s358
      %s376 = sphi 0, %s376
      %s378 = sphi 0, %s376
      %s379 = sphi 0, %s378
      %s393 = sphi 0, %s379
      %s397 = sphi 0, %s397
      %s399 = sphi 0, %s397
      %s400 = sphi 0, %s399
      %s414 = sphi 0, %s400
      %s418 = sphi 0, %s418
      %s420 = sphi 0, %s418
      %s421 = sphi 0, %s420
      %s435 = sphi 0, %s421
      %s439 = sphi 0, %s439
      %s441 = sphi 0, %s439
      %s442 = sphi 0, %s441
      %s456 = sphi 0, %s442
      %s460 = sphi 0, %s460
      %s462 = sphi 0, %s460
      %s463 = sphi 0, %s462
      %s477 = sphi 0, %s463
      %s481 = sphi 0, %s481
      %s483 = sphi 0, %s481
      %s484 = sphi 0, %s483
      %s498 = sphi 0, %s484
      %s502 = sphi 0, %s502
      %s504 = sphi 0, %s502
      %s505 = sphi 0, %s504
      %s519 = sphi 0, %s505
      %s523 = sphi 0, %s523
      %s525 = sphi 0, %s523
      %s526 = sphi 0, %s525
      %s540 = sphi 0, %s526
      %s544 = sphi 0, %s544
      %s546 = sphi 0, %s544
      %s547 = sphi 0, %s546
      %s561 = sphi 0, %s547
      %s567 = sphi 0, %s569
      %s570 = sphi 0, %s567
      %s571 = sphi 0, %s570
      %s587 = sphi 0, %s571
    $region4: #{forward.3} parent=1 // loop_header_branch
      %36 = sbr.rel (%p34) target = $region8
    $region5: #{forward.3} parent=1 // loop_body
      %s38 = ssub.s32 %s33, 1
      %s39 = ssub.s32 %s33, 2
      %s40 = sadd.s32 %s33, 1
      %s41 = ssub.s32 %s33, %s40
      %p42 = scmp.eq.s32.totalorder %s41, 0
      %s44 = sadd.s32 %s43, 1
      %s45 = scalar_select %p42, %s43, %s44
      %p48 = pneg %p42
      %p49 = scmp.eq.s32.totalorder %s33, 1
      %p50 = por %p48, %p49
      %p51 = scmp.ne.s32.totalorder %s43, %s46
      %p52 = scmp.eq.s32.totalorder %s33, 0
      %p53 = por %p51, %p52
      %p54 = scmp.ne.s32.totalorder %s43, %s46
      %p55 = scmp.eq.s32.totalorder %s38, 1
      %p56 = por %p54, %p55
      %p57 = scmp.ne.s32.totalorder %s46, %s47
      %p58 = scmp.eq.s32.totalorder %s38, 0
      %p59 = por %p57, %p58
      %p60 = scmp.ne.s32.totalorder %s46, %s47
      %p61 = scmp.eq.s32.totalorder %s39, 1
      %p62 = por %p60, %p61
      %p64 = scmp.ne.s32.totalorder %s47, %s63
      %p65 = scmp.eq.s32.totalorder %s39, 0
      %p66 = por %p64, %p65
      %s67 = ssub.s32 %s33, %s40
      %p68 = scmp.eq.s32.totalorder %s67, 0
      %s70 = sadd.s32 %s69, 1
      %s71 = scalar_select %p68, %s69, %s70
      %p74 = pneg %p68
      %p75 = scmp.eq.s32.totalorder %s33, 1
      %p76 = por %p74, %p75
      %p77 = scmp.ne.s32.totalorder %s69, %s72
      %p78 = scmp.eq.s32.totalorder %s33, 0
      %p79 = por %p77, %p78
      %p80 = scmp.ne.s32.totalorder %s69, %s72
      %p81 = scmp.eq.s32.totalorder %s38, 1
      %p82 = por %p80, %p81
      %p83 = scmp.ne.s32.totalorder %s72, %s73
      %p84 = scmp.eq.s32.totalorder %s38, 0
      %p85 = por %p83, %p84
      %p86 = scmp.ne.s32.totalorder %s72, %s73
      %p87 = scmp.eq.s32.totalorder %s39, 1
      %p88 = por %p86, %p87
      %p90 = scmp.ne.s32.totalorder %s73, %s89
      %p91 = scmp.eq.s32.totalorder %s39, 0
      %p92 = por %p90, %p91
      %s93 = ssub.s32 %s33, %s40
      %p94 = scmp.eq.s32.totalorder %s93, 0
      %s96 = sadd.s32 %s95, 1
      %s97 = scalar_select %p94, %s95, %s96
      %p100 = pneg %p94
      %p101 = scmp.eq.s32.totalorder %s33, 1
      %p102 = por %p100, %p101
      %p103 = scmp.ne.s32.totalorder %s95, %s98
      %p104 = scmp.eq.s32.totalorder %s33, 0
      %p105 = por %p103, %p104
      %p106 = scmp.ne.s32.totalorder %s95, %s98
      %p107 = scmp.eq.s32.totalorder %s38, 1
      %p108 = por %p106, %p107
      %p109 = scmp.ne.s32.totalorder %s98, %s99
      %p110 = scmp.eq.s32.totalorder %s38, 0
      %p111 = por %p109, %p110
      %p112 = scmp.ne.s32.totalorder %s98, %s99
      %p113 = scmp.eq.s32.totalorder %s39, 1
      %p114 = por %p112, %p113
      %p116 = scmp.ne.s32.totalorder %s99, %s115
      %p117 = scmp.eq.s32.totalorder %s39, 0
      %p118 = por %p116, %p117
      %s119 = ssub.s32 %s33, %s40
      %p120 = scmp.eq.s32.totalorder %s119, 0
      %s122 = sadd.s32 %s121, 1
      %s123 = scalar_select %p120, %s121, %s122
      %p126 = pneg %p120
      %p127 = scmp.eq.s32.totalorder %s33, 1
      %p128 = por %p126, %p127
      %p129 = scmp.ne.s32.totalorder %s121, %s124
      %p130 = scmp.eq.s32.totalorder %s33, 0
      %p131 = por %p129, %p130
      %p132 = scmp.ne.s32.totalorder %s121, %s124
      %p133 = scmp.eq.s32.totalorder %s38, 1
      %p134 = por %p132, %p133
      %p135 = scmp.ne.s32.totalorder %s124, %s125
      %p136 = scmp.eq.s32.totalorder %s38, 0
      %p137 = por %p135, %p136
      %p138 = scmp.ne.s32.totalorder %s124, %s125
      %p139 = scmp.eq.s32.totalorder %s39, 1
      %p140 = por %p138, %p139
      %p142 = scmp.ne.s32.totalorder %s125, %s141
      %p143 = scmp.eq.s32.totalorder %s39, 0
      %p144 = por %p142, %p143
      %s146 = sadd.s32 %s145, 1
      %p149 = scmp.eq.s32.totalorder %s33, 1
      %p150 = scmp.ne.s32.totalorder %s145, %s147
      %p151 = scmp.eq.s32.totalorder %s33, 0
      %p152 = por %p150, %p151
      %p153 = scmp.ne.s32.totalorder %s145, %s147
      %p154 = scmp.eq.s32.totalorder %s38, 1
      %p155 = por %p153, %p154
      %p156 = scmp.ne.s32.totalorder %s147, %s148
      %p157 = scmp.eq.s32.totalorder %s38, 0
      %p158 = por %p156, %p157
      %p159 = scmp.ne.s32.totalorder %s147, %s148
      %p160 = scmp.eq.s32.totalorder %s39, 1
      %p161 = por %p159, %p160
      %p163 = scmp.ne.s32.totalorder %s148, %s162
      %p164 = scmp.eq.s32.totalorder %s39, 0
      %p165 = por %p163, %p164
      %s167 = sadd.s32 %s166, 1
      %p170 = scmp.eq.s32.totalorder %s33, 1
      %p171 = scmp.ne.s32.totalorder %s166, %s168
      %p172 = scmp.eq.s32.totalorder %s33, 0
      %p173 = por %p171, %p172
      %p174 = scmp.ne.s32.totalorder %s166, %s168
      %p175 = scmp.eq.s32.totalorder %s38, 1
      %p176 = por %p174, %p175
      %p177 = scmp.ne.s32.totalorder %s168, %s169
      %p178 = scmp.eq.s32.totalorder %s38, 0
      %p179 = por %p177, %p178
      %p180 = scmp.ne.s32.totalorder %s168, %s169
      %p181 = scmp.eq.s32.totalorder %s39, 1
      %p182 = por %p180, %p181
      %p184 = scmp.ne.s32.totalorder %s169, %s183
      %p185 = scmp.eq.s32.totalorder %s39, 0
      %p186 = por %p184, %p185
      %s188 = sadd.s32 %s187, 1
      %p191 = scmp.eq.s32.totalorder %s33, 1
      %p192 = scmp.ne.s32.totalorder %s187, %s189
      %p193 = scmp.eq.s32.totalorder %s33, 0
      %p194 = por %p192, %p193
      %p195 = scmp.ne.s32.totalorder %s187, %s189
      %p196 = scmp.eq.s32.totalorder %s38, 1
      %p197 = por %p195, %p196
      %p198 = scmp.ne.s32.totalorder %s189, %s190
      %p199 = scmp.eq.s32.totalorder %s38, 0
      %p200 = por %p198, %p199
      %p201 = scmp.ne.s32.totalorder %s189, %s190
      %p202 = scmp.eq.s32.totalorder %s39, 1
      %p203 = por %p201, %p202
      %p205 = scmp.ne.s32.totalorder %s190, %s204
      %p206 = scmp.eq.s32.totalorder %s39, 0
      %p207 = por %p205, %p206
      %s209 = sadd.s32 %s208, 1
      %p212 = scmp.eq.s32.totalorder %s33, 1
      %p213 = scmp.ne.s32.totalorder %s208, %s210
      %p214 = scmp.eq.s32.totalorder %s33, 0
      %p215 = por %p213, %p214
      %p216 = scmp.ne.s32.totalorder %s208, %s210
      %p217 = scmp.eq.s32.totalorder %s38, 1
      %p218 = por %p216, %p217
      %p219 = scmp.ne.s32.totalorder %s210, %s211
      %p220 = scmp.eq.s32.totalorder %s38, 0
      %p221 = por %p219, %p220
      %p222 = scmp.ne.s32.totalorder %s210, %s211
      %p223 = scmp.eq.s32.totalorder %s39, 1
      %p224 = por %p222, %p223
      %p226 = scmp.ne.s32.totalorder %s211, %s225
      %p227 = scmp.eq.s32.totalorder %s39, 0
      %p228 = por %p226, %p227
      %s230 = sadd.s32 %s229, 1
      %p233 = scmp.eq.s32.totalorder %s33, 1
      %p234 = scmp.ne.s32.totalorder %s229, %s231
      %p235 = scmp.eq.s32.totalorder %s33, 0
      %p236 = por %p234, %p235
      %p237 = scmp.ne.s32.totalorder %s229, %s231
      %p238 = scmp.eq.s32.totalorder %s38, 1
      %p239 = por %p237, %p238
      %p240 = scmp.ne.s32.totalorder %s231, %s232
      %p241 = scmp.eq.s32.totalorder %s38, 0
      %p242 = por %p240, %p241
      %p243 = scmp.ne.s32.totalorder %s231, %s232
      %p244 = scmp.eq.s32.totalorder %s39, 1
      %p245 = por %p243, %p244
      %p247 = scmp.ne.s32.totalorder %s232, %s246
      %p248 = scmp.eq.s32.totalorder %s39, 0
      %p249 = por %p247, %p248
      %s251 = sadd.s32 %s250, 1
      %p254 = scmp.eq.s32.totalorder %s33, 1
      %p255 = scmp.ne.s32.totalorder %s250, %s252
      %p256 = scmp.eq.s32.totalorder %s33, 0
      %p257 = por %p255, %p256
      %p258 = scmp.ne.s32.totalorder %s250, %s252
      %p259 = scmp.eq.s32.totalorder %s38, 1
      %p260 = por %p258, %p259
      %p261 = scmp.ne.s32.totalorder %s252, %s253
      %p262 = scmp.eq.s32.totalorder %s38, 0
      %p263 = por %p261, %p262
      %p264 = scmp.ne.s32.totalorder %s252, %s253
      %p265 = scmp.eq.s32.totalorder %s39, 1
      %p266 = por %p264, %p265
      %p268 = scmp.ne.s32.totalorder %s253, %s267
      %p269 = scmp.eq.s32.totalorder %s39, 0
      %p270 = por %p268, %p269
      %s272 = sadd.s32 %s271, 1
      %p275 = scmp.eq.s32.totalorder %s33, 1
      %p276 = scmp.ne.s32.totalorder %s271, %s273
      %p277 = scmp.eq.s32.totalorder %s33, 0
      %p278 = por %p276, %p277
      %p279 = scmp.ne.s32.totalorder %s271, %s273
      %p280 = scmp.eq.s32.totalorder %s38, 1
      %p281 = por %p279, %p280
      %p282 = scmp.ne.s32.totalorder %s273, %s274
      %p283 = scmp.eq.s32.totalorder %s38, 0
      %p284 = por %p282, %p283
      %p285 = scmp.ne.s32.totalorder %s273, %s274
      %p286 = scmp.eq.s32.totalorder %s39, 1
      %p287 = por %p285, %p286
      %p289 = scmp.ne.s32.totalorder %s274, %s288
      %p290 = scmp.eq.s32.totalorder %s39, 0
      %p291 = por %p289, %p290
      %s293 = sadd.s32 %s292, 1
      %p296 = scmp.eq.s32.totalorder %s33, 1
      %p297 = scmp.ne.s32.totalorder %s292, %s294
      %p298 = scmp.eq.s32.totalorder %s33, 0
      %p299 = por %p297, %p298
      %p300 = scmp.ne.s32.totalorder %s292, %s294
      %p301 = scmp.eq.s32.totalorder %s38, 1
      %p302 = por %p300, %p301
      %p303 = scmp.ne.s32.totalorder %s294, %s295
      %p304 = scmp.eq.s32.totalorder %s38, 0
      %p305 = por %p303, %p304
      %p306 = scmp.ne.s32.totalorder %s294, %s295
      %p307 = scmp.eq.s32.totalorder %s39, 1
      %p308 = por %p306, %p307
      %p310 = scmp.ne.s32.totalorder %s295, %s309
      %p311 = scmp.eq.s32.totalorder %s39, 0
      %p312 = por %p310, %p311
      %s314 = sadd.s32 %s313, 1
      %p317 = scmp.eq.s32.totalorder %s33, 1
      %p318 = scmp.ne.s32.totalorder %s313, %s315
      %p319 = scmp.eq.s32.totalorder %s33, 0
      %p320 = por %p318, %p319
      %p321 = scmp.ne.s32.totalorder %s313, %s315
      %p322 = scmp.eq.s32.totalorder %s38, 1
      %p323 = por %p321, %p322
      %p324 = scmp.ne.s32.totalorder %s315, %s316
      %p325 = scmp.eq.s32.totalorder %s38, 0
      %p326 = por %p324, %p325
      %p327 = scmp.ne.s32.totalorder %s315, %s316
      %p328 = scmp.eq.s32.totalorder %s39, 1
      %p329 = por %p327, %p328
      %p331 = scmp.ne.s32.totalorder %s316, %s330
      %p332 = scmp.eq.s32.totalorder %s39, 0
      %p333 = por %p331, %p332
      %s335 = sadd.s32 %s334, 1
      %p338 = scmp.eq.s32.totalorder %s33, 1
      %p339 = scmp.ne.s32.totalorder %s334, %s336
      %p340 = scmp.eq.s32.totalorder %s33, 0
      %p341 = por %p339, %p340
      %p342 = scmp.ne.s32.totalorder %s334, %s336
      %p343 = scmp.eq.s32.totalorder %s38, 1
      %p344 = por %p342, %p343
      %p345 = scmp.ne.s32.totalorder %s336, %s337
      %p346 = scmp.eq.s32.totalorder %s38, 0
      %p347 = por %p345, %p346
      %p348 = scmp.ne.s32.totalorder %s336, %s337
      %p349 = scmp.eq.s32.totalorder %s39, 1
      %p350 = por %p348, %p349
      %p352 = scmp.ne.s32.totalorder %s337, %s351
      %p353 = scmp.eq.s32.totalorder %s39, 0
      %p354 = por %p352, %p353
      %s356 = sadd.s32 %s355, 1
      %p359 = scmp.eq.s32.totalorder %s33, 1
      %p360 = scmp.ne.s32.totalorder %s355, %s357
      %p361 = scmp.eq.s32.totalorder %s33, 0
      %p362 = por %p360, %p361
      %p363 = scmp.ne.s32.totalorder %s355, %s357
      %p364 = scmp.eq.s32.totalorder %s38, 1
      %p365 = por %p363, %p364
      %p366 = scmp.ne.s32.totalorder %s357, %s358
      %p367 = scmp.eq.s32.totalorder %s38, 0
      %p368 = por %p366, %p367
      %p369 = scmp.ne.s32.totalorder %s357, %s358
      %p370 = scmp.eq.s32.totalorder %s39, 1
      %p371 = por %p369, %p370
      %p373 = scmp.ne.s32.totalorder %s358, %s372
      %p374 = scmp.eq.s32.totalorder %s39, 0
      %p375 = por %p373, %p374
      %s377 = sadd.s32 %s376, 1
      %p380 = scmp.eq.s32.totalorder %s33, 1
      %p381 = scmp.ne.s32.totalorder %s376, %s378
      %p382 = scmp.eq.s32.totalorder %s33, 0
      %p383 = por %p381, %p382
      %p384 = scmp.ne.s32.totalorder %s376, %s378
      %p385 = scmp.eq.s32.totalorder %s38, 1
      %p386 = por %p384, %p385
      %p387 = scmp.ne.s32.totalorder %s378, %s379
      %p388 = scmp.eq.s32.totalorder %s38, 0
      %p389 = por %p387, %p388
      %p390 = scmp.ne.s32.totalorder %s378, %s379
      %p391 = scmp.eq.s32.totalorder %s39, 1
      %p392 = por %p390, %p391
      %p394 = scmp.ne.s32.totalorder %s379, %s393
      %p395 = scmp.eq.s32.totalorder %s39, 0
      %p396 = por %p394, %p395
      %s398 = sadd.s32 %s397, 1
      %p401 = scmp.eq.s32.totalorder %s33, 1
      %p402 = scmp.ne.s32.totalorder %s397, %s399
      %p403 = scmp.eq.s32.totalorder %s33, 0
      %p404 = por %p402, %p403
      %p405 = scmp.ne.s32.totalorder %s397, %s399
      %p406 = scmp.eq.s32.totalorder %s38, 1
      %p407 = por %p405, %p406
      %p408 = scmp.ne.s32.totalorder %s399, %s400
      %p409 = scmp.eq.s32.totalorder %s38, 0
      %p410 = por %p408, %p409
      %p411 = scmp.ne.s32.totalorder %s399, %s400
      %p412 = scmp.eq.s32.totalorder %s39, 1
      %p413 = por %p411, %p412
      %p415 = scmp.ne.s32.totalorder %s400, %s414
      %p416 = scmp.eq.s32.totalorder %s39, 0
      %p417 = por %p415, %p416
      %s419 = sadd.s32 %s418, 1
      %p422 = scmp.eq.s32.totalorder %s33, 1
      %p423 = scmp.ne.s32.totalorder %s418, %s420
      %p424 = scmp.eq.s32.totalorder %s33, 0
      %p425 = por %p423, %p424
      %p426 = scmp.ne.s32.totalorder %s418, %s420
      %p427 = scmp.eq.s32.totalorder %s38, 1
      %p428 = por %p426, %p427
      %p429 = scmp.ne.s32.totalorder %s420, %s421
      %p430 = scmp.eq.s32.totalorder %s38, 0
      %p431 = por %p429, %p430
      %p432 = scmp.ne.s32.totalorder %s420, %s421
      %p433 = scmp.eq.s32.totalorder %s39, 1
      %p434 = por %p432, %p433
      %p436 = scmp.ne.s32.totalorder %s421, %s435
      %p437 = scmp.eq.s32.totalorder %s39, 0
      %p438 = por %p436, %p437
      %s440 = sadd.s32 %s439, 1
      %p443 = scmp.eq.s32.totalorder %s33, 1
      %p444 = scmp.ne.s32.totalorder %s439, %s441
      %p445 = scmp.eq.s32.totalorder %s33, 0
      %p446 = por %p444, %p445
      %p447 = scmp.ne.s32.totalorder %s439, %s441
      %p448 = scmp.eq.s32.totalorder %s38, 1
      %p449 = por %p447, %p448
      %p450 = scmp.ne.s32.totalorder %s441, %s442
      %p451 = scmp.eq.s32.totalorder %s38, 0
      %p452 = por %p450, %p451
      %p453 = scmp.ne.s32.totalorder %s441, %s442
      %p454 = scmp.eq.s32.totalorder %s39, 1
      %p455 = por %p453, %p454
      %p457 = scmp.ne.s32.totalorder %s442, %s456
      %p458 = scmp.eq.s32.totalorder %s39, 0
      %p459 = por %p457, %p458
      %s461 = sadd.s32 %s460, 1
      %p464 = scmp.eq.s32.totalorder %s33, 1
      %p465 = scmp.ne.s32.totalorder %s460, %s462
      %p466 = scmp.eq.s32.totalorder %s33, 0
      %p467 = por %p465, %p466
      %p468 = scmp.ne.s32.totalorder %s460, %s462
      %p469 = scmp.eq.s32.totalorder %s38, 1
      %p470 = por %p468, %p469
      %p471 = scmp.ne.s32.totalorder %s462, %s463
      %p472 = scmp.eq.s32.totalorder %s38, 0
      %p473 = por %p471, %p472
      %p474 = scmp.ne.s32.totalorder %s462, %s463
      %p475 = scmp.eq.s32.totalorder %s39, 1
      %p476 = por %p474, %p475
      %p478 = scmp.ne.s32.totalorder %s463, %s477
      %p479 = scmp.eq.s32.totalorder %s39, 0
      %p480 = por %p478, %p479
      %s482 = sadd.s32 %s481, 1
      %p485 = scmp.eq.s32.totalorder %s33, 1
      %p486 = scmp.ne.s32.totalorder %s481, %s483
      %p487 = scmp.eq.s32.totalorder %s33, 0
      %p488 = por %p486, %p487
      %p489 = scmp.ne.s32.totalorder %s481, %s483
      %p490 = scmp.eq.s32.totalorder %s38, 1
      %p491 = por %p489, %p490
      %p492 = scmp.ne.s32.totalorder %s483, %s484
      %p493 = scmp.eq.s32.totalorder %s38, 0
      %p494 = por %p492, %p493
      %p495 = scmp.ne.s32.totalorder %s483, %s484
      %p496 = scmp.eq.s32.totalorder %s39, 1
      %p497 = por %p495, %p496
      %p499 = scmp.ne.s32.totalorder %s484, %s498
      %p500 = scmp.eq.s32.totalorder %s39, 0
      %p501 = por %p499, %p500
      %s503 = sadd.s32 %s502, 1
      %p506 = scmp.eq.s32.totalorder %s33, 1
      %p507 = scmp.ne.s32.totalorder %s502, %s504
      %p508 = scmp.eq.s32.totalorder %s33, 0
      %p509 = por %p507, %p508
      %p510 = scmp.ne.s32.totalorder %s502, %s504
      %p511 = scmp.eq.s32.totalorder %s38, 1
      %p512 = por %p510, %p511
      %p513 = scmp.ne.s32.totalorder %s504, %s505
      %p514 = scmp.eq.s32.totalorder %s38, 0
      %p515 = por %p513, %p514
      %p516 = scmp.ne.s32.totalorder %s504, %s505
      %p517 = scmp.eq.s32.totalorder %s39, 1
      %p518 = por %p516, %p517
      %p520 = scmp.ne.s32.totalorder %s505, %s519
      %p521 = scmp.eq.s32.totalorder %s39, 0
      %p522 = por %p520, %p521
      %s524 = sadd.s32 %s523, 1
      %p527 = scmp.eq.s32.totalorder %s33, 1
      %p528 = scmp.ne.s32.totalorder %s523, %s525
      %p529 = scmp.eq.s32.totalorder %s33, 0
      %p530 = por %p528, %p529
      %p531 = scmp.ne.s32.totalorder %s523, %s525
      %p532 = scmp.eq.s32.totalorder %s38, 1
      %p533 = por %p531, %p532
      %p534 = scmp.ne.s32.totalorder %s525, %s526
      %p535 = scmp.eq.s32.totalorder %s38, 0
      %p536 = por %p534, %p535
      %p537 = scmp.ne.s32.totalorder %s525, %s526
      %p538 = scmp.eq.s32.totalorder %s39, 1
      %p539 = por %p537, %p538
      %p541 = scmp.ne.s32.totalorder %s526, %s540
      %p542 = scmp.eq.s32.totalorder %s39, 0
      %p543 = por %p541, %p542
      %s545 = sadd.s32 %s544, 1
      %p548 = scmp.eq.s32.totalorder %s33, 1
      %p549 = scmp.ne.s32.totalorder %s544, %s546
      %p550 = scmp.eq.s32.totalorder %s33, 0
      %p551 = por %p549, %p550
      %p552 = scmp.ne.s32.totalorder %s544, %s546
      %p553 = scmp.eq.s32.totalorder %s38, 1
      %p554 = por %p552, %p553
      %p555 = scmp.ne.s32.totalorder %s546, %s547
      %p556 = scmp.eq.s32.totalorder %s38, 0
      %p557 = por %p555, %p556
      %p558 = scmp.ne.s32.totalorder %s546, %s547
      %p559 = scmp.eq.s32.totalorder %s39, 1
      %p560 = por %p558, %p559
      %p562 = scmp.ne.s32.totalorder %s547, %s561
      %p563 = scmp.eq.s32.totalorder %s39, 0
      %p564 = por %p562, %p563
      %s565 = ssub.s32 %s33, %s40
      %p566 = scmp.eq.s32.totalorder %s565, 0
      %s568 = sadd.s32 %s567, 1
      %s569 = scalar_select %p566, %s567, %s568
      %p572 = pneg %p566
      %p573 = scmp.eq.s32.totalorder %s33, 1
      %p574 = por %p572, %p573
      %p575 = scmp.ne.s32.totalorder %s567, %s570
      %p576 = scmp.eq.s32.totalorder %s33, 0
      %p577 = por %p575, %p576
      %p578 = scmp.ne.s32.totalorder %s567, %s570
      %p579 = scmp.eq.s32.totalorder %s38, 1
      %p580 = por %p578, %p579
      %p581 = scmp.ne.s32.totalorder %s570, %s571
      %p582 = scmp.eq.s32.totalorder %s38, 0
      %p583 = por %p581, %p582
      %p584 = scmp.ne.s32.totalorder %s570, %s571
      %p585 = scmp.eq.s32.totalorder %s39, 1
      %p586 = por %p584, %p585
      %p588 = scmp.ne.s32.totalorder %s571, %s587
      %p589 = scmp.eq.s32.totalorder %s39, 0
      %p590 = por %p588, %p589
      %p591 = scmp.le.s32.totalorder 1, %s33
      %p592 = scmp.lt.s32.totalorder %s33, 3
      %p593 = pnand %p591, %p592
      %p594 = pneg %p593
      // Predicated region
      $region9: #{forward.3} parent=5 // pred_check
        _
      $region10: #{forward.3} parent=5 // pred_check_branch
        %596 = sbr.rel (%p593) target = $region12
      $region11: #{forward.3} parent=5 // pred_region
        %s597 = ssub.s32 %s33, 1
        // Predicated region
        $region13: #{forward.3} parent=11 // pred_check
          %p598 = pneg %p158
        $region14: #{forward.3} parent=11 // pred_check_branch
          %600 = sbr.rel (%p598) target = $region16
        $region15: #{forward.3} parent=11 // pred_region
          _
        $region16: #{forward.3} parent=11 // pred_fallthru
          _
        // Predicated region
        $region17: #{forward.3} parent=11 // pred_check
          %p601 = pneg %p179
        $region18: #{forward.3} parent=11 // pred_check_branch
          %603 = sbr.rel (%p601) target = $region20
        $region19: #{forward.3} parent=11 // pred_region
          _
        $region20: #{forward.3} parent=11 // pred_fallthru
          _
        // Predicated region
        $region21: #{forward.3} parent=11 // pred_check
          %p604 = pneg %p200
        $region22: #{forward.3} parent=11 // pred_check_branch
          %606 = sbr.rel (%p604) target = $region24
        $region23: #{forward.3} parent=11 // pred_region
          _
        $region24: #{forward.3} parent=11 // pred_fallthru
          _
        // Predicated region
        $region25: #{forward.3} parent=11 // pred_check
          %p607 = pneg %p221
        $region26: #{forward.3} parent=11 // pred_check_branch
          %609 = sbr.rel (%p607) target = $region28
        $region27: #{forward.3} parent=11 // pred_region
          _
        $region28: #{forward.3} parent=11 // pred_fallthru
          _
        // Predicated region
        $region29: #{forward.3} parent=11 // pred_check
          %p610 = pneg %p242
        $region30: #{forward.3} parent=11 // pred_check_branch
          %612 = sbr.rel (%p610) target = $region32
        $region31: #{forward.3} parent=11 // pred_region
          _
        $region32: #{forward.3} parent=11 // pred_fallthru
          _
        // Predicated region
        $region33: #{forward.3} parent=11 // pred_check
          %p613 = pneg %p263
        $region34: #{forward.3} parent=11 // pred_check_branch
          %615 = sbr.rel (%p613) target = $region36
        $region35: #{forward.3} parent=11 // pred_region
          _
        $region36: #{forward.3} parent=11 // pred_fallthru
          _
        // Predicated region
        $region37: #{forward.3} parent=11 // pred_check
          %p616 = pneg %p284
        $region38: #{forward.3} parent=11 // pred_check_branch
          %618 = sbr.rel (%p616) target = $region40
        $region39: #{forward.3} parent=11 // pred_region
          _
        $region40: #{forward.3} parent=11 // pred_fallthru
          _
        // Predicated region
        $region41: #{forward.3} parent=11 // pred_check
          %p619 = pneg %p305
        $region42: #{forward.3} parent=11 // pred_check_branch
          %621 = sbr.rel (%p619) target = $region44
        $region43: #{forward.3} parent=11 // pred_region
          _
        $region44: #{forward.3} parent=11 // pred_fallthru
          _
        // Predicated region
        $region45: #{forward.3} parent=11 // pred_check
          %p622 = pneg %p326
        $region46: #{forward.3} parent=11 // pred_check_branch
          %624 = sbr.rel (%p622) target = $region48
        $region47: #{forward.3} parent=11 // pred_region
          _
        $region48: #{forward.3} parent=11 // pred_fallthru
          _
        // Predicated region
        $region49: #{forward.3} parent=11 // pred_check
          %p625 = pneg %p347
        $region50: #{forward.3} parent=11 // pred_check_branch
          %627 = sbr.rel (%p625) target = $region52
        $region51: #{forward.3} parent=11 // pred_region
          _
        $region52: #{forward.3} parent=11 // pred_fallthru
          _
        // Predicated region
        $region53: #{forward.3} parent=11 // pred_check
          %p628 = pneg %p368
        $region54: #{forward.3} parent=11 // pred_check_branch
          %630 = sbr.rel (%p628) target = $region56
        $region55: #{forward.3} parent=11 // pred_region
          _
        $region56: #{forward.3} parent=11 // pred_fallthru
          _
        // Predicated region
        $region57: #{forward.3} parent=11 // pred_check
          %p631 = pneg %p389
        $region58: #{forward.3} parent=11 // pred_check_branch
          %633 = sbr.rel (%p631) target = $region60
        $region59: #{forward.3} parent=11 // pred_region
          _
        $region60: #{forward.3} parent=11 // pred_fallthru
          _
        // Predicated region
        $region61: #{forward.3} parent=11 // pred_check
          %p634 = pneg %p410
        $region62: #{forward.3} parent=11 // pred_check_branch
          %636 = sbr.rel (%p634) target = $region64
        $region63: #{forward.3} parent=11 // pred_region
          _
        $region64: #{forward.3} parent=11 // pred_fallthru
          _
        // Predicated region
        $region65: #{forward.3} parent=11 // pred_check
          %p637 = pneg %p431
        $region66: #{forward.3} parent=11 // pred_check_branch
          %639 = sbr.rel (%p637) target = $region68
        $region67: #{forward.3} parent=11 // pred_region
          _
        $region68: #{forward.3} parent=11 // pred_fallthru
          _
        // Predicated region
        $region69: #{forward.3} parent=11 // pred_check
          %p640 = pneg %p452
        $region70: #{forward.3} parent=11 // pred_check_branch
          %642 = sbr.rel (%p640) target = $region72
        $region71: #{forward.3} parent=11 // pred_region
          _
        $region72: #{forward.3} parent=11 // pred_fallthru
          _
        // Predicated region
        $region73: #{forward.3} parent=11 // pred_check
          %p643 = pneg %p473
        $region74: #{forward.3} parent=11 // pred_check_branch
          %645 = sbr.rel (%p643) target = $region76
        $region75: #{forward.3} parent=11 // pred_region
          _
        $region76: #{forward.3} parent=11 // pred_fallthru
          _
        // Predicated region
        $region77: #{forward.3} parent=11 // pred_check
          %p646 = pneg %p494
        $region78: #{forward.3} parent=11 // pred_check_branch
          %648 = sbr.rel (%p646) target = $region80
        $region79: #{forward.3} parent=11 // pred_region
          _
        $region80: #{forward.3} parent=11 // pred_fallthru
          _
        // Predicated region
        $region81: #{forward.3} parent=11 // pred_check
          %p649 = pneg %p515
        $region82: #{forward.3} parent=11 // pred_check_branch
          %651 = sbr.rel (%p649) target = $region84
        $region83: #{forward.3} parent=11 // pred_region
          _
        $region84: #{forward.3} parent=11 // pred_fallthru
          _
        // Predicated region
        $region85: #{forward.3} parent=11 // pred_check
          %p652 = pneg %p536
        $region86: #{forward.3} parent=11 // pred_check_branch
          %654 = sbr.rel (%p652) target = $region88
        $region87: #{forward.3} parent=11 // pred_region
          _
        $region88: #{forward.3} parent=11 // pred_fallthru
          _
        // Predicated region
        $region89: #{forward.3} parent=11 // pred_check
          %p655 = pneg %p557
        $region90: #{forward.3} parent=11 // pred_check_branch
          %657 = sbr.rel (%p655) target = $region92
        $region91: #{forward.3} parent=11 // pred_region
          _
        $region92: #{forward.3} parent=11 // pred_fallthru
          _
      $region12: #{forward.3} parent=5 // pred_fallthru
        _
      %p658 = scmp.lt.s32.totalorder %s33, 2
      // Predicated region
      $region93: #{forward.3} parent=5 // pred_check
        %p659 = pneg %p658
      $region94: #{forward.3} parent=5 // pred_check_branch
        %661 = sbr.rel (%p659) target = $region96
      $region95: #{forward.3} parent=5 // pred_region
        // Predicated region
        $region97: #{forward.3} parent=95 // pred_check
          %p662 = pneg %p53
        $region98: #{forward.3} parent=95 // pred_check_branch
          %664 = sbr.rel (%p662) target = $region100
        $region99: #{forward.3} parent=95 // pred_region
          %p665 = scmp.lt.s32.totalorder %s33, 1
          %s666 = scalar_select %p665, %s33, 1
          %s667 = smul.addr %s666, 8
          %s668 = scalar_lea.vmem %s0, %s667
        $region100: #{forward.3} parent=95 // pred_fallthru
          _
        // Predicated region
        $region101: #{forward.3} parent=95 // pred_check
          %p669 = pneg %p79
        $region102: #{forward.3} parent=95 // pred_check_branch
          %671 = sbr.rel (%p669) target = $region104
        $region103: #{forward.3} parent=95 // pred_region
          %p672 = scmp.lt.s32.totalorder %s33, 1
          %s673 = scalar_select %p672, %s33, 1
          %s674 = smul.addr %s673, 8
          %s675 = scalar_lea.vmem %s1, %s674
        $region104: #{forward.3} parent=95 // pred_fallthru
          _
        // Predicated region
        $region105: #{forward.3} parent=95 // pred_check
          %p676 = pneg %p105
        $region106: #{forward.3} parent=95 // pred_check_branch
          %678 = sbr.rel (%p676) target = $region108
        $region107: #{forward.3} parent=95 // pred_region
          %p679 = scmp.lt.s32.totalorder %s33, 1
          %s680 = scalar_select %p679, %s33, 1
          %s681 = smul.addr %s680, 8
          %s682 = scalar_lea.vmem %s2, %s681
        $region108: #{forward.3} parent=95 // pred_fallthru
          _
        // Predicated region
        $region109: #{forward.3} parent=95 // pred_check
          %p683 = pneg %p131
        $region110: #{forward.3} parent=95 // pred_check_branch
          %685 = sbr.rel (%p683) target = $region112
        $region111: #{forward.3} parent=95 // pred_region
          %p686 = scmp.lt.s32.totalorder %s33, 1
          %s687 = scalar_select %p686, %s33, 1
          %s688 = smul.addr %s687, 8
          %s689 = scalar_lea.vmem %s3, %s688
        $region112: #{forward.3} parent=95 // pred_fallthru
          _
      $region96: #{forward.3} parent=5 // pred_fallthru
        _
      %p690 = scmp.le.s32.totalorder 1, %s33
      %p691 = scmp.lt.s32.totalorder %s33, 3
      %p692 = pnand %p690, %p691
      %p693 = pneg %p692
      // Predicated region
      $region113: #{forward.3} parent=5 // pred_check
        _
      $region114: #{forward.3} parent=5 // pred_check_branch
        %695 = sbr.rel (%p692) target = $region116
      $region115: #{forward.3} parent=5 // pred_region
        %s696 = ssub.s32 %s33, 1
        %p697 = scmp.lt.s32.totalorder %s38, 1
        %s698 = scalar_select %p697, %s38, 1
        %s699 = smul.addr %s698, 8
        %s700 = scalar_lea.vmem %s0, %s699
        %p701 = pneg %p59
        %p702 = pneg %p56
        %p703 = scmp.lt.s32.totalorder %s38, 1
        %s704 = scalar_select %p703, %s38, 1
        %s705 = smul.addr %s704, 8
        %s706 = scalar_lea.vmem %s1, %s705
        %p707 = pneg %p85
        %p708 = pneg %p82
        %p709 = scmp.lt.s32.totalorder %s38, 1
        %s710 = scalar_select %p709, %s38, 1
        %s711 = smul.addr %s710, 8
        %s712 = scalar_lea.vmem %s2, %s711
        %p713 = pneg %p111
        %p714 = pneg %p108
        %p715 = scmp.lt.s32.totalorder %s38, 1
        %s716 = scalar_select %p715, %s38, 1
        %s717 = smul.addr %s716, 8
        %s718 = scalar_lea.vmem %s3, %s717
        %p719 = pneg %p137
        %p720 = pneg %p134
        %p721 = pneg %p158
        %p722 = pneg %p155
        %p723 = pneg %p179
        %p724 = pneg %p176
        %p725 = pneg %p200
        %p726 = pneg %p197
        %p727 = pneg %p221
        %p728 = pneg %p218
        %p729 = pneg %p242
        %p730 = pneg %p239
        %p731 = pneg %p263
        %p732 = pneg %p260
        %p733 = pneg %p284
        %p734 = pneg %p281
        %p735 = pneg %p305
        %p736 = pneg %p302
        %p737 = pneg %p326
        %p738 = pneg %p323
        %p739 = pneg %p347
        %p740 = pneg %p344
        %p741 = pneg %p368
        %p742 = pneg %p365
        %p743 = pneg %p389
        %p744 = pneg %p386
        %p745 = pneg %p410
        %p746 = pneg %p407
        %p747 = pneg %p431
        %p748 = pneg %p428
        %p749 = pneg %p452
        %p750 = pneg %p449
        %p751 = pneg %p473
        %p752 = pneg %p470
        %p753 = pneg %p494
        %p754 = pneg %p491
        %p755 = pneg %p515
        %p756 = pneg %p512
        %p757 = pneg %p536
        %p758 = pneg %p533
        %p759 = pneg %p557
        %p760 = pneg %p554
        %p761 = pneg %p583
        %p762 = pneg %p580
        %s763 = sand.u32 %s570, 1
        %s764 = scalar_lea.sflag [#allocation3], %s763
        %s765 = sand.u32 %s570, 1
        %s766 = smul.addr %s765, 8
        %s767 = scalar_lea.vmem [#allocation2], %s766
        %p768 = scmp.lt.s32.totalorder %s38, 1
        %s769 = scalar_select %p768, %s38, 1
        %s770 = smul.addr %s769, 8
        %s771 = scalar_lea.vmem %s0, %s770
        %p772 = scmp.lt.s32.totalorder %s38, 1
        %s773 = scalar_select %p772, %s38, 1
        %s774 = smul.addr %s773, 8
        %s775 = scalar_lea.vmem %s1, %s774
        %p776 = scmp.lt.s32.totalorder %s38, 1
        %s777 = scalar_select %p776, %s38, 1
        %s778 = smul.addr %s777, 8
        %s779 = scalar_lea.vmem %s2, %s778
        %p780 = scmp.lt.s32.totalorder %s38, 1
        %s781 = scalar_select %p780, %s38, 1
        %s782 = smul.addr %s781, 8
        %s783 = scalar_lea.vmem %s3, %s782
        %v784 = vld [vmem:[%s771] sm:$0xff]
        %v785 = vld [vmem:[%s775] sm:$0xff]
        %v786 = vld [vmem:[%s12] sm:$0x1]
        %v787 = vld [vmem:[%s13] sm:$0x1]
        %vm788 = vcmask 261120
        %v789 = vsel %vm788, %v784, 0.0
        %790 = vadd.xlane.f32.xlu0 %v789
        %v791 = vpop.xlane.xlu0 %790
        %v792 = vrcp.pop 32.0
        %v793 = vmul.f32 %v791, %v792
        %v794 = vsub.f32 %v784, %v793
        %v795 = vmul.f32 %v794, %v794
        %v796 = vsel %vm788, %v795, 0.0
        %797 = vadd.xlane.f32.xlu0 %v796
        %v798 = vpop.xlane.xlu0 %797
        %v799 = vmul.f32 %v798, %v792
        %v800 = vadd.f32 %v799, 1e-06
        %v801 = vrsqrt.pop %v800
        %v802 = vmul.f32 %v794, %v801
        %v804 = vlaneseq
        %v805 = vshrl.u32 %v804, 7
        %v806 = vsub.s32 0, %v805
        %v807 = vrot.slane %v786, %v806
        %v809 = vmul.f32 %v802, %v807
        %v811 = vlaneseq
        %v812 = vshrl.u32 %v811, 7
        %v813 = vsub.s32 0, %v812
        %v814 = vrot.slane %v787, %v813
        %v816 = vadd.f32 %v809, %v814
        %v817 = vld [vmem:[%s779] sm:$0xff]
        %v818 = vld [vmem:[%s4] sm:$0xff]
        %v819 = vld [vmem:[%s4 + $0x8] sm:$0xff]
        %v820 = vld [vmem:[%s4 + $0x10] sm:$0xff]
        %v821 = vld [vmem:[%s4 + $0x18] sm:$0xff]
        %v822 = vld [vmem:[%s5] sm:$0x1]
        %v823 = vld [vmem:[%s6] sm:$0xff]
        %v824 = vld [vmem:[%s6 + $0x8] sm:$0xff]
        %v825 = vld [vmem:[%s6 + $0x10] sm:$0xff]
        %v826 = vld [vmem:[%s6 + $0x18] sm:$0xff]
        %v827 = vld [vmem:[%s7] sm:$0x1]
        %v829 = vlaneseq
        %v830 = vshrl.u32 %v829, 7
        %v831 = vsub.s32 0, %v830
        %v832 = vrot.slane %v822, %v831
        %v835 = vsel %vm788, %v816, 0
        %837 = vmatprep.subr.mxu0 0.0
        %838 = vmatpush1.msra.mxu0 0.0
        %839 = vmatprep.subr.mxu0 0.0
        %840 = vmatpush1.msra.mxu0 0.0
        %841 = vmatprep.subr.mxu0 0.0
        %842 = vmatpush1.msra.mxu0 0.0
        %843 = vmatprep.subr.mxu0 0.0
        %844 = vmatpush1.msra.mxu0 0.0
        %845 = vmatprep.subr.mxu0 0.0
        %846 = vmatpush1.msra.mxu0 0.0
        %847 = vmatprep.subr.mxu0 0.0
        %848 = vmatpush1.msra.mxu0 0.0
        %849 = vmatprep.subr.mxu0 0.0
        %850 = vmatpush1.msra.mxu0 0.0
        %851 = vmatprep.subr.mxu0 0.0
        %852 = vmatpush1.msra.mxu0 0.0
        %853 = vmatprep.subr.mxu0 0.0
        %854 = vmatpush1.msra.mxu0 0.0
        %855 = vmatprep.subr.mxu0 0.0
        %856 = vmatpush1.msra.mxu0 0.0
        %857 = vmatprep.subr.mxu0 0.0
        %858 = vmatpush1.msra.mxu0 0.0
        %859 = vmatprep.subr.mxu0 0.0
        %860 = vmatpush1.msra.mxu0 0.0
        %861 = vmatprep.subr.mxu0 0.0
        %862 = vmatpush1.msra.mxu0 %v821
        %863 = vmatprep.subr.mxu0 0.0
        %864 = vmatpush1.msra.mxu0 %v820
        %865 = vmatprep.subr.mxu0 0.0
        %866 = vmatpush1.msra.mxu0 %v819
        %867 = vmatprep.subr.mxu0 0.0
        %868 = vmatpush1.msra.mxu0 %v818
        %869 = vmatprep.subr.mxu0 0.0
        %870 = vmatpush2.msra.mxu0 0.0
        %871 = vmatprep.subr.mxu0 0.0
        %872 = vmatpush2.msra.mxu0 0.0
        %873 = vmatprep.subr.mxu0 0.0
        %874 = vmatpush2.msra.mxu0 0.0
        %875 = vmatprep.subr.mxu0 0.0
        %876 = vmatpush2.msra.mxu0 0.0
        %877 = vmatprep.subr.mxu0 0.0
        %878 = vmatpush2.msra.mxu0 0.0
        %879 = vmatprep.subr.mxu0 0.0
        %880 = vmatpush2.msra.mxu0 0.0
        %881 = vmatprep.subr.mxu0 0.0
        %882 = vmatpush2.msra.mxu0 0.0
        %883 = vmatprep.subr.mxu0 0.0
        %884 = vmatpush2.msra.mxu0 0.0
        %885 = vmatprep.subr.mxu0 0.0
        %886 = vmatpush2.msra.mxu0 0.0
        %887 = vmatprep.subr.mxu0 0.0
        %888 = vmatpush2.msra.mxu0 0.0
        %889 = vmatprep.subr.mxu0 0.0
        %890 = vmatpush2.msra.mxu0 0.0
        %891 = vmatprep.subr.mxu0 0.0
        %892 = vmatpush2.msra.mxu0 0.0
        %893 = vmatprep.subr.mxu0 0.0
        %894 = vmatpush2.msra.mxu0 0.0
        %895 = vmatprep.subr.mxu0 0.0
        %896 = vmatpush2.msra.mxu0 0.0
        %897 = vmatprep.subr.mxu0 0.0
        %898 = vmatpush2.msra.mxu0 0.0
        %899 = vmatprep.subr.mxu0 0.0
        %900 = vmatpush2.msra.mxu0 0.0
        %901 = vmatprep.mubr.f32.mxu0 0.0
        %902 = vmatmul.mubr.f32.gmra.mxu0 %v835
        %v903 = vpop.f32.mrf.mxu0
        %v904 = vadd.f32 %v832, %v903
        %v905 = vpop.f32.mrf.mxu0
        %906 = vdwg.mxu0
        %908 = vrot.lane.b32.xlu0 %v904, 96
        %v909 = vpop.permute.xlu0 %908
        %vm910 = vcmask 64512
        %v911 = vsel %vm910, %v904, 0
        %v913 = vsel %vm910, %v909, 0
        %915 = vmatprep.subr.mxu0 0.0
        %916 = vmatpush1.xpose.msra.mxu0 0.0
        %917 = vmatprep.subr.mxu0 0.0
        %918 = vmatpush1.xpose.msra.mxu0 0.0
        %919 = vmatprep.subr.mxu0 0.0
        %920 = vmatpush1.xpose.msra.mxu0 0.0
        %921 = vmatprep.subr.mxu0 0.0
        %922 = vmatpush1.xpose.msra.mxu0 0.0
        %923 = vmatprep.subr.mxu0 0.0
        %924 = vmatpush1.xpose.msra.mxu0 0.0
        %925 = vmatprep.subr.mxu0 0.0
        %926 = vmatpush1.xpose.msra.mxu0 0.0
        %927 = vmatprep.subr.mxu0 0.0
        %928 = vmatpush1.xpose.msra.mxu0 0.0
        %929 = vmatprep.subr.mxu0 0.0
        %930 = vmatpush1.xpose.msra.mxu0 0.0
        %931 = vmatprep.subr.mxu0 0.0
        %932 = vmatpush1.xpose.msra.mxu0 0.0
        %933 = vmatprep.subr.mxu0 0.0
        %934 = vmatpush1.xpose.msra.mxu0 0.0
        %935 = vmatprep.subr.mxu0 0.0
        %936 = vmatpush1.xpose.msra.mxu0 0.0
        %937 = vmatprep.subr.mxu0 0.0
        %938 = vmatpush1.xpose.msra.mxu0 0.0
        %939 = vmatprep.subr.mxu0 0.0
        %940 = vmatpush1.xpose.msra.mxu0 0.0
        %941 = vmatprep.subr.mxu0 0.0
        %942 = vmatpush1.xpose.msra.mxu0 0.0
        %943 = vmatprep.subr.mxu0 0.0
        %944 = vmatpush1.xpose.msra.mxu0 0.0
        %945 = vmatprep.subr.mxu0 0.0
        %946 = vmatpush1.xpose.msra.mxu0 %v913
        %947 = vmatprep.subr.mxu0 0.0
        %948 = vmatpush2.xpose.msra.mxu0 0.0
        %949 = vmatprep.subr.mxu0 0.0
        %950 = vmatpush2.xpose.msra.mxu0 0.0
        %951 = vmatprep.subr.mxu0 0.0
        %952 = vmatpush2.xpose.msra.mxu0 0.0
        %953 = vmatprep.subr.mxu0 0.0
        %954 = vmatpush2.xpose.msra.mxu0 0.0
        %955 = vmatprep.subr.mxu0 0.0
        %956 = vmatpush2.xpose.msra.mxu0 0.0
        %957 = vmatprep.subr.mxu0 0.0
        %958 = vmatpush2.xpose.msra.mxu0 0.0
        %959 = vmatprep.subr.mxu0 0.0
        %960 = vmatpush2.xpose.msra.mxu0 0.0
        %961 = vmatprep.subr.mxu0 0.0
        %962 = vmatpush2.xpose.msra.mxu0 0.0
        %963 = vmatprep.subr.mxu0 0.0
        %964 = vmatpush2.xpose.msra.mxu0 0.0
        %965 = vmatprep.subr.mxu0 0.0
        %966 = vmatpush2.xpose.msra.mxu0 0.0
        %967 = vmatprep.subr.mxu0 0.0
        %968 = vmatpush2.xpose.msra.mxu0 0.0
        %969 = vmatprep.subr.mxu0 0.0
        %970 = vmatpush2.xpose.msra.mxu0 0.0
        %971 = vmatprep.subr.mxu0 0.0
        %972 = vmatpush2.xpose.msra.mxu0 0.0
        %973 = vmatprep.subr.mxu0 0.0
        %974 = vmatpush2.xpose.msra.mxu0 0.0
        %975 = vmatprep.subr.mxu0 0.0
        %976 = vmatpush2.xpose.msra.mxu0 0.0
        %977 = vmatprep.subr.mxu0 0.0
        %978 = vmatpush2.xpose.msra.mxu0 0.0
        %979 = vmatprep.mubr.f32.mxu0 0.0
        %980 = vmatmul.mubr.f32.gmra.mxu0 %v911
        %v981 = vpop.f32.mrf.mxu0
        %v982 = vadd.f32 0.0, %v981
        %v983 = vpop.f32.mrf.mxu0
        %984 = vdwg.mxu0
        %v985 = vmul.f32 %v982, 0.35355338
        %v986 = vadd.f32 %v985, %v817
        %v987 = vsel %vm910, %v986, -inf
        %988 = vmax.xlane.f32.xlu0 %v987
        %v989 = vpop.xlane.xlu0 %988
        %v990 = vsub.f32 %v986, %v989
        %v991 = vmul.f32 %v990, 1.442695
        %v992 = vpow.pop %v991
        %v993 = vsel %vm910, %v992, 0.0
        %994 = vadd.xlane.f32.xlu0 %v993
        %v995 = vpop.xlane.xlu0 %994
        %v996 = vrcp.pop %v995
        %v997 = vmul.f32 %v992, %v996
        %998 = vrot.lane.b32.xlu0 %v904, 64
        %v999 = vpop.permute.xlu0 %998
        %v1002 = vsel %vm910, %v997, 0
        %1004 = vmatprep.subr.mxu0 0.0
        %1005 = vmatpush1.msra.mxu0 0.0
        %1006 = vmatprep.subr.mxu0 0.0
        %1007 = vmatpush1.msra.mxu0 0.0
        %1008 = vmatprep.subr.mxu0 0.0
        %1009 = vmatpush1.msra.mxu0 0.0
        %1010 = vmatprep.subr.mxu0 0.0
        %1011 = vmatpush1.msra.mxu0 0.0
        %1012 = vmatprep.subr.mxu0 0.0
        %1013 = vmatpush1.msra.mxu0 0.0
        %1014 = vmatprep.subr.mxu0 0.0
        %1015 = vmatpush1.msra.mxu0 0.0
        %1016 = vmatprep.subr.mxu0 0.0
        %1017 = vmatpush1.msra.mxu0 0.0
        %1018 = vmatprep.subr.mxu0 0.0
        %1019 = vmatpush1.msra.mxu0 0.0
        %1020 = vmatprep.subr.mxu0 0.0
        %1021 = vmatpush1.msra.mxu0 0.0
        %1022 = vmatprep.subr.mxu0 0.0
        %1023 = vmatpush1.msra.mxu0 0.0
        %1024 = vmatprep.subr.mxu0 0.0
        %1025 = vmatpush1.msra.mxu0 0.0
        %1026 = vmatprep.subr.mxu0 0.0
        %1027 = vmatpush1.msra.mxu0 0.0
        %1028 = vmatprep.subr.mxu0 0.0
        %1029 = vmatpush1.msra.mxu0 0.0
        %1030 = vmatprep.subr.mxu0 0.0
        %1031 = vmatpush1.msra.mxu0 0.0
        %1032 = vmatprep.subr.mxu0 0.0
        %1033 = vmatpush1.msra.mxu0 0.0
        %1034 = vmatprep.subr.mxu0 0.0
        %1035 = vmatpush1.msra.mxu0 %v999
        %1036 = vmatprep.subr.mxu0 0.0
        %1037 = vmatpush2.msra.mxu0 0.0
        %1038 = vmatprep.subr.mxu0 0.0
        %1039 = vmatpush2.msra.mxu0 0.0
        %1040 = vmatprep.subr.mxu0 0.0
        %1041 = vmatpush2.msra.mxu0 0.0
        %1042 = vmatprep.subr.mxu0 0.0
        %1043 = vmatpush2.msra.mxu0 0.0
        %1044 = vmatprep.subr.mxu0 0.0
        %1045 = vmatpush2.msra.mxu0 0.0
        %1046 = vmatprep.subr.mxu0 0.0
        %1047 = vmatpush2.msra.mxu0 0.0
        %1048 = vmatprep.subr.mxu0 0.0
        %1049 = vmatpush2.msra.mxu0 0.0
        %1050 = vmatprep.subr.mxu0 0.0
        %1051 = vmatpush2.msra.mxu0 0.0
        %1052 = vmatprep.subr.mxu0 0.0
        %1053 = vmatpush2.msra.mxu0 0.0
        %1054 = vmatprep.subr.mxu0 0.0
        %1055 = vmatpush2.msra.mxu0 0.0
        %1056 = vmatprep.subr.mxu0 0.0
        %1057 = vmatpush2.msra.mxu0 0.0
        %1058 = vmatprep.subr.mxu0 0.0
        %1059 = vmatpush2.msra.mxu0 0.0
        %1060 = vmatprep.subr.mxu0 0.0
        %1061 = vmatpush2.msra.mxu0 0.0
        %1062 = vmatprep.subr.mxu0 0.0
        %1063 = vmatpush2.msra.mxu0 0.0
        %1064 = vmatprep.subr.mxu0 0.0
        %1065 = vmatpush2.msra.mxu0 0.0
        %1066 = vmatprep.subr.mxu0 0.0
        %1067 = vmatpush2.msra.mxu0 0.0
        %1068 = vmatprep.mubr.f32.mxu0 0.0
        %1069 = vmatmul.mubr.f32.gmra.mxu0 %v1002
        %v1070 = vpop.f32.mrf.mxu0
        %v1071 = vadd.f32 0.0, %v1070
        %v1072 = vpop.f32.mrf.mxu0
        %1073 = vdwg.mxu0
        %1074 = vrot.lane.b32.xlu0 %v904, 120
        %v1075 = vpop.permute.xlu0 %1074
        %1076 = vrot.lane.b32.xlu0 %v904, 88
        %v1077 = vpop.permute.xlu0 %1076
        %v1078 = vsel %vm910, %v1075, 0
        %v1080 = vsel %vm910, %v1077, 0
        %1082 = vmatprep.subr.mxu0 0.0
        %1083 = vmatpush1.xpose.msra.mxu0 0.0
        %1084 = vmatprep.subr.mxu0 0.0
        %1085 = vmatpush1.xpose.msra.mxu0 0.0
        %1086 = vmatprep.subr.mxu0 0.0
        %1087 = vmatpush1.xpose.msra.mxu0 0.0
        %1088 = vmatprep.subr.mxu0 0.0
        %1089 = vmatpush1.xpose.msra.mxu0 0.0
        %1090 = vmatprep.subr.mxu0 0.0
        %1091 = vmatpush1.xpose.msra.mxu0 0.0
        %1092 = vmatprep.subr.mxu0 0.0
        %1093 = vmatpush1.xpose.msra.mxu0 0.0
        %1094 = vmatprep.subr.mxu0 0.0
        %1095 = vmatpush1.xpose.msra.mxu0 0.0
        %1096 = vmatprep.subr.mxu0 0.0
        %1097 = vmatpush1.xpose.msra.mxu0 0.0
        %1098 = vmatprep.subr.mxu0 0.0
        %1099 = vmatpush1.xpose.msra.mxu0 0.0
        %1100 = vmatprep.subr.mxu0 0.0
        %1101 = vmatpush1.xpose.msra.mxu0 0.0
        %1102 = vmatprep.subr.mxu0 0.0
        %1103 = vmatpush1.xpose.msra.mxu0 0.0
        %1104 = vmatprep.subr.mxu0 0.0
        %1105 = vmatpush1.xpose.msra.mxu0 0.0
        %1106 = vmatprep.subr.mxu0 0.0
        %1107 = vmatpush1.xpose.msra.mxu0 0.0
        %1108 = vmatprep.subr.mxu0 0.0
        %1109 = vmatpush1.xpose.msra.mxu0 0.0
        %1110 = vmatprep.subr.mxu0 0.0
        %1111 = vmatpush1.xpose.msra.mxu0 0.0
        %1112 = vmatprep.subr.mxu0 0.0
        %1113 = vmatpush1.xpose.msra.mxu0 %v1080
        %1114 = vmatprep.subr.mxu0 0.0
        %1115 = vmatpush2.xpose.msra.mxu0 0.0
        %1116 = vmatprep.subr.mxu0 0.0
        %1117 = vmatpush2.xpose.msra.mxu0 0.0
        %1118 = vmatprep.subr.mxu0 0.0
        %1119 = vmatpush2.xpose.msra.mxu0 0.0
        %1120 = vmatprep.subr.mxu0 0.0
        %1121 = vmatpush2.xpose.msra.mxu0 0.0
        %1122 = vmatprep.subr.mxu0 0.0
        %1123 = vmatpush2.xpose.msra.mxu0 0.0
        %1124 = vmatprep.subr.mxu0 0.0
        %1125 = vmatpush2.xpose.msra.mxu0 0.0
        %1126 = vmatprep.subr.mxu0 0.0
        %1127 = vmatpush2.xpose.msra.mxu0 0.0
        %1128 = vmatprep.subr.mxu0 0.0
        %1129 = vmatpush2.xpose.msra.mxu0 0.0
        %1130 = vmatprep.subr.mxu0 0.0
        %1131 = vmatpush2.xpose.msra.mxu0 0.0
        %1132 = vmatprep.subr.mxu0 0.0
        %1133 = vmatpush2.xpose.msra.mxu0 0.0
        %1134 = vmatprep.subr.mxu0 0.0
        %1135 = vmatpush2.xpose.msra.mxu0 0.0
        %1136 = vmatprep.subr.mxu0 0.0
        %1137 = vmatpush2.xpose.msra.mxu0 0.0
        %1138 = vmatprep.subr.mxu0 0.0
        %1139 = vmatpush2.xpose.msra.mxu0 0.0
        %1140 = vmatprep.subr.mxu0 0.0
        %1141 = vmatpush2.xpose.msra.mxu0 0.0
        %1142 = vmatprep.subr.mxu0 0.0
        %1143 = vmatpush2.xpose.msra.mxu0 0.0
        %1144 = vmatprep.subr.mxu0 0.0
        %1145 = vmatpush2.xpose.msra.mxu0 0.0
        %1146 = vmatprep.mubr.f32.mxu0 0.0
        %1147 = vmatmul.mubr.f32.gmra.mxu0 %v1078
        %v1148 = vpop.f32.mrf.mxu0
        %v1149 = vadd.f32 0.0, %v1148
        %v1150 = vpop.f32.mrf.mxu0
        %1151 = vdwg.mxu0
        %v1152 = vmul.f32 %v1149, 0.35355338
        %v1153 = vadd.f32 %v1152, %v817
        %v1154 = vsel %vm910, %v1153, -inf
        %1155 = vmax.xlane.f32.xlu0 %v1154
        %v1156 = vpop.xlane.xlu0 %1155
        %v1157 = vsub.f32 %v1153, %v1156
        %v1158 = vmul.f32 %v1157, 1.442695
        %v1159 = vpow.pop %v1158
        %v1160 = vsel %vm910, %v1159, 0.0
        %1161 = vadd.xlane.f32.xlu0 %v1160
        %v1162 = vpop.xlane.xlu0 %1161
        %v1163 = vrcp.pop %v1162
        %v1164 = vmul.f32 %v1159, %v1163
        %1165 = vrot.lane.b32.xlu0 %v904, 56
        %v1166 = vpop.permute.xlu0 %1165
        %v1169 = vsel %vm910, %v1164, 0
        %1171 = vmatprep.subr.mxu0 0.0
        %1172 = vmatpush1.msra.mxu0 0.0
        %1173 = vmatprep.subr.mxu0 0.0
        %1174 = vmatpush1.msra.mxu0 0.0
        %1175 = vmatprep.subr.mxu0 0.0
        %1176 = vmatpush1.msra.mxu0 0.0
        %1177 = vmatprep.subr.mxu0 0.0
        %1178 = vmatpush1.msra.mxu0 0.0
        %1179 = vmatprep.subr.mxu0 0.0
        %1180 = vmatpush1.msra.mxu0 0.0
        %1181 = vmatprep.subr.mxu0 0.0
        %1182 = vmatpush1.msra.mxu0 0.0
        %1183 = vmatprep.subr.mxu0 0.0
        %1184 = vmatpush1.msra.mxu0 0.0
        %1185 = vmatprep.subr.mxu0 0.0
        %1186 = vmatpush1.msra.mxu0 0.0
        %1187 = vmatprep.subr.mxu0 0.0
        %1188 = vmatpush1.msra.mxu0 0.0
        %1189 = vmatprep.subr.mxu0 0.0
        %1190 = vmatpush1.msra.mxu0 0.0
        %1191 = vmatprep.subr.mxu0 0.0
        %1192 = vmatpush1.msra.mxu0 0.0
        %1193 = vmatprep.subr.mxu0 0.0
        %1194 = vmatpush1.msra.mxu0 0.0
        %1195 = vmatprep.subr.mxu0 0.0
        %1196 = vmatpush1.msra.mxu0 0.0
        %1197 = vmatprep.subr.mxu0 0.0
        %1198 = vmatpush1.msra.mxu0 0.0
        %1199 = vmatprep.subr.mxu0 0.0
        %1200 = vmatpush1.msra.mxu0 0.0
        %1201 = vmatprep.subr.mxu0 0.0
        %1202 = vmatpush1.msra.mxu0 %v1166
        %1203 = vmatprep.subr.mxu0 0.0
        %1204 = vmatpush2.msra.mxu0 0.0
        %1205 = vmatprep.subr.mxu0 0.0
        %1206 = vmatpush2.msra.mxu0 0.0
        %1207 = vmatprep.subr.mxu0 0.0
        %1208 = vmatpush2.msra.mxu0 0.0
        %1209 = vmatprep.subr.mxu0 0.0
        %1210 = vmatpush2.msra.mxu0 0.0
        %1211 = vmatprep.subr.mxu0 0.0
        %1212 = vmatpush2.msra.mxu0 0.0
        %1213 = vmatprep.subr.mxu0 0.0
        %1214 = vmatpush2.msra.mxu0 0.0
        %1215 = vmatprep.subr.mxu0 0.0
        %1216 = vmatpush2.msra.mxu0 0.0
        %1217 = vmatprep.subr.mxu0 0.0
        %1218 = vmatpush2.msra.mxu0 0.0
        %1219 = vmatprep.subr.mxu0 0.0
        %1220 = vmatpush2.msra.mxu0 0.0
        %1221 = vmatprep.subr.mxu0 0.0
        %1222 = vmatpush2.msra.mxu0 0.0
        %1223 = vmatprep.subr.mxu0 0.0
        %1224 = vmatpush2.msra.mxu0 0.0
        %1225 = vmatprep.subr.mxu0 0.0
        %1226 = vmatpush2.msra.mxu0 0.0
        %1227 = vmatprep.subr.mxu0 0.0
        %1228 = vmatpush2.msra.mxu0 0.0
        %1229 = vmatprep.subr.mxu0 0.0
        %1230 = vmatpush2.msra.mxu0 0.0
        %1231 = vmatprep.subr.mxu0 0.0
        %1232 = vmatpush2.msra.mxu0 0.0
        %1233 = vmatprep.subr.mxu0 0.0
        %1234 = vmatpush2.msra.mxu0 0.0
        %1235 = vmatprep.mubr.f32.mxu0 0.0
        %1236 = vmatmul.mubr.f32.gmra.mxu0 %v1169
        %v1237 = vpop.f32.mrf.mxu0
        %v1238 = vadd.f32 0.0, %v1237
        %v1239 = vpop.f32.mrf.mxu0
        %1240 = vdwg.mxu0
        %v1242 = vsel %vm910, %v1238, 0
        %1244 = vmatprep.subr.mxu0 0.0
        %1245 = vmatpush1.msra.mxu0 0.0
        %1246 = vmatprep.subr.mxu0 0.0
        %1247 = vmatpush1.msra.mxu0 0.0
        %1248 = vmatprep.subr.mxu0 0.0
        %1249 = vmatpush1.msra.mxu0 0.0
        %1250 = vmatprep.subr.mxu0 0.0
        %1251 = vmatpush1.msra.mxu0 0.0
        %1252 = vmatprep.subr.mxu0 0.0
        %1253 = vmatpush1.msra.mxu0 0.0
        %1254 = vmatprep.subr.mxu0 0.0
        %1255 = vmatpush1.msra.mxu0 0.0
        %1256 = vmatprep.subr.mxu0 0.0
        %1257 = vmatpush1.msra.mxu0 0.0
        %1258 = vmatprep.subr.mxu0 0.0
        %1259 = vmatpush1.msra.mxu0 0.0
        %1260 = vmatprep.subr.mxu0 0.0
        %1261 = vmatpush1.msra.mxu0 0.0
        %1262 = vmatprep.subr.mxu0 0.0
        %1263 = vmatpush1.msra.mxu0 0.0
        %1264 = vmatprep.subr.mxu0 0.0
        %1265 = vmatpush1.msra.mxu0 0.0
        %1266 = vmatprep.subr.mxu0 0.0
        %1267 = vmatpush1.msra.mxu0 0.0
        %1268 = vmatprep.subr.mxu0 0.0
        %1269 = vmatpush1.msra.mxu0 0.0
        %1270 = vmatprep.subr.mxu0 0.0
        %1271 = vmatpush1.msra.mxu0 0.0
        %1272 = vmatprep.subr.mxu0 0.0
        %1273 = vmatpush1.msra.mxu0 0.0
        %1274 = vmatprep.subr.mxu0 0.0
        %1275 = vmatpush1.msra.mxu0 %v824
        %1276 = vmatprep.subr.mxu0 0.0
        %1277 = vmatpush2.msra.mxu0 0.0
        %1278 = vmatprep.subr.mxu0 0.0
        %1279 = vmatpush2.msra.mxu0 0.0
        %1280 = vmatprep.subr.mxu0 0.0
        %1281 = vmatpush2.msra.mxu0 0.0
        %1282 = vmatprep.subr.mxu0 0.0
        %1283 = vmatpush2.msra.mxu0 0.0
        %1284 = vmatprep.subr.mxu0 0.0
        %1285 = vmatpush2.msra.mxu0 0.0
        %1286 = vmatprep.subr.mxu0 0.0
        %1287 = vmatpush2.msra.mxu0 0.0
        %1288 = vmatprep.subr.mxu0 0.0
        %1289 = vmatpush2.msra.mxu0 0.0
        %1290 = vmatprep.subr.mxu0 0.0
        %1291 = vmatpush2.msra.mxu0 0.0
        %1292 = vmatprep.subr.mxu0 0.0
        %1293 = vmatpush2.msra.mxu0 0.0
        %1294 = vmatprep.subr.mxu0 0.0
        %1295 = vmatpush2.msra.mxu0 0.0
        %1296 = vmatprep.subr.mxu0 0.0
        %1297 = vmatpush2.msra.mxu0 0.0
        %1298 = vmatprep.subr.mxu0 0.0
        %1299 = vmatpush2.msra.mxu0 0.0
        %1300 = vmatprep.subr.mxu0 0.0
        %1301 = vmatpush2.msra.mxu0 0.0
        %1302 = vmatprep.subr.mxu0 0.0
        %1303 = vmatpush2.msra.mxu0 0.0
        %1304 = vmatprep.subr.mxu0 0.0
        %1305 = vmatpush2.msra.mxu0 0.0
        %1306 = vmatprep.subr.mxu0 0.0
        %1307 = vmatpush2.msra.mxu0 0.0
        %1308 = vmatprep.mubr.f32.mxu0 0.0
        %1309 = vmatmul.mubr.f32.gmra.mxu0 %v1242
        %v1310 = vpop.f32.mrf.mxu0
        %v1311 = vadd.f32 0.0, %v1310
        %v1312 = vpop.f32.mrf.mxu0
        %1313 = vdwg.mxu0
        %v1315 = vsel %vm910, %v1071, 0
        %1317 = vmatprep.subr.mxu0 0.0
        %1318 = vmatpush1.msra.mxu0 0.0
        %1319 = vmatprep.subr.mxu0 0.0
        %1320 = vmatpush1.msra.mxu0 0.0
        %1321 = vmatprep.subr.mxu0 0.0
        %1322 = vmatpush1.msra.mxu0 0.0
        %1323 = vmatprep.subr.mxu0 0.0
        %1324 = vmatpush1.msra.mxu0 0.0
        %1325 = vmatprep.subr.mxu0 0.0
        %1326 = vmatpush1.msra.mxu0 0.0
        %1327 = vmatprep.subr.mxu0 0.0
        %1328 = vmatpush1.msra.mxu0 0.0
        %1329 = vmatprep.subr.mxu0 0.0
        %1330 = vmatpush1.msra.mxu0 0.0
        %1331 = vmatprep.subr.mxu0 0.0
        %1332 = vmatpush1.msra.mxu0 0.0
        %1333 = vmatprep.subr.mxu0 0.0
        %1334 = vmatpush1.msra.mxu0 0.0
        %1335 = vmatprep.subr.mxu0 0.0
        %1336 = vmatpush1.msra.mxu0 0.0
        %1337 = vmatprep.subr.mxu0 0.0
        %1338 = vmatpush1.msra.mxu0 0.0
        %1339 = vmatprep.subr.mxu0 0.0
        %1340 = vmatpush1.msra.mxu0 0.0
        %1341 = vmatprep.subr.mxu0 0.0
        %1342 = vmatpush1.msra.mxu0 0.0
        %1343 = vmatprep.subr.mxu0 0.0
        %1344 = vmatpush1.msra.mxu0 0.0
        %1345 = vmatprep.subr.mxu0 0.0
        %1346 = vmatpush1.msra.mxu0 0.0
        %1347 = vmatprep.subr.mxu0 0.0
        %1348 = vmatpush1.msra.mxu0 %v823
        %1349 = vmatprep.subr.mxu0 0.0
        %1350 = vmatpush2.msra.mxu0 0.0
        %1351 = vmatprep.subr.mxu0 0.0
        %1352 = vmatpush2.msra.mxu0 0.0
        %1353 = vmatprep.subr.mxu0 0.0
        %1354 = vmatpush2.msra.mxu0 0.0
        %1355 = vmatprep.subr.mxu0 0.0
        %1356 = vmatpush2.msra.mxu0 0.0
        %1357 = vmatprep.subr.mxu0 0.0
        %1358 = vmatpush2.msra.mxu0 0.0
        %1359 = vmatprep.subr.mxu0 0.0
        %1360 = vmatpush2.msra.mxu0 0.0
        %1361 = vmatprep.subr.mxu0 0.0
        %1362 = vmatpush2.msra.mxu0 0.0
        %1363 = vmatprep.subr.mxu0 0.0
        %1364 = vmatpush2.msra.mxu0 0.0
        %1365 = vmatprep.subr.mxu0 0.0
        %1366 = vmatpush2.msra.mxu0 0.0
        %1367 = vmatprep.subr.mxu0 0.0
        %1368 = vmatpush2.msra.mxu0 0.0
        %1369 = vmatprep.subr.mxu0 0.0
        %1370 = vmatpush2.msra.mxu0 0.0
        %1371 = vmatprep.subr.mxu0 0.0
        %1372 = vmatpush2.msra.mxu0 0.0
        %1373 = vmatprep.subr.mxu0 0.0
        %1374 = vmatpush2.msra.mxu0 0.0
        %1375 = vmatprep.subr.mxu0 0.0
        %1376 = vmatpush2.msra.mxu0 0.0
        %1377 = vmatprep.subr.mxu0 0.0
        %1378 = vmatpush2.msra.mxu0 0.0
        %1379 = vmatprep.subr.mxu0 0.0
        %1380 = vmatpush2.msra.mxu0 0.0
        %1381 = vmatprep.mubr.f32.mxu0 0.0
        %1382 = vmatmul.mubr.f32.gmra.mxu0 %v1315
        %v1383 = vpop.f32.mrf.mxu0
        %v1384 = vadd.f32 %v1311, %v1383
        %v1385 = vpop.f32.mrf.mxu0
        %1386 = vdwg.mxu0
        %1387 = vrot.lane.b32.xlu0 %v904, 112
        %v1388 = vpop.permute.xlu0 %1387
        %1389 = vrot.lane.b32.xlu0 %v904, 80
        %v1390 = vpop.permute.xlu0 %1389
        %v1391 = vsel %vm910, %v1388, 0
        %v1393 = vsel %vm910, %v1390, 0
        %1395 = vmatprep.subr.mxu0 0.0
        %1396 = vmatpush1.xpose.msra.mxu0 0.0
        %1397 = vmatprep.subr.mxu0 0.0
        %1398 = vmatpush1.xpose.msra.mxu0 0.0
        %1399 = vmatprep.subr.mxu0 0.0
        %1400 = vmatpush1.xpose.msra.mxu0 0.0
        %1401 = vmatprep.subr.mxu0 0.0
        %1402 = vmatpush1.xpose.msra.mxu0 0.0
        %1403 = vmatprep.subr.mxu0 0.0
        %1404 = vmatpush1.xpose.msra.mxu0 0.0
        %1405 = vmatprep.subr.mxu0 0.0
        %1406 = vmatpush1.xpose.msra.mxu0 0.0
        %1407 = vmatprep.subr.mxu0 0.0
        %1408 = vmatpush1.xpose.msra.mxu0 0.0
        %1409 = vmatprep.subr.mxu0 0.0
        %1410 = vmatpush1.xpose.msra.mxu0 0.0
        %1411 = vmatprep.subr.mxu0 0.0
        %1412 = vmatpush1.xpose.msra.mxu0 0.0
        %1413 = vmatprep.subr.mxu0 0.0
        %1414 = vmatpush1.xpose.msra.mxu0 0.0
        %1415 = vmatprep.subr.mxu0 0.0
        %1416 = vmatpush1.xpose.msra.mxu0 0.0
        %1417 = vmatprep.subr.mxu0 0.0
        %1418 = vmatpush1.xpose.msra.mxu0 0.0
        %1419 = vmatprep.subr.mxu0 0.0
        %1420 = vmatpush1.xpose.msra.mxu0 0.0
        %1421 = vmatprep.subr.mxu0 0.0
        %1422 = vmatpush1.xpose.msra.mxu0 0.0
        %1423 = vmatprep.subr.mxu0 0.0
        %1424 = vmatpush1.xpose.msra.mxu0 0.0
        %1425 = vmatprep.subr.mxu0 0.0
        %1426 = vmatpush1.xpose.msra.mxu0 %v1393
        %1427 = vmatprep.subr.mxu0 0.0
        %1428 = vmatpush2.xpose.msra.mxu0 0.0
        %1429 = vmatprep.subr.mxu0 0.0
        %1430 = vmatpush2.xpose.msra.mxu0 0.0
        %1431 = vmatprep.subr.mxu0 0.0
        %1432 = vmatpush2.xpose.msra.mxu0 0.0
        %1433 = vmatprep.subr.mxu0 0.0
        %1434 = vmatpush2.xpose.msra.mxu0 0.0
        %1435 = vmatprep.subr.mxu0 0.0
        %1436 = vmatpush2.xpose.msra.mxu0 0.0
        %1437 = vmatprep.subr.mxu0 0.0
        %1438 = vmatpush2.xpose.msra.mxu0 0.0
        %1439 = vmatprep.subr.mxu0 0.0
        %1440 = vmatpush2.xpose.msra.mxu0 0.0
        %1441 = vmatprep.subr.mxu0 0.0
        %1442 = vmatpush2.xpose.msra.mxu0 0.0
        %1443 = vmatprep.subr.mxu0 0.0
        %1444 = vmatpush2.xpose.msra.mxu0 0.0
        %1445 = vmatprep.subr.mxu0 0.0
        %1446 = vmatpush2.xpose.msra.mxu0 0.0
        %1447 = vmatprep.subr.mxu0 0.0
        %1448 = vmatpush2.xpose.msra.mxu0 0.0
        %1449 = vmatprep.subr.mxu0 0.0
        %1450 = vmatpush2.xpose.msra.mxu0 0.0
        %1451 = vmatprep.subr.mxu0 0.0
        %1452 = vmatpush2.xpose.msra.mxu0 0.0
        %1453 = vmatprep.subr.mxu0 0.0
        %1454 = vmatpush2.xpose.msra.mxu0 0.0
        %1455 = vmatprep.subr.mxu0 0.0
        %1456 = vmatpush2.xpose.msra.mxu0 0.0
        %1457 = vmatprep.subr.mxu0 0.0
        %1458 = vmatpush2.xpose.msra.mxu0 0.0
        %1459 = vmatprep.mubr.f32.mxu0 0.0
        %1460 = vmatmul.mubr.f32.gmra.mxu0 %v1391
        %v1461 = vpop.f32.mrf.mxu0
        %v1462 = vadd.f32 0.0, %v1461
        %v1463 = vpop.f32.mrf.mxu0
        %1464 = vdwg.mxu0
        %v1465 = vmul.f32 %v1462, 0.35355338
        %v1466 = vadd.f32 %v1465, %v817
        %v1467 = vsel %vm910, %v1466, -inf
        %1468 = vmax.xlane.f32.xlu0 %v1467
        %v1469 = vpop.xlane.xlu0 %1468
        %v1470 = vsub.f32 %v1466, %v1469
        %v1471 = vmul.f32 %v1470, 1.442695
        %v1472 = vpow.pop %v1471
        %v1473 = vsel %vm910, %v1472, 0.0
        %1474 = vadd.xlane.f32.xlu0 %v1473
        %v1475 = vpop.xlane.xlu0 %1474
        %v1476 = vrcp.pop %v1475
        %v1477 = vmul.f32 %v1472, %v1476
        %1478 = vrot.lane.b32.xlu0 %v904, 48
        %v1479 = vpop.permute.xlu0 %1478
        %v1482 = vsel %vm910, %v1477, 0
        %1484 = vmatprep.subr.mxu0 0.0
        %1485 = vmatpush1.msra.mxu0 0.0
        %1486 = vmatprep.subr.mxu0 0.0
        %1487 = vmatpush1.msra.mxu0 0.0
        %1488 = vmatprep.subr.mxu0 0.0
        %1489 = vmatpush1.msra.mxu0 0.0
        %1490 = vmatprep.subr.mxu0 0.0
        %1491 = vmatpush1.msra.mxu0 0.0
        %1492 = vmatprep.subr.mxu0 0.0
        %1493 = vmatpush1.msra.mxu0 0.0
        %1494 = vmatprep.subr.mxu0 0.0
        %1495 = vmatpush1.msra.mxu0 0.0
        %1496 = vmatprep.subr.mxu0 0.0
        %1497 = vmatpush1.msra.mxu0 0.0
        %1498 = vmatprep.subr.mxu0 0.0
        %1499 = vmatpush1.msra.mxu0 0.0
        %1500 = vmatprep.subr.mxu0 0.0
        %1501 = vmatpush1.msra.mxu0 0.0
        %1502 = vmatprep.subr.mxu0 0.0
        %1503 = vmatpush1.msra.mxu0 0.0
        %1504 = vmatprep.subr.mxu0 0.0
        %1505 = vmatpush1.msra.mxu0 0.0
        %1506 = vmatprep.subr.mxu0 0.0
        %1507 = vmatpush1.msra.mxu0 0.0
        %1508 = vmatprep.subr.mxu0 0.0
        %1509 = vmatpush1.msra.mxu0 0.0
        %1510 = vmatprep.subr.mxu0 0.0
        %1511 = vmatpush1.msra.mxu0 0.0
        %1512 = vmatprep.subr.mxu0 0.0
        %1513 = vmatpush1.msra.mxu0 0.0
        %1514 = vmatprep.subr.mxu0 0.0
        %1515 = vmatpush1.msra.mxu0 %v1479
        %1516 = vmatprep.subr.mxu0 0.0
        %1517 = vmatpush2.msra.mxu0 0.0
        %1518 = vmatprep.subr.mxu0 0.0
        %1519 = vmatpush2.msra.mxu0 0.0
        %1520 = vmatprep.subr.mxu0 0.0
        %1521 = vmatpush2.msra.mxu0 0.0
        %1522 = vmatprep.subr.mxu0 0.0
        %1523 = vmatpush2.msra.mxu0 0.0
        %1524 = vmatprep.subr.mxu0 0.0
        %1525 = vmatpush2.msra.mxu0 0.0
        %1526 = vmatprep.subr.mxu0 0.0
        %1527 = vmatpush2.msra.mxu0 0.0
        %1528 = vmatprep.subr.mxu0 0.0
        %1529 = vmatpush2.msra.mxu0 0.0
        %1530 = vmatprep.subr.mxu0 0.0
        %1531 = vmatpush2.msra.mxu0 0.0
        %1532 = vmatprep.subr.mxu0 0.0
        %1533 = vmatpush2.msra.mxu0 0.0
        %1534 = vmatprep.subr.mxu0 0.0
        %1535 = vmatpush2.msra.mxu0 0.0
        %1536 = vmatprep.subr.mxu0 0.0
        %1537 = vmatpush2.msra.mxu0 0.0
        %1538 = vmatprep.subr.mxu0 0.0
        %1539 = vmatpush2.msra.mxu0 0.0
        %1540 = vmatprep.subr.mxu0 0.0
        %1541 = vmatpush2.msra.mxu0 0.0
        %1542 = vmatprep.subr.mxu0 0.0
        %1543 = vmatpush2.msra.mxu0 0.0
        %1544 = vmatprep.subr.mxu0 0.0
        %1545 = vmatpush2.msra.mxu0 0.0
        %1546 = vmatprep.subr.mxu0 0.0
        %1547 = vmatpush2.msra.mxu0 0.0
        %1548 = vmatprep.mubr.f32.mxu0 0.0
        %1549 = vmatmul.mubr.f32.gmra.mxu0 %v1482
        %v1550 = vpop.f32.mrf.mxu0
        %v1551 = vadd.f32 0.0, %v1550
        %v1552 = vpop.f32.mrf.mxu0
        %1553 = vdwg.mxu0
        %v1555 = vsel %vm910, %v1551, 0
        %1557 = vmatprep.subr.mxu0 0.0
        %1558 = vmatpush1.msra.mxu0 0.0
        %1559 = vmatprep.subr.mxu0 0.0
        %1560 = vmatpush1.msra.mxu0 0.0
        %1561 = vmatprep.subr.mxu0 0.0
        %1562 = vmatpush1.msra.mxu0 0.0
        %1563 = vmatprep.subr.mxu0 0.0
        %1564 = vmatpush1.msra.mxu0 0.0
        %1565 = vmatprep.subr.mxu0 0.0
        %1566 = vmatpush1.msra.mxu0 0.0
        %1567 = vmatprep.subr.mxu0 0.0
        %1568 = vmatpush1.msra.mxu0 0.0
        %1569 = vmatprep.subr.mxu0 0.0
        %1570 = vmatpush1.msra.mxu0 0.0
        %1571 = vmatprep.subr.mxu0 0.0
        %1572 = vmatpush1.msra.mxu0 0.0
        %1573 = vmatprep.subr.mxu0 0.0
        %1574 = vmatpush1.msra.mxu0 0.0
        %1575 = vmatprep.subr.mxu0 0.0
        %1576 = vmatpush1.msra.mxu0 0.0
        %1577 = vmatprep.subr.mxu0 0.0
        %1578 = vmatpush1.msra.mxu0 0.0
        %1579 = vmatprep.subr.mxu0 0.0
        %1580 = vmatpush1.msra.mxu0 0.0
        %1581 = vmatprep.subr.mxu0 0.0
        %1582 = vmatpush1.msra.mxu0 0.0
        %1583 = vmatprep.subr.mxu0 0.0
        %1584 = vmatpush1.msra.mxu0 0.0
        %1585 = vmatprep.subr.mxu0 0.0
        %1586 = vmatpush1.msra.mxu0 0.0
        %1587 = vmatprep.subr.mxu0 0.0
        %1588 = vmatpush1.msra.mxu0 %v825
        %1589 = vmatprep.subr.mxu0 0.0
        %1590 = vmatpush2.msra.mxu0 0.0
        %1591 = vmatprep.subr.mxu0 0.0
        %1592 = vmatpush2.msra.mxu0 0.0
        %1593 = vmatprep.subr.mxu0 0.0
        %1594 = vmatpush2.msra.mxu0 0.0
        %1595 = vmatprep.subr.mxu0 0.0
        %1596 = vmatpush2.msra.mxu0 0.0
        %1597 = vmatprep.subr.mxu0 0.0
        %1598 = vmatpush2.msra.mxu0 0.0
        %1599 = vmatprep.subr.mxu0 0.0
        %1600 = vmatpush2.msra.mxu0 0.0
        %1601 = vmatprep.subr.mxu0 0.0
        %1602 = vmatpush2.msra.mxu0 0.0
        %1603 = vmatprep.subr.mxu0 0.0
        %1604 = vmatpush2.msra.mxu0 0.0
        %1605 = vmatprep.subr.mxu0 0.0
        %1606 = vmatpush2.msra.mxu0 0.0
        %1607 = vmatprep.subr.mxu0 0.0
        %1608 = vmatpush2.msra.mxu0 0.0
        %1609 = vmatprep.subr.mxu0 0.0
        %1610 = vmatpush2.msra.mxu0 0.0
        %1611 = vmatprep.subr.mxu0 0.0
        %1612 = vmatpush2.msra.mxu0 0.0
        %1613 = vmatprep.subr.mxu0 0.0
        %1614 = vmatpush2.msra.mxu0 0.0
        %1615 = vmatprep.subr.mxu0 0.0
        %1616 = vmatpush2.msra.mxu0 0.0
        %1617 = vmatprep.subr.mxu0 0.0
        %1618 = vmatpush2.msra.mxu0 0.0
        %1619 = vmatprep.subr.mxu0 0.0
        %1620 = vmatpush2.msra.mxu0 0.0
        %1621 = vmatprep.mubr.f32.mxu0 0.0
        %1622 = vmatmul.mubr.f32.gmra.mxu0 %v1555
        %v1623 = vpop.f32.mrf.mxu0
        %v1624 = vadd.f32 0.0, %v1623
        %v1625 = vpop.f32.mrf.mxu0
        %1626 = vdwg.mxu0
        %v1627 = vadd.f32 %v1384, %v1624
        %1628 = vrot.lane.b32.xlu0 %v904, 104
        %v1629 = vpop.permute.xlu0 %1628
        %1630 = vrot.lane.b32.xlu0 %v904, 72
        %v1631 = vpop.permute.xlu0 %1630
        %v1632 = vsel %vm910, %v1629, 0
        %v1634 = vsel %vm910, %v1631, 0
        %1636 = vmatprep.subr.mxu0 0.0
        %1637 = vmatpush1.xpose.msra.mxu0 0.0
        %1638 = vmatprep.subr.mxu0 0.0
        %1639 = vmatpush1.xpose.msra.mxu0 0.0
        %1640 = vmatprep.subr.mxu0 0.0
        %1641 = vmatpush1.xpose.msra.mxu0 0.0
        %1642 = vmatprep.subr.mxu0 0.0
        %1643 = vmatpush1.xpose.msra.mxu0 0.0
        %1644 = vmatprep.subr.mxu0 0.0
        %1645 = vmatpush1.xpose.msra.mxu0 0.0
        %1646 = vmatprep.subr.mxu0 0.0
        %1647 = vmatpush1.xpose.msra.mxu0 0.0
        %1648 = vmatprep.subr.mxu0 0.0
        %1649 = vmatpush1.xpose.msra.mxu0 0.0
        %1650 = vmatprep.subr.mxu0 0.0
        %1651 = vmatpush1.xpose.msra.mxu0 0.0
        %1652 = vmatprep.subr.mxu0 0.0
        %1653 = vmatpush1.xpose.msra.mxu0 0.0
        %1654 = vmatprep.subr.mxu0 0.0
        %1655 = vmatpush1.xpose.msra.mxu0 0.0
        %1656 = vmatprep.subr.mxu0 0.0
        %1657 = vmatpush1.xpose.msra.mxu0 0.0
        %1658 = vmatprep.subr.mxu0 0.0
        %1659 = vmatpush1.xpose.msra.mxu0 0.0
        %1660 = vmatprep.subr.mxu0 0.0
        %1661 = vmatpush1.xpose.msra.mxu0 0.0
        %1662 = vmatprep.subr.mxu0 0.0
        %1663 = vmatpush1.xpose.msra.mxu0 0.0
        %1664 = vmatprep.subr.mxu0 0.0
        %1665 = vmatpush1.xpose.msra.mxu0 0.0
        %1666 = vmatprep.subr.mxu0 0.0
        %1667 = vmatpush1.xpose.msra.mxu0 %v1634
        %1668 = vmatprep.subr.mxu0 0.0
        %1669 = vmatpush2.xpose.msra.mxu0 0.0
        %1670 = vmatprep.subr.mxu0 0.0
        %1671 = vmatpush2.xpose.msra.mxu0 0.0
        %1672 = vmatprep.subr.mxu0 0.0
        %1673 = vmatpush2.xpose.msra.mxu0 0.0
        %1674 = vmatprep.subr.mxu0 0.0
        %1675 = vmatpush2.xpose.msra.mxu0 0.0
        %1676 = vmatprep.subr.mxu0 0.0
        %1677 = vmatpush2.xpose.msra.mxu0 0.0
        %1678 = vmatprep.subr.mxu0 0.0
        %1679 = vmatpush2.xpose.msra.mxu0 0.0
        %1680 = vmatprep.subr.mxu0 0.0
        %1681 = vmatpush2.xpose.msra.mxu0 0.0
        %1682 = vmatprep.subr.mxu0 0.0
        %1683 = vmatpush2.xpose.msra.mxu0 0.0
        %1684 = vmatprep.subr.mxu0 0.0
        %1685 = vmatpush2.xpose.msra.mxu0 0.0
        %1686 = vmatprep.subr.mxu0 0.0
        %1687 = vmatpush2.xpose.msra.mxu0 0.0
        %1688 = vmatprep.subr.mxu0 0.0
        %1689 = vmatpush2.xpose.msra.mxu0 0.0
        %1690 = vmatprep.subr.mxu0 0.0
        %1691 = vmatpush2.xpose.msra.mxu0 0.0
        %1692 = vmatprep.subr.mxu0 0.0
        %1693 = vmatpush2.xpose.msra.mxu0 0.0
        %1694 = vmatprep.subr.mxu0 0.0
        %1695 = vmatpush2.xpose.msra.mxu0 0.0
        %1696 = vmatprep.subr.mxu0 0.0
        %1697 = vmatpush2.xpose.msra.mxu0 0.0
        %1698 = vmatprep.subr.mxu0 0.0
        %1699 = vmatpush2.xpose.msra.mxu0 0.0
        %1700 = vmatprep.mubr.f32.mxu0 0.0
        %1701 = vmatmul.mubr.f32.gmra.mxu0 %v1632
        %v1702 = vpop.f32.mrf.mxu0
        %v1703 = vadd.f32 0.0, %v1702
        %v1704 = vpop.f32.mrf.mxu0
        %1705 = vdwg.mxu0
        %v1706 = vmul.f32 %v1703, 0.35355338
        %v1707 = vadd.f32 %v1706, %v817
        %v1708 = vsel %vm910, %v1707, -inf
        %1709 = vmax.xlane.f32.xlu0 %v1708
        %v1710 = vpop.xlane.xlu0 %1709
        %v1711 = vsub.f32 %v1707, %v1710
        %v1712 = vmul.f32 %v1711, 1.442695
        %v1713 = vpow.pop %v1712
        %v1714 = vsel %vm910, %v1713, 0.0
        %1715 = vadd.xlane.f32.xlu0 %v1714
        %v1716 = vpop.xlane.xlu0 %1715
        %v1717 = vrcp.pop %v1716
        %v1718 = vmul.f32 %v1713, %v1717
        %1719 = vrot.lane.b32.xlu0 %v904, 40
        %v1720 = vpop.permute.xlu0 %1719
        %v1723 = vsel %vm910, %v1718, 0
        %1725 = vmatprep.subr.mxu0 0.0
        %1726 = vmatpush1.msra.mxu0 0.0
        %1727 = vmatprep.subr.mxu0 0.0
        %1728 = vmatpush1.msra.mxu0 0.0
        %1729 = vmatprep.subr.mxu0 0.0
        %1730 = vmatpush1.msra.mxu0 0.0
        %1731 = vmatprep.subr.mxu0 0.0
        %1732 = vmatpush1.msra.mxu0 0.0
        %1733 = vmatprep.subr.mxu0 0.0
        %1734 = vmatpush1.msra.mxu0 0.0
        %1735 = vmatprep.subr.mxu0 0.0
        %1736 = vmatpush1.msra.mxu0 0.0
        %1737 = vmatprep.subr.mxu0 0.0
        %1738 = vmatpush1.msra.mxu0 0.0
        %1739 = vmatprep.subr.mxu0 0.0
        %1740 = vmatpush1.msra.mxu0 0.0
        %1741 = vmatprep.subr.mxu0 0.0
        %1742 = vmatpush1.msra.mxu0 0.0
        %1743 = vmatprep.subr.mxu0 0.0
        %1744 = vmatpush1.msra.mxu0 0.0
        %1745 = vmatprep.subr.mxu0 0.0
        %1746 = vmatpush1.msra.mxu0 0.0
        %1747 = vmatprep.subr.mxu0 0.0
        %1748 = vmatpush1.msra.mxu0 0.0
        %1749 = vmatprep.subr.mxu0 0.0
        %1750 = vmatpush1.msra.mxu0 0.0
        %1751 = vmatprep.subr.mxu0 0.0
        %1752 = vmatpush1.msra.mxu0 0.0
        %1753 = vmatprep.subr.mxu0 0.0
        %1754 = vmatpush1.msra.mxu0 0.0
        %1755 = vmatprep.subr.mxu0 0.0
        %1756 = vmatpush1.msra.mxu0 %v1720
        %1757 = vmatprep.subr.mxu0 0.0
        %1758 = vmatpush2.msra.mxu0 0.0
        %1759 = vmatprep.subr.mxu0 0.0
        %1760 = vmatpush2.msra.mxu0 0.0
        %1761 = vmatprep.subr.mxu0 0.0
        %1762 = vmatpush2.msra.mxu0 0.0
        %1763 = vmatprep.subr.mxu0 0.0
        %1764 = vmatpush2.msra.mxu0 0.0
        %1765 = vmatprep.subr.mxu0 0.0
        %1766 = vmatpush2.msra.mxu0 0.0
        %1767 = vmatprep.subr.mxu0 0.0
        %1768 = vmatpush2.msra.mxu0 0.0
        %1769 = vmatprep.subr.mxu0 0.0
        %1770 = vmatpush2.msra.mxu0 0.0
        %1771 = vmatprep.subr.mxu0 0.0
        %1772 = vmatpush2.msra.mxu0 0.0
        %1773 = vmatprep.subr.mxu0 0.0
        %1774 = vmatpush2.msra.mxu0 0.0
        %1775 = vmatprep.subr.mxu0 0.0
        %1776 = vmatpush2.msra.mxu0 0.0
        %1777 = vmatprep.subr.mxu0 0.0
        %1778 = vmatpush2.msra.mxu0 0.0
        %1779 = vmatprep.subr.mxu0 0.0
        %1780 = vmatpush2.msra.mxu0 0.0
        %1781 = vmatprep.subr.mxu0 0.0
        %1782 = vmatpush2.msra.mxu0 0.0
        %1783 = vmatprep.subr.mxu0 0.0
        %1784 = vmatpush2.msra.mxu0 0.0
        %1785 = vmatprep.subr.mxu0 0.0
        %1786 = vmatpush2.msra.mxu0 0.0
        %1787 = vmatprep.subr.mxu0 0.0
        %1788 = vmatpush2.msra.mxu0 0.0
        %1789 = vmatprep.mubr.f32.mxu0 0.0
        %1790 = vmatmul.mubr.f32.gmra.mxu0 %v1723
        %v1791 = vpop.f32.mrf.mxu0
        %v1792 = vadd.f32 0.0, %v1791
        %v1793 = vpop.f32.mrf.mxu0
        %1794 = vdwg.mxu0
        %v1796 = vsel %vm910, %v1792, 0
        %1798 = vmatprep.subr.mxu0 0.0
        %1799 = vmatpush1.msra.mxu0 0.0
        %1800 = vmatprep.subr.mxu0 0.0
        %1801 = vmatpush1.msra.mxu0 0.0
        %1802 = vmatprep.subr.mxu0 0.0
        %1803 = vmatpush1.msra.mxu0 0.0
        %1804 = vmatprep.subr.mxu0 0.0
        %1805 = vmatpush1.msra.mxu0 0.0
        %1806 = vmatprep.subr.mxu0 0.0
        %1807 = vmatpush1.msra.mxu0 0.0
        %1808 = vmatprep.subr.mxu0 0.0
        %1809 = vmatpush1.msra.mxu0 0.0
        %1810 = vmatprep.subr.mxu0 0.0
        %1811 = vmatpush1.msra.mxu0 0.0
        %1812 = vmatprep.subr.mxu0 0.0
        %1813 = vmatpush1.msra.mxu0 0.0
        %1814 = vmatprep.subr.mxu0 0.0
        %1815 = vmatpush1.msra.mxu0 0.0
        %1816 = vmatprep.subr.mxu0 0.0
        %1817 = vmatpush1.msra.mxu0 0.0
        %1818 = vmatprep.subr.mxu0 0.0
        %1819 = vmatpush1.msra.mxu0 0.0
        %1820 = vmatprep.subr.mxu0 0.0
        %1821 = vmatpush1.msra.mxu0 0.0
        %1822 = vmatprep.subr.mxu0 0.0
        %1823 = vmatpush1.msra.mxu0 0.0
        %1824 = vmatprep.subr.mxu0 0.0
        %1825 = vmatpush1.msra.mxu0 0.0
        %1826 = vmatprep.subr.mxu0 0.0
        %1827 = vmatpush1.msra.mxu0 0.0
        %1828 = vmatprep.subr.mxu0 0.0
        %1829 = vmatpush1.msra.mxu0 %v826
        %1830 = vmatprep.subr.mxu0 0.0
        %1831 = vmatpush2.msra.mxu0 0.0
        %1832 = vmatprep.subr.mxu0 0.0
        %1833 = vmatpush2.msra.mxu0 0.0
        %1834 = vmatprep.subr.mxu0 0.0
        %1835 = vmatpush2.msra.mxu0 0.0
        %1836 = vmatprep.subr.mxu0 0.0
        %1837 = vmatpush2.msra.mxu0 0.0
        %1838 = vmatprep.subr.mxu0 0.0
        %1839 = vmatpush2.msra.mxu0 0.0
        %1840 = vmatprep.subr.mxu0 0.0
        %1841 = vmatpush2.msra.mxu0 0.0
        %1842 = vmatprep.subr.mxu0 0.0
        %1843 = vmatpush2.msra.mxu0 0.0
        %1844 = vmatprep.subr.mxu0 0.0
        %1845 = vmatpush2.msra.mxu0 0.0
        %1846 = vmatprep.subr.mxu0 0.0
        %1847 = vmatpush2.msra.mxu0 0.0
        %1848 = vmatprep.subr.mxu0 0.0
        %1849 = vmatpush2.msra.mxu0 0.0
        %1850 = vmatprep.subr.mxu0 0.0
        %1851 = vmatpush2.msra.mxu0 0.0
        %1852 = vmatprep.subr.mxu0 0.0
        %1853 = vmatpush2.msra.mxu0 0.0
        %1854 = vmatprep.subr.mxu0 0.0
        %1855 = vmatpush2.msra.mxu0 0.0
        %1856 = vmatprep.subr.mxu0 0.0
        %1857 = vmatpush2.msra.mxu0 0.0
        %1858 = vmatprep.subr.mxu0 0.0
        %1859 = vmatpush2.msra.mxu0 0.0
        %1860 = vmatprep.subr.mxu0 0.0
        %1861 = vmatpush2.msra.mxu0 0.0
        %1862 = vmatprep.mubr.f32.mxu0 0.0
        %1863 = vmatmul.mubr.f32.gmra.mxu0 %v1796
        %v1864 = vpop.f32.mrf.mxu0
        %v1865 = vadd.f32 0.0, %v1864
        %v1866 = vpop.f32.mrf.mxu0
        %1867 = vdwg.mxu0
        %v1868 = vadd.f32 %v1627, %v1865
        %v1870 = vlaneseq
        %v1871 = vshrl.u32 %v1870, 7
        %v1872 = vsub.s32 0, %v1871
        %v1873 = vrot.slane %v827, %v1872
        %v1875 = vadd.f32 %v1868, %v1873
        %v1876 = vadd.f32 %v784, %v1875
        %v1877 = vld [vmem:[%s14] sm:$0x1]
        %v1878 = vld [vmem:[%s15] sm:$0x1]
        %v1879 = vsel %vm788, %v1876, 0.0
        %1880 = vadd.xlane.f32.xlu0 %v1879
        %v1881 = vpop.xlane.xlu0 %1880
        %v1882 = vmul.f32 %v1881, %v792
        %v1883 = vsub.f32 %v1876, %v1882
        %v1884 = vmul.f32 %v1883, %v1883
        %v1885 = vsel %vm788, %v1884, 0.0
        %1886 = vadd.xlane.f32.xlu0 %v1885
        %v1887 = vpop.xlane.xlu0 %1886
        %v1888 = vmul.f32 %v1887, %v792
        %v1889 = vadd.f32 %v1888, 1e-06
        %v1890 = vrsqrt.pop %v1889
        %v1891 = vmul.f32 %v1883, %v1890
        %v1893 = vlaneseq
        %v1894 = vshrl.u32 %v1893, 7
        %v1895 = vsub.s32 0, %v1894
        %v1896 = vrot.slane %v1877, %v1895
        %v1898 = vmul.f32 %v1891, %v1896
        %v1900 = vlaneseq
        %v1901 = vshrl.u32 %v1900, 7
        %v1902 = vsub.s32 0, %v1901
        %v1903 = vrot.slane %v1878, %v1902
        %v1905 = vadd.f32 %v1898, %v1903
        %v1906 = vld [vmem:[%s783] sm:$0xff]
        %v1907 = vld [vmem:[%s8] sm:$0xff]
        %v1908 = vld [vmem:[%s8 + $0x8] sm:$0xff]
        %v1909 = vld [vmem:[%s8 + $0x10] sm:$0xff]
        %v1910 = vld [vmem:[%s8 + $0x18] sm:$0xff]
        %v1911 = vld [vmem:[%s9] sm:$0x1]
        %v1912 = vld [vmem:[%s10] sm:$0xff]
        %v1913 = vld [vmem:[%s10 + $0x8] sm:$0xff]
        %v1914 = vld [vmem:[%s10 + $0x10] sm:$0xff]
        %v1915 = vld [vmem:[%s10 + $0x18] sm:$0xff]
        %v1916 = vld [vmem:[%s11] sm:$0x1]
        %v1918 = vlaneseq
        %v1919 = vshrl.u32 %v1918, 7
        %v1920 = vsub.s32 0, %v1919
        %v1921 = vrot.slane %v1911, %v1920
        %v1924 = vsel %vm788, %v1905, 0
        %1926 = vmatprep.subr.mxu0 0.0
        %1927 = vmatpush1.msra.mxu0 0.0
        %1928 = vmatprep.subr.mxu0 0.0
        %1929 = vmatpush1.msra.mxu0 0.0
        %1930 = vmatprep.subr.mxu0 0.0
        %1931 = vmatpush1.msra.mxu0 0.0
        %1932 = vmatprep.subr.mxu0 0.0
        %1933 = vmatpush1.msra.mxu0 0.0
        %1934 = vmatprep.subr.mxu0 0.0
        %1935 = vmatpush1.msra.mxu0 0.0
        %1936 = vmatprep.subr.mxu0 0.0
        %1937 = vmatpush1.msra.mxu0 0.0
        %1938 = vmatprep.subr.mxu0 0.0
        %1939 = vmatpush1.msra.mxu0 0.0
        %1940 = vmatprep.subr.mxu0 0.0
        %1941 = vmatpush1.msra.mxu0 0.0
        %1942 = vmatprep.subr.mxu0 0.0
        %1943 = vmatpush1.msra.mxu0 0.0
        %1944 = vmatprep.subr.mxu0 0.0
        %1945 = vmatpush1.msra.mxu0 0.0
        %1946 = vmatprep.subr.mxu0 0.0
        %1947 = vmatpush1.msra.mxu0 0.0
        %1948 = vmatprep.subr.mxu0 0.0
        %1949 = vmatpush1.msra.mxu0 0.0
        %1950 = vmatprep.subr.mxu0 0.0
        %1951 = vmatpush1.msra.mxu0 %v1910
        %1952 = vmatprep.subr.mxu0 0.0
        %1953 = vmatpush1.msra.mxu0 %v1909
        %1954 = vmatprep.subr.mxu0 0.0
        %1955 = vmatpush1.msra.mxu0 %v1908
        %1956 = vmatprep.subr.mxu0 0.0
        %1957 = vmatpush1.msra.mxu0 %v1907
        %1958 = vmatprep.subr.mxu0 0.0
        %1959 = vmatpush2.msra.mxu0 0.0
        %1960 = vmatprep.subr.mxu0 0.0
        %1961 = vmatpush2.msra.mxu0 0.0
        %1962 = vmatprep.subr.mxu0 0.0
        %1963 = vmatpush2.msra.mxu0 0.0
        %1964 = vmatprep.subr.mxu0 0.0
        %1965 = vmatpush2.msra.mxu0 0.0
        %1966 = vmatprep.subr.mxu0 0.0
        %1967 = vmatpush2.msra.mxu0 0.0
        %1968 = vmatprep.subr.mxu0 0.0
        %1969 = vmatpush2.msra.mxu0 0.0
        %1970 = vmatprep.subr.mxu0 0.0
        %1971 = vmatpush2.msra.mxu0 0.0
        %1972 = vmatprep.subr.mxu0 0.0
        %1973 = vmatpush2.msra.mxu0 0.0
        %1974 = vmatprep.subr.mxu0 0.0
        %1975 = vmatpush2.msra.mxu0 0.0
        %1976 = vmatprep.subr.mxu0 0.0
        %1977 = vmatpush2.msra.mxu0 0.0
        %1978 = vmatprep.subr.mxu0 0.0
        %1979 = vmatpush2.msra.mxu0 0.0
        %1980 = vmatprep.subr.mxu0 0.0
        %1981 = vmatpush2.msra.mxu0 0.0
        %1982 = vmatprep.subr.mxu0 0.0
        %1983 = vmatpush2.msra.mxu0 0.0
        %1984 = vmatprep.subr.mxu0 0.0
        %1985 = vmatpush2.msra.mxu0 0.0
        %1986 = vmatprep.subr.mxu0 0.0
        %1987 = vmatpush2.msra.mxu0 0.0
        %1988 = vmatprep.subr.mxu0 0.0
        %1989 = vmatpush2.msra.mxu0 0.0
        %1990 = vmatprep.mubr.f32.mxu0 0.0
        %1991 = vmatmul.mubr.f32.gmra.mxu0 %v1924
        %v1992 = vpop.f32.mrf.mxu0
        %v1993 = vadd.f32 %v1921, %v1992
        %v1994 = vpop.f32.mrf.mxu0
        %1995 = vdwg.mxu0
        %v1997 = vsel %vm788, %v785, 0
        %1999 = vmatprep.subr.mxu0 0.0
        %2000 = vmatpush1.msra.mxu0 0.0
        %2001 = vmatprep.subr.mxu0 0.0
        %2002 = vmatpush1.msra.mxu0 0.0
        %2003 = vmatprep.subr.mxu0 0.0
        %2004 = vmatpush1.msra.mxu0 0.0
        %2005 = vmatprep.subr.mxu0 0.0
        %2006 = vmatpush1.msra.mxu0 0.0
        %2007 = vmatprep.subr.mxu0 0.0
        %2008 = vmatpush1.msra.mxu0 0.0
        %2009 = vmatprep.subr.mxu0 0.0
        %2010 = vmatpush1.msra.mxu0 0.0
        %2011 = vmatprep.subr.mxu0 0.0
        %2012 = vmatpush1.msra.mxu0 0.0
        %2013 = vmatprep.subr.mxu0 0.0
        %2014 = vmatpush1.msra.mxu0 0.0
        %2015 = vmatprep.subr.mxu0 0.0
        %2016 = vmatpush1.msra.mxu0 0.0
        %2017 = vmatprep.subr.mxu0 0.0
        %2018 = vmatpush1.msra.mxu0 0.0
        %2019 = vmatprep.subr.mxu0 0.0
        %2020 = vmatpush1.msra.mxu0 0.0
        %2021 = vmatprep.subr.mxu0 0.0
        %2022 = vmatpush1.msra.mxu0 0.0
        %2023 = vmatprep.subr.mxu0 0.0
        %2024 = vmatpush1.msra.mxu0 %v1910
        %2025 = vmatprep.subr.mxu0 0.0
        %2026 = vmatpush1.msra.mxu0 %v1909
        %2027 = vmatprep.subr.mxu0 0.0
        %2028 = vmatpush1.msra.mxu0 %v1908
        %2029 = vmatprep.subr.mxu0 0.0
        %2030 = vmatpush1.msra.mxu0 %v1907
        %2031 = vmatprep.subr.mxu0 0.0
        %2032 = vmatpush2.msra.mxu0 0.0
        %2033 = vmatprep.subr.mxu0 0.0
        %2034 = vmatpush2.msra.mxu0 0.0
        %2035 = vmatprep.subr.mxu0 0.0
        %2036 = vmatpush2.msra.mxu0 0.0
        %2037 = vmatprep.subr.mxu0 0.0
        %2038 = vmatpush2.msra.mxu0 0.0
        %2039 = vmatprep.subr.mxu0 0.0
        %2040 = vmatpush2.msra.mxu0 0.0
        %2041 = vmatprep.subr.mxu0 0.0
        %2042 = vmatpush2.msra.mxu0 0.0
        %2043 = vmatprep.subr.mxu0 0.0
        %2044 = vmatpush2.msra.mxu0 0.0
        %2045 = vmatprep.subr.mxu0 0.0
        %2046 = vmatpush2.msra.mxu0 0.0
        %2047 = vmatprep.subr.mxu0 0.0
        %2048 = vmatpush2.msra.mxu0 0.0
        %2049 = vmatprep.subr.mxu0 0.0
        %2050 = vmatpush2.msra.mxu0 0.0
        %2051 = vmatprep.subr.mxu0 0.0
        %2052 = vmatpush2.msra.mxu0 0.0
        %2053 = vmatprep.subr.mxu0 0.0
        %2054 = vmatpush2.msra.mxu0 0.0
        %2055 = vmatprep.subr.mxu0 0.0
        %2056 = vmatpush2.msra.mxu0 0.0
        %2057 = vmatprep.subr.mxu0 0.0
        %2058 = vmatpush2.msra.mxu0 0.0
        %2059 = vmatprep.subr.mxu0 0.0
        %2060 = vmatpush2.msra.mxu0 0.0
        %2061 = vmatprep.subr.mxu0 0.0
        %2062 = vmatpush2.msra.mxu0 0.0
        %2063 = vmatprep.mubr.f32.mxu0 0.0
        %2064 = vmatmul.mubr.f32.gmra.mxu0 %v1997
        %v2065 = vpop.f32.mrf.mxu0
        %v2066 = vadd.f32 %v1921, %v2065
        %v2067 = vpop.f32.mrf.mxu0
        %2068 = vdwg.mxu0
        %2070 = vrot.lane.b32.xlu0 %v2066, 96
        %v2071 = vpop.permute.xlu0 %2070
        %v2073 = vsel %vm910, %v1993, 0
        %v2075 = vsel %vm910, %v2071, 0
        %2077 = vmatprep.subr.mxu0 0.0
        %2078 = vmatpush1.xpose.msra.mxu0 0.0
        %2079 = vmatprep.subr.mxu0 0.0
        %2080 = vmatpush1.xpose.msra.mxu0 0.0
        %2081 = vmatprep.subr.mxu0 0.0
        %2082 = vmatpush1.xpose.msra.mxu0 0.0
        %2083 = vmatprep.subr.mxu0 0.0
        %2084 = vmatpush1.xpose.msra.mxu0 0.0
        %2085 = vmatprep.subr.mxu0 0.0
        %2086 = vmatpush1.xpose.msra.mxu0 0.0
        %2087 = vmatprep.subr.mxu0 0.0
        %2088 = vmatpush1.xpose.msra.mxu0 0.0
        %2089 = vmatprep.subr.mxu0 0.0
        %2090 = vmatpush1.xpose.msra.mxu0 0.0
        %2091 = vmatprep.subr.mxu0 0.0
        %2092 = vmatpush1.xpose.msra.mxu0 0.0
        %2093 = vmatprep.subr.mxu0 0.0
        %2094 = vmatpush1.xpose.msra.mxu0 0.0
        %2095 = vmatprep.subr.mxu0 0.0
        %2096 = vmatpush1.xpose.msra.mxu0 0.0
        %2097 = vmatprep.subr.mxu0 0.0
        %2098 = vmatpush1.xpose.msra.mxu0 0.0
        %2099 = vmatprep.subr.mxu0 0.0
        %2100 = vmatpush1.xpose.msra.mxu0 0.0
        %2101 = vmatprep.subr.mxu0 0.0
        %2102 = vmatpush1.xpose.msra.mxu0 0.0
        %2103 = vmatprep.subr.mxu0 0.0
        %2104 = vmatpush1.xpose.msra.mxu0 0.0
        %2105 = vmatprep.subr.mxu0 0.0
        %2106 = vmatpush1.xpose.msra.mxu0 0.0
        %2107 = vmatprep.subr.mxu0 0.0
        %2108 = vmatpush1.xpose.msra.mxu0 %v2075
        %2109 = vmatprep.subr.mxu0 0.0
        %2110 = vmatpush2.xpose.msra.mxu0 0.0
        %2111 = vmatprep.subr.mxu0 0.0
        %2112 = vmatpush2.xpose.msra.mxu0 0.0
        %2113 = vmatprep.subr.mxu0 0.0
        %2114 = vmatpush2.xpose.msra.mxu0 0.0
        %2115 = vmatprep.subr.mxu0 0.0
        %2116 = vmatpush2.xpose.msra.mxu0 0.0
        %2117 = vmatprep.subr.mxu0 0.0
        %2118 = vmatpush2.xpose.msra.mxu0 0.0
        %2119 = vmatprep.subr.mxu0 0.0
        %2120 = vmatpush2.xpose.msra.mxu0 0.0
        %2121 = vmatprep.subr.mxu0 0.0
        %2122 = vmatpush2.xpose.msra.mxu0 0.0
        %2123 = vmatprep.subr.mxu0 0.0
        %2124 = vmatpush2.xpose.msra.mxu0 0.0
        %2125 = vmatprep.subr.mxu0 0.0
        %2126 = vmatpush2.xpose.msra.mxu0 0.0
        %2127 = vmatprep.subr.mxu0 0.0
        %2128 = vmatpush2.xpose.msra.mxu0 0.0
        %2129 = vmatprep.subr.mxu0 0.0
        %2130 = vmatpush2.xpose.msra.mxu0 0.0
        %2131 = vmatprep.subr.mxu0 0.0
        %2132 = vmatpush2.xpose.msra.mxu0 0.0
        %2133 = vmatprep.subr.mxu0 0.0
        %2134 = vmatpush2.xpose.msra.mxu0 0.0
        %2135 = vmatprep.subr.mxu0 0.0
        %2136 = vmatpush2.xpose.msra.mxu0 0.0
        %2137 = vmatprep.subr.mxu0 0.0
        %2138 = vmatpush2.xpose.msra.mxu0 0.0
        %2139 = vmatprep.subr.mxu0 0.0
        %2140 = vmatpush2.xpose.msra.mxu0 0.0
        %2141 = vmatprep.mubr.f32.mxu0 0.0
        %2142 = vmatmul.mubr.f32.gmra.mxu0 %v2073
        %v2143 = vpop.f32.mrf.mxu0
        %v2144 = vadd.f32 0.0, %v2143
        %v2145 = vpop.f32.mrf.mxu0
        %2146 = vdwg.mxu0
        %v2147 = vmul.f32 %v2144, 0.35355338
        %v2148 = vadd.f32 %v2147, %v1906
        %v2149 = vsel %vm910, %v2148, -inf
        %2150 = vmax.xlane.f32.xlu0 %v2149
        %v2151 = vpop.xlane.xlu0 %2150
        %v2152 = vsub.f32 %v2148, %v2151
        %v2153 = vmul.f32 %v2152, 1.442695
        %v2154 = vpow.pop %v2153
        %v2155 = vsel %vm910, %v2154, 0.0
        %2156 = vadd.xlane.f32.xlu0 %v2155
        %v2157 = vpop.xlane.xlu0 %2156
        %v2158 = vrcp.pop %v2157
        %v2159 = vmul.f32 %v2154, %v2158
        %2160 = vrot.lane.b32.xlu0 %v2066, 64
        %v2161 = vpop.permute.xlu0 %2160
        %v2164 = vsel %vm910, %v2159, 0
        %2166 = vmatprep.subr.mxu0 0.0
        %2167 = vmatpush1.msra.mxu0 0.0
        %2168 = vmatprep.subr.mxu0 0.0
        %2169 = vmatpush1.msra.mxu0 0.0
        %2170 = vmatprep.subr.mxu0 0.0
        %2171 = vmatpush1.msra.mxu0 0.0
        %2172 = vmatprep.subr.mxu0 0.0
        %2173 = vmatpush1.msra.mxu0 0.0
        %2174 = vmatprep.subr.mxu0 0.0
        %2175 = vmatpush1.msra.mxu0 0.0
        %2176 = vmatprep.subr.mxu0 0.0
        %2177 = vmatpush1.msra.mxu0 0.0
        %2178 = vmatprep.subr.mxu0 0.0
        %2179 = vmatpush1.msra.mxu0 0.0
        %2180 = vmatprep.subr.mxu0 0.0
        %2181 = vmatpush1.msra.mxu0 0.0
        %2182 = vmatprep.subr.mxu0 0.0
        %2183 = vmatpush1.msra.mxu0 0.0
        %2184 = vmatprep.subr.mxu0 0.0
        %2185 = vmatpush1.msra.mxu0 0.0
        %2186 = vmatprep.subr.mxu0 0.0
        %2187 = vmatpush1.msra.mxu0 0.0
        %2188 = vmatprep.subr.mxu0 0.0
        %2189 = vmatpush1.msra.mxu0 0.0
        %2190 = vmatprep.subr.mxu0 0.0
        %2191 = vmatpush1.msra.mxu0 0.0
        %2192 = vmatprep.subr.mxu0 0.0
        %2193 = vmatpush1.msra.mxu0 0.0
        %2194 = vmatprep.subr.mxu0 0.0
        %2195 = vmatpush1.msra.mxu0 0.0
        %2196 = vmatprep.subr.mxu0 0.0
        %2197 = vmatpush1.msra.mxu0 %v2161
        %2198 = vmatprep.subr.mxu0 0.0
        %2199 = vmatpush2.msra.mxu0 0.0
        %2200 = vmatprep.subr.mxu0 0.0
        %2201 = vmatpush2.msra.mxu0 0.0
        %2202 = vmatprep.subr.mxu0 0.0
        %2203 = vmatpush2.msra.mxu0 0.0
        %2204 = vmatprep.subr.mxu0 0.0
        %2205 = vmatpush2.msra.mxu0 0.0
        %2206 = vmatprep.subr.mxu0 0.0
        %2207 = vmatpush2.msra.mxu0 0.0
        %2208 = vmatprep.subr.mxu0 0.0
        %2209 = vmatpush2.msra.mxu0 0.0
        %2210 = vmatprep.subr.mxu0 0.0
        %2211 = vmatpush2.msra.mxu0 0.0
        %2212 = vmatprep.subr.mxu0 0.0
        %2213 = vmatpush2.msra.mxu0 0.0
        %2214 = vmatprep.subr.mxu0 0.0
        %2215 = vmatpush2.msra.mxu0 0.0
        %2216 = vmatprep.subr.mxu0 0.0
        %2217 = vmatpush2.msra.mxu0 0.0
        %2218 = vmatprep.subr.mxu0 0.0
        %2219 = vmatpush2.msra.mxu0 0.0
        %2220 = vmatprep.subr.mxu0 0.0
        %2221 = vmatpush2.msra.mxu0 0.0
        %2222 = vmatprep.subr.mxu0 0.0
        %2223 = vmatpush2.msra.mxu0 0.0
        %2224 = vmatprep.subr.mxu0 0.0
        %2225 = vmatpush2.msra.mxu0 0.0
        %2226 = vmatprep.subr.mxu0 0.0
        %2227 = vmatpush2.msra.mxu0 0.0
        %2228 = vmatprep.subr.mxu0 0.0
        %2229 = vmatpush2.msra.mxu0 0.0
        %2230 = vmatprep.mubr.f32.mxu0 0.0
        %2231 = vmatmul.mubr.f32.gmra.mxu0 %v2164
        %v2232 = vpop.f32.mrf.mxu0
        %v2233 = vadd.f32 0.0, %v2232
        %v2234 = vpop.f32.mrf.mxu0
        %2235 = vdwg.mxu0
        %2236 = vrot.lane.b32.xlu0 %v1993, 120
        %v2237 = vpop.permute.xlu0 %2236
        %2238 = vrot.lane.b32.xlu0 %v2066, 88
        %v2239 = vpop.permute.xlu0 %2238
        %v2240 = vsel %vm910, %v2237, 0
        %v2242 = vsel %vm910, %v2239, 0
        %2244 = vmatprep.subr.mxu0 0.0
        %2245 = vmatpush1.xpose.msra.mxu0 0.0
        %2246 = vmatprep.subr.mxu0 0.0
        %2247 = vmatpush1.xpose.msra.mxu0 0.0
        %2248 = vmatprep.subr.mxu0 0.0
        %2249 = vmatpush1.xpose.msra.mxu0 0.0
        %2250 = vmatprep.subr.mxu0 0.0
        %2251 = vmatpush1.xpose.msra.mxu0 0.0
        %2252 = vmatprep.subr.mxu0 0.0
        %2253 = vmatpush1.xpose.msra.mxu0 0.0
        %2254 = vmatprep.subr.mxu0 0.0
        %2255 = vmatpush1.xpose.msra.mxu0 0.0
        %2256 = vmatprep.subr.mxu0 0.0
        %2257 = vmatpush1.xpose.msra.mxu0 0.0
        %2258 = vmatprep.subr.mxu0 0.0
        %2259 = vmatpush1.xpose.msra.mxu0 0.0
        %2260 = vmatprep.subr.mxu0 0.0
        %2261 = vmatpush1.xpose.msra.mxu0 0.0
        %2262 = vmatprep.subr.mxu0 0.0
        %2263 = vmatpush1.xpose.msra.mxu0 0.0
        %2264 = vmatprep.subr.mxu0 0.0
        %2265 = vmatpush1.xpose.msra.mxu0 0.0
        %2266 = vmatprep.subr.mxu0 0.0
        %2267 = vmatpush1.xpose.msra.mxu0 0.0
        %2268 = vmatprep.subr.mxu0 0.0
        %2269 = vmatpush1.xpose.msra.mxu0 0.0
        %2270 = vmatprep.subr.mxu0 0.0
        %2271 = vmatpush1.xpose.msra.mxu0 0.0
        %2272 = vmatprep.subr.mxu0 0.0
        %2273 = vmatpush1.xpose.msra.mxu0 0.0
        %2274 = vmatprep.subr.mxu0 0.0
        %2275 = vmatpush1.xpose.msra.mxu0 %v2242
        %2276 = vmatprep.subr.mxu0 0.0
        %2277 = vmatpush2.xpose.msra.mxu0 0.0
        %2278 = vmatprep.subr.mxu0 0.0
        %2279 = vmatpush2.xpose.msra.mxu0 0.0
        %2280 = vmatprep.subr.mxu0 0.0
        %2281 = vmatpush2.xpose.msra.mxu0 0.0
        %2282 = vmatprep.subr.mxu0 0.0
        %2283 = vmatpush2.xpose.msra.mxu0 0.0
        %2284 = vmatprep.subr.mxu0 0.0
        %2285 = vmatpush2.xpose.msra.mxu0 0.0
        %2286 = vmatprep.subr.mxu0 0.0
        %2287 = vmatpush2.xpose.msra.mxu0 0.0
        %2288 = vmatprep.subr.mxu0 0.0
        %2289 = vmatpush2.xpose.msra.mxu0 0.0
        %2290 = vmatprep.subr.mxu0 0.0
        %2291 = vmatpush2.xpose.msra.mxu0 0.0
        %2292 = vmatprep.subr.mxu0 0.0
        %2293 = vmatpush2.xpose.msra.mxu0 0.0
        %2294 = vmatprep.subr.mxu0 0.0
        %2295 = vmatpush2.xpose.msra.mxu0 0.0
        %2296 = vmatprep.subr.mxu0 0.0
        %2297 = vmatpush2.xpose.msra.mxu0 0.0
        %2298 = vmatprep.subr.mxu0 0.0
        %2299 = vmatpush2.xpose.msra.mxu0 0.0
        %2300 = vmatprep.subr.mxu0 0.0
        %2301 = vmatpush2.xpose.msra.mxu0 0.0
        %2302 = vmatprep.subr.mxu0 0.0
        %2303 = vmatpush2.xpose.msra.mxu0 0.0
        %2304 = vmatprep.subr.mxu0 0.0
        %2305 = vmatpush2.xpose.msra.mxu0 0.0
        %2306 = vmatprep.subr.mxu0 0.0
        %2307 = vmatpush2.xpose.msra.mxu0 0.0
        %2308 = vmatprep.mubr.f32.mxu0 0.0
        %2309 = vmatmul.mubr.f32.gmra.mxu0 %v2240
        %v2310 = vpop.f32.mrf.mxu0
        %v2311 = vadd.f32 0.0, %v2310
        %v2312 = vpop.f32.mrf.mxu0
        %2313 = vdwg.mxu0
        %v2314 = vmul.f32 %v2311, 0.35355338
        %v2315 = vadd.f32 %v2314, %v1906
        %v2316 = vsel %vm910, %v2315, -inf
        %2317 = vmax.xlane.f32.xlu0 %v2316
        %v2318 = vpop.xlane.xlu0 %2317
        %v2319 = vsub.f32 %v2315, %v2318
        %v2320 = vmul.f32 %v2319, 1.442695
        %v2321 = vpow.pop %v2320
        %v2322 = vsel %vm910, %v2321, 0.0
        %2323 = vadd.xlane.f32.xlu0 %v2322
        %v2324 = vpop.xlane.xlu0 %2323
        %v2325 = vrcp.pop %v2324
        %v2326 = vmul.f32 %v2321, %v2325
        %2327 = vrot.lane.b32.xlu0 %v2066, 56
        %v2328 = vpop.permute.xlu0 %2327
        %v2331 = vsel %vm910, %v2326, 0
        %2333 = vmatprep.subr.mxu0 0.0
        %2334 = vmatpush1.msra.mxu0 0.0
        %2335 = vmatprep.subr.mxu0 0.0
        %2336 = vmatpush1.msra.mxu0 0.0
        %2337 = vmatprep.subr.mxu0 0.0
        %2338 = vmatpush1.msra.mxu0 0.0
        %2339 = vmatprep.subr.mxu0 0.0
        %2340 = vmatpush1.msra.mxu0 0.0
        %2341 = vmatprep.subr.mxu0 0.0
        %2342 = vmatpush1.msra.mxu0 0.0
        %2343 = vmatprep.subr.mxu0 0.0
        %2344 = vmatpush1.msra.mxu0 0.0
        %2345 = vmatprep.subr.mxu0 0.0
        %2346 = vmatpush1.msra.mxu0 0.0
        %2347 = vmatprep.subr.mxu0 0.0
        %2348 = vmatpush1.msra.mxu0 0.0
        %2349 = vmatprep.subr.mxu0 0.0
        %2350 = vmatpush1.msra.mxu0 0.0
        %2351 = vmatprep.subr.mxu0 0.0
        %2352 = vmatpush1.msra.mxu0 0.0
        %2353 = vmatprep.subr.mxu0 0.0
        %2354 = vmatpush1.msra.mxu0 0.0
        %2355 = vmatprep.subr.mxu0 0.0
        %2356 = vmatpush1.msra.mxu0 0.0
        %2357 = vmatprep.subr.mxu0 0.0
        %2358 = vmatpush1.msra.mxu0 0.0
        %2359 = vmatprep.subr.mxu0 0.0
        %2360 = vmatpush1.msra.mxu0 0.0
        %2361 = vmatprep.subr.mxu0 0.0
        %2362 = vmatpush1.msra.mxu0 0.0
        %2363 = vmatprep.subr.mxu0 0.0
        %2364 = vmatpush1.msra.mxu0 %v2328
        %2365 = vmatprep.subr.mxu0 0.0
        %2366 = vmatpush2.msra.mxu0 0.0
        %2367 = vmatprep.subr.mxu0 0.0
        %2368 = vmatpush2.msra.mxu0 0.0
        %2369 = vmatprep.subr.mxu0 0.0
        %2370 = vmatpush2.msra.mxu0 0.0
        %2371 = vmatprep.subr.mxu0 0.0
        %2372 = vmatpush2.msra.mxu0 0.0
        %2373 = vmatprep.subr.mxu0 0.0
        %2374 = vmatpush2.msra.mxu0 0.0
        %2375 = vmatprep.subr.mxu0 0.0
        %2376 = vmatpush2.msra.mxu0 0.0
        %2377 = vmatprep.subr.mxu0 0.0
        %2378 = vmatpush2.msra.mxu0 0.0
        %2379 = vmatprep.subr.mxu0 0.0
        %2380 = vmatpush2.msra.mxu0 0.0
        %2381 = vmatprep.subr.mxu0 0.0
        %2382 = vmatpush2.msra.mxu0 0.0
        %2383 = vmatprep.subr.mxu0 0.0
        %2384 = vmatpush2.msra.mxu0 0.0
        %2385 = vmatprep.subr.mxu0 0.0
        %2386 = vmatpush2.msra.mxu0 0.0
        %2387 = vmatprep.subr.mxu0 0.0
        %2388 = vmatpush2.msra.mxu0 0.0
        %2389 = vmatprep.subr.mxu0 0.0
        %2390 = vmatpush2.msra.mxu0 0.0
        %2391 = vmatprep.subr.mxu0 0.0
        %2392 = vmatpush2.msra.mxu0 0.0
        %2393 = vmatprep.subr.mxu0 0.0
        %2394 = vmatpush2.msra.mxu0 0.0
        %2395 = vmatprep.subr.mxu0 0.0
        %2396 = vmatpush2.msra.mxu0 0.0
        %2397 = vmatprep.mubr.f32.mxu0 0.0
        %2398 = vmatmul.mubr.f32.gmra.mxu0 %v2331
        %v2399 = vpop.f32.mrf.mxu0
        %v2400 = vadd.f32 0.0, %v2399
        %v2401 = vpop.f32.mrf.mxu0
        %2402 = vdwg.mxu0
        %v2404 = vsel %vm910, %v2400, 0
        %2406 = vmatprep.subr.mxu0 0.0
        %2407 = vmatpush1.msra.mxu0 0.0
        %2408 = vmatprep.subr.mxu0 0.0
        %2409 = vmatpush1.msra.mxu0 0.0
        %2410 = vmatprep.subr.mxu0 0.0
        %2411 = vmatpush1.msra.mxu0 0.0
        %2412 = vmatprep.subr.mxu0 0.0
        %2413 = vmatpush1.msra.mxu0 0.0
        %2414 = vmatprep.subr.mxu0 0.0
        %2415 = vmatpush1.msra.mxu0 0.0
        %2416 = vmatprep.subr.mxu0 0.0
        %2417 = vmatpush1.msra.mxu0 0.0
        %2418 = vmatprep.subr.mxu0 0.0
        %2419 = vmatpush1.msra.mxu0 0.0
        %2420 = vmatprep.subr.mxu0 0.0
        %2421 = vmatpush1.msra.mxu0 0.0
        %2422 = vmatprep.subr.mxu0 0.0
        %2423 = vmatpush1.msra.mxu0 0.0
        %2424 = vmatprep.subr.mxu0 0.0
        %2425 = vmatpush1.msra.mxu0 0.0
        %2426 = vmatprep.subr.mxu0 0.0
        %2427 = vmatpush1.msra.mxu0 0.0
        %2428 = vmatprep.subr.mxu0 0.0
        %2429 = vmatpush1.msra.mxu0 0.0
        %2430 = vmatprep.subr.mxu0 0.0
        %2431 = vmatpush1.msra.mxu0 0.0
        %2432 = vmatprep.subr.mxu0 0.0
        %2433 = vmatpush1.msra.mxu0 0.0
        %2434 = vmatprep.subr.mxu0 0.0
        %2435 = vmatpush1.msra.mxu0 0.0
        %2436 = vmatprep.subr.mxu0 0.0
        %2437 = vmatpush1.msra.mxu0 %v1913
        %2438 = vmatprep.subr.mxu0 0.0
        %2439 = vmatpush2.msra.mxu0 0.0
        %2440 = vmatprep.subr.mxu0 0.0
        %2441 = vmatpush2.msra.mxu0 0.0
        %2442 = vmatprep.subr.mxu0 0.0
        %2443 = vmatpush2.msra.mxu0 0.0
        %2444 = vmatprep.subr.mxu0 0.0
        %2445 = vmatpush2.msra.mxu0 0.0
        %2446 = vmatprep.subr.mxu0 0.0
        %2447 = vmatpush2.msra.mxu0 0.0
        %2448 = vmatprep.subr.mxu0 0.0
        %2449 = vmatpush2.msra.mxu0 0.0
        %2450 = vmatprep.subr.mxu0 0.0
        %2451 = vmatpush2.msra.mxu0 0.0
        %2452 = vmatprep.subr.mxu0 0.0
        %2453 = vmatpush2.msra.mxu0 0.0
        %2454 = vmatprep.subr.mxu0 0.0
        %2455 = vmatpush2.msra.mxu0 0.0
        %2456 = vmatprep.subr.mxu0 0.0
        %2457 = vmatpush2.msra.mxu0 0.0
        %2458 = vmatprep.subr.mxu0 0.0
        %2459 = vmatpush2.msra.mxu0 0.0
        %2460 = vmatprep.subr.mxu0 0.0
        %2461 = vmatpush2.msra.mxu0 0.0
        %2462 = vmatprep.subr.mxu0 0.0
        %2463 = vmatpush2.msra.mxu0 0.0
        %2464 = vmatprep.subr.mxu0 0.0
        %2465 = vmatpush2.msra.mxu0 0.0
        %2466 = vmatprep.subr.mxu0 0.0
        %2467 = vmatpush2.msra.mxu0 0.0
        %2468 = vmatprep.subr.mxu0 0.0
        %2469 = vmatpush2.msra.mxu0 0.0
        %2470 = vmatprep.mubr.f32.mxu0 0.0
        %2471 = vmatmul.mubr.f32.gmra.mxu0 %v2404
        %v2472 = vpop.f32.mrf.mxu0
        %v2473 = vadd.f32 0.0, %v2472
        %v2474 = vpop.f32.mrf.mxu0
        %2475 = vdwg.mxu0
        %v2477 = vsel %vm910, %v2233, 0
        %2479 = vmatprep.subr.mxu0 0.0
        %2480 = vmatpush1.msra.mxu0 0.0
        %2481 = vmatprep.subr.mxu0 0.0
        %2482 = vmatpush1.msra.mxu0 0.0
        %2483 = vmatprep.subr.mxu0 0.0
        %2484 = vmatpush1.msra.mxu0 0.0
        %2485 = vmatprep.subr.mxu0 0.0
        %2486 = vmatpush1.msra.mxu0 0.0
        %2487 = vmatprep.subr.mxu0 0.0
        %2488 = vmatpush1.msra.mxu0 0.0
        %2489 = vmatprep.subr.mxu0 0.0
        %2490 = vmatpush1.msra.mxu0 0.0
        %2491 = vmatprep.subr.mxu0 0.0
        %2492 = vmatpush1.msra.mxu0 0.0
        %2493 = vmatprep.subr.mxu0 0.0
        %2494 = vmatpush1.msra.mxu0 0.0
        %2495 = vmatprep.subr.mxu0 0.0
        %2496 = vmatpush1.msra.mxu0 0.0
        %2497 = vmatprep.subr.mxu0 0.0
        %2498 = vmatpush1.msra.mxu0 0.0
        %2499 = vmatprep.subr.mxu0 0.0
        %2500 = vmatpush1.msra.mxu0 0.0
        %2501 = vmatprep.subr.mxu0 0.0
        %2502 = vmatpush1.msra.mxu0 0.0
        %2503 = vmatprep.subr.mxu0 0.0
        %2504 = vmatpush1.msra.mxu0 0.0
        %2505 = vmatprep.subr.mxu0 0.0
        %2506 = vmatpush1.msra.mxu0 0.0
        %2507 = vmatprep.subr.mxu0 0.0
        %2508 = vmatpush1.msra.mxu0 0.0
        %2509 = vmatprep.subr.mxu0 0.0
        %2510 = vmatpush1.msra.mxu0 %v1912
        %2511 = vmatprep.subr.mxu0 0.0
        %2512 = vmatpush2.msra.mxu0 0.0
        %2513 = vmatprep.subr.mxu0 0.0
        %2514 = vmatpush2.msra.mxu0 0.0
        %2515 = vmatprep.subr.mxu0 0.0
        %2516 = vmatpush2.msra.mxu0 0.0
        %2517 = vmatprep.subr.mxu0 0.0
        %2518 = vmatpush2.msra.mxu0 0.0
        %2519 = vmatprep.subr.mxu0 0.0
        %2520 = vmatpush2.msra.mxu0 0.0
        %2521 = vmatprep.subr.mxu0 0.0
        %2522 = vmatpush2.msra.mxu0 0.0
        %2523 = vmatprep.subr.mxu0 0.0
        %2524 = vmatpush2.msra.mxu0 0.0
        %2525 = vmatprep.subr.mxu0 0.0
        %2526 = vmatpush2.msra.mxu0 0.0
        %2527 = vmatprep.subr.mxu0 0.0
        %2528 = vmatpush2.msra.mxu0 0.0
        %2529 = vmatprep.subr.mxu0 0.0
        %2530 = vmatpush2.msra.mxu0 0.0
        %2531 = vmatprep.subr.mxu0 0.0
        %2532 = vmatpush2.msra.mxu0 0.0
        %2533 = vmatprep.subr.mxu0 0.0
        %2534 = vmatpush2.msra.mxu0 0.0
        %2535 = vmatprep.subr.mxu0 0.0
        %2536 = vmatpush2.msra.mxu0 0.0
        %2537 = vmatprep.subr.mxu0 0.0
        %2538 = vmatpush2.msra.mxu0 0.0
        %2539 = vmatprep.subr.mxu0 0.0
        %2540 = vmatpush2.msra.mxu0 0.0
        %2541 = vmatprep.subr.mxu0 0.0
        %2542 = vmatpush2.msra.mxu0 0.0
        %2543 = vmatprep.mubr.f32.mxu0 0.0
        %2544 = vmatmul.mubr.f32.gmra.mxu0 %v2477
        %v2545 = vpop.f32.mrf.mxu0
        %v2546 = vadd.f32 %v2473, %v2545
        %v2547 = vpop.f32.mrf.mxu0
        %2548 = vdwg.mxu0
        %2549 = vrot.lane.b32.xlu0 %v1993, 112
        %v2550 = vpop.permute.xlu0 %2549
        %2551 = vrot.lane.b32.xlu0 %v2066, 80
        %v2552 = vpop.permute.xlu0 %2551
        %v2553 = vsel %vm910, %v2550, 0
        %v2555 = vsel %vm910, %v2552, 0
        %2557 = vmatprep.subr.mxu0 0.0
        %2558 = vmatpush1.xpose.msra.mxu0 0.0
        %2559 = vmatprep.subr.mxu0 0.0
        %2560 = vmatpush1.xpose.msra.mxu0 0.0
        %2561 = vmatprep.subr.mxu0 0.0
        %2562 = vmatpush1.xpose.msra.mxu0 0.0
        %2563 = vmatprep.subr.mxu0 0.0
        %2564 = vmatpush1.xpose.msra.mxu0 0.0
        %2565 = vmatprep.subr.mxu0 0.0
        %2566 = vmatpush1.xpose.msra.mxu0 0.0
        %2567 = vmatprep.subr.mxu0 0.0
        %2568 = vmatpush1.xpose.msra.mxu0 0.0
        %2569 = vmatprep.subr.mxu0 0.0
        %2570 = vmatpush1.xpose.msra.mxu0 0.0
        %2571 = vmatprep.subr.mxu0 0.0
        %2572 = vmatpush1.xpose.msra.mxu0 0.0
        %2573 = vmatprep.subr.mxu0 0.0
        %2574 = vmatpush1.xpose.msra.mxu0 0.0
        %2575 = vmatprep.subr.mxu0 0.0
        %2576 = vmatpush1.xpose.msra.mxu0 0.0
        %2577 = vmatprep.subr.mxu0 0.0
        %2578 = vmatpush1.xpose.msra.mxu0 0.0
        %2579 = vmatprep.subr.mxu0 0.0
        %2580 = vmatpush1.xpose.msra.mxu0 0.0
        %2581 = vmatprep.subr.mxu0 0.0
        %2582 = vmatpush1.xpose.msra.mxu0 0.0
        %2583 = vmatprep.subr.mxu0 0.0
        %2584 = vmatpush1.xpose.msra.mxu0 0.0
        %2585 = vmatprep.subr.mxu0 0.0
        %2586 = vmatpush1.xpose.msra.mxu0 0.0
        %2587 = vmatprep.subr.mxu0 0.0
        %2588 = vmatpush1.xpose.msra.mxu0 %v2555
        %2589 = vmatprep.subr.mxu0 0.0
        %2590 = vmatpush2.xpose.msra.mxu0 0.0
        %2591 = vmatprep.subr.mxu0 0.0
        %2592 = vmatpush2.xpose.msra.mxu0 0.0
        %2593 = vmatprep.subr.mxu0 0.0
        %2594 = vmatpush2.xpose.msra.mxu0 0.0
        %2595 = vmatprep.subr.mxu0 0.0
        %2596 = vmatpush2.xpose.msra.mxu0 0.0
        %2597 = vmatprep.subr.mxu0 0.0
        %2598 = vmatpush2.xpose.msra.mxu0 0.0
        %2599 = vmatprep.subr.mxu0 0.0
        %2600 = vmatpush2.xpose.msra.mxu0 0.0
        %2601 = vmatprep.subr.mxu0 0.0
        %2602 = vmatpush2.xpose.msra.mxu0 0.0
        %2603 = vmatprep.subr.mxu0 0.0
        %2604 = vmatpush2.xpose.msra.mxu0 0.0
        %2605 = vmatprep.subr.mxu0 0.0
        %2606 = vmatpush2.xpose.msra.mxu0 0.0
        %2607 = vmatprep.subr.mxu0 0.0
        %2608 = vmatpush2.xpose.msra.mxu0 0.0
        %2609 = vmatprep.subr.mxu0 0.0
        %2610 = vmatpush2.xpose.msra.mxu0 0.0
        %2611 = vmatprep.subr.mxu0 0.0
        %2612 = vmatpush2.xpose.msra.mxu0 0.0
        %2613 = vmatprep.subr.mxu0 0.0
        %2614 = vmatpush2.xpose.msra.mxu0 0.0
        %2615 = vmatprep.subr.mxu0 0.0
        %2616 = vmatpush2.xpose.msra.mxu0 0.0
        %2617 = vmatprep.subr.mxu0 0.0
        %2618 = vmatpush2.xpose.msra.mxu0 0.0
        %2619 = vmatprep.subr.mxu0 0.0
        %2620 = vmatpush2.xpose.msra.mxu0 0.0
        %2621 = vmatprep.mubr.f32.mxu0 0.0
        %2622 = vmatmul.mubr.f32.gmra.mxu0 %v2553
        %v2623 = vpop.f32.mrf.mxu0
        %v2624 = vadd.f32 0.0, %v2623
        %v2625 = vpop.f32.mrf.mxu0
        %2626 = vdwg.mxu0
        %v2627 = vmul.f32 %v2624, 0.35355338
        %v2628 = vadd.f32 %v2627, %v1906
        %v2629 = vsel %vm910, %v2628, -inf
        %2630 = vmax.xlane.f32.xlu0 %v2629
        %v2631 = vpop.xlane.xlu0 %2630
        %v2632 = vsub.f32 %v2628, %v2631
        %v2633 = vmul.f32 %v2632, 1.442695
        %v2634 = vpow.pop %v2633
        %v2635 = vsel %vm910, %v2634, 0.0
        %2636 = vadd.xlane.f32.xlu0 %v2635
        %v2637 = vpop.xlane.xlu0 %2636
        %v2638 = vrcp.pop %v2637
        %v2639 = vmul.f32 %v2634, %v2638
        %2640 = vrot.lane.b32.xlu0 %v2066, 48
        %v2641 = vpop.permute.xlu0 %2640
        %v2644 = vsel %vm910, %v2639, 0
        %2646 = vmatprep.subr.mxu0 0.0
        %2647 = vmatpush1.msra.mxu0 0.0
        %2648 = vmatprep.subr.mxu0 0.0
        %2649 = vmatpush1.msra.mxu0 0.0
        %2650 = vmatprep.subr.mxu0 0.0
        %2651 = vmatpush1.msra.mxu0 0.0
        %2652 = vmatprep.subr.mxu0 0.0
        %2653 = vmatpush1.msra.mxu0 0.0
        %2654 = vmatprep.subr.mxu0 0.0
        %2655 = vmatpush1.msra.mxu0 0.0
        %2656 = vmatprep.subr.mxu0 0.0
        %2657 = vmatpush1.msra.mxu0 0.0
        %2658 = vmatprep.subr.mxu0 0.0
        %2659 = vmatpush1.msra.mxu0 0.0
        %2660 = vmatprep.subr.mxu0 0.0
        %2661 = vmatpush1.msra.mxu0 0.0
        %2662 = vmatprep.subr.mxu0 0.0
        %2663 = vmatpush1.msra.mxu0 0.0
        %2664 = vmatprep.subr.mxu0 0.0
        %2665 = vmatpush1.msra.mxu0 0.0
        %2666 = vmatprep.subr.mxu0 0.0
        %2667 = vmatpush1.msra.mxu0 0.0
        %2668 = vmatprep.subr.mxu0 0.0
        %2669 = vmatpush1.msra.mxu0 0.0
        %2670 = vmatprep.subr.mxu0 0.0
        %2671 = vmatpush1.msra.mxu0 0.0
        %2672 = vmatprep.subr.mxu0 0.0
        %2673 = vmatpush1.msra.mxu0 0.0
        %2674 = vmatprep.subr.mxu0 0.0
        %2675 = vmatpush1.msra.mxu0 0.0
        %2676 = vmatprep.subr.mxu0 0.0
        %2677 = vmatpush1.msra.mxu0 %v2641
        %2678 = vmatprep.subr.mxu0 0.0
        %2679 = vmatpush2.msra.mxu0 0.0
        %2680 = vmatprep.subr.mxu0 0.0
        %2681 = vmatpush2.msra.mxu0 0.0
        %2682 = vmatprep.subr.mxu0 0.0
        %2683 = vmatpush2.msra.mxu0 0.0
        %2684 = vmatprep.subr.mxu0 0.0
        %2685 = vmatpush2.msra.mxu0 0.0
        %2686 = vmatprep.subr.mxu0 0.0
        %2687 = vmatpush2.msra.mxu0 0.0
        %2688 = vmatprep.subr.mxu0 0.0
        %2689 = vmatpush2.msra.mxu0 0.0
        %2690 = vmatprep.subr.mxu0 0.0
        %2691 = vmatpush2.msra.mxu0 0.0
        %2692 = vmatprep.subr.mxu0 0.0
        %2693 = vmatpush2.msra.mxu0 0.0
        %2694 = vmatprep.subr.mxu0 0.0
        %2695 = vmatpush2.msra.mxu0 0.0
        %2696 = vmatprep.subr.mxu0 0.0
        %2697 = vmatpush2.msra.mxu0 0.0
        %2698 = vmatprep.subr.mxu0 0.0
        %2699 = vmatpush2.msra.mxu0 0.0
        %2700 = vmatprep.subr.mxu0 0.0
        %2701 = vmatpush2.msra.mxu0 0.0
        %2702 = vmatprep.subr.mxu0 0.0
        %2703 = vmatpush2.msra.mxu0 0.0
        %2704 = vmatprep.subr.mxu0 0.0
        %2705 = vmatpush2.msra.mxu0 0.0
        %2706 = vmatprep.subr.mxu0 0.0
        %2707 = vmatpush2.msra.mxu0 0.0
        %2708 = vmatprep.subr.mxu0 0.0
        %2709 = vmatpush2.msra.mxu0 0.0
        %2710 = vmatprep.mubr.f32.mxu0 0.0
        %2711 = vmatmul.mubr.f32.gmra.mxu0 %v2644
        %v2712 = vpop.f32.mrf.mxu0
        %v2713 = vadd.f32 0.0, %v2712
        %v2714 = vpop.f32.mrf.mxu0
        %2715 = vdwg.mxu0
        %v2717 = vsel %vm910, %v2713, 0
        %2719 = vmatprep.subr.mxu0 0.0
        %2720 = vmatpush1.msra.mxu0 0.0
        %2721 = vmatprep.subr.mxu0 0.0
        %2722 = vmatpush1.msra.mxu0 0.0
        %2723 = vmatprep.subr.mxu0 0.0
        %2724 = vmatpush1.msra.mxu0 0.0
        %2725 = vmatprep.subr.mxu0 0.0
        %2726 = vmatpush1.msra.mxu0 0.0
        %2727 = vmatprep.subr.mxu0 0.0
        %2728 = vmatpush1.msra.mxu0 0.0
        %2729 = vmatprep.subr.mxu0 0.0
        %2730 = vmatpush1.msra.mxu0 0.0
        %2731 = vmatprep.subr.mxu0 0.0
        %2732 = vmatpush1.msra.mxu0 0.0
        %2733 = vmatprep.subr.mxu0 0.0
        %2734 = vmatpush1.msra.mxu0 0.0
        %2735 = vmatprep.subr.mxu0 0.0
        %2736 = vmatpush1.msra.mxu0 0.0
        %2737 = vmatprep.subr.mxu0 0.0
        %2738 = vmatpush1.msra.mxu0 0.0
        %2739 = vmatprep.subr.mxu0 0.0
        %2740 = vmatpush1.msra.mxu0 0.0
        %2741 = vmatprep.subr.mxu0 0.0
        %2742 = vmatpush1.msra.mxu0 0.0
        %2743 = vmatprep.subr.mxu0 0.0
        %2744 = vmatpush1.msra.mxu0 0.0
        %2745 = vmatprep.subr.mxu0 0.0
        %2746 = vmatpush1.msra.mxu0 0.0
        %2747 = vmatprep.subr.mxu0 0.0
        %2748 = vmatpush1.msra.mxu0 0.0
        %2749 = vmatprep.subr.mxu0 0.0
        %2750 = vmatpush1.msra.mxu0 %v1914
        %2751 = vmatprep.subr.mxu0 0.0
        %2752 = vmatpush2.msra.mxu0 0.0
        %2753 = vmatprep.subr.mxu0 0.0
        %2754 = vmatpush2.msra.mxu0 0.0
        %2755 = vmatprep.subr.mxu0 0.0
        %2756 = vmatpush2.msra.mxu0 0.0
        %2757 = vmatprep.subr.mxu0 0.0
        %2758 = vmatpush2.msra.mxu0 0.0
        %2759 = vmatprep.subr.mxu0 0.0
        %2760 = vmatpush2.msra.mxu0 0.0
        %2761 = vmatprep.subr.mxu0 0.0
        %2762 = vmatpush2.msra.mxu0 0.0
        %2763 = vmatprep.subr.mxu0 0.0
        %2764 = vmatpush2.msra.mxu0 0.0
        %2765 = vmatprep.subr.mxu0 0.0
        %2766 = vmatpush2.msra.mxu0 0.0
        %2767 = vmatprep.subr.mxu0 0.0
        %2768 = vmatpush2.msra.mxu0 0.0
        %2769 = vmatprep.subr.mxu0 0.0
        %2770 = vmatpush2.msra.mxu0 0.0
        %2771 = vmatprep.subr.mxu0 0.0
        %2772 = vmatpush2.msra.mxu0 0.0
        %2773 = vmatprep.subr.mxu0 0.0
        %2774 = vmatpush2.msra.mxu0 0.0
        %2775 = vmatprep.subr.mxu0 0.0
        %2776 = vmatpush2.msra.mxu0 0.0
        %2777 = vmatprep.subr.mxu0 0.0
        %2778 = vmatpush2.msra.mxu0 0.0
        %2779 = vmatprep.subr.mxu0 0.0
        %2780 = vmatpush2.msra.mxu0 0.0
        %2781 = vmatprep.subr.mxu0 0.0
        %2782 = vmatpush2.msra.mxu0 0.0
        %2783 = vmatprep.mubr.f32.mxu0 0.0
        %2784 = vmatmul.mubr.f32.gmra.mxu0 %v2717
        %v2785 = vpop.f32.mrf.mxu0
        %v2786 = vadd.f32 0.0, %v2785
        %v2787 = vpop.f32.mrf.mxu0
        %2788 = vdwg.mxu0
        %v2789 = vadd.f32 %v2546, %v2786
        %2790 = vrot.lane.b32.xlu0 %v1993, 104
        %v2791 = vpop.permute.xlu0 %2790
        %2792 = vrot.lane.b32.xlu0 %v2066, 72
        %v2793 = vpop.permute.xlu0 %2792
        %v2794 = vsel %vm910, %v2791, 0
        %v2796 = vsel %vm910, %v2793, 0
        %2798 = vmatprep.subr.mxu0 0.0
        %2799 = vmatpush1.xpose.msra.mxu0 0.0
        %2800 = vmatprep.subr.mxu0 0.0
        %2801 = vmatpush1.xpose.msra.mxu0 0.0
        %2802 = vmatprep.subr.mxu0 0.0
        %2803 = vmatpush1.xpose.msra.mxu0 0.0
        %2804 = vmatprep.subr.mxu0 0.0
        %2805 = vmatpush1.xpose.msra.mxu0 0.0
        %2806 = vmatprep.subr.mxu0 0.0
        %2807 = vmatpush1.xpose.msra.mxu0 0.0
        %2808 = vmatprep.subr.mxu0 0.0
        %2809 = vmatpush1.xpose.msra.mxu0 0.0
        %2810 = vmatprep.subr.mxu0 0.0
        %2811 = vmatpush1.xpose.msra.mxu0 0.0
        %2812 = vmatprep.subr.mxu0 0.0
        %2813 = vmatpush1.xpose.msra.mxu0 0.0
        %2814 = vmatprep.subr.mxu0 0.0
        %2815 = vmatpush1.xpose.msra.mxu0 0.0
        %2816 = vmatprep.subr.mxu0 0.0
        %2817 = vmatpush1.xpose.msra.mxu0 0.0
        %2818 = vmatprep.subr.mxu0 0.0
        %2819 = vmatpush1.xpose.msra.mxu0 0.0
        %2820 = vmatprep.subr.mxu0 0.0
        %2821 = vmatpush1.xpose.msra.mxu0 0.0
        %2822 = vmatprep.subr.mxu0 0.0
        %2823 = vmatpush1.xpose.msra.mxu0 0.0
        %2824 = vmatprep.subr.mxu0 0.0
        %2825 = vmatpush1.xpose.msra.mxu0 0.0
        %2826 = vmatprep.subr.mxu0 0.0
        %2827 = vmatpush1.xpose.msra.mxu0 0.0
        %2828 = vmatprep.subr.mxu0 0.0
        %2829 = vmatpush1.xpose.msra.mxu0 %v2796
        %2830 = vmatprep.subr.mxu0 0.0
        %2831 = vmatpush2.xpose.msra.mxu0 0.0
        %2832 = vmatprep.subr.mxu0 0.0
        %2833 = vmatpush2.xpose.msra.mxu0 0.0
        %2834 = vmatprep.subr.mxu0 0.0
        %2835 = vmatpush2.xpose.msra.mxu0 0.0
        %2836 = vmatprep.subr.mxu0 0.0
        %2837 = vmatpush2.xpose.msra.mxu0 0.0
        %2838 = vmatprep.subr.mxu0 0.0
        %2839 = vmatpush2.xpose.msra.mxu0 0.0
        %2840 = vmatprep.subr.mxu0 0.0
        %2841 = vmatpush2.xpose.msra.mxu0 0.0
        %2842 = vmatprep.subr.mxu0 0.0
        %2843 = vmatpush2.xpose.msra.mxu0 0.0
        %2844 = vmatprep.subr.mxu0 0.0
        %2845 = vmatpush2.xpose.msra.mxu0 0.0
        %2846 = vmatprep.subr.mxu0 0.0
        %2847 = vmatpush2.xpose.msra.mxu0 0.0
        %2848 = vmatprep.subr.mxu0 0.0
        %2849 = vmatpush2.xpose.msra.mxu0 0.0
        %2850 = vmatprep.subr.mxu0 0.0
        %2851 = vmatpush2.xpose.msra.mxu0 0.0
        %2852 = vmatprep.subr.mxu0 0.0
        %2853 = vmatpush2.xpose.msra.mxu0 0.0
        %2854 = vmatprep.subr.mxu0 0.0
        %2855 = vmatpush2.xpose.msra.mxu0 0.0
        %2856 = vmatprep.subr.mxu0 0.0
        %2857 = vmatpush2.xpose.msra.mxu0 0.0
        %2858 = vmatprep.subr.mxu0 0.0
        %2859 = vmatpush2.xpose.msra.mxu0 0.0
        %2860 = vmatprep.subr.mxu0 0.0
        %2861 = vmatpush2.xpose.msra.mxu0 0.0
        %2862 = vmatprep.mubr.f32.mxu0 0.0
        %2863 = vmatmul.mubr.f32.gmra.mxu0 %v2794
        %v2864 = vpop.f32.mrf.mxu0
        %v2865 = vadd.f32 0.0, %v2864
        %v2866 = vpop.f32.mrf.mxu0
        %2867 = vdwg.mxu0
        %v2868 = vmul.f32 %v2865, 0.35355338
        %v2869 = vadd.f32 %v2868, %v1906
        %v2870 = vsel %vm910, %v2869, -inf
        %2871 = vmax.xlane.f32.xlu0 %v2870
        %v2872 = vpop.xlane.xlu0 %2871
        %v2873 = vsub.f32 %v2869, %v2872
        %v2874 = vmul.f32 %v2873, 1.442695
        %v2875 = vpow.pop %v2874
        %v2876 = vsel %vm910, %v2875, 0.0
        %2877 = vadd.xlane.f32.xlu0 %v2876
        %v2878 = vpop.xlane.xlu0 %2877
        %v2879 = vrcp.pop %v2878
        %v2880 = vmul.f32 %v2875, %v2879
        %2881 = vrot.lane.b32.xlu0 %v2066, 40
        %v2882 = vpop.permute.xlu0 %2881
        %v2885 = vsel %vm910, %v2880, 0
        %2887 = vmatprep.subr.mxu0 0.0
        %2888 = vmatpush1.msra.mxu0 0.0
        %2889 = vmatprep.subr.mxu0 0.0
        %2890 = vmatpush1.msra.mxu0 0.0
        %2891 = vmatprep.subr.mxu0 0.0
        %2892 = vmatpush1.msra.mxu0 0.0
        %2893 = vmatprep.subr.mxu0 0.0
        %2894 = vmatpush1.msra.mxu0 0.0
        %2895 = vmatprep.subr.mxu0 0.0
        %2896 = vmatpush1.msra.mxu0 0.0
        %2897 = vmatprep.subr.mxu0 0.0
        %2898 = vmatpush1.msra.mxu0 0.0
        %2899 = vmatprep.subr.mxu0 0.0
        %2900 = vmatpush1.msra.mxu0 0.0
        %2901 = vmatprep.subr.mxu0 0.0
        %2902 = vmatpush1.msra.mxu0 0.0
        %2903 = vmatprep.subr.mxu0 0.0
        %2904 = vmatpush1.msra.mxu0 0.0
        %2905 = vmatprep.subr.mxu0 0.0
        %2906 = vmatpush1.msra.mxu0 0.0
        %2907 = vmatprep.subr.mxu0 0.0
        %2908 = vmatpush1.msra.mxu0 0.0
        %2909 = vmatprep.subr.mxu0 0.0
        %2910 = vmatpush1.msra.mxu0 0.0
        %2911 = vmatprep.subr.mxu0 0.0
        %2912 = vmatpush1.msra.mxu0 0.0
        %2913 = vmatprep.subr.mxu0 0.0
        %2914 = vmatpush1.msra.mxu0 0.0
        %2915 = vmatprep.subr.mxu0 0.0
        %2916 = vmatpush1.msra.mxu0 0.0
        %2917 = vmatprep.subr.mxu0 0.0
        %2918 = vmatpush1.msra.mxu0 %v2882
        %2919 = vmatprep.subr.mxu0 0.0
        %2920 = vmatpush2.msra.mxu0 0.0
        %2921 = vmatprep.subr.mxu0 0.0
        %2922 = vmatpush2.msra.mxu0 0.0
        %2923 = vmatprep.subr.mxu0 0.0
        %2924 = vmatpush2.msra.mxu0 0.0
        %2925 = vmatprep.subr.mxu0 0.0
        %2926 = vmatpush2.msra.mxu0 0.0
        %2927 = vmatprep.subr.mxu0 0.0
        %2928 = vmatpush2.msra.mxu0 0.0
        %2929 = vmatprep.subr.mxu0 0.0
        %2930 = vmatpush2.msra.mxu0 0.0
        %2931 = vmatprep.subr.mxu0 0.0
        %2932 = vmatpush2.msra.mxu0 0.0
        %2933 = vmatprep.subr.mxu0 0.0
        %2934 = vmatpush2.msra.mxu0 0.0
        %2935 = vmatprep.subr.mxu0 0.0
        %2936 = vmatpush2.msra.mxu0 0.0
        %2937 = vmatprep.subr.mxu0 0.0
        %2938 = vmatpush2.msra.mxu0 0.0
        %2939 = vmatprep.subr.mxu0 0.0
        %2940 = vmatpush2.msra.mxu0 0.0
        %2941 = vmatprep.subr.mxu0 0.0
        %2942 = vmatpush2.msra.mxu0 0.0
        %2943 = vmatprep.subr.mxu0 0.0
        %2944 = vmatpush2.msra.mxu0 0.0
        %2945 = vmatprep.subr.mxu0 0.0
        %2946 = vmatpush2.msra.mxu0 0.0
        %2947 = vmatprep.subr.mxu0 0.0
        %2948 = vmatpush2.msra.mxu0 0.0
        %2949 = vmatprep.subr.mxu0 0.0
        %2950 = vmatpush2.msra.mxu0 0.0
        %2951 = vmatprep.mubr.f32.mxu0 0.0
        %2952 = vmatmul.mubr.f32.gmra.mxu0 %v2885
        %v2953 = vpop.f32.mrf.mxu0
        %v2954 = vadd.f32 0.0, %v2953
        %v2955 = vpop.f32.mrf.mxu0
        %2956 = vdwg.mxu0
        %v2958 = vsel %vm910, %v2954, 0
        %2960 = vmatprep.subr.mxu0 0.0
        %2961 = vmatpush1.msra.mxu0 0.0
        %2962 = vmatprep.subr.mxu0 0.0
        %2963 = vmatpush1.msra.mxu0 0.0
        %2964 = vmatprep.subr.mxu0 0.0
        %2965 = vmatpush1.msra.mxu0 0.0
        %2966 = vmatprep.subr.mxu0 0.0
        %2967 = vmatpush1.msra.mxu0 0.0
        %2968 = vmatprep.subr.mxu0 0.0
        %2969 = vmatpush1.msra.mxu0 0.0
        %2970 = vmatprep.subr.mxu0 0.0
        %2971 = vmatpush1.msra.mxu0 0.0
        %2972 = vmatprep.subr.mxu0 0.0
        %2973 = vmatpush1.msra.mxu0 0.0
        %2974 = vmatprep.subr.mxu0 0.0
        %2975 = vmatpush1.msra.mxu0 0.0
        %2976 = vmatprep.subr.mxu0 0.0
        %2977 = vmatpush1.msra.mxu0 0.0
        %2978 = vmatprep.subr.mxu0 0.0
        %2979 = vmatpush1.msra.mxu0 0.0
        %2980 = vmatprep.subr.mxu0 0.0
        %2981 = vmatpush1.msra.mxu0 0.0
        %2982 = vmatprep.subr.mxu0 0.0
        %2983 = vmatpush1.msra.mxu0 0.0
        %2984 = vmatprep.subr.mxu0 0.0
        %2985 = vmatpush1.msra.mxu0 0.0
        %2986 = vmatprep.subr.mxu0 0.0
        %2987 = vmatpush1.msra.mxu0 0.0
        %2988 = vmatprep.subr.mxu0 0.0
        %2989 = vmatpush1.msra.mxu0 0.0
        %2990 = vmatprep.subr.mxu0 0.0
        %2991 = vmatpush1.msra.mxu0 %v1915
        %2992 = vmatprep.subr.mxu0 0.0
        %2993 = vmatpush2.msra.mxu0 0.0
        %2994 = vmatprep.subr.mxu0 0.0
        %2995 = vmatpush2.msra.mxu0 0.0
        %2996 = vmatprep.subr.mxu0 0.0
        %2997 = vmatpush2.msra.mxu0 0.0
        %2998 = vmatprep.subr.mxu0 0.0
        %2999 = vmatpush2.msra.mxu0 0.0
        %3000 = vmatprep.subr.mxu0 0.0
        %3001 = vmatpush2.msra.mxu0 0.0
        %3002 = vmatprep.subr.mxu0 0.0
        %3003 = vmatpush2.msra.mxu0 0.0
        %3004 = vmatprep.subr.mxu0 0.0
        %3005 = vmatpush2.msra.mxu0 0.0
        %3006 = vmatprep.subr.mxu0 0.0
        %3007 = vmatpush2.msra.mxu0 0.0
        %3008 = vmatprep.subr.mxu0 0.0
        %3009 = vmatpush2.msra.mxu0 0.0
        %3010 = vmatprep.subr.mxu0 0.0
        %3011 = vmatpush2.msra.mxu0 0.0
        %3012 = vmatprep.subr.mxu0 0.0
        %3013 = vmatpush2.msra.mxu0 0.0
        %3014 = vmatprep.subr.mxu0 0.0
        %3015 = vmatpush2.msra.mxu0 0.0
        %3016 = vmatprep.subr.mxu0 0.0
        %3017 = vmatpush2.msra.mxu0 0.0
        %3018 = vmatprep.subr.mxu0 0.0
        %3019 = vmatpush2.msra.mxu0 0.0
        %3020 = vmatprep.subr.mxu0 0.0
        %3021 = vmatpush2.msra.mxu0 0.0
        %3022 = vmatprep.subr.mxu0 0.0
        %3023 = vmatpush2.msra.mxu0 0.0
        %3024 = vmatprep.mubr.f32.mxu0 0.0
        %3025 = vmatmul.mubr.f32.gmra.mxu0 %v2958
        %v3026 = vpop.f32.mrf.mxu0
        %v3027 = vadd.f32 0.0, %v3026
        %v3028 = vpop.f32.mrf.mxu0
        %3029 = vdwg.mxu0
        %v3030 = vadd.f32 %v2789, %v3027
        %v3032 = vlaneseq
        %v3033 = vshrl.u32 %v3032, 7
        %v3034 = vsub.s32 0, %v3033
        %v3035 = vrot.slane %v1916, %v3034
        %v3037 = vadd.f32 %v3030, %v3035
        %v3038 = vadd.f32 %v1876, %v3037
        %v3039 = vld [vmem:[%s16] sm:$0x1]
        %v3040 = vld [vmem:[%s17] sm:$0x1]
        %v3041 = vsel %vm788, %v3038, 0.0
        %3042 = vadd.xlane.f32.xlu0 %v3041
        %v3043 = vpop.xlane.xlu0 %3042
        %v3044 = vmul.f32 %v3043, %v792
        %v3045 = vsub.f32 %v3038, %v3044
        %v3046 = vmul.f32 %v3045, %v3045
        %v3047 = vsel %vm788, %v3046, 0.0
        %3048 = vadd.xlane.f32.xlu0 %v3047
        %v3049 = vpop.xlane.xlu0 %3048
        %v3050 = vmul.f32 %v3049, %v792
        %v3051 = vadd.f32 %v3050, 1e-06
        %v3052 = vrsqrt.pop %v3051
        %v3053 = vmul.f32 %v3045, %v3052
        %v3055 = vlaneseq
        %v3056 = vshrl.u32 %v3055, 7
        %v3057 = vsub.s32 0, %v3056
        %v3058 = vrot.slane %v3039, %v3057
        %v3060 = vmul.f32 %v3053, %v3058
        %v3062 = vlaneseq
        %v3063 = vshrl.u32 %v3062, 7
        %v3064 = vsub.s32 0, %v3063
        %v3065 = vrot.slane %v3040, %v3064
        %v3067 = vadd.f32 %v3060, %v3065
        %v3068 = vld [vmem:[%s20] sm:$0xff]
        %v3069 = vld [vmem:[%s20 + $0x8] sm:$0xff]
        %v3070 = vld [vmem:[%s20 + $0x10] sm:$0xff]
        %v3071 = vld [vmem:[%s20 + $0x18] sm:$0xff]
        %v3072 = vld [vmem:[%s21] sm:$0x1]
        %v3073 = vld [vmem:[%s22] sm:$0xff]
        %v3074 = vld [vmem:[%s22 + $0x8] sm:$0xff]
        %v3075 = vld [vmem:[%s22 + $0x10] sm:$0xff]
        %v3076 = vld [vmem:[%s22 + $0x18] sm:$0xff]
        %v3077 = vld [vmem:[%s22 + $0x20] sm:$0xff]
        %v3078 = vld [vmem:[%s22 + $0x28] sm:$0xff]
        %v3079 = vld [vmem:[%s22 + $0x30] sm:$0xff]
        %v3080 = vld [vmem:[%s22 + $0x38] sm:$0xff]
        %v3081 = vld [vmem:[%s23] sm:$0x1]
        %v3083 = vlaneseq
        %v3084 = vshrl.u32 %v3083, 7
        %v3085 = vsub.s32 0, %v3084
        %v3086 = vrot.slane %v3072, %v3085
        %v3089 = vsel %vm788, %v3067, 0
        %3091 = vmatprep.subr.mxu0 0.0
        %3092 = vmatpush1.msra.mxu0 0.0
        %3093 = vmatprep.subr.mxu0 0.0
        %3094 = vmatpush1.msra.mxu0 0.0
        %3095 = vmatprep.subr.mxu0 0.0
        %3096 = vmatpush1.msra.mxu0 0.0
        %3097 = vmatprep.subr.mxu0 0.0
        %3098 = vmatpush1.msra.mxu0 0.0
        %3099 = vmatprep.subr.mxu0 0.0
        %3100 = vmatpush1.msra.mxu0 0.0
        %3101 = vmatprep.subr.mxu0 0.0
        %3102 = vmatpush1.msra.mxu0 0.0
        %3103 = vmatprep.subr.mxu0 0.0
        %3104 = vmatpush1.msra.mxu0 0.0
        %3105 = vmatprep.subr.mxu0 0.0
        %3106 = vmatpush1.msra.mxu0 0.0
        %3107 = vmatprep.subr.mxu0 0.0
        %3108 = vmatpush1.msra.mxu0 0.0
        %3109 = vmatprep.subr.mxu0 0.0
        %3110 = vmatpush1.msra.mxu0 0.0
        %3111 = vmatprep.subr.mxu0 0.0
        %3112 = vmatpush1.msra.mxu0 0.0
        %3113 = vmatprep.subr.mxu0 0.0
        %3114 = vmatpush1.msra.mxu0 0.0
        %3115 = vmatprep.subr.mxu0 0.0
        %3116 = vmatpush1.msra.mxu0 %v3071
        %3117 = vmatprep.subr.mxu0 0.0
        %3118 = vmatpush1.msra.mxu0 %v3070
        %3119 = vmatprep.subr.mxu0 0.0
        %3120 = vmatpush1.msra.mxu0 %v3069
        %3121 = vmatprep.subr.mxu0 0.0
        %3122 = vmatpush1.msra.mxu0 %v3068
        %3123 = vmatprep.subr.mxu0 0.0
        %3124 = vmatpush2.msra.mxu0 0.0
        %3125 = vmatprep.subr.mxu0 0.0
        %3126 = vmatpush2.msra.mxu0 0.0
        %3127 = vmatprep.subr.mxu0 0.0
        %3128 = vmatpush2.msra.mxu0 0.0
        %3129 = vmatprep.subr.mxu0 0.0
        %3130 = vmatpush2.msra.mxu0 0.0
        %3131 = vmatprep.subr.mxu0 0.0
        %3132 = vmatpush2.msra.mxu0 0.0
        %3133 = vmatprep.subr.mxu0 0.0
        %3134 = vmatpush2.msra.mxu0 0.0
        %3135 = vmatprep.subr.mxu0 0.0
        %3136 = vmatpush2.msra.mxu0 0.0
        %3137 = vmatprep.subr.mxu0 0.0
        %3138 = vmatpush2.msra.mxu0 0.0
        %3139 = vmatprep.subr.mxu0 0.0
        %3140 = vmatpush2.msra.mxu0 0.0
        %3141 = vmatprep.subr.mxu0 0.0
        %3142 = vmatpush2.msra.mxu0 0.0
        %3143 = vmatprep.subr.mxu0 0.0
        %3144 = vmatpush2.msra.mxu0 0.0
        %3145 = vmatprep.subr.mxu0 0.0
        %3146 = vmatpush2.msra.mxu0 0.0
        %3147 = vmatprep.subr.mxu0 0.0
        %3148 = vmatpush2.msra.mxu0 0.0
        %3149 = vmatprep.subr.mxu0 0.0
        %3150 = vmatpush2.msra.mxu0 0.0
        %3151 = vmatprep.subr.mxu0 0.0
        %3152 = vmatpush2.msra.mxu0 0.0
        %3153 = vmatprep.subr.mxu0 0.0
        %3154 = vmatpush2.msra.mxu0 0.0
        %3155 = vmatprep.mubr.f32.mxu0 0.0
        %3156 = vmatmul.mubr.f32.gmra.mxu0 %v3089
        %v3157 = vpop.f32.mrf.mxu0
        %v3158 = vadd.f32 %v3086, %v3157
        %v3159 = vpop.f32.mrf.mxu0
        %3160 = vdwg.mxu0
        %v3161 = vmax.f32 %v3158, 0.0
        %v3163 = vlaneseq
        %v3164 = vshrl.u32 %v3163, 7
        %v3165 = vsub.s32 0, %v3164
        %v3166 = vrot.slane %v3081, %v3165
        %vm3168 = vcmask 523264
        %v3170 = vsel %vm3168, %v3161, 0
        %3172 = vmatprep.subr.mxu0 0.0
        %3173 = vmatpush1.msra.mxu0 0.0
        %3174 = vmatprep.subr.mxu0 0.0
        %3175 = vmatpush1.msra.mxu0 0.0
        %3176 = vmatprep.subr.mxu0 0.0
        %3177 = vmatpush1.msra.mxu0 0.0
        %3178 = vmatprep.subr.mxu0 0.0
        %3179 = vmatpush1.msra.mxu0 0.0
        %3180 = vmatprep.subr.mxu0 0.0
        %3181 = vmatpush1.msra.mxu0 0.0
        %3182 = vmatprep.subr.mxu0 0.0
        %3183 = vmatpush1.msra.mxu0 0.0
        %3184 = vmatprep.subr.mxu0 0.0
        %3185 = vmatpush1.msra.mxu0 0.0
        %3186 = vmatprep.subr.mxu0 0.0
        %3187 = vmatpush1.msra.mxu0 0.0
        %3188 = vmatprep.subr.mxu0 0.0
        %3189 = vmatpush1.msra.mxu0 %v3080
        %3190 = vmatprep.subr.mxu0 0.0
        %3191 = vmatpush1.msra.mxu0 %v3079
        %3192 = vmatprep.subr.mxu0 0.0
        %3193 = vmatpush1.msra.mxu0 %v3078
        %3194 = vmatprep.subr.mxu0 0.0
        %3195 = vmatpush1.msra.mxu0 %v3077
        %3196 = vmatprep.subr.mxu0 0.0
        %3197 = vmatpush1.msra.mxu0 %v3076
        %3198 = vmatprep.subr.mxu0 0.0
        %3199 = vmatpush1.msra.mxu0 %v3075
        %3200 = vmatprep.subr.mxu0 0.0
        %3201 = vmatpush1.msra.mxu0 %v3074
        %3202 = vmatprep.subr.mxu0 0.0
        %3203 = vmatpush1.msra.mxu0 %v3073
        %3204 = vmatprep.subr.mxu0 0.0
        %3205 = vmatpush2.msra.mxu0 0.0
        %3206 = vmatprep.subr.mxu0 0.0
        %3207 = vmatpush2.msra.mxu0 0.0
        %3208 = vmatprep.subr.mxu0 0.0
        %3209 = vmatpush2.msra.mxu0 0.0
        %3210 = vmatprep.subr.mxu0 0.0
        %3211 = vmatpush2.msra.mxu0 0.0
        %3212 = vmatprep.subr.mxu0 0.0
        %3213 = vmatpush2.msra.mxu0 0.0
        %3214 = vmatprep.subr.mxu0 0.0
        %3215 = vmatpush2.msra.mxu0 0.0
        %3216 = vmatprep.subr.mxu0 0.0
        %3217 = vmatpush2.msra.mxu0 0.0
        %3218 = vmatprep.subr.mxu0 0.0
        %3219 = vmatpush2.msra.mxu0 0.0
        %3220 = vmatprep.subr.mxu0 0.0
        %3221 = vmatpush2.msra.mxu0 0.0
        %3222 = vmatprep.subr.mxu0 0.0
        %3223 = vmatpush2.msra.mxu0 0.0
        %3224 = vmatprep.subr.mxu0 0.0
        %3225 = vmatpush2.msra.mxu0 0.0
        %3226 = vmatprep.subr.mxu0 0.0
        %3227 = vmatpush2.msra.mxu0 0.0
        %3228 = vmatprep.subr.mxu0 0.0
        %3229 = vmatpush2.msra.mxu0 0.0
        %3230 = vmatprep.subr.mxu0 0.0
        %3231 = vmatpush2.msra.mxu0 0.0
        %3232 = vmatprep.subr.mxu0 0.0
        %3233 = vmatpush2.msra.mxu0 0.0
        %3234 = vmatprep.subr.mxu0 0.0
        %3235 = vmatpush2.msra.mxu0 0.0
        %3236 = vmatprep.mubr.f32.mxu0 0.0
        %3237 = vmatmul.mubr.f32.gmra.mxu0 %v3170
        %v3238 = vpop.f32.mrf.mxu0
        %v3239 = vadd.f32 %v3166, %v3238
        %v3240 = vpop.f32.mrf.mxu0
        %3241 = vdwg.mxu0
        %v3242 = vadd.f32 %v3038, %v3239
        %v3243 = vld [vmem:[%s18] sm:$0x1]
        %v3244 = vld [vmem:[%s19] sm:$0x1]
        %v3245 = vsel %vm788, %v3242, 0.0
        %3246 = vadd.xlane.f32.xlu0 %v3245
        %v3247 = vpop.xlane.xlu0 %3246
        %v3248 = vmul.f32 %v3247, %v792
        %v3249 = vsub.f32 %v3242, %v3248
        %v3250 = vmul.f32 %v3249, %v3249
        %v3251 = vsel %vm788, %v3250, 0.0
        %3252 = vadd.xlane.f32.xlu0 %v3251
        %v3253 = vpop.xlane.xlu0 %3252
        %v3254 = vmul.f32 %v3253, %v792
        %v3255 = vadd.f32 %v3254, 1e-06
        %v3256 = vrsqrt.pop %v3255
        %v3257 = vmul.f32 %v3249, %v3256
        %v3259 = vlaneseq
        %v3260 = vshrl.u32 %v3259, 7
        %v3261 = vsub.s32 0, %v3260
        %v3262 = vrot.slane %v3243, %v3261
        %v3264 = vmul.f32 %v3257, %v3262
        %v3266 = vlaneseq
        %v3267 = vshrl.u32 %v3266, 7
        %v3268 = vsub.s32 0, %v3267
        %v3269 = vrot.slane %v3244, %v3268
        %v3271 = vadd.f32 %v3264, %v3269
        %3272 = vst.msk [vmem:[%s767] sm:$0xff] %vm788, %v3271
        %s3273 = sand.u32 %s570, 1
        %s3274 = scalar_lea.sflag [#allocation3], %s3273
        %s3275 = sand.u32 %s570, 1
        %s3276 = smul.addr %s3275, 8
        %s3277 = scalar_lea.vmem [#allocation2], %s3276
        // Predicated region
        $region117: #{forward.3} parent=115 // pred_check
          %p3278 = pneg %p580
        $region118: #{forward.3} parent=115 // pred_check_branch
          %3280 = sbr.rel (%p3278) target = $region120
        $region119: #{forward.3} parent=115 // pred_region
          %s3282 = ssub.s32 128, 128
          %3283 = vsyncadd %s3274, %s3282
          %s3284 = smul.addr %s38, 128
          %s3285 = scalar_lea.hbm %s24, %s3284
          %s3287 = sshll.u32 %s3277, 4
          %s3288 = int_to_ptr.vmem [resolvable:$true] %s3287
          %3290 = dma.vmem_to_hbm [thread:$0]  %s3288, 128, %s3285, %s3274
        $region120: #{forward.3} parent=115 // pred_fallthru
          _
      $region116: #{forward.3} parent=5 // pred_fallthru
        _
      %p3291 = scmp.le.s32.totalorder 2, %s33
      // Predicated region
      $region121: #{forward.3} parent=5 // pred_check
        %p3292 = pneg %p3291
      $region122: #{forward.3} parent=5 // pred_check_branch
        %3294 = sbr.rel (%p3292) target = $region124
      $region123: #{forward.3} parent=5 // pred_region
        %s3295 = ssub.s32 %s33, 2
        // Predicated region
        $region125: #{forward.3} parent=123 // pred_check
          %p3296 = pneg %p586
        $region126: #{forward.3} parent=123 // pred_check_branch
          %3298 = sbr.rel (%p3296) target = $region128
        $region127: #{forward.3} parent=123 // pred_region
          %s3299 = sand.u32 %s571, 1
          %s3300 = scalar_lea.sflag [#allocation3], %s3299
          %s3301 = sand.u32 %s571, 1
          %s3302 = smul.addr %s3301, 8
          %s3303 = scalar_lea.vmem [#allocation2], %s3302
          %3304 = dma.done %s3300, 128
        $region128: #{forward.3} parent=123 // pred_fallthru
          _
      $region124: #{forward.3} parent=5 // pred_fallthru
        _
    $region6: #{forward.3} parent=1 // loop_footer
      %s37 = sadd.s32 1, %s33
    $region7: #{forward.3} parent=1 // loop_footer_branch
      %32 = sbr.rel target = $region3
    $region8: #{forward.3} parent=1 // loop_exit
      _
    %3305 = vsyncpa [#allocation3], 1
    %s3306 = scalar_lea.sflag [#allocation3], 1
    %3307 = vsyncpa %s3306, 1

// kernel: forward.2
$region0: #{forward.2}
  #allocation0 [shape = 'u32[]', space=smem, size = 0x4, offset = 0x4, fixed_abs, tag = 'smem constant byte address 0x4 - core index']
  #allocation1 [shape = 'u32[144,128]{1,0:T(1,128)}', space=vmem, size = 0x12000, scoped, tag = 'internal scratch']
  %s0 = inlined_call_operand.vmem [shape: f32[2,8,32], index: 0, kind: input, shape index: {}]
  %s1 = inlined_call_operand.vmem [shape: f32[2,8,8], index: 1, kind: input, shape index: {}]
  %s2 = inlined_call_operand.vmem [shape: f32[2,8,8], index: 2, kind: input, shape index: {}]
  %s3 = inlined_call_operand.vmem [shape: f32[32,96], index: 3, kind: input, shape index: {}]
  %s4 = inlined_call_operand.vmem [shape: f32[1,96], index: 4, kind: input, shape index: {}]
  %s5 = inlined_call_operand.vmem [shape: f32[32,32], index: 5, kind: input, shape index: {}]
  %s6 = inlined_call_operand.vmem [shape: f32[1,32], index: 6, kind: input, shape index: {}]
  %s7 = inlined_call_operand.vmem [shape: f32[32,96], index: 7, kind: input, shape index: {}]
  %s8 = inlined_call_operand.vmem [shape: f32[1,96], index: 8, kind: input, shape index: {}]
  %s9 = inlined_call_operand.vmem [shape: f32[32,32], index: 9, kind: input, shape index: {}]
  %s10 = inlined_call_operand.vmem [shape: f32[1,32], index: 10, kind: input, shape index: {}]
  %s11 = inlined_call_operand.vmem [shape: f32[1,32], index: 11, kind: input, shape index: {}]
  %s12 = inlined_call_operand.vmem [shape: f32[1,32], index: 12, kind: input, shape index: {}]
  %s13 = inlined_call_operand.vmem [shape: f32[1,32], index: 13, kind: input, shape index: {}]
  %s14 = inlined_call_operand.vmem [shape: f32[1,32], index: 14, kind: input, shape index: {}]
  %s15 = inlined_call_operand.vmem [shape: f32[1,32], index: 15, kind: input, shape index: {}]
  %s16 = inlined_call_operand.vmem [shape: f32[1,32], index: 16, kind: input, shape index: {}]
  %s17 = inlined_call_operand.vmem [shape: f32[1,32], index: 17, kind: input, shape index: {}]
  %s18 = inlined_call_operand.vmem [shape: f32[1,32], index: 18, kind: input, shape index: {}]
  %s19 = inlined_call_operand.vmem [shape: f32[32,64], index: 19, kind: input, shape index: {}]
  %s20 = inlined_call_operand.vmem [shape: f32[1,64], index: 20, kind: input, shape index: {}]
  %s21 = inlined_call_operand.vmem [shape: f32[64,32], index: 21, kind: input, shape index: {}]
  %s22 = inlined_call_operand.vmem [shape: f32[1,32], index: 22, kind: input, shape index: {}]
  %s23 = inlined_call_operand.vmem [shape: f32[2,8,32], index: 23, kind: output, shape index: {}]
  %s24 = sld [smem:[#allocation0]]
  $region125: #{forward.2} parent=0
    _
  %s26 = ssub.s32 1, %s24
  %s27 = scalar_select 0, %s26, %s24
  loop: start=0, step=1, limit=4
  $region2: #{forward.2} parent=0 // loop_pre_header
    _
  $region3: #{forward.2} parent=0 // loop_header
    %s29 = sphi 0, %s33
    %p30 = scmp.ge.s32.totalorder %s29, 4
    %s39 = sphi 0, %s41
    %s42 = sphi 0, %s39
    %s43 = sphi 0, %s42
    %s59 = sphi 0, %s43
    %s65 = sphi 0, %s67
    %s68 = sphi 0, %s65
    %s69 = sphi 0, %s68
    %s85 = sphi 0, %s69
    %s91 = sphi 0, %s93
    %s94 = sphi 0, %s91
    %s95 = sphi 0, %s94
    %s111 = sphi 0, %s95
    %s115 = sphi 0, %s115
    %s117 = sphi 0, %s115
    %s118 = sphi 0, %s117
    %s132 = sphi 0, %s118
    %s136 = sphi 0, %s136
    %s138 = sphi 0, %s136
    %s139 = sphi 0, %s138
    %s153 = sphi 0, %s139
    %s157 = sphi 0, %s157
    %s159 = sphi 0, %s157
    %s160 = sphi 0, %s159
    %s174 = sphi 0, %s160
    %s178 = sphi 0, %s178
    %s180 = sphi 0, %s178
    %s181 = sphi 0, %s180
    %s195 = sphi 0, %s181
    %s199 = sphi 0, %s199
    %s201 = sphi 0, %s199
    %s202 = sphi 0, %s201
    %s216 = sphi 0, %s202
    %s220 = sphi 0, %s220
    %s222 = sphi 0, %s220
    %s223 = sphi 0, %s222
    %s237 = sphi 0, %s223
    %s241 = sphi 0, %s241
    %s243 = sphi 0, %s241
    %s244 = sphi 0, %s243
    %s258 = sphi 0, %s244
    %s262 = sphi 0, %s262
    %s264 = sphi 0, %s262
    %s265 = sphi 0, %s264
    %s279 = sphi 0, %s265
    %s283 = sphi 0, %s283
    %s285 = sphi 0, %s283
    %s286 = sphi 0, %s285
    %s300 = sphi 0, %s286
    %s304 = sphi 0, %s304
    %s306 = sphi 0, %s304
    %s307 = sphi 0, %s306
    %s321 = sphi 0, %s307
    %s325 = sphi 0, %s325
    %s327 = sphi 0, %s325
    %s328 = sphi 0, %s327
    %s342 = sphi 0, %s328
    %s346 = sphi 0, %s346
    %s348 = sphi 0, %s346
    %s349 = sphi 0, %s348
    %s363 = sphi 0, %s349
    %s367 = sphi 0, %s367
    %s369 = sphi 0, %s367
    %s370 = sphi 0, %s369
    %s384 = sphi 0, %s370
    %s388 = sphi 0, %s388
    %s390 = sphi 0, %s388
    %s391 = sphi 0, %s390
    %s405 = sphi 0, %s391
    %s409 = sphi 0, %s409
    %s411 = sphi 0, %s409
    %s412 = sphi 0, %s411
    %s426 = sphi 0, %s412
    %s430 = sphi 0, %s430
    %s432 = sphi 0, %s430
    %s433 = sphi 0, %s432
    %s447 = sphi 0, %s433
    %s451 = sphi 0, %s451
    %s453 = sphi 0, %s451
    %s454 = sphi 0, %s453
    %s468 = sphi 0, %s454
    %s472 = sphi 0, %s472
    %s474 = sphi 0, %s472
    %s475 = sphi 0, %s474
    %s489 = sphi 0, %s475
    %s493 = sphi 0, %s493
    %s495 = sphi 0, %s493
    %s496 = sphi 0, %s495
    %s510 = sphi 0, %s496
    %s514 = sphi 0, %s514
    %s516 = sphi 0, %s514
    %s517 = sphi 0, %s516
    %s531 = sphi 0, %s517
    %s537 = sphi 0, %s539
    %s540 = sphi 0, %s537
    %s541 = sphi 0, %s540
    %s557 = sphi 0, %s541
  $region4: #{forward.2} parent=0 // loop_header_branch
    %32 = sbr.rel (%p30) target = $region8
  $region5: #{forward.2} parent=0 // loop_body
    %s34 = ssub.s32 %s29, 1
    %s35 = ssub.s32 %s29, 2
    %s36 = sadd.s32 %s29, 1
    %s37 = ssub.s32 %s29, %s36
    %p38 = scmp.eq.s32.totalorder %s37, 0
    %s40 = sadd.s32 %s39, 1
    %s41 = scalar_select %p38, %s39, %s40
    %p44 = pneg %p38
    %p45 = scmp.eq.s32.totalorder %s29, 1
    %p46 = por %p44, %p45
    %p47 = scmp.ne.s32.totalorder %s39, %s42
    %p48 = scmp.eq.s32.totalorder %s29, 0
    %p49 = por %p47, %p48
    %p50 = scmp.ne.s32.totalorder %s39, %s42
    %p51 = scmp.eq.s32.totalorder %s34, 1
    %p52 = por %p50, %p51
    %p53 = scmp.ne.s32.totalorder %s42, %s43
    %p54 = scmp.eq.s32.totalorder %s34, 0
    %p55 = por %p53, %p54
    %p56 = scmp.ne.s32.totalorder %s42, %s43
    %p57 = scmp.eq.s32.totalorder %s35, 1
    %p58 = por %p56, %p57
    %p60 = scmp.ne.s32.totalorder %s43, %s59
    %p61 = scmp.eq.s32.totalorder %s35, 0
    %p62 = por %p60, %p61
    %s63 = ssub.s32 %s29, %s36
    %p64 = scmp.eq.s32.totalorder %s63, 0
    %s66 = sadd.s32 %s65, 1
    %s67 = scalar_select %p64, %s65, %s66
    %p70 = pneg %p64
    %p71 = scmp.eq.s32.totalorder %s29, 1
    %p72 = por %p70, %p71
    %p73 = scmp.ne.s32.totalorder %s65, %s68
    %p74 = scmp.eq.s32.totalorder %s29, 0
    %p75 = por %p73, %p74
    %p76 = scmp.ne.s32.totalorder %s65, %s68
    %p77 = scmp.eq.s32.totalorder %s34, 1
    %p78 = por %p76, %p77
    %p79 = scmp.ne.s32.totalorder %s68, %s69
    %p80 = scmp.eq.s32.totalorder %s34, 0
    %p81 = por %p79, %p80
    %p82 = scmp.ne.s32.totalorder %s68, %s69
    %p83 = scmp.eq.s32.totalorder %s35, 1
    %p84 = por %p82, %p83
    %p86 = scmp.ne.s32.totalorder %s69, %s85
    %p87 = scmp.eq.s32.totalorder %s35, 0
    %p88 = por %p86, %p87
    %s89 = ssub.s32 %s29, %s36
    %p90 = scmp.eq.s32.totalorder %s89, 0
    %s92 = sadd.s32 %s91, 1
    %s93 = scalar_select %p90, %s91, %s92
    %p96 = pneg %p90
    %p97 = scmp.eq.s32.totalorder %s29, 1
    %p98 = por %p96, %p97
    %p99 = scmp.ne.s32.totalorder %s91, %s94
    %p100 = scmp.eq.s32.totalorder %s29, 0
    %p101 = por %p99, %p100
    %p102 = scmp.ne.s32.totalorder %s91, %s94
    %p103 = scmp.eq.s32.totalorder %s34, 1
    %p104 = por %p102, %p103
    %p105 = scmp.ne.s32.totalorder %s94, %s95
    %p106 = scmp.eq.s32.totalorder %s34, 0
    %p107 = por %p105, %p106
    %p108 = scmp.ne.s32.totalorder %s94, %s95
    %p109 = scmp.eq.s32.totalorder %s35, 1
    %p110 = por %p108, %p109
    %p112 = scmp.ne.s32.totalorder %s95, %s111
    %p113 = scmp.eq.s32.totalorder %s35, 0
    %p114 = por %p112, %p113
    %s116 = sadd.s32 %s115, 1
    %p119 = scmp.eq.s32.totalorder %s29, 1
    %p120 = scmp.ne.s32.totalorder %s115, %s117
    %p121 = scmp.eq.s32.totalorder %s29, 0
    %p122 = por %p120, %p121
    %p123 = scmp.ne.s32.totalorder %s115, %s117
    %p124 = scmp.eq.s32.totalorder %s34, 1
    %p125 = por %p123, %p124
    %p126 = scmp.ne.s32.totalorder %s117, %s118
    %p127 = scmp.eq.s32.totalorder %s34, 0
    %p128 = por %p126, %p127
    %p129 = scmp.ne.s32.totalorder %s117, %s118
    %p130 = scmp.eq.s32.totalorder %s35, 1
    %p131 = por %p129, %p130
    %p133 = scmp.ne.s32.totalorder %s118, %s132
    %p134 = scmp.eq.s32.totalorder %s35, 0
    %p135 = por %p133, %p134
    %s137 = sadd.s32 %s136, 1
    %p140 = scmp.eq.s32.totalorder %s29, 1
    %p141 = scmp.ne.s32.totalorder %s136, %s138
    %p142 = scmp.eq.s32.totalorder %s29, 0
    %p143 = por %p141, %p142
    %p144 = scmp.ne.s32.totalorder %s136, %s138
    %p145 = scmp.eq.s32.totalorder %s34, 1
    %p146 = por %p144, %p145
    %p147 = scmp.ne.s32.totalorder %s138, %s139
    %p148 = scmp.eq.s32.totalorder %s34, 0
    %p149 = por %p147, %p148
    %p150 = scmp.ne.s32.totalorder %s138, %s139
    %p151 = scmp.eq.s32.totalorder %s35, 1
    %p152 = por %p150, %p151
    %p154 = scmp.ne.s32.totalorder %s139, %s153
    %p155 = scmp.eq.s32.totalorder %s35, 0
    %p156 = por %p154, %p155
    %s158 = sadd.s32 %s157, 1
    %p161 = scmp.eq.s32.totalorder %s29, 1
    %p162 = scmp.ne.s32.totalorder %s157, %s159
    %p163 = scmp.eq.s32.totalorder %s29, 0
    %p164 = por %p162, %p163
    %p165 = scmp.ne.s32.totalorder %s157, %s159
    %p166 = scmp.eq.s32.totalorder %s34, 1
    %p167 = por %p165, %p166
    %p168 = scmp.ne.s32.totalorder %s159, %s160
    %p169 = scmp.eq.s32.totalorder %s34, 0
    %p170 = por %p168, %p169
    %p171 = scmp.ne.s32.totalorder %s159, %s160
    %p172 = scmp.eq.s32.totalorder %s35, 1
    %p173 = por %p171, %p172
    %p175 = scmp.ne.s32.totalorder %s160, %s174
    %p176 = scmp.eq.s32.totalorder %s35, 0
    %p177 = por %p175, %p176
    %s179 = sadd.s32 %s178, 1
    %p182 = scmp.eq.s32.totalorder %s29, 1
    %p183 = scmp.ne.s32.totalorder %s178, %s180
    %p184 = scmp.eq.s32.totalorder %s29, 0
    %p185 = por %p183, %p184
    %p186 = scmp.ne.s32.totalorder %s178, %s180
    %p187 = scmp.eq.s32.totalorder %s34, 1
    %p188 = por %p186, %p187
    %p189 = scmp.ne.s32.totalorder %s180, %s181
    %p190 = scmp.eq.s32.totalorder %s34, 0
    %p191 = por %p189, %p190
    %p192 = scmp.ne.s32.totalorder %s180, %s181
    %p193 = scmp.eq.s32.totalorder %s35, 1
    %p194 = por %p192, %p193
    %p196 = scmp.ne.s32.totalorder %s181, %s195
    %p197 = scmp.eq.s32.totalorder %s35, 0
    %p198 = por %p196, %p197
    %s200 = sadd.s32 %s199, 1
    %p203 = scmp.eq.s32.totalorder %s29, 1
    %p204 = scmp.ne.s32.totalorder %s199, %s201
    %p205 = scmp.eq.s32.totalorder %s29, 0
    %p206 = por %p204, %p205
    %p207 = scmp.ne.s32.totalorder %s199, %s201
    %p208 = scmp.eq.s32.totalorder %s34, 1
    %p209 = por %p207, %p208
    %p210 = scmp.ne.s32.totalorder %s201, %s202
    %p211 = scmp.eq.s32.totalorder %s34, 0
    %p212 = por %p210, %p211
    %p213 = scmp.ne.s32.totalorder %s201, %s202
    %p214 = scmp.eq.s32.totalorder %s35, 1
    %p215 = por %p213, %p214
    %p217 = scmp.ne.s32.totalorder %s202, %s216
    %p218 = scmp.eq.s32.totalorder %s35, 0
    %p219 = por %p217, %p218
    %s221 = sadd.s32 %s220, 1
    %p224 = scmp.eq.s32.totalorder %s29, 1
    %p225 = scmp.ne.s32.totalorder %s220, %s222
    %p226 = scmp.eq.s32.totalorder %s29, 0
    %p227 = por %p225, %p226
    %p228 = scmp.ne.s32.totalorder %s220, %s222
    %p229 = scmp.eq.s32.totalorder %s34, 1
    %p230 = por %p228, %p229
    %p231 = scmp.ne.s32.totalorder %s222, %s223
    %p232 = scmp.eq.s32.totalorder %s34, 0
    %p233 = por %p231, %p232
    %p234 = scmp.ne.s32.totalorder %s222, %s223
    %p235 = scmp.eq.s32.totalorder %s35, 1
    %p236 = por %p234, %p235
    %p238 = scmp.ne.s32.totalorder %s223, %s237
    %p239 = scmp.eq.s32.totalorder %s35, 0
    %p240 = por %p238, %p239
    %s242 = sadd.s32 %s241, 1
    %p245 = scmp.eq.s32.totalorder %s29, 1
    %p246 = scmp.ne.s32.totalorder %s241, %s243
    %p247 = scmp.eq.s32.totalorder %s29, 0
    %p248 = por %p246, %p247
    %p249 = scmp.ne.s32.totalorder %s241, %s243
    %p250 = scmp.eq.s32.totalorder %s34, 1
    %p251 = por %p249, %p250
    %p252 = scmp.ne.s32.totalorder %s243, %s244
    %p253 = scmp.eq.s32.totalorder %s34, 0
    %p254 = por %p252, %p253
    %p255 = scmp.ne.s32.totalorder %s243, %s244
    %p256 = scmp.eq.s32.totalorder %s35, 1
    %p257 = por %p255, %p256
    %p259 = scmp.ne.s32.totalorder %s244, %s258
    %p260 = scmp.eq.s32.totalorder %s35, 0
    %p261 = por %p259, %p260
    %s263 = sadd.s32 %s262, 1
    %p266 = scmp.eq.s32.totalorder %s29, 1
    %p267 = scmp.ne.s32.totalorder %s262, %s264
    %p268 = scmp.eq.s32.totalorder %s29, 0
    %p269 = por %p267, %p268
    %p270 = scmp.ne.s32.totalorder %s262, %s264
    %p271 = scmp.eq.s32.totalorder %s34, 1
    %p272 = por %p270, %p271
    %p273 = scmp.ne.s32.totalorder %s264, %s265
    %p274 = scmp.eq.s32.totalorder %s34, 0
    %p275 = por %p273, %p274
    %p276 = scmp.ne.s32.totalorder %s264, %s265
    %p277 = scmp.eq.s32.totalorder %s35, 1
    %p278 = por %p276, %p277
    %p280 = scmp.ne.s32.totalorder %s265, %s279
    %p281 = scmp.eq.s32.totalorder %s35, 0
    %p282 = por %p280, %p281
    %s284 = sadd.s32 %s283, 1
    %p287 = scmp.eq.s32.totalorder %s29, 1
    %p288 = scmp.ne.s32.totalorder %s283, %s285
    %p289 = scmp.eq.s32.totalorder %s29, 0
    %p290 = por %p288, %p289
    %p291 = scmp.ne.s32.totalorder %s283, %s285
    %p292 = scmp.eq.s32.totalorder %s34, 1
    %p293 = por %p291, %p292
    %p294 = scmp.ne.s32.totalorder %s285, %s286
    %p295 = scmp.eq.s32.totalorder %s34, 0
    %p296 = por %p294, %p295
    %p297 = scmp.ne.s32.totalorder %s285, %s286
    %p298 = scmp.eq.s32.totalorder %s35, 1
    %p299 = por %p297, %p298
    %p301 = scmp.ne.s32.totalorder %s286, %s300
    %p302 = scmp.eq.s32.totalorder %s35, 0
    %p303 = por %p301, %p302
    %s305 = sadd.s32 %s304, 1
    %p308 = scmp.eq.s32.totalorder %s29, 1
    %p309 = scmp.ne.s32.totalorder %s304, %s306
    %p310 = scmp.eq.s32.totalorder %s29, 0
    %p311 = por %p309, %p310
    %p312 = scmp.ne.s32.totalorder %s304, %s306
    %p313 = scmp.eq.s32.totalorder %s34, 1
    %p314 = por %p312, %p313
    %p315 = scmp.ne.s32.totalorder %s306, %s307
    %p316 = scmp.eq.s32.totalorder %s34, 0
    %p317 = por %p315, %p316
    %p318 = scmp.ne.s32.totalorder %s306, %s307
    %p319 = scmp.eq.s32.totalorder %s35, 1
    %p320 = por %p318, %p319
    %p322 = scmp.ne.s32.totalorder %s307, %s321
    %p323 = scmp.eq.s32.totalorder %s35, 0
    %p324 = por %p322, %p323
    %s326 = sadd.s32 %s325, 1
    %p329 = scmp.eq.s32.totalorder %s29, 1
    %p330 = scmp.ne.s32.totalorder %s325, %s327
    %p331 = scmp.eq.s32.totalorder %s29, 0
    %p332 = por %p330, %p331
    %p333 = scmp.ne.s32.totalorder %s325, %s327
    %p334 = scmp.eq.s32.totalorder %s34, 1
    %p335 = por %p333, %p334
    %p336 = scmp.ne.s32.totalorder %s327, %s328
    %p337 = scmp.eq.s32.totalorder %s34, 0
    %p338 = por %p336, %p337
    %p339 = scmp.ne.s32.totalorder %s327, %s328
    %p340 = scmp.eq.s32.totalorder %s35, 1
    %p341 = por %p339, %p340
    %p343 = scmp.ne.s32.totalorder %s328, %s342
    %p344 = scmp.eq.s32.totalorder %s35, 0
    %p345 = por %p343, %p344
    %s347 = sadd.s32 %s346, 1
    %p350 = scmp.eq.s32.totalorder %s29, 1
    %p351 = scmp.ne.s32.totalorder %s346, %s348
    %p352 = scmp.eq.s32.totalorder %s29, 0
    %p353 = por %p351, %p352
    %p354 = scmp.ne.s32.totalorder %s346, %s348
    %p355 = scmp.eq.s32.totalorder %s34, 1
    %p356 = por %p354, %p355
    %p357 = scmp.ne.s32.totalorder %s348, %s349
    %p358 = scmp.eq.s32.totalorder %s34, 0
    %p359 = por %p357, %p358
    %p360 = scmp.ne.s32.totalorder %s348, %s349
    %p361 = scmp.eq.s32.totalorder %s35, 1
    %p362 = por %p360, %p361
    %p364 = scmp.ne.s32.totalorder %s349, %s363
    %p365 = scmp.eq.s32.totalorder %s35, 0
    %p366 = por %p364, %p365
    %s368 = sadd.s32 %s367, 1
    %p371 = scmp.eq.s32.totalorder %s29, 1
    %p372 = scmp.ne.s32.totalorder %s367, %s369
    %p373 = scmp.eq.s32.totalorder %s29, 0
    %p374 = por %p372, %p373
    %p375 = scmp.ne.s32.totalorder %s367, %s369
    %p376 = scmp.eq.s32.totalorder %s34, 1
    %p377 = por %p375, %p376
    %p378 = scmp.ne.s32.totalorder %s369, %s370
    %p379 = scmp.eq.s32.totalorder %s34, 0
    %p380 = por %p378, %p379
    %p381 = scmp.ne.s32.totalorder %s369, %s370
    %p382 = scmp.eq.s32.totalorder %s35, 1
    %p383 = por %p381, %p382
    %p385 = scmp.ne.s32.totalorder %s370, %s384
    %p386 = scmp.eq.s32.totalorder %s35, 0
    %p387 = por %p385, %p386
    %s389 = sadd.s32 %s388, 1
    %p392 = scmp.eq.s32.totalorder %s29, 1
    %p393 = scmp.ne.s32.totalorder %s388, %s390
    %p394 = scmp.eq.s32.totalorder %s29, 0
    %p395 = por %p393, %p394
    %p396 = scmp.ne.s32.totalorder %s388, %s390
    %p397 = scmp.eq.s32.totalorder %s34, 1
    %p398 = por %p396, %p397
    %p399 = scmp.ne.s32.totalorder %s390, %s391
    %p400 = scmp.eq.s32.totalorder %s34, 0
    %p401 = por %p399, %p400
    %p402 = scmp.ne.s32.totalorder %s390, %s391
    %p403 = scmp.eq.s32.totalorder %s35, 1
    %p404 = por %p402, %p403
    %p406 = scmp.ne.s32.totalorder %s391, %s405
    %p407 = scmp.eq.s32.totalorder %s35, 0
    %p408 = por %p406, %p407
    %s410 = sadd.s32 %s409, 1
    %p413 = scmp.eq.s32.totalorder %s29, 1
    %p414 = scmp.ne.s32.totalorder %s409, %s411
    %p415 = scmp.eq.s32.totalorder %s29, 0
    %p416 = por %p414, %p415
    %p417 = scmp.ne.s32.totalorder %s409, %s411
    %p418 = scmp.eq.s32.totalorder %s34, 1
    %p419 = por %p417, %p418
    %p420 = scmp.ne.s32.totalorder %s411, %s412
    %p421 = scmp.eq.s32.totalorder %s34, 0
    %p422 = por %p420, %p421
    %p423 = scmp.ne.s32.totalorder %s411, %s412
    %p424 = scmp.eq.s32.totalorder %s35, 1
    %p425 = por %p423, %p424
    %p427 = scmp.ne.s32.totalorder %s412, %s426
    %p428 = scmp.eq.s32.totalorder %s35, 0
    %p429 = por %p427, %p428
    %s431 = sadd.s32 %s430, 1
    %p434 = scmp.eq.s32.totalorder %s29, 1
    %p435 = scmp.ne.s32.totalorder %s430, %s432
    %p436 = scmp.eq.s32.totalorder %s29, 0
    %p437 = por %p435, %p436
    %p438 = scmp.ne.s32.totalorder %s430, %s432
    %p439 = scmp.eq.s32.totalorder %s34, 1
    %p440 = por %p438, %p439
    %p441 = scmp.ne.s32.totalorder %s432, %s433
    %p442 = scmp.eq.s32.totalorder %s34, 0
    %p443 = por %p441, %p442
    %p444 = scmp.ne.s32.totalorder %s432, %s433
    %p445 = scmp.eq.s32.totalorder %s35, 1
    %p446 = por %p444, %p445
    %p448 = scmp.ne.s32.totalorder %s433, %s447
    %p449 = scmp.eq.s32.totalorder %s35, 0
    %p450 = por %p448, %p449
    %s452 = sadd.s32 %s451, 1
    %p455 = scmp.eq.s32.totalorder %s29, 1
    %p456 = scmp.ne.s32.totalorder %s451, %s453
    %p457 = scmp.eq.s32.totalorder %s29, 0
    %p458 = por %p456, %p457
    %p459 = scmp.ne.s32.totalorder %s451, %s453
    %p460 = scmp.eq.s32.totalorder %s34, 1
    %p461 = por %p459, %p460
    %p462 = scmp.ne.s32.totalorder %s453, %s454
    %p463 = scmp.eq.s32.totalorder %s34, 0
    %p464 = por %p462, %p463
    %p465 = scmp.ne.s32.totalorder %s453, %s454
    %p466 = scmp.eq.s32.totalorder %s35, 1
    %p467 = por %p465, %p466
    %p469 = scmp.ne.s32.totalorder %s454, %s468
    %p470 = scmp.eq.s32.totalorder %s35, 0
    %p471 = por %p469, %p470
    %s473 = sadd.s32 %s472, 1
    %p476 = scmp.eq.s32.totalorder %s29, 1
    %p477 = scmp.ne.s32.totalorder %s472, %s474
    %p478 = scmp.eq.s32.totalorder %s29, 0
    %p479 = por %p477, %p478
    %p480 = scmp.ne.s32.totalorder %s472, %s474
    %p481 = scmp.eq.s32.totalorder %s34, 1
    %p482 = por %p480, %p481
    %p483 = scmp.ne.s32.totalorder %s474, %s475
    %p484 = scmp.eq.s32.totalorder %s34, 0
    %p485 = por %p483, %p484
    %p486 = scmp.ne.s32.totalorder %s474, %s475
    %p487 = scmp.eq.s32.totalorder %s35, 1
    %p488 = por %p486, %p487
    %p490 = scmp.ne.s32.totalorder %s475, %s489
    %p491 = scmp.eq.s32.totalorder %s35, 0
    %p492 = por %p490, %p491
    %s494 = sadd.s32 %s493, 1
    %p497 = scmp.eq.s32.totalorder %s29, 1
    %p498 = scmp.ne.s32.totalorder %s493, %s495
    %p499 = scmp.eq.s32.totalorder %s29, 0
    %p500 = por %p498, %p499
    %p501 = scmp.ne.s32.totalorder %s493, %s495
    %p502 = scmp.eq.s32.totalorder %s34, 1
    %p503 = por %p501, %p502
    %p504 = scmp.ne.s32.totalorder %s495, %s496
    %p505 = scmp.eq.s32.totalorder %s34, 0
    %p506 = por %p504, %p505
    %p507 = scmp.ne.s32.totalorder %s495, %s496
    %p508 = scmp.eq.s32.totalorder %s35, 1
    %p509 = por %p507, %p508
    %p511 = scmp.ne.s32.totalorder %s496, %s510
    %p512 = scmp.eq.s32.totalorder %s35, 0
    %p513 = por %p511, %p512
    %s515 = sadd.s32 %s514, 1
    %p518 = scmp.eq.s32.totalorder %s29, 1
    %p519 = scmp.ne.s32.totalorder %s514, %s516
    %p520 = scmp.eq.s32.totalorder %s29, 0
    %p521 = por %p519, %p520
    %p522 = scmp.ne.s32.totalorder %s514, %s516
    %p523 = scmp.eq.s32.totalorder %s34, 1
    %p524 = por %p522, %p523
    %p525 = scmp.ne.s32.totalorder %s516, %s517
    %p526 = scmp.eq.s32.totalorder %s34, 0
    %p527 = por %p525, %p526
    %p528 = scmp.ne.s32.totalorder %s516, %s517
    %p529 = scmp.eq.s32.totalorder %s35, 1
    %p530 = por %p528, %p529
    %p532 = scmp.ne.s32.totalorder %s517, %s531
    %p533 = scmp.eq.s32.totalorder %s35, 0
    %p534 = por %p532, %p533
    %s535 = ssub.s32 %s29, %s36
    %p536 = scmp.eq.s32.totalorder %s535, 0
    %s538 = sadd.s32 %s537, 1
    %s539 = scalar_select %p536, %s537, %s538
    %p542 = pneg %p536
    %p543 = scmp.eq.s32.totalorder %s29, 1
    %p544 = por %p542, %p543
    %p545 = scmp.ne.s32.totalorder %s537, %s540
    %p546 = scmp.eq.s32.totalorder %s29, 0
    %p547 = por %p545, %p546
    %p548 = scmp.ne.s32.totalorder %s537, %s540
    %p549 = scmp.eq.s32.totalorder %s34, 1
    %p550 = por %p548, %p549
    %p551 = scmp.ne.s32.totalorder %s540, %s541
    %p552 = scmp.eq.s32.totalorder %s34, 0
    %p553 = por %p551, %p552
    %p554 = scmp.ne.s32.totalorder %s540, %s541
    %p555 = scmp.eq.s32.totalorder %s35, 1
    %p556 = por %p554, %p555
    %p558 = scmp.ne.s32.totalorder %s541, %s557
    %p559 = scmp.eq.s32.totalorder %s35, 0
    %p560 = por %p558, %p559
    %p561 = scmp.le.s32.totalorder 1, %s29
    %p562 = scmp.lt.s32.totalorder %s29, 3
    %p563 = pnand %p561, %p562
    %p564 = pneg %p563
    // Predicated region
    $region9: #{forward.2} parent=5 // pred_check
      _
    $region10: #{forward.2} parent=5 // pred_check_branch
      %566 = sbr.rel (%p563) target = $region12
    $region11: #{forward.2} parent=5 // pred_region
      %s567 = ssub.s32 %s29, 1
      // Predicated region
      $region13: #{forward.2} parent=11 // pred_check
        %p568 = pneg %p128
      $region14: #{forward.2} parent=11 // pred_check_branch
        %570 = sbr.rel (%p568) target = $region16
      $region15: #{forward.2} parent=11 // pred_region
        _
      $region16: #{forward.2} parent=11 // pred_fallthru
        _
      // Predicated region
      $region17: #{forward.2} parent=11 // pred_check
        %p571 = pneg %p149
      $region18: #{forward.2} parent=11 // pred_check_branch
        %573 = sbr.rel (%p571) target = $region20
      $region19: #{forward.2} parent=11 // pred_region
        _
      $region20: #{forward.2} parent=11 // pred_fallthru
        _
      // Predicated region
      $region21: #{forward.2} parent=11 // pred_check
        %p574 = pneg %p170
      $region22: #{forward.2} parent=11 // pred_check_branch
        %576 = sbr.rel (%p574) target = $region24
      $region23: #{forward.2} parent=11 // pred_region
        _
      $region24: #{forward.2} parent=11 // pred_fallthru
        _
      // Predicated region
      $region25: #{forward.2} parent=11 // pred_check
        %p577 = pneg %p191
      $region26: #{forward.2} parent=11 // pred_check_branch
        %579 = sbr.rel (%p577) target = $region28
      $region27: #{forward.2} parent=11 // pred_region
        _
      $region28: #{forward.2} parent=11 // pred_fallthru
        _
      // Predicated region
      $region29: #{forward.2} parent=11 // pred_check
        %p580 = pneg %p212
      $region30: #{forward.2} parent=11 // pred_check_branch
        %582 = sbr.rel (%p580) target = $region32
      $region31: #{forward.2} parent=11 // pred_region
        _
      $region32: #{forward.2} parent=11 // pred_fallthru
        _
      // Predicated region
      $region33: #{forward.2} parent=11 // pred_check
        %p583 = pneg %p233
      $region34: #{forward.2} parent=11 // pred_check_branch
        %585 = sbr.rel (%p583) target = $region36
      $region35: #{forward.2} parent=11 // pred_region
        _
      $region36: #{forward.2} parent=11 // pred_fallthru
        _
      // Predicated region
      $region37: #{forward.2} parent=11 // pred_check
        %p586 = pneg %p254
      $region38: #{forward.2} parent=11 // pred_check_branch
        %588 = sbr.rel (%p586) target = $region40
      $region39: #{forward.2} parent=11 // pred_region
        _
      $region40: #{forward.2} parent=11 // pred_fallthru
        _
      // Predicated region
      $region41: #{forward.2} parent=11 // pred_check
        %p589 = pneg %p275
      $region42: #{forward.2} parent=11 // pred_check_branch
        %591 = sbr.rel (%p589) target = $region44
      $region43: #{forward.2} parent=11 // pred_region
        _
      $region44: #{forward.2} parent=11 // pred_fallthru
        _
      // Predicated region
      $region45: #{forward.2} parent=11 // pred_check
        %p592 = pneg %p296
      $region46: #{forward.2} parent=11 // pred_check_branch
        %594 = sbr.rel (%p592) target = $region48
      $region47: #{forward.2} parent=11 // pred_region
        _
      $region48: #{forward.2} parent=11 // pred_fallthru
        _
      // Predicated region
      $region49: #{forward.2} parent=11 // pred_check
        %p595 = pneg %p317
      $region50: #{forward.2} parent=11 // pred_check_branch
        %597 = sbr.rel (%p595) target = $region52
      $region51: #{forward.2} parent=11 // pred_region
        _
      $region52: #{forward.2} parent=11 // pred_fallthru
        _
      // Predicated region
      $region53: #{forward.2} parent=11 // pred_check
        %p598 = pneg %p338
      $region54: #{forward.2} parent=11 // pred_check_branch
        %600 = sbr.rel (%p598) target = $region56
      $region55: #{forward.2} parent=11 // pred_region
        _
      $region56: #{forward.2} parent=11 // pred_fallthru
        _
      // Predicated region
      $region57: #{forward.2} parent=11 // pred_check
        %p601 = pneg %p359
      $region58: #{forward.2} parent=11 // pred_check_branch
        %603 = sbr.rel (%p601) target = $region60
      $region59: #{forward.2} parent=11 // pred_region
        _
      $region60: #{forward.2} parent=11 // pred_fallthru
        _
      // Predicated region
      $region61: #{forward.2} parent=11 // pred_check
        %p604 = pneg %p380
      $region62: #{forward.2} parent=11 // pred_check_branch
        %606 = sbr.rel (%p604) target = $region64
      $region63: #{forward.2} parent=11 // pred_region
        _
      $region64: #{forward.2} parent=11 // pred_fallthru
        _
      // Predicated region
      $region65: #{forward.2} parent=11 // pred_check
        %p607 = pneg %p401
      $region66: #{forward.2} parent=11 // pred_check_branch
        %609 = sbr.rel (%p607) target = $region68
      $region67: #{forward.2} parent=11 // pred_region
        _
      $region68: #{forward.2} parent=11 // pred_fallthru
        _
      // Predicated region
      $region69: #{forward.2} parent=11 // pred_check
        %p610 = pneg %p422
      $region70: #{forward.2} parent=11 // pred_check_branch
        %612 = sbr.rel (%p610) target = $region72
      $region71: #{forward.2} parent=11 // pred_region
        _
      $region72: #{forward.2} parent=11 // pred_fallthru
        _
      // Predicated region
      $region73: #{forward.2} parent=11 // pred_check
        %p613 = pneg %p443
      $region74: #{forward.2} parent=11 // pred_check_branch
        %615 = sbr.rel (%p613) target = $region76
      $region75: #{forward.2} parent=11 // pred_region
        _
      $region76: #{forward.2} parent=11 // pred_fallthru
        _
      // Predicated region
      $region77: #{forward.2} parent=11 // pred_check
        %p616 = pneg %p464
      $region78: #{forward.2} parent=11 // pred_check_branch
        %618 = sbr.rel (%p616) target = $region80
      $region79: #{forward.2} parent=11 // pred_region
        _
      $region80: #{forward.2} parent=11 // pred_fallthru
        _
      // Predicated region
      $region81: #{forward.2} parent=11 // pred_check
        %p619 = pneg %p485
      $region82: #{forward.2} parent=11 // pred_check_branch
        %621 = sbr.rel (%p619) target = $region84
      $region83: #{forward.2} parent=11 // pred_region
        _
      $region84: #{forward.2} parent=11 // pred_fallthru
        _
      // Predicated region
      $region85: #{forward.2} parent=11 // pred_check
        %p622 = pneg %p506
      $region86: #{forward.2} parent=11 // pred_check_branch
        %624 = sbr.rel (%p622) target = $region88
      $region87: #{forward.2} parent=11 // pred_region
        _
      $region88: #{forward.2} parent=11 // pred_fallthru
        _
      // Predicated region
      $region89: #{forward.2} parent=11 // pred_check
        %p625 = pneg %p527
      $region90: #{forward.2} parent=11 // pred_check_branch
        %627 = sbr.rel (%p625) target = $region92
      $region91: #{forward.2} parent=11 // pred_region
        _
      $region92: #{forward.2} parent=11 // pred_fallthru
        _
    $region12: #{forward.2} parent=5 // pred_fallthru
      _
    %p628 = scmp.lt.s32.totalorder %s29, 2
    // Predicated region
    $region93: #{forward.2} parent=5 // pred_check
      %p629 = pneg %p628
    $region94: #{forward.2} parent=5 // pred_check_branch
      %631 = sbr.rel (%p629) target = $region96
    $region95: #{forward.2} parent=5 // pred_region
      // Predicated region
      $region97: #{forward.2} parent=95 // pred_check
        %p632 = pneg %p49
      $region98: #{forward.2} parent=95 // pred_check_branch
        %634 = sbr.rel (%p632) target = $region100
      $region99: #{forward.2} parent=95 // pred_region
        %p635 = scmp.lt.s32.totalorder %s29, 1
        %s636 = scalar_select %p635, %s29, 1
        %s637 = smul.addr %s636, 8
        %s638 = scalar_lea.vmem %s0, %s637
      $region100: #{forward.2} parent=95 // pred_fallthru
        _
      // Predicated region
      $region101: #{forward.2} parent=95 // pred_check
        %p639 = pneg %p75
      $region102: #{forward.2} parent=95 // pred_check_branch
        %641 = sbr.rel (%p639) target = $region104
      $region103: #{forward.2} parent=95 // pred_region
        %p642 = scmp.lt.s32.totalorder %s29, 1
        %s643 = scalar_select %p642, %s29, 1
        %s644 = smul.addr %s643, 8
        %s645 = scalar_lea.vmem %s1, %s644
      $region104: #{forward.2} parent=95 // pred_fallthru
        _
      // Predicated region
      $region105: #{forward.2} parent=95 // pred_check
        %p646 = pneg %p101
      $region106: #{forward.2} parent=95 // pred_check_branch
        %648 = sbr.rel (%p646) target = $region108
      $region107: #{forward.2} parent=95 // pred_region
        %p649 = scmp.lt.s32.totalorder %s29, 1
        %s650 = scalar_select %p649, %s29, 1
        %s651 = smul.addr %s650, 8
        %s652 = scalar_lea.vmem %s2, %s651
      $region108: #{forward.2} parent=95 // pred_fallthru
        _
    $region96: #{forward.2} parent=5 // pred_fallthru
      _
    %p653 = scmp.le.s32.totalorder 1, %s29
    %p654 = scmp.lt.s32.totalorder %s29, 3
    %p655 = pnand %p653, %p654
    %p656 = pneg %p655
    // Predicated region
    $region109: #{forward.2} parent=5 // pred_check
      _
    $region110: #{forward.2} parent=5 // pred_check_branch
      %658 = sbr.rel (%p655) target = $region112
    $region111: #{forward.2} parent=5 // pred_region
      %s659 = ssub.s32 %s29, 1
      %p660 = scmp.lt.s32.totalorder %s34, 1
      %s661 = scalar_select %p660, %s34, 1
      %s662 = smul.addr %s661, 8
      %s663 = scalar_lea.vmem %s0, %s662
      %p664 = pneg %p55
      %p665 = pneg %p52
      %p666 = scmp.lt.s32.totalorder %s34, 1
      %s667 = scalar_select %p666, %s34, 1
      %s668 = smul.addr %s667, 8
      %s669 = scalar_lea.vmem %s1, %s668
      %p670 = pneg %p81
      %p671 = pneg %p78
      %p672 = scmp.lt.s32.totalorder %s34, 1
      %s673 = scalar_select %p672, %s34, 1
      %s674 = smul.addr %s673, 8
      %s675 = scalar_lea.vmem %s2, %s674
      %p676 = pneg %p107
      %p677 = pneg %p104
      %p678 = pneg %p128
      %p679 = pneg %p125
      %p680 = pneg %p149
      %p681 = pneg %p146
      %p682 = pneg %p170
      %p683 = pneg %p167
      %p684 = pneg %p191
      %p685 = pneg %p188
      %p686 = pneg %p212
      %p687 = pneg %p209
      %p688 = pneg %p233
      %p689 = pneg %p230
      %p690 = pneg %p254
      %p691 = pneg %p251
      %p692 = pneg %p275
      %p693 = pneg %p272
      %p694 = pneg %p296
      %p695 = pneg %p293
      %p696 = pneg %p317
      %p697 = pneg %p314
      %p698 = pneg %p338
      %p699 = pneg %p335
      %p700 = pneg %p359
      %p701 = pneg %p356
      %p702 = pneg %p380
      %p703 = pneg %p377
      %p704 = pneg %p401
      %p705 = pneg %p398
      %p706 = pneg %p422
      %p707 = pneg %p419
      %p708 = pneg %p443
      %p709 = pneg %p440
      %p710 = pneg %p464
      %p711 = pneg %p461
      %p712 = pneg %p485
      %p713 = pneg %p482
      %p714 = pneg %p506
      %p715 = pneg %p503
      %p716 = pneg %p527
      %p717 = pneg %p524
      %p718 = pneg %p553
      %p719 = pneg %p550
      %p720 = scmp.lt.s32.totalorder %s34, 1
      %s721 = scalar_select %p720, %s34, 1
      %s722 = smul.addr %s721, 8
      %s723 = scalar_lea.vmem %s23, %s722
      %p724 = scmp.lt.s32.totalorder %s34, 1
      %s725 = scalar_select %p724, %s34, 1
      %s726 = smul.addr %s725, 8
      %s727 = scalar_lea.vmem %s0, %s726
      %p728 = scmp.lt.s32.totalorder %s34, 1
      %s729 = scalar_select %p728, %s34, 1
      %s730 = smul.addr %s729, 8
      %s731 = scalar_lea.vmem %s1, %s730
      %p732 = scmp.lt.s32.totalorder %s34, 1
      %s733 = scalar_select %p732, %s34, 1
      %s734 = smul.addr %s733, 8
      %s735 = scalar_lea.vmem %s2, %s734
      %p736 = scmp.lt.s32.totalorder %s34, 1
      %s737 = scalar_select %p736, %s34, 1
      %s738 = smul.addr %s737, 8
      %s739 = scalar_lea.vmem %s23, %s738
      %v740 = vld [vmem:[%s727] sm:$0xff]
      %v741 = vld [vmem:[%s11] sm:$0x1]
      %v742 = vld [vmem:[%s12] sm:$0x1]
      %vm743 = vcmask 261120
      %v744 = vsel %vm743, %v740, 0.0
      %745 = vadd.xlane.f32.xlu0 %v744
      %v746 = vpop.xlane.xlu0 %745
      %v747 = vrcp.pop 32.0
      %v748 = vmul.f32 %v746, %v747
      %v749 = vsub.f32 %v740, %v748
      %v750 = vmul.f32 %v749, %v749
      %v751 = vsel %vm743, %v750, 0.0
      %752 = vadd.xlane.f32.xlu0 %v751
      %v753 = vpop.xlane.xlu0 %752
      %v754 = vmul.f32 %v753, %v747
      %v755 = vadd.f32 %v754, 1e-06
      %v756 = vrsqrt.pop %v755
      %v757 = vmul.f32 %v749, %v756
      %v759 = vlaneseq
      %v760 = vshrl.u32 %v759, 7
      %v761 = vsub.s32 0, %v760
      %v762 = vrot.slane %v741, %v761
      %v764 = vmul.f32 %v757, %v762
      %v766 = vlaneseq
      %v767 = vshrl.u32 %v766, 7
      %v768 = vsub.s32 0, %v767
      %v769 = vrot.slane %v742, %v768
      %v771 = vadd.f32 %v764, %v769
      %v772 = vld [vmem:[%s731] sm:$0xff]
      %v773 = vld [vmem:[%s3] sm:$0xff]
      %v774 = vld [vmem:[%s3 + $0x8] sm:$0xff]
      %v775 = vld [vmem:[%s3 + $0x10] sm:$0xff]
      %v776 = vld [vmem:[%s3 + $0x18] sm:$0xff]
      %v777 = vld [vmem:[%s4] sm:$0x1]
      %v778 = vld [vmem:[%s5] sm:$0xff]
      %v779 = vld [vmem:[%s5 + $0x8] sm:$0xff]
      %v780 = vld [vmem:[%s5 + $0x10] sm:$0xff]
      %v781 = vld [vmem:[%s5 + $0x18] sm:$0xff]
      %v782 = vld [vmem:[%s6] sm:$0x1]
      %v784 = vlaneseq
      %v785 = vshrl.u32 %v784, 7
      %v786 = vsub.s32 0, %v785
      %v787 = vrot.slane %v777, %v786
      %v790 = vsel %vm743, %v771, 0
      %792 = vmatprep.subr.mxu0 0.0
      %793 = vmatpush1.msra.mxu0 0.0
      %794 = vmatprep.subr.mxu0 0.0
      %795 = vmatpush1.msra.mxu0 0.0
      %796 = vmatprep.subr.mxu0 0.0
      %797 = vmatpush1.msra.mxu0 0.0
      %798 = vmatprep.subr.mxu0 0.0
      %799 = vmatpush1.msra.mxu0 0.0
      %800 = vmatprep.subr.mxu0 0.0
      %801 = vmatpush1.msra.mxu0 0.0
      %802 = vmatprep.subr.mxu0 0.0
      %803 = vmatpush1.msra.mxu0 0.0
      %804 = vmatprep.subr.mxu0 0.0
      %805 = vmatpush1.msra.mxu0 0.0
      %806 = vmatprep.subr.mxu0 0.0
      %807 = vmatpush1.msra.mxu0 0.0
      %808 = vmatprep.subr.mxu0 0.0
      %809 = vmatpush1.msra.mxu0 0.0
      %810 = vmatprep.subr.mxu0 0.0
      %811 = vmatpush1.msra.mxu0 0.0
      %812 = vmatprep.subr.mxu0 0.0
      %813 = vmatpush1.msra.mxu0 0.0
      %814 = vmatprep.subr.mxu0 0.0
      %815 = vmatpush1.msra.mxu0 0.0
      %816 = vmatprep.subr.mxu0 0.0
      %817 = vmatpush1.msra.mxu0 %v776
      %818 = vmatprep.subr.mxu0 0.0
      %819 = vmatpush1.msra.mxu0 %v775
      %820 = vmatprep.subr.mxu0 0.0
      %821 = vmatpush1.msra.mxu0 %v774
      %822 = vmatprep.subr.mxu0 0.0
      %823 = vmatpush1.msra.mxu0 %v773
      %824 = vmatprep.subr.mxu0 0.0
      %825 = vmatpush2.msra.mxu0 0.0
      %826 = vmatprep.subr.mxu0 0.0
      %827 = vmatpush2.msra.mxu0 0.0
      %828 = vmatprep.subr.mxu0 0.0
      %829 = vmatpush2.msra.mxu0 0.0
      %830 = vmatprep.subr.mxu0 0.0
      %831 = vmatpush2.msra.mxu0 0.0
      %832 = vmatprep.subr.mxu0 0.0
      %833 = vmatpush2.msra.mxu0 0.0
      %834 = vmatprep.subr.mxu0 0.0
      %835 = vmatpush2.msra.mxu0 0.0
      %836 = vmatprep.subr.mxu0 0.0
      %837 = vmatpush2.msra.mxu0 0.0
      %838 = vmatprep.subr.mxu0 0.0
      %839 = vmatpush2.msra.mxu0 0.0
      %840 = vmatprep.subr.mxu0 0.0
      %841 = vmatpush2.msra.mxu0 0.0
      %842 = vmatprep.subr.mxu0 0.0
      %843 = vmatpush2.msra.mxu0 0.0
      %844 = vmatprep.subr.mxu0 0.0
      %845 = vmatpush2.msra.mxu0 0.0
      %846 = vmatprep.subr.mxu0 0.0
      %847 = vmatpush2.msra.mxu0 0.0
      %848 = vmatprep.subr.mxu0 0.0
      %849 = vmatpush2.msra.mxu0 0.0
      %850 = vmatprep.subr.mxu0 0.0
      %851 = vmatpush2.msra.mxu0 0.0
      %852 = vmatprep.subr.mxu0 0.0
      %853 = vmatpush2.msra.mxu0 0.0
      %854 = vmatprep.subr.mxu0 0.0
      %855 = vmatpush2.msra.mxu0 0.0
      %856 = vmatprep.mubr.f32.mxu0 0.0
      %857 = vmatmul.mubr.f32.gmra.mxu0 %v790
      %v858 = vpop.f32.mrf.mxu0
      %v859 = vadd.f32 %v787, %v858
      %v860 = vpop.f32.mrf.mxu0
      %861 = vdwg.mxu0
      %863 = vrot.lane.b32.xlu0 %v859, 96
      %v864 = vpop.permute.xlu0 %863
      %vm865 = vcmask 64512
      %v866 = vsel %vm865, %v859, 0
      %v868 = vsel %vm865, %v864, 0
      %870 = vmatprep.subr.mxu0 0.0
      %871 = vmatpush1.xpose.msra.mxu0 0.0
      %872 = vmatprep.subr.mxu0 0.0
      %873 = vmatpush1.xpose.msra.mxu0 0.0
      %874 = vmatprep.subr.mxu0 0.0
      %875 = vmatpush1.xpose.msra.mxu0 0.0
      %876 = vmatprep.subr.mxu0 0.0
      %877 = vmatpush1.xpose.msra.mxu0 0.0
      %878 = vmatprep.subr.mxu0 0.0
      %879 = vmatpush1.xpose.msra.mxu0 0.0
      %880 = vmatprep.subr.mxu0 0.0
      %881 = vmatpush1.xpose.msra.mxu0 0.0
      %882 = vmatprep.subr.mxu0 0.0
      %883 = vmatpush1.xpose.msra.mxu0 0.0
      %884 = vmatprep.subr.mxu0 0.0
      %885 = vmatpush1.xpose.msra.mxu0 0.0
      %886 = vmatprep.subr.mxu0 0.0
      %887 = vmatpush1.xpose.msra.mxu0 0.0
      %888 = vmatprep.subr.mxu0 0.0
      %889 = vmatpush1.xpose.msra.mxu0 0.0
      %890 = vmatprep.subr.mxu0 0.0
      %891 = vmatpush1.xpose.msra.mxu0 0.0
      %892 = vmatprep.subr.mxu0 0.0
      %893 = vmatpush1.xpose.msra.mxu0 0.0
      %894 = vmatprep.subr.mxu0 0.0
      %895 = vmatpush1.xpose.msra.mxu0 0.0
      %896 = vmatprep.subr.mxu0 0.0
      %897 = vmatpush1.xpose.msra.mxu0 0.0
      %898 = vmatprep.subr.mxu0 0.0
      %899 = vmatpush1.xpose.msra.mxu0 0.0
      %900 = vmatprep.subr.mxu0 0.0
      %901 = vmatpush1.xpose.msra.mxu0 %v868
      %902 = vmatprep.subr.mxu0 0.0
      %903 = vmatpush2.xpose.msra.mxu0 0.0
      %904 = vmatprep.subr.mxu0 0.0
      %905 = vmatpush2.xpose.msra.mxu0 0.0
      %906 = vmatprep.subr.mxu0 0.0
      %907 = vmatpush2.xpose.msra.mxu0 0.0
      %908 = vmatprep.subr.mxu0 0.0
      %909 = vmatpush2.xpose.msra.mxu0 0.0
      %910 = vmatprep.subr.mxu0 0.0
      %911 = vmatpush2.xpose.msra.mxu0 0.0
      %912 = vmatprep.subr.mxu0 0.0
      %913 = vmatpush2.xpose.msra.mxu0 0.0
      %914 = vmatprep.subr.mxu0 0.0
      %915 = vmatpush2.xpose.msra.mxu0 0.0
      %916 = vmatprep.subr.mxu0 0.0
      %917 = vmatpush2.xpose.msra.mxu0 0.0
      %918 = vmatprep.subr.mxu0 0.0
      %919 = vmatpush2.xpose.msra.mxu0 0.0
      %920 = vmatprep.subr.mxu0 0.0
      %921 = vmatpush2.xpose.msra.mxu0 0.0
      %922 = vmatprep.subr.mxu0 0.0
      %923 = vmatpush2.xpose.msra.mxu0 0.0
      %924 = vmatprep.subr.mxu0 0.0
      %925 = vmatpush2.xpose.msra.mxu0 0.0
      %926 = vmatprep.subr.mxu0 0.0
      %927 = vmatpush2.xpose.msra.mxu0 0.0
      %928 = vmatprep.subr.mxu0 0.0
      %929 = vmatpush2.xpose.msra.mxu0 0.0
      %930 = vmatprep.subr.mxu0 0.0
      %931 = vmatpush2.xpose.msra.mxu0 0.0
      %932 = vmatprep.subr.mxu0 0.0
      %933 = vmatpush2.xpose.msra.mxu0 0.0
      %934 = vmatprep.mubr.f32.mxu0 0.0
      %935 = vmatmul.mubr.f32.gmra.mxu0 %v866
      %v936 = vpop.f32.mrf.mxu0
      %v937 = vadd.f32 0.0, %v936
      %v938 = vpop.f32.mrf.mxu0
      %939 = vdwg.mxu0
      %v940 = vmul.f32 %v937, 0.35355338
      %v941 = vadd.f32 %v940, %v772
      %v942 = vsel %vm865, %v941, -inf
      %943 = vmax.xlane.f32.xlu0 %v942
      %v944 = vpop.xlane.xlu0 %943
      %v945 = vsub.f32 %v941, %v944
      %v946 = vmul.f32 %v945, 1.442695
      %v947 = vpow.pop %v946
      %v948 = vsel %vm865, %v947, 0.0
      %949 = vadd.xlane.f32.xlu0 %v948
      %v950 = vpop.xlane.xlu0 %949
      %v951 = vrcp.pop %v950
      %v952 = vmul.f32 %v947, %v951
      %953 = vrot.lane.b32.xlu0 %v859, 64
      %v954 = vpop.permute.xlu0 %953
      %v957 = vsel %vm865, %v952, 0
      %959 = vmatprep.subr.mxu0 0.0
      %960 = vmatpush1.msra.mxu0 0.0
      %961 = vmatprep.subr.mxu0 0.0
      %962 = vmatpush1.msra.mxu0 0.0
      %963 = vmatprep.subr.mxu0 0.0
      %964 = vmatpush1.msra.mxu0 0.0
      %965 = vmatprep.subr.mxu0 0.0
      %966 = vmatpush1.msra.mxu0 0.0
      %967 = vmatprep.subr.mxu0 0.0
      %968 = vmatpush1.msra.mxu0 0.0
      %969 = vmatprep.subr.mxu0 0.0
      %970 = vmatpush1.msra.mxu0 0.0
      %971 = vmatprep.subr.mxu0 0.0
      %972 = vmatpush1.msra.mxu0 0.0
      %973 = vmatprep.subr.mxu0 0.0
      %974 = vmatpush1.msra.mxu0 0.0
      %975 = vmatprep.subr.mxu0 0.0
      %976 = vmatpush1.msra.mxu0 0.0
      %977 = vmatprep.subr.mxu0 0.0
      %978 = vmatpush1.msra.mxu0 0.0
      %979 = vmatprep.subr.mxu0 0.0
      %980 = vmatpush1.msra.mxu0 0.0
      %981 = vmatprep.subr.mxu0 0.0
      %982 = vmatpush1.msra.mxu0 0.0
      %983 = vmatprep.subr.mxu0 0.0
      %984 = vmatpush1.msra.mxu0 0.0
      %985 = vmatprep.subr.mxu0 0.0
      %986 = vmatpush1.msra.mxu0 0.0
      %987 = vmatprep.subr.mxu0 0.0
      %988 = vmatpush1.msra.mxu0 0.0
      %989 = vmatprep.subr.mxu0 0.0
      %990 = vmatpush1.msra.mxu0 %v954
      %991 = vmatprep.subr.mxu0 0.0
      %992 = vmatpush2.msra.mxu0 0.0
      %993 = vmatprep.subr.mxu0 0.0
      %994 = vmatpush2.msra.mxu0 0.0
      %995 = vmatprep.subr.mxu0 0.0
      %996 = vmatpush2.msra.mxu0 0.0
      %997 = vmatprep.subr.mxu0 0.0
      %998 = vmatpush2.msra.mxu0 0.0
      %999 = vmatprep.subr.mxu0 0.0
      %1000 = vmatpush2.msra.mxu0 0.0
      %1001 = vmatprep.subr.mxu0 0.0
      %1002 = vmatpush2.msra.mxu0 0.0
      %1003 = vmatprep.subr.mxu0 0.0
      %1004 = vmatpush2.msra.mxu0 0.0
      %1005 = vmatprep.subr.mxu0 0.0
      %1006 = vmatpush2.msra.mxu0 0.0
      %1007 = vmatprep.subr.mxu0 0.0
      %1008 = vmatpush2.msra.mxu0 0.0
      %1009 = vmatprep.subr.mxu0 0.0
      %1010 = vmatpush2.msra.mxu0 0.0
      %1011 = vmatprep.subr.mxu0 0.0
      %1012 = vmatpush2.msra.mxu0 0.0
      %1013 = vmatprep.subr.mxu0 0.0
      %1014 = vmatpush2.msra.mxu0 0.0
      %1015 = vmatprep.subr.mxu0 0.0
      %1016 = vmatpush2.msra.mxu0 0.0
      %1017 = vmatprep.subr.mxu0 0.0
      %1018 = vmatpush2.msra.mxu0 0.0
      %1019 = vmatprep.subr.mxu0 0.0
      %1020 = vmatpush2.msra.mxu0 0.0
      %1021 = vmatprep.subr.mxu0 0.0
      %1022 = vmatpush2.msra.mxu0 0.0
      %1023 = vmatprep.mubr.f32.mxu0 0.0
      %1024 = vmatmul.mubr.f32.gmra.mxu0 %v957
      %v1025 = vpop.f32.mrf.mxu0
      %v1026 = vadd.f32 0.0, %v1025
      %v1027 = vpop.f32.mrf.mxu0
      %1028 = vdwg.mxu0
      %1029 = vrot.lane.b32.xlu0 %v859, 120
      %v1030 = vpop.permute.xlu0 %1029
      %1031 = vrot.lane.b32.xlu0 %v859, 88
      %v1032 = vpop.permute.xlu0 %1031
      %v1033 = vsel %vm865, %v1030, 0
      %v1035 = vsel %vm865, %v1032, 0
      %1037 = vmatprep.subr.mxu0 0.0
      %1038 = vmatpush1.xpose.msra.mxu0 0.0
      %1039 = vmatprep.subr.mxu0 0.0
      %1040 = vmatpush1.xpose.msra.mxu0 0.0
      %1041 = vmatprep.subr.mxu0 0.0
      %1042 = vmatpush1.xpose.msra.mxu0 0.0
      %1043 = vmatprep.subr.mxu0 0.0
      %1044 = vmatpush1.xpose.msra.mxu0 0.0
      %1045 = vmatprep.subr.mxu0 0.0
      %1046 = vmatpush1.xpose.msra.mxu0 0.0
      %1047 = vmatprep.subr.mxu0 0.0
      %1048 = vmatpush1.xpose.msra.mxu0 0.0
      %1049 = vmatprep.subr.mxu0 0.0
      %1050 = vmatpush1.xpose.msra.mxu0 0.0
      %1051 = vmatprep.subr.mxu0 0.0
      %1052 = vmatpush1.xpose.msra.mxu0 0.0
      %1053 = vmatprep.subr.mxu0 0.0
      %1054 = vmatpush1.xpose.msra.mxu0 0.0
      %1055 = vmatprep.subr.mxu0 0.0
      %1056 = vmatpush1.xpose.msra.mxu0 0.0
      %1057 = vmatprep.subr.mxu0 0.0
      %1058 = vmatpush1.xpose.msra.mxu0 0.0
      %1059 = vmatprep.subr.mxu0 0.0
      %1060 = vmatpush1.xpose.msra.mxu0 0.0
      %1061 = vmatprep.subr.mxu0 0.0
      %1062 = vmatpush1.xpose.msra.mxu0 0.0
      %1063 = vmatprep.subr.mxu0 0.0
      %1064 = vmatpush1.xpose.msra.mxu0 0.0
      %1065 = vmatprep.subr.mxu0 0.0
      %1066 = vmatpush1.xpose.msra.mxu0 0.0
      %1067 = vmatprep.subr.mxu0 0.0
      %1068 = vmatpush1.xpose.msra.mxu0 %v1035
      %1069 = vmatprep.subr.mxu0 0.0
      %1070 = vmatpush2.xpose.msra.mxu0 0.0
      %1071 = vmatprep.subr.mxu0 0.0
      %1072 = vmatpush2.xpose.msra.mxu0 0.0
      %1073 = vmatprep.subr.mxu0 0.0
      %1074 = vmatpush2.xpose.msra.mxu0 0.0
      %1075 = vmatprep.subr.mxu0 0.0
      %1076 = vmatpush2.xpose.msra.mxu0 0.0
      %1077 = vmatprep.subr.mxu0 0.0
      %1078 = vmatpush2.xpose.msra.mxu0 0.0
      %1079 = vmatprep.subr.mxu0 0.0
      %1080 = vmatpush2.xpose.msra.mxu0 0.0
      %1081 = vmatprep.subr.mxu0 0.0
      %1082 = vmatpush2.xpose.msra.mxu0 0.0
      %1083 = vmatprep.subr.mxu0 0.0
      %1084 = vmatpush2.xpose.msra.mxu0 0.0
      %1085 = vmatprep.subr.mxu0 0.0
      %1086 = vmatpush2.xpose.msra.mxu0 0.0
      %1087 = vmatprep.subr.mxu0 0.0
      %1088 = vmatpush2.xpose.msra.mxu0 0.0
      %1089 = vmatprep.subr.mxu0 0.0
      %1090 = vmatpush2.xpose.msra.mxu0 0.0
      %1091 = vmatprep.subr.mxu0 0.0
      %1092 = vmatpush2.xpose.msra.mxu0 0.0
      %1093 = vmatprep.subr.mxu0 0.0
      %1094 = vmatpush2.xpose.msra.mxu0 0.0
      %1095 = vmatprep.subr.mxu0 0.0
      %1096 = vmatpush2.xpose.msra.mxu0 0.0
      %1097 = vmatprep.subr.mxu0 0.0
      %1098 = vmatpush2.xpose.msra.mxu0 0.0
      %1099 = vmatprep.subr.mxu0 0.0
      %1100 = vmatpush2.xpose.msra.mxu0 0.0
      %1101 = vmatprep.mubr.f32.mxu0 0.0
      %1102 = vmatmul.mubr.f32.gmra.mxu0 %v1033
      %v1103 = vpop.f32.mrf.mxu0
      %v1104 = vadd.f32 0.0, %v1103
      %v1105 = vpop.f32.mrf.mxu0
      %1106 = vdwg.mxu0
      %v1107 = vmul.f32 %v1104, 0.35355338
      %v1108 = vadd.f32 %v1107, %v772
      %v1109 = vsel %vm865, %v1108, -inf
      %1110 = vmax.xlane.f32.xlu0 %v1109
      %v1111 = vpop.xlane.xlu0 %1110
      %v1112 = vsub.f32 %v1108, %v1111
      %v1113 = vmul.f32 %v1112, 1.442695
      %v1114 = vpow.pop %v1113
      %v1115 = vsel %vm865, %v1114, 0.0
      %1116 = vadd.xlane.f32.xlu0 %v1115
      %v1117 = vpop.xlane.xlu0 %1116
      %v1118 = vrcp.pop %v1117
      %v1119 = vmul.f32 %v1114, %v1118
      %1120 = vrot.lane.b32.xlu0 %v859, 56
      %v1121 = vpop.permute.xlu0 %1120
      %v1124 = vsel %vm865, %v1119, 0
      %1126 = vmatprep.subr.mxu0 0.0
      %1127 = vmatpush1.msra.mxu0 0.0
      %1128 = vmatprep.subr.mxu0 0.0
      %1129 = vmatpush1.msra.mxu0 0.0
      %1130 = vmatprep.subr.mxu0 0.0
      %1131 = vmatpush1.msra.mxu0 0.0
      %1132 = vmatprep.subr.mxu0 0.0
      %1133 = vmatpush1.msra.mxu0 0.0
      %1134 = vmatprep.subr.mxu0 0.0
      %1135 = vmatpush1.msra.mxu0 0.0
      %1136 = vmatprep.subr.mxu0 0.0
      %1137 = vmatpush1.msra.mxu0 0.0
      %1138 = vmatprep.subr.mxu0 0.0
      %1139 = vmatpush1.msra.mxu0 0.0
      %1140 = vmatprep.subr.mxu0 0.0
      %1141 = vmatpush1.msra.mxu0 0.0
      %1142 = vmatprep.subr.mxu0 0.0
      %1143 = vmatpush1.msra.mxu0 0.0
      %1144 = vmatprep.subr.mxu0 0.0
      %1145 = vmatpush1.msra.mxu0 0.0
      %1146 = vmatprep.subr.mxu0 0.0
      %1147 = vmatpush1.msra.mxu0 0.0
      %1148 = vmatprep.subr.mxu0 0.0
      %1149 = vmatpush1.msra.mxu0 0.0
      %1150 = vmatprep.subr.mxu0 0.0
      %1151 = vmatpush1.msra.mxu0 0.0
      %1152 = vmatprep.subr.mxu0 0.0
      %1153 = vmatpush1.msra.mxu0 0.0
      %1154 = vmatprep.subr.mxu0 0.0
      %1155 = vmatpush1.msra.mxu0 0.0
      %1156 = vmatprep.subr.mxu0 0.0
      %1157 = vmatpush1.msra.mxu0 %v1121
      %1158 = vmatprep.subr.mxu0 0.0
      %1159 = vmatpush2.msra.mxu0 0.0
      %1160 = vmatprep.subr.mxu0 0.0
      %1161 = vmatpush2.msra.mxu0 0.0
      %1162 = vmatprep.subr.mxu0 0.0
      %1163 = vmatpush2.msra.mxu0 0.0
      %1164 = vmatprep.subr.mxu0 0.0
      %1165 = vmatpush2.msra.mxu0 0.0
      %1166 = vmatprep.subr.mxu0 0.0
      %1167 = vmatpush2.msra.mxu0 0.0
      %1168 = vmatprep.subr.mxu0 0.0
      %1169 = vmatpush2.msra.mxu0 0.0
      %1170 = vmatprep.subr.mxu0 0.0
      %1171 = vmatpush2.msra.mxu0 0.0
      %1172 = vmatprep.subr.mxu0 0.0
      %1173 = vmatpush2.msra.mxu0 0.0
      %1174 = vmatprep.subr.mxu0 0.0
      %1175 = vmatpush2.msra.mxu0 0.0
      %1176 = vmatprep.subr.mxu0 0.0
      %1177 = vmatpush2.msra.mxu0 0.0
      %1178 = vmatprep.subr.mxu0 0.0
      %1179 = vmatpush2.msra.mxu0 0.0
      %1180 = vmatprep.subr.mxu0 0.0
      %1181 = vmatpush2.msra.mxu0 0.0
      %1182 = vmatprep.subr.mxu0 0.0
      %1183 = vmatpush2.msra.mxu0 0.0
      %1184 = vmatprep.subr.mxu0 0.0
      %1185 = vmatpush2.msra.mxu0 0.0
      %1186 = vmatprep.subr.mxu0 0.0
      %1187 = vmatpush2.msra.mxu0 0.0
      %1188 = vmatprep.subr.mxu0 0.0
      %1189 = vmatpush2.msra.mxu0 0.0
      %1190 = vmatprep.mubr.f32.mxu0 0.0
      %1191 = vmatmul.mubr.f32.gmra.mxu0 %v1124
      %v1192 = vpop.f32.mrf.mxu0
      %v1193 = vadd.f32 0.0, %v1192
      %v1194 = vpop.f32.mrf.mxu0
      %1195 = vdwg.mxu0
      %v1197 = vsel %vm865, %v1193, 0
      %1199 = vmatprep.subr.mxu0 0.0
      %1200 = vmatpush1.msra.mxu0 0.0
      %1201 = vmatprep.subr.mxu0 0.0
      %1202 = vmatpush1.msra.mxu0 0.0
      %1203 = vmatprep.subr.mxu0 0.0
      %1204 = vmatpush1.msra.mxu0 0.0
      %1205 = vmatprep.subr.mxu0 0.0
      %1206 = vmatpush1.msra.mxu0 0.0
      %1207 = vmatprep.subr.mxu0 0.0
      %1208 = vmatpush1.msra.mxu0 0.0
      %1209 = vmatprep.subr.mxu0 0.0
      %1210 = vmatpush1.msra.mxu0 0.0
      %1211 = vmatprep.subr.mxu0 0.0
      %1212 = vmatpush1.msra.mxu0 0.0
      %1213 = vmatprep.subr.mxu0 0.0
      %1214 = vmatpush1.msra.mxu0 0.0
      %1215 = vmatprep.subr.mxu0 0.0
      %1216 = vmatpush1.msra.mxu0 0.0
      %1217 = vmatprep.subr.mxu0 0.0
      %1218 = vmatpush1.msra.mxu0 0.0
      %1219 = vmatprep.subr.mxu0 0.0
      %1220 = vmatpush1.msra.mxu0 0.0
      %1221 = vmatprep.subr.mxu0 0.0
      %1222 = vmatpush1.msra.mxu0 0.0
      %1223 = vmatprep.subr.mxu0 0.0
      %1224 = vmatpush1.msra.mxu0 0.0
      %1225 = vmatprep.subr.mxu0 0.0
      %1226 = vmatpush1.msra.mxu0 0.0
      %1227 = vmatprep.subr.mxu0 0.0
      %1228 = vmatpush1.msra.mxu0 0.0
      %1229 = vmatprep.subr.mxu0 0.0
      %1230 = vmatpush1.msra.mxu0 %v779
      %1231 = vmatprep.subr.mxu0 0.0
      %1232 = vmatpush2.msra.mxu0 0.0
      %1233 = vmatprep.subr.mxu0 0.0
      %1234 = vmatpush2.msra.mxu0 0.0
      %1235 = vmatprep.subr.mxu0 0.0
      %1236 = vmatpush2.msra.mxu0 0.0
      %1237 = vmatprep.subr.mxu0 0.0
      %1238 = vmatpush2.msra.mxu0 0.0
      %1239 = vmatprep.subr.mxu0 0.0
      %1240 = vmatpush2.msra.mxu0 0.0
      %1241 = vmatprep.subr.mxu0 0.0
      %1242 = vmatpush2.msra.mxu0 0.0
      %1243 = vmatprep.subr.mxu0 0.0
      %1244 = vmatpush2.msra.mxu0 0.0
      %1245 = vmatprep.subr.mxu0 0.0
      %1246 = vmatpush2.msra.mxu0 0.0
      %1247 = vmatprep.subr.mxu0 0.0
      %1248 = vmatpush2.msra.mxu0 0.0
      %1249 = vmatprep.subr.mxu0 0.0
      %1250 = vmatpush2.msra.mxu0 0.0
      %1251 = vmatprep.subr.mxu0 0.0
      %1252 = vmatpush2.msra.mxu0 0.0
      %1253 = vmatprep.subr.mxu0 0.0
      %1254 = vmatpush2.msra.mxu0 0.0
      %1255 = vmatprep.subr.mxu0 0.0
      %1256 = vmatpush2.msra.mxu0 0.0
      %1257 = vmatprep.subr.mxu0 0.0
      %1258 = vmatpush2.msra.mxu0 0.0
      %1259 = vmatprep.subr.mxu0 0.0
      %1260 = vmatpush2.msra.mxu0 0.0
      %1261 = vmatprep.subr.mxu0 0.0
      %1262 = vmatpush2.msra.mxu0 0.0
      %1263 = vmatprep.mubr.f32.mxu0 0.0
      %1264 = vmatmul.mubr.f32.gmra.mxu0 %v1197
      %v1265 = vpop.f32.mrf.mxu0
      %v1266 = vadd.f32 0.0, %v1265
      %v1267 = vpop.f32.mrf.mxu0
      %1268 = vdwg.mxu0
      %v1270 = vsel %vm865, %v1026, 0
      %1272 = vmatprep.subr.mxu0 0.0
      %1273 = vmatpush1.msra.mxu0 0.0
      %1274 = vmatprep.subr.mxu0 0.0
      %1275 = vmatpush1.msra.mxu0 0.0
      %1276 = vmatprep.subr.mxu0 0.0
      %1277 = vmatpush1.msra.mxu0 0.0
      %1278 = vmatprep.subr.mxu0 0.0
      %1279 = vmatpush1.msra.mxu0 0.0
      %1280 = vmatprep.subr.mxu0 0.0
      %1281 = vmatpush1.msra.mxu0 0.0
      %1282 = vmatprep.subr.mxu0 0.0
      %1283 = vmatpush1.msra.mxu0 0.0
      %1284 = vmatprep.subr.mxu0 0.0
      %1285 = vmatpush1.msra.mxu0 0.0
      %1286 = vmatprep.subr.mxu0 0.0
      %1287 = vmatpush1.msra.mxu0 0.0
      %1288 = vmatprep.subr.mxu0 0.0
      %1289 = vmatpush1.msra.mxu0 0.0
      %1290 = vmatprep.subr.mxu0 0.0
      %1291 = vmatpush1.msra.mxu0 0.0
      %1292 = vmatprep.subr.mxu0 0.0
      %1293 = vmatpush1.msra.mxu0 0.0
      %1294 = vmatprep.subr.mxu0 0.0
      %1295 = vmatpush1.msra.mxu0 0.0
      %1296 = vmatprep.subr.mxu0 0.0
      %1297 = vmatpush1.msra.mxu0 0.0
      %1298 = vmatprep.subr.mxu0 0.0
      %1299 = vmatpush1.msra.mxu0 0.0
      %1300 = vmatprep.subr.mxu0 0.0
      %1301 = vmatpush1.msra.mxu0 0.0
      %1302 = vmatprep.subr.mxu0 0.0
      %1303 = vmatpush1.msra.mxu0 %v778
      %1304 = vmatprep.subr.mxu0 0.0
      %1305 = vmatpush2.msra.mxu0 0.0
      %1306 = vmatprep.subr.mxu0 0.0
      %1307 = vmatpush2.msra.mxu0 0.0
      %1308 = vmatprep.subr.mxu0 0.0
      %1309 = vmatpush2.msra.mxu0 0.0
      %1310 = vmatprep.subr.mxu0 0.0
      %1311 = vmatpush2.msra.mxu0 0.0
      %1312 = vmatprep.subr.mxu0 0.0
      %1313 = vmatpush2.msra.mxu0 0.0
      %1314 = vmatprep.subr.mxu0 0.0
      %1315 = vmatpush2.msra.mxu0 0.0
      %1316 = vmatprep.subr.mxu0 0.0
      %1317 = vmatpush2.msra.mxu0 0.0
      %1318 = vmatprep.subr.mxu0 0.0
      %1319 = vmatpush2.msra.mxu0 0.0
      %1320 = vmatprep.subr.mxu0 0.0
      %1321 = vmatpush2.msra.mxu0 0.0
      %1322 = vmatprep.subr.mxu0 0.0
      %1323 = vmatpush2.msra.mxu0 0.0
      %1324 = vmatprep.subr.mxu0 0.0
      %1325 = vmatpush2.msra.mxu0 0.0
      %1326 = vmatprep.subr.mxu0 0.0
      %1327 = vmatpush2.msra.mxu0 0.0
      %1328 = vmatprep.subr.mxu0 0.0
      %1329 = vmatpush2.msra.mxu0 0.0
      %1330 = vmatprep.subr.mxu0 0.0
      %1331 = vmatpush2.msra.mxu0 0.0
      %1332 = vmatprep.subr.mxu0 0.0
      %1333 = vmatpush2.msra.mxu0 0.0
      %1334 = vmatprep.subr.mxu0 0.0
      %1335 = vmatpush2.msra.mxu0 0.0
      %1336 = vmatprep.mubr.f32.mxu0 0.0
      %1337 = vmatmul.mubr.f32.gmra.mxu0 %v1270
      %v1338 = vpop.f32.mrf.mxu0
      %v1339 = vadd.f32 %v1266, %v1338
      %v1340 = vpop.f32.mrf.mxu0
      %1341 = vdwg.mxu0
      %1342 = vrot.lane.b32.xlu0 %v859, 112
      %v1343 = vpop.permute.xlu0 %1342
      %1344 = vrot.lane.b32.xlu0 %v859, 80
      %v1345 = vpop.permute.xlu0 %1344
      %v1346 = vsel %vm865, %v1343, 0
      %v1348 = vsel %vm865, %v1345, 0
      %1350 = vmatprep.subr.mxu0 0.0
      %1351 = vmatpush1.xpose.msra.mxu0 0.0
      %1352 = vmatprep.subr.mxu0 0.0
      %1353 = vmatpush1.xpose.msra.mxu0 0.0
      %1354 = vmatprep.subr.mxu0 0.0
      %1355 = vmatpush1.xpose.msra.mxu0 0.0
      %1356 = vmatprep.subr.mxu0 0.0
      %1357 = vmatpush1.xpose.msra.mxu0 0.0
      %1358 = vmatprep.subr.mxu0 0.0
      %1359 = vmatpush1.xpose.msra.mxu0 0.0
      %1360 = vmatprep.subr.mxu0 0.0
      %1361 = vmatpush1.xpose.msra.mxu0 0.0
      %1362 = vmatprep.subr.mxu0 0.0
      %1363 = vmatpush1.xpose.msra.mxu0 0.0
      %1364 = vmatprep.subr.mxu0 0.0
      %1365 = vmatpush1.xpose.msra.mxu0 0.0
      %1366 = vmatprep.subr.mxu0 0.0
      %1367 = vmatpush1.xpose.msra.mxu0 0.0
      %1368 = vmatprep.subr.mxu0 0.0
      %1369 = vmatpush1.xpose.msra.mxu0 0.0
      %1370 = vmatprep.subr.mxu0 0.0
      %1371 = vmatpush1.xpose.msra.mxu0 0.0
      %1372 = vmatprep.subr.mxu0 0.0
      %1373 = vmatpush1.xpose.msra.mxu0 0.0
      %1374 = vmatprep.subr.mxu0 0.0
      %1375 = vmatpush1.xpose.msra.mxu0 0.0
      %1376 = vmatprep.subr.mxu0 0.0
      %1377 = vmatpush1.xpose.msra.mxu0 0.0
      %1378 = vmatprep.subr.mxu0 0.0
      %1379 = vmatpush1.xpose.msra.mxu0 0.0
      %1380 = vmatprep.subr.mxu0 0.0
      %1381 = vmatpush1.xpose.msra.mxu0 %v1348
      %1382 = vmatprep.subr.mxu0 0.0
      %1383 = vmatpush2.xpose.msra.mxu0 0.0
      %1384 = vmatprep.subr.mxu0 0.0
      %1385 = vmatpush2.xpose.msra.mxu0 0.0
      %1386 = vmatprep.subr.mxu0 0.0
      %1387 = vmatpush2.xpose.msra.mxu0 0.0
      %1388 = vmatprep.subr.mxu0 0.0
      %1389 = vmatpush2.xpose.msra.mxu0 0.0
      %1390 = vmatprep.subr.mxu0 0.0
      %1391 = vmatpush2.xpose.msra.mxu0 0.0
      %1392 = vmatprep.subr.mxu0 0.0
      %1393 = vmatpush2.xpose.msra.mxu0 0.0
      %1394 = vmatprep.subr.mxu0 0.0
      %1395 = vmatpush2.xpose.msra.mxu0 0.0
      %1396 = vmatprep.subr.mxu0 0.0
      %1397 = vmatpush2.xpose.msra.mxu0 0.0
      %1398 = vmatprep.subr.mxu0 0.0
      %1399 = vmatpush2.xpose.msra.mxu0 0.0
      %1400 = vmatprep.subr.mxu0 0.0
      %1401 = vmatpush2.xpose.msra.mxu0 0.0
      %1402 = vmatprep.subr.mxu0 0.0
      %1403 = vmatpush2.xpose.msra.mxu0 0.0
      %1404 = vmatprep.subr.mxu0 0.0
      %1405 = vmatpush2.xpose.msra.mxu0 0.0
      %1406 = vmatprep.subr.mxu0 0.0
      %1407 = vmatpush2.xpose.msra.mxu0 0.0
      %1408 = vmatprep.subr.mxu0 0.0
      %1409 = vmatpush2.xpose.msra.mxu0 0.0
      %1410 = vmatprep.subr.mxu0 0.0
      %1411 = vmatpush2.xpose.msra.mxu0 0.0
      %1412 = vmatprep.subr.mxu0 0.0
      %1413 = vmatpush2.xpose.msra.mxu0 0.0
      %1414 = vmatprep.mubr.f32.mxu0 0.0
      %1415 = vmatmul.mubr.f32.gmra.mxu0 %v1346
      %v1416 = vpop.f32.mrf.mxu0
      %v1417 = vadd.f32 0.0, %v1416
      %v1418 = vpop.f32.mrf.mxu0
      %1419 = vdwg.mxu0
      %v1420 = vmul.f32 %v1417, 0.35355338
      %v1421 = vadd.f32 %v1420, %v772
      %v1422 = vsel %vm865, %v1421, -inf
      %1423 = vmax.xlane.f32.xlu0 %v1422
      %v1424 = vpop.xlane.xlu0 %1423
      %v1425 = vsub.f32 %v1421, %v1424
      %v1426 = vmul.f32 %v1425, 1.442695
      %v1427 = vpow.pop %v1426
      %v1428 = vsel %vm865, %v1427, 0.0
      %1429 = vadd.xlane.f32.xlu0 %v1428
      %v1430 = vpop.xlane.xlu0 %1429
      %v1431 = vrcp.pop %v1430
      %v1432 = vmul.f32 %v1427, %v1431
      %1433 = vrot.lane.b32.xlu0 %v859, 48
      %v1434 = vpop.permute.xlu0 %1433
      %v1437 = vsel %vm865, %v1432, 0
      %1439 = vmatprep.subr.mxu0 0.0
      %1440 = vmatpush1.msra.mxu0 0.0
      %1441 = vmatprep.subr.mxu0 0.0
      %1442 = vmatpush1.msra.mxu0 0.0
      %1443 = vmatprep.subr.mxu0 0.0
      %1444 = vmatpush1.msra.mxu0 0.0
      %1445 = vmatprep.subr.mxu0 0.0
      %1446 = vmatpush1.msra.mxu0 0.0
      %1447 = vmatprep.subr.mxu0 0.0
      %1448 = vmatpush1.msra.mxu0 0.0
      %1449 = vmatprep.subr.mxu0 0.0
      %1450 = vmatpush1.msra.mxu0 0.0
      %1451 = vmatprep.subr.mxu0 0.0
      %1452 = vmatpush1.msra.mxu0 0.0
      %1453 = vmatprep.subr.mxu0 0.0
      %1454 = vmatpush1.msra.mxu0 0.0
      %1455 = vmatprep.subr.mxu0 0.0
      %1456 = vmatpush1.msra.mxu0 0.0
      %1457 = vmatprep.subr.mxu0 0.0
      %1458 = vmatpush1.msra.mxu0 0.0
      %1459 = vmatprep.subr.mxu0 0.0
      %1460 = vmatpush1.msra.mxu0 0.0
      %1461 = vmatprep.subr.mxu0 0.0
      %1462 = vmatpush1.msra.mxu0 0.0
      %1463 = vmatprep.subr.mxu0 0.0
      %1464 = vmatpush1.msra.mxu0 0.0
      %1465 = vmatprep.subr.mxu0 0.0
      %1466 = vmatpush1.msra.mxu0 0.0
      %1467 = vmatprep.subr.mxu0 0.0
      %1468 = vmatpush1.msra.mxu0 0.0
      %1469 = vmatprep.subr.mxu0 0.0
      %1470 = vmatpush1.msra.mxu0 %v1434
      %1471 = vmatprep.subr.mxu0 0.0
      %1472 = vmatpush2.msra.mxu0 0.0
      %1473 = vmatprep.subr.mxu0 0.0
      %1474 = vmatpush2.msra.mxu0 0.0
      %1475 = vmatprep.subr.mxu0 0.0
      %1476 = vmatpush2.msra.mxu0 0.0
      %1477 = vmatprep.subr.mxu0 0.0
      %1478 = vmatpush2.msra.mxu0 0.0
      %1479 = vmatprep.subr.mxu0 0.0
      %1480 = vmatpush2.msra.mxu0 0.0
      %1481 = vmatprep.subr.mxu0 0.0
      %1482 = vmatpush2.msra.mxu0 0.0
      %1483 = vmatprep.subr.mxu0 0.0
      %1484 = vmatpush2.msra.mxu0 0.0
      %1485 = vmatprep.subr.mxu0 0.0
      %1486 = vmatpush2.msra.mxu0 0.0
      %1487 = vmatprep.subr.mxu0 0.0
      %1488 = vmatpush2.msra.mxu0 0.0
      %1489 = vmatprep.subr.mxu0 0.0
      %1490 = vmatpush2.msra.mxu0 0.0
      %1491 = vmatprep.subr.mxu0 0.0
      %1492 = vmatpush2.msra.mxu0 0.0
      %1493 = vmatprep.subr.mxu0 0.0
      %1494 = vmatpush2.msra.mxu0 0.0
      %1495 = vmatprep.subr.mxu0 0.0
      %1496 = vmatpush2.msra.mxu0 0.0
      %1497 = vmatprep.subr.mxu0 0.0
      %1498 = vmatpush2.msra.mxu0 0.0
      %1499 = vmatprep.subr.mxu0 0.0
      %1500 = vmatpush2.msra.mxu0 0.0
      %1501 = vmatprep.subr.mxu0 0.0
      %1502 = vmatpush2.msra.mxu0 0.0
      %1503 = vmatprep.mubr.f32.mxu0 0.0
      %1504 = vmatmul.mubr.f32.gmra.mxu0 %v1437
      %v1505 = vpop.f32.mrf.mxu0
      %v1506 = vadd.f32 0.0, %v1505
      %v1507 = vpop.f32.mrf.mxu0
      %1508 = vdwg.mxu0
      %v1510 = vsel %vm865, %v1506, 0
      %1512 = vmatprep.subr.mxu0 0.0
      %1513 = vmatpush1.msra.mxu0 0.0
      %1514 = vmatprep.subr.mxu0 0.0
      %1515 = vmatpush1.msra.mxu0 0.0
      %1516 = vmatprep.subr.mxu0 0.0
      %1517 = vmatpush1.msra.mxu0 0.0
      %1518 = vmatprep.subr.mxu0 0.0
      %1519 = vmatpush1.msra.mxu0 0.0
      %1520 = vmatprep.subr.mxu0 0.0
      %1521 = vmatpush1.msra.mxu0 0.0
      %1522 = vmatprep.subr.mxu0 0.0
      %1523 = vmatpush1.msra.mxu0 0.0
      %1524 = vmatprep.subr.mxu0 0.0
      %1525 = vmatpush1.msra.mxu0 0.0
      %1526 = vmatprep.subr.mxu0 0.0
      %1527 = vmatpush1.msra.mxu0 0.0
      %1528 = vmatprep.subr.mxu0 0.0
      %1529 = vmatpush1.msra.mxu0 0.0
      %1530 = vmatprep.subr.mxu0 0.0
      %1531 = vmatpush1.msra.mxu0 0.0
      %1532 = vmatprep.subr.mxu0 0.0
      %1533 = vmatpush1.msra.mxu0 0.0
      %1534 = vmatprep.subr.mxu0 0.0
      %1535 = vmatpush1.msra.mxu0 0.0
      %1536 = vmatprep.subr.mxu0 0.0
      %1537 = vmatpush1.msra.mxu0 0.0
      %1538 = vmatprep.subr.mxu0 0.0
      %1539 = vmatpush1.msra.mxu0 0.0
      %1540 = vmatprep.subr.mxu0 0.0
      %1541 = vmatpush1.msra.mxu0 0.0
      %1542 = vmatprep.subr.mxu0 0.0
      %1543 = vmatpush1.msra.mxu0 %v780
      %1544 = vmatprep.subr.mxu0 0.0
      %1545 = vmatpush2.msra.mxu0 0.0
      %1546 = vmatprep.subr.mxu0 0.0
      %1547 = vmatpush2.msra.mxu0 0.0
      %1548 = vmatprep.subr.mxu0 0.0
      %1549 = vmatpush2.msra.mxu0 0.0
      %1550 = vmatprep.subr.mxu0 0.0
      %1551 = vmatpush2.msra.mxu0 0.0
      %1552 = vmatprep.subr.mxu0 0.0
      %1553 = vmatpush2.msra.mxu0 0.0
      %1554 = vmatprep.subr.mxu0 0.0
      %1555 = vmatpush2.msra.mxu0 0.0
      %1556 = vmatprep.subr.mxu0 0.0
      %1557 = vmatpush2.msra.mxu0 0.0
      %1558 = vmatprep.subr.mxu0 0.0
      %1559 = vmatpush2.msra.mxu0 0.0
      %1560 = vmatprep.subr.mxu0 0.0
      %1561 = vmatpush2.msra.mxu0 0.0
      %1562 = vmatprep.subr.mxu0 0.0
      %1563 = vmatpush2.msra.mxu0 0.0
      %1564 = vmatprep.subr.mxu0 0.0
      %1565 = vmatpush2.msra.mxu0 0.0
      %1566 = vmatprep.subr.mxu0 0.0
      %1567 = vmatpush2.msra.mxu0 0.0
      %1568 = vmatprep.subr.mxu0 0.0
      %1569 = vmatpush2.msra.mxu0 0.0
      %1570 = vmatprep.subr.mxu0 0.0
      %1571 = vmatpush2.msra.mxu0 0.0
      %1572 = vmatprep.subr.mxu0 0.0
      %1573 = vmatpush2.msra.mxu0 0.0
      %1574 = vmatprep.subr.mxu0 0.0
      %1575 = vmatpush2.msra.mxu0 0.0
      %1576 = vmatprep.mubr.f32.mxu0 0.0
      %1577 = vmatmul.mubr.f32.gmra.mxu0 %v1510
      %v1578 = vpop.f32.mrf.mxu0
      %v1579 = vadd.f32 0.0, %v1578
      %v1580 = vpop.f32.mrf.mxu0
      %1581 = vdwg.mxu0
      %v1582 = vadd.f32 %v1339, %v1579
      %1583 = vrot.lane.b32.xlu0 %v859, 104
      %v1584 = vpop.permute.xlu0 %1583
      %1585 = vrot.lane.b32.xlu0 %v859, 72
      %v1586 = vpop.permute.xlu0 %1585
      %v1587 = vsel %vm865, %v1584, 0
      %v1589 = vsel %vm865, %v1586, 0
      %1591 = vmatprep.subr.mxu0 0.0
      %1592 = vmatpush1.xpose.msra.mxu0 0.0
      %1593 = vmatprep.subr.mxu0 0.0
      %1594 = vmatpush1.xpose.msra.mxu0 0.0
      %1595 = vmatprep.subr.mxu0 0.0
      %1596 = vmatpush1.xpose.msra.mxu0 0.0
      %1597 = vmatprep.subr.mxu0 0.0
      %1598 = vmatpush1.xpose.msra.mxu0 0.0
      %1599 = vmatprep.subr.mxu0 0.0
      %1600 = vmatpush1.xpose.msra.mxu0 0.0
      %1601 = vmatprep.subr.mxu0 0.0
      %1602 = vmatpush1.xpose.msra.mxu0 0.0
      %1603 = vmatprep.subr.mxu0 0.0
      %1604 = vmatpush1.xpose.msra.mxu0 0.0
      %1605 = vmatprep.subr.mxu0 0.0
      %1606 = vmatpush1.xpose.msra.mxu0 0.0
      %1607 = vmatprep.subr.mxu0 0.0
      %1608 = vmatpush1.xpose.msra.mxu0 0.0
      %1609 = vmatprep.subr.mxu0 0.0
      %1610 = vmatpush1.xpose.msra.mxu0 0.0
      %1611 = vmatprep.subr.mxu0 0.0
      %1612 = vmatpush1.xpose.msra.mxu0 0.0
      %1613 = vmatprep.subr.mxu0 0.0
      %1614 = vmatpush1.xpose.msra.mxu0 0.0
      %1615 = vmatprep.subr.mxu0 0.0
      %1616 = vmatpush1.xpose.msra.mxu0 0.0
      %1617 = vmatprep.subr.mxu0 0.0
      %1618 = vmatpush1.xpose.msra.mxu0 0.0
      %1619 = vmatprep.subr.mxu0 0.0
      %1620 = vmatpush1.xpose.msra.mxu0 0.0
      %1621 = vmatprep.subr.mxu0 0.0
      %1622 = vmatpush1.xpose.msra.mxu0 %v1589
      %1623 = vmatprep.subr.mxu0 0.0
      %1624 = vmatpush2.xpose.msra.mxu0 0.0
      %1625 = vmatprep.subr.mxu0 0.0
      %1626 = vmatpush2.xpose.msra.mxu0 0.0
      %1627 = vmatprep.subr.mxu0 0.0
      %1628 = vmatpush2.xpose.msra.mxu0 0.0
      %1629 = vmatprep.subr.mxu0 0.0
      %1630 = vmatpush2.xpose.msra.mxu0 0.0
      %1631 = vmatprep.subr.mxu0 0.0
      %1632 = vmatpush2.xpose.msra.mxu0 0.0
      %1633 = vmatprep.subr.mxu0 0.0
      %1634 = vmatpush2.xpose.msra.mxu0 0.0
      %1635 = vmatprep.subr.mxu0 0.0
      %1636 = vmatpush2.xpose.msra.mxu0 0.0
      %1637 = vmatprep.subr.mxu0 0.0
      %1638 = vmatpush2.xpose.msra.mxu0 0.0
      %1639 = vmatprep.subr.mxu0 0.0
      %1640 = vmatpush2.xpose.msra.mxu0 0.0
      %1641 = vmatprep.subr.mxu0 0.0
      %1642 = vmatpush2.xpose.msra.mxu0 0.0
      %1643 = vmatprep.subr.mxu0 0.0
      %1644 = vmatpush2.xpose.msra.mxu0 0.0
      %1645 = vmatprep.subr.mxu0 0.0
      %1646 = vmatpush2.xpose.msra.mxu0 0.0
      %1647 = vmatprep.subr.mxu0 0.0
      %1648 = vmatpush2.xpose.msra.mxu0 0.0
      %1649 = vmatprep.subr.mxu0 0.0
      %1650 = vmatpush2.xpose.msra.mxu0 0.0
      %1651 = vmatprep.subr.mxu0 0.0
      %1652 = vmatpush2.xpose.msra.mxu0 0.0
      %1653 = vmatprep.subr.mxu0 0.0
      %1654 = vmatpush2.xpose.msra.mxu0 0.0
      %1655 = vmatprep.mubr.f32.mxu0 0.0
      %1656 = vmatmul.mubr.f32.gmra.mxu0 %v1587
      %v1657 = vpop.f32.mrf.mxu0
      %v1658 = vadd.f32 0.0, %v1657
      %v1659 = vpop.f32.mrf.mxu0
      %1660 = vdwg.mxu0
      %v1661 = vmul.f32 %v1658, 0.35355338
      %v1662 = vadd.f32 %v1661, %v772
      %v1663 = vsel %vm865, %v1662, -inf
      %1664 = vmax.xlane.f32.xlu0 %v1663
      %v1665 = vpop.xlane.xlu0 %1664
      %v1666 = vsub.f32 %v1662, %v1665
      %v1667 = vmul.f32 %v1666, 1.442695
      %v1668 = vpow.pop %v1667
      %v1669 = vsel %vm865, %v1668, 0.0
      %1670 = vadd.xlane.f32.xlu0 %v1669
      %v1671 = vpop.xlane.xlu0 %1670
      %v1672 = vrcp.pop %v1671
      %v1673 = vmul.f32 %v1668, %v1672
      %1674 = vrot.lane.b32.xlu0 %v859, 40
      %v1675 = vpop.permute.xlu0 %1674
      %v1678 = vsel %vm865, %v1673, 0
      %1680 = vmatprep.subr.mxu0 0.0
      %1681 = vmatpush1.msra.mxu0 0.0
      %1682 = vmatprep.subr.mxu0 0.0
      %1683 = vmatpush1.msra.mxu0 0.0
      %1684 = vmatprep.subr.mxu0 0.0
      %1685 = vmatpush1.msra.mxu0 0.0
      %1686 = vmatprep.subr.mxu0 0.0
      %1687 = vmatpush1.msra.mxu0 0.0
      %1688 = vmatprep.subr.mxu0 0.0
      %1689 = vmatpush1.msra.mxu0 0.0
      %1690 = vmatprep.subr.mxu0 0.0
      %1691 = vmatpush1.msra.mxu0 0.0
      %1692 = vmatprep.subr.mxu0 0.0
      %1693 = vmatpush1.msra.mxu0 0.0
      %1694 = vmatprep.subr.mxu0 0.0
      %1695 = vmatpush1.msra.mxu0 0.0
      %1696 = vmatprep.subr.mxu0 0.0
      %1697 = vmatpush1.msra.mxu0 0.0
      %1698 = vmatprep.subr.mxu0 0.0
      %1699 = vmatpush1.msra.mxu0 0.0
      %1700 = vmatprep.subr.mxu0 0.0
      %1701 = vmatpush1.msra.mxu0 0.0
      %1702 = vmatprep.subr.mxu0 0.0
      %1703 = vmatpush1.msra.mxu0 0.0
      %1704 = vmatprep.subr.mxu0 0.0
      %1705 = vmatpush1.msra.mxu0 0.0
      %1706 = vmatprep.subr.mxu0 0.0
      %1707 = vmatpush1.msra.mxu0 0.0
      %1708 = vmatprep.subr.mxu0 0.0
      %1709 = vmatpush1.msra.mxu0 0.0
      %1710 = vmatprep.subr.mxu0 0.0
      %1711 = vmatpush1.msra.mxu0 %v1675
      %1712 = vmatprep.subr.mxu0 0.0
      %1713 = vmatpush2.msra.mxu0 0.0
      %1714 = vmatprep.subr.mxu0 0.0
      %1715 = vmatpush2.msra.mxu0 0.0
      %1716 = vmatprep.subr.mxu0 0.0
      %1717 = vmatpush2.msra.mxu0 0.0
      %1718 = vmatprep.subr.mxu0 0.0
      %1719 = vmatpush2.msra.mxu0 0.0
      %1720 = vmatprep.subr.mxu0 0.0
      %1721 = vmatpush2.msra.mxu0 0.0
      %1722 = vmatprep.subr.mxu0 0.0
      %1723 = vmatpush2.msra.mxu0 0.0
      %1724 = vmatprep.subr.mxu0 0.0
      %1725 = vmatpush2.msra.mxu0 0.0
      %1726 = vmatprep.subr.mxu0 0.0
      %1727 = vmatpush2.msra.mxu0 0.0
      %1728 = vmatprep.subr.mxu0 0.0
      %1729 = vmatpush2.msra.mxu0 0.0
      %1730 = vmatprep.subr.mxu0 0.0
      %1731 = vmatpush2.msra.mxu0 0.0
      %1732 = vmatprep.subr.mxu0 0.0
      %1733 = vmatpush2.msra.mxu0 0.0
      %1734 = vmatprep.subr.mxu0 0.0
      %1735 = vmatpush2.msra.mxu0 0.0
      %1736 = vmatprep.subr.mxu0 0.0
      %1737 = vmatpush2.msra.mxu0 0.0
      %1738 = vmatprep.subr.mxu0 0.0
      %1739 = vmatpush2.msra.mxu0 0.0
      %1740 = vmatprep.subr.mxu0 0.0
      %1741 = vmatpush2.msra.mxu0 0.0
      %1742 = vmatprep.subr.mxu0 0.0
      %1743 = vmatpush2.msra.mxu0 0.0
      %1744 = vmatprep.mubr.f32.mxu0 0.0
      %1745 = vmatmul.mubr.f32.gmra.mxu0 %v1678
      %v1746 = vpop.f32.mrf.mxu0
      %v1747 = vadd.f32 0.0, %v1746
      %v1748 = vpop.f32.mrf.mxu0
      %1749 = vdwg.mxu0
      %v1751 = vsel %vm865, %v1747, 0
      %1753 = vmatprep.subr.mxu0 0.0
      %1754 = vmatpush1.msra.mxu0 0.0
      %1755 = vmatprep.subr.mxu0 0.0
      %1756 = vmatpush1.msra.mxu0 0.0
      %1757 = vmatprep.subr.mxu0 0.0
      %1758 = vmatpush1.msra.mxu0 0.0
      %1759 = vmatprep.subr.mxu0 0.0
      %1760 = vmatpush1.msra.mxu0 0.0
      %1761 = vmatprep.subr.mxu0 0.0
      %1762 = vmatpush1.msra.mxu0 0.0
      %1763 = vmatprep.subr.mxu0 0.0
      %1764 = vmatpush1.msra.mxu0 0.0
      %1765 = vmatprep.subr.mxu0 0.0
      %1766 = vmatpush1.msra.mxu0 0.0
      %1767 = vmatprep.subr.mxu0 0.0
      %1768 = vmatpush1.msra.mxu0 0.0
      %1769 = vmatprep.subr.mxu0 0.0
      %1770 = vmatpush1.msra.mxu0 0.0
      %1771 = vmatprep.subr.mxu0 0.0
      %1772 = vmatpush1.msra.mxu0 0.0
      %1773 = vmatprep.subr.mxu0 0.0
      %1774 = vmatpush1.msra.mxu0 0.0
      %1775 = vmatprep.subr.mxu0 0.0
      %1776 = vmatpush1.msra.mxu0 0.0
      %1777 = vmatprep.subr.mxu0 0.0
      %1778 = vmatpush1.msra.mxu0 0.0
      %1779 = vmatprep.subr.mxu0 0.0
      %1780 = vmatpush1.msra.mxu0 0.0
      %1781 = vmatprep.subr.mxu0 0.0
      %1782 = vmatpush1.msra.mxu0 0.0
      %1783 = vmatprep.subr.mxu0 0.0
      %1784 = vmatpush1.msra.mxu0 %v781
      %1785 = vmatprep.subr.mxu0 0.0
      %1786 = vmatpush2.msra.mxu0 0.0
      %1787 = vmatprep.subr.mxu0 0.0
      %1788 = vmatpush2.msra.mxu0 0.0
      %1789 = vmatprep.subr.mxu0 0.0
      %1790 = vmatpush2.msra.mxu0 0.0
      %1791 = vmatprep.subr.mxu0 0.0
      %1792 = vmatpush2.msra.mxu0 0.0
      %1793 = vmatprep.subr.mxu0 0.0
      %1794 = vmatpush2.msra.mxu0 0.0
      %1795 = vmatprep.subr.mxu0 0.0
      %1796 = vmatpush2.msra.mxu0 0.0
      %1797 = vmatprep.subr.mxu0 0.0
      %1798 = vmatpush2.msra.mxu0 0.0
      %1799 = vmatprep.subr.mxu0 0.0
      %1800 = vmatpush2.msra.mxu0 0.0
      %1801 = vmatprep.subr.mxu0 0.0
      %1802 = vmatpush2.msra.mxu0 0.0
      %1803 = vmatprep.subr.mxu0 0.0
      %1804 = vmatpush2.msra.mxu0 0.0
      %1805 = vmatprep.subr.mxu0 0.0
      %1806 = vmatpush2.msra.mxu0 0.0
      %1807 = vmatprep.subr.mxu0 0.0
      %1808 = vmatpush2.msra.mxu0 0.0
      %1809 = vmatprep.subr.mxu0 0.0
      %1810 = vmatpush2.msra.mxu0 0.0
      %1811 = vmatprep.subr.mxu0 0.0
      %1812 = vmatpush2.msra.mxu0 0.0
      %1813 = vmatprep.subr.mxu0 0.0
      %1814 = vmatpush2.msra.mxu0 0.0
      %1815 = vmatprep.subr.mxu0 0.0
      %1816 = vmatpush2.msra.mxu0 0.0
      %1817 = vmatprep.mubr.f32.mxu0 0.0
      %1818 = vmatmul.mubr.f32.gmra.mxu0 %v1751
      %v1819 = vpop.f32.mrf.mxu0
      %v1820 = vadd.f32 0.0, %v1819
      %v1821 = vpop.f32.mrf.mxu0
      %1822 = vdwg.mxu0
      %v1823 = vadd.f32 %v1582, %v1820
      %v1825 = vlaneseq
      %v1826 = vshrl.u32 %v1825, 7
      %v1827 = vsub.s32 0, %v1826
      %v1828 = vrot.slane %v782, %v1827
      %v1830 = vadd.f32 %v1823, %v1828
      %v1831 = vadd.f32 %v740, %v1830
      %v1832 = vld [vmem:[%s13] sm:$0x1]
      %v1833 = vld [vmem:[%s14] sm:$0x1]
      %v1834 = vsel %vm743, %v1831, 0.0
      %1835 = vadd.xlane.f32.xlu0 %v1834
      %v1836 = vpop.xlane.xlu0 %1835
      %v1837 = vmul.f32 %v1836, %v747
      %v1838 = vsub.f32 %v1831, %v1837
      %v1839 = vmul.f32 %v1838, %v1838
      %v1840 = vsel %vm743, %v1839, 0.0
      %1841 = vadd.xlane.f32.xlu0 %v1840
      %v1842 = vpop.xlane.xlu0 %1841
      %v1843 = vmul.f32 %v1842, %v747
      %v1844 = vadd.f32 %v1843, 1e-06
      %v1845 = vrsqrt.pop %v1844
      %v1846 = vmul.f32 %v1838, %v1845
      %v1848 = vlaneseq
      %v1849 = vshrl.u32 %v1848, 7
      %v1850 = vsub.s32 0, %v1849
      %v1851 = vrot.slane %v1832, %v1850
      %v1853 = vmul.f32 %v1846, %v1851
      %v1855 = vlaneseq
      %v1856 = vshrl.u32 %v1855, 7
      %v1857 = vsub.s32 0, %v1856
      %v1858 = vrot.slane %v1833, %v1857
      %v1860 = vadd.f32 %v1853, %v1858
      %v1861 = vld [vmem:[%s735] sm:$0xff]
      %v1862 = vld [vmem:[%s7] sm:$0xff]
      %v1863 = vld [vmem:[%s7 + $0x8] sm:$0xff]
      %v1864 = vld [vmem:[%s7 + $0x10] sm:$0xff]
      %v1865 = vld [vmem:[%s7 + $0x18] sm:$0xff]
      %v1866 = vld [vmem:[%s8] sm:$0x1]
      %v1867 = vld [vmem:[%s9] sm:$0xff]
      %v1868 = vld [vmem:[%s9 + $0x8] sm:$0xff]
      %v1869 = vld [vmem:[%s9 + $0x10] sm:$0xff]
      %v1870 = vld [vmem:[%s9 + $0x18] sm:$0xff]
      %v1871 = vld [vmem:[%s10] sm:$0x1]
      %v1873 = vlaneseq
      %v1874 = vshrl.u32 %v1873, 7
      %v1875 = vsub.s32 0, %v1874
      %v1876 = vrot.slane %v1866, %v1875
      %v1879 = vsel %vm743, %v1860, 0
      %1881 = vmatprep.subr.mxu0 0.0
      %1882 = vmatpush1.msra.mxu0 0.0
      %1883 = vmatprep.subr.mxu0 0.0
      %1884 = vmatpush1.msra.mxu0 0.0
      %1885 = vmatprep.subr.mxu0 0.0
      %1886 = vmatpush1.msra.mxu0 0.0
      %1887 = vmatprep.subr.mxu0 0.0
      %1888 = vmatpush1.msra.mxu0 0.0
      %1889 = vmatprep.subr.mxu0 0.0
      %1890 = vmatpush1.msra.mxu0 0.0
      %1891 = vmatprep.subr.mxu0 0.0
      %1892 = vmatpush1.msra.mxu0 0.0
      %1893 = vmatprep.subr.mxu0 0.0
      %1894 = vmatpush1.msra.mxu0 0.0
      %1895 = vmatprep.subr.mxu0 0.0
      %1896 = vmatpush1.msra.mxu0 0.0
      %1897 = vmatprep.subr.mxu0 0.0
      %1898 = vmatpush1.msra.mxu0 0.0
      %1899 = vmatprep.subr.mxu0 0.0
      %1900 = vmatpush1.msra.mxu0 0.0
      %1901 = vmatprep.subr.mxu0 0.0
      %1902 = vmatpush1.msra.mxu0 0.0
      %1903 = vmatprep.subr.mxu0 0.0
      %1904 = vmatpush1.msra.mxu0 0.0
      %1905 = vmatprep.subr.mxu0 0.0
      %1906 = vmatpush1.msra.mxu0 %v1865
      %1907 = vmatprep.subr.mxu0 0.0
      %1908 = vmatpush1.msra.mxu0 %v1864
      %1909 = vmatprep.subr.mxu0 0.0
      %1910 = vmatpush1.msra.mxu0 %v1863
      %1911 = vmatprep.subr.mxu0 0.0
      %1912 = vmatpush1.msra.mxu0 %v1862
      %1913 = vmatprep.subr.mxu0 0.0
      %1914 = vmatpush2.msra.mxu0 0.0
      %1915 = vmatprep.subr.mxu0 0.0
      %1916 = vmatpush2.msra.mxu0 0.0
      %1917 = vmatprep.subr.mxu0 0.0
      %1918 = vmatpush2.msra.mxu0 0.0
      %1919 = vmatprep.subr.mxu0 0.0
      %1920 = vmatpush2.msra.mxu0 0.0
      %1921 = vmatprep.subr.mxu0 0.0
      %1922 = vmatpush2.msra.mxu0 0.0
      %1923 = vmatprep.subr.mxu0 0.0
      %1924 = vmatpush2.msra.mxu0 0.0
      %1925 = vmatprep.subr.mxu0 0.0
      %1926 = vmatpush2.msra.mxu0 0.0
      %1927 = vmatprep.subr.mxu0 0.0
      %1928 = vmatpush2.msra.mxu0 0.0
      %1929 = vmatprep.subr.mxu0 0.0
      %1930 = vmatpush2.msra.mxu0 0.0
      %1931 = vmatprep.subr.mxu0 0.0
      %1932 = vmatpush2.msra.mxu0 0.0
      %1933 = vmatprep.subr.mxu0 0.0
      %1934 = vmatpush2.msra.mxu0 0.0
      %1935 = vmatprep.subr.mxu0 0.0
      %1936 = vmatpush2.msra.mxu0 0.0
      %1937 = vmatprep.subr.mxu0 0.0
      %1938 = vmatpush2.msra.mxu0 0.0
      %1939 = vmatprep.subr.mxu0 0.0
      %1940 = vmatpush2.msra.mxu0 0.0
      %1941 = vmatprep.subr.mxu0 0.0
      %1942 = vmatpush2.msra.mxu0 0.0
      %1943 = vmatprep.subr.mxu0 0.0
      %1944 = vmatpush2.msra.mxu0 0.0
      %1945 = vmatprep.mubr.f32.mxu0 0.0
      %1946 = vmatmul.mubr.f32.gmra.mxu0 %v1879
      %v1947 = vpop.f32.mrf.mxu0
      %v1948 = vadd.f32 %v1876, %v1947
      %v1949 = vpop.f32.mrf.mxu0
      %1950 = vdwg.mxu0
      %1952 = vrot.lane.b32.xlu0 %v1948, 96
      %v1953 = vpop.permute.xlu0 %1952
      %v1954 = vsel %vm865, %v1948, 0
      %v1956 = vsel %vm865, %v1953, 0
      %1958 = vmatprep.subr.mxu0 0.0
      %1959 = vmatpush1.xpose.msra.mxu0 0.0
      %1960 = vmatprep.subr.mxu0 0.0
      %1961 = vmatpush1.xpose.msra.mxu0 0.0
      %1962 = vmatprep.subr.mxu0 0.0
      %1963 = vmatpush1.xpose.msra.mxu0 0.0
      %1964 = vmatprep.subr.mxu0 0.0
      %1965 = vmatpush1.xpose.msra.mxu0 0.0
      %1966 = vmatprep.subr.mxu0 0.0
      %1967 = vmatpush1.xpose.msra.mxu0 0.0
      %1968 = vmatprep.subr.mxu0 0.0
      %1969 = vmatpush1.xpose.msra.mxu0 0.0
      %1970 = vmatprep.subr.mxu0 0.0
      %1971 = vmatpush1.xpose.msra.mxu0 0.0
      %1972 = vmatprep.subr.mxu0 0.0
      %1973 = vmatpush1.xpose.msra.mxu0 0.0
      %1974 = vmatprep.subr.mxu0 0.0
      %1975 = vmatpush1.xpose.msra.mxu0 0.0
      %1976 = vmatprep.subr.mxu0 0.0
      %1977 = vmatpush1.xpose.msra.mxu0 0.0
      %1978 = vmatprep.subr.mxu0 0.0
      %1979 = vmatpush1.xpose.msra.mxu0 0.0
      %1980 = vmatprep.subr.mxu0 0.0
      %1981 = vmatpush1.xpose.msra.mxu0 0.0
      %1982 = vmatprep.subr.mxu0 0.0
      %1983 = vmatpush1.xpose.msra.mxu0 0.0
      %1984 = vmatprep.subr.mxu0 0.0
      %1985 = vmatpush1.xpose.msra.mxu0 0.0
      %1986 = vmatprep.subr.mxu0 0.0
      %1987 = vmatpush1.xpose.msra.mxu0 0.0
      %1988 = vmatprep.subr.mxu0 0.0
      %1989 = vmatpush1.xpose.msra.mxu0 %v1956
      %1990 = vmatprep.subr.mxu0 0.0
      %1991 = vmatpush2.xpose.msra.mxu0 0.0
      %1992 = vmatprep.subr.mxu0 0.0
      %1993 = vmatpush2.xpose.msra.mxu0 0.0
      %1994 = vmatprep.subr.mxu0 0.0
      %1995 = vmatpush2.xpose.msra.mxu0 0.0
      %1996 = vmatprep.subr.mxu0 0.0
      %1997 = vmatpush2.xpose.msra.mxu0 0.0
      %1998 = vmatprep.subr.mxu0 0.0
      %1999 = vmatpush2.xpose.msra.mxu0 0.0
      %2000 = vmatprep.subr.mxu0 0.0
      %2001 = vmatpush2.xpose.msra.mxu0 0.0
      %2002 = vmatprep.subr.mxu0 0.0
      %2003 = vmatpush2.xpose.msra.mxu0 0.0
      %2004 = vmatprep.subr.mxu0 0.0
      %2005 = vmatpush2.xpose.msra.mxu0 0.0
      %2006 = vmatprep.subr.mxu0 0.0
      %2007 = vmatpush2.xpose.msra.mxu0 0.0
      %2008 = vmatprep.subr.mxu0 0.0
      %2009 = vmatpush2.xpose.msra.mxu0 0.0
      %2010 = vmatprep.subr.mxu0 0.0
      %2011 = vmatpush2.xpose.msra.mxu0 0.0
      %2012 = vmatprep.subr.mxu0 0.0
      %2013 = vmatpush2.xpose.msra.mxu0 0.0
      %2014 = vmatprep.subr.mxu0 0.0
      %2015 = vmatpush2.xpose.msra.mxu0 0.0
      %2016 = vmatprep.subr.mxu0 0.0
      %2017 = vmatpush2.xpose.msra.mxu0 0.0
      %2018 = vmatprep.subr.mxu0 0.0
      %2019 = vmatpush2.xpose.msra.mxu0 0.0
      %2020 = vmatprep.subr.mxu0 0.0
      %2021 = vmatpush2.xpose.msra.mxu0 0.0
      %2022 = vmatprep.mubr.f32.mxu0 0.0
      %2023 = vmatmul.mubr.f32.gmra.mxu0 %v1954
      %v2024 = vpop.f32.mrf.mxu0
      %v2025 = vadd.f32 0.0, %v2024
      %v2026 = vpop.f32.mrf.mxu0
      %2027 = vdwg.mxu0
      %v2028 = vmul.f32 %v2025, 0.35355338
      %v2029 = vadd.f32 %v2028, %v1861
      %v2030 = vsel %vm865, %v2029, -inf
      %2031 = vmax.xlane.f32.xlu0 %v2030
      %v2032 = vpop.xlane.xlu0 %2031
      %v2033 = vsub.f32 %v2029, %v2032
      %v2034 = vmul.f32 %v2033, 1.442695
      %v2035 = vpow.pop %v2034
      %v2036 = vsel %vm865, %v2035, 0.0
      %2037 = vadd.xlane.f32.xlu0 %v2036
      %v2038 = vpop.xlane.xlu0 %2037
      %v2039 = vrcp.pop %v2038
      %v2040 = vmul.f32 %v2035, %v2039
      %2041 = vrot.lane.b32.xlu0 %v1948, 64
      %v2042 = vpop.permute.xlu0 %2041
      %v2045 = vsel %vm865, %v2040, 0
      %2047 = vmatprep.subr.mxu0 0.0
      %2048 = vmatpush1.msra.mxu0 0.0
      %2049 = vmatprep.subr.mxu0 0.0
      %2050 = vmatpush1.msra.mxu0 0.0
      %2051 = vmatprep.subr.mxu0 0.0
      %2052 = vmatpush1.msra.mxu0 0.0
      %2053 = vmatprep.subr.mxu0 0.0
      %2054 = vmatpush1.msra.mxu0 0.0
      %2055 = vmatprep.subr.mxu0 0.0
      %2056 = vmatpush1.msra.mxu0 0.0
      %2057 = vmatprep.subr.mxu0 0.0
      %2058 = vmatpush1.msra.mxu0 0.0
      %2059 = vmatprep.subr.mxu0 0.0
      %2060 = vmatpush1.msra.mxu0 0.0
      %2061 = vmatprep.subr.mxu0 0.0
      %2062 = vmatpush1.msra.mxu0 0.0
      %2063 = vmatprep.subr.mxu0 0.0
      %2064 = vmatpush1.msra.mxu0 0.0
      %2065 = vmatprep.subr.mxu0 0.0
      %2066 = vmatpush1.msra.mxu0 0.0
      %2067 = vmatprep.subr.mxu0 0.0
      %2068 = vmatpush1.msra.mxu0 0.0
      %2069 = vmatprep.subr.mxu0 0.0
      %2070 = vmatpush1.msra.mxu0 0.0
      %2071 = vmatprep.subr.mxu0 0.0
      %2072 = vmatpush1.msra.mxu0 0.0
      %2073 = vmatprep.subr.mxu0 0.0
      %2074 = vmatpush1.msra.mxu0 0.0
      %2075 = vmatprep.subr.mxu0 0.0
      %2076 = vmatpush1.msra.mxu0 0.0
      %2077 = vmatprep.subr.mxu0 0.0
      %2078 = vmatpush1.msra.mxu0 %v2042
      %2079 = vmatprep.subr.mxu0 0.0
      %2080 = vmatpush2.msra.mxu0 0.0
      %2081 = vmatprep.subr.mxu0 0.0
      %2082 = vmatpush2.msra.mxu0 0.0
      %2083 = vmatprep.subr.mxu0 0.0
      %2084 = vmatpush2.msra.mxu0 0.0
      %2085 = vmatprep.subr.mxu0 0.0
      %2086 = vmatpush2.msra.mxu0 0.0
      %2087 = vmatprep.subr.mxu0 0.0
      %2088 = vmatpush2.msra.mxu0 0.0
      %2089 = vmatprep.subr.mxu0 0.0
      %2090 = vmatpush2.msra.mxu0 0.0
      %2091 = vmatprep.subr.mxu0 0.0
      %2092 = vmatpush2.msra.mxu0 0.0
      %2093 = vmatprep.subr.mxu0 0.0
      %2094 = vmatpush2.msra.mxu0 0.0
      %2095 = vmatprep.subr.mxu0 0.0
      %2096 = vmatpush2.msra.mxu0 0.0
      %2097 = vmatprep.subr.mxu0 0.0
      %2098 = vmatpush2.msra.mxu0 0.0
      %2099 = vmatprep.subr.mxu0 0.0
      %2100 = vmatpush2.msra.mxu0 0.0
      %2101 = vmatprep.subr.mxu0 0.0
      %2102 = vmatpush2.msra.mxu0 0.0
      %2103 = vmatprep.subr.mxu0 0.0
      %2104 = vmatpush2.msra.mxu0 0.0
      %2105 = vmatprep.subr.mxu0 0.0
      %2106 = vmatpush2.msra.mxu0 0.0
      %2107 = vmatprep.subr.mxu0 0.0
      %2108 = vmatpush2.msra.mxu0 0.0
      %2109 = vmatprep.subr.mxu0 0.0
      %2110 = vmatpush2.msra.mxu0 0.0
      %2111 = vmatprep.mubr.f32.mxu0 0.0
      %2112 = vmatmul.mubr.f32.gmra.mxu0 %v2045
      %v2113 = vpop.f32.mrf.mxu0
      %v2114 = vadd.f32 0.0, %v2113
      %v2115 = vpop.f32.mrf.mxu0
      %2116 = vdwg.mxu0
      %2117 = vrot.lane.b32.xlu0 %v1948, 120
      %v2118 = vpop.permute.xlu0 %2117
      %2119 = vrot.lane.b32.xlu0 %v1948, 88
      %v2120 = vpop.permute.xlu0 %2119
      %v2121 = vsel %vm865, %v2118, 0
      %v2123 = vsel %vm865, %v2120, 0
      %2125 = vmatprep.subr.mxu0 0.0
      %2126 = vmatpush1.xpose.msra.mxu0 0.0
      %2127 = vmatprep.subr.mxu0 0.0
      %2128 = vmatpush1.xpose.msra.mxu0 0.0
      %2129 = vmatprep.subr.mxu0 0.0
      %2130 = vmatpush1.xpose.msra.mxu0 0.0
      %2131 = vmatprep.subr.mxu0 0.0
      %2132 = vmatpush1.xpose.msra.mxu0 0.0
      %2133 = vmatprep.subr.mxu0 0.0
      %2134 = vmatpush1.xpose.msra.mxu0 0.0
      %2135 = vmatprep.subr.mxu0 0.0
      %2136 = vmatpush1.xpose.msra.mxu0 0.0
      %2137 = vmatprep.subr.mxu0 0.0
      %2138 = vmatpush1.xpose.msra.mxu0 0.0
      %2139 = vmatprep.subr.mxu0 0.0
      %2140 = vmatpush1.xpose.msra.mxu0 0.0
      %2141 = vmatprep.subr.mxu0 0.0
      %2142 = vmatpush1.xpose.msra.mxu0 0.0
      %2143 = vmatprep.subr.mxu0 0.0
      %2144 = vmatpush1.xpose.msra.mxu0 0.0
      %2145 = vmatprep.subr.mxu0 0.0
      %2146 = vmatpush1.xpose.msra.mxu0 0.0
      %2147 = vmatprep.subr.mxu0 0.0
      %2148 = vmatpush1.xpose.msra.mxu0 0.0
      %2149 = vmatprep.subr.mxu0 0.0
      %2150 = vmatpush1.xpose.msra.mxu0 0.0
      %2151 = vmatprep.subr.mxu0 0.0
      %2152 = vmatpush1.xpose.msra.mxu0 0.0
      %2153 = vmatprep.subr.mxu0 0.0
      %2154 = vmatpush1.xpose.msra.mxu0 0.0
      %2155 = vmatprep.subr.mxu0 0.0
      %2156 = vmatpush1.xpose.msra.mxu0 %v2123
      %2157 = vmatprep.subr.mxu0 0.0
      %2158 = vmatpush2.xpose.msra.mxu0 0.0
      %2159 = vmatprep.subr.mxu0 0.0
      %2160 = vmatpush2.xpose.msra.mxu0 0.0
      %2161 = vmatprep.subr.mxu0 0.0
      %2162 = vmatpush2.xpose.msra.mxu0 0.0
      %2163 = vmatprep.subr.mxu0 0.0
      %2164 = vmatpush2.xpose.msra.mxu0 0.0
      %2165 = vmatprep.subr.mxu0 0.0
      %2166 = vmatpush2.xpose.msra.mxu0 0.0
      %2167 = vmatprep.subr.mxu0 0.0
      %2168 = vmatpush2.xpose.msra.mxu0 0.0
      %2169 = vmatprep.subr.mxu0 0.0
      %2170 = vmatpush2.xpose.msra.mxu0 0.0
      %2171 = vmatprep.subr.mxu0 0.0
      %2172 = vmatpush2.xpose.msra.mxu0 0.0
      %2173 = vmatprep.subr.mxu0 0.0
      %2174 = vmatpush2.xpose.msra.mxu0 0.0
      %2175 = vmatprep.subr.mxu0 0.0
      %2176 = vmatpush2.xpose.msra.mxu0 0.0
      %2177 = vmatprep.subr.mxu0 0.0
      %2178 = vmatpush2.xpose.msra.mxu0 0.0
      %2179 = vmatprep.subr.mxu0 0.0
      %2180 = vmatpush2.xpose.msra.mxu0 0.0
      %2181 = vmatprep.subr.mxu0 0.0
      %2182 = vmatpush2.xpose.msra.mxu0 0.0
      %2183 = vmatprep.subr.mxu0 0.0
      %2184 = vmatpush2.xpose.msra.mxu0 0.0
      %2185 = vmatprep.subr.mxu0 0.0
      %2186 = vmatpush2.xpose.msra.mxu0 0.0
      %2187 = vmatprep.subr.mxu0 0.0
      %2188 = vmatpush2.xpose.msra.mxu0 0.0
      %2189 = vmatprep.mubr.f32.mxu0 0.0
      %2190 = vmatmul.mubr.f32.gmra.mxu0 %v2121
      %v2191 = vpop.f32.mrf.mxu0
      %v2192 = vadd.f32 0.0, %v2191
      %v2193 = vpop.f32.mrf.mxu0
      %2194 = vdwg.mxu0
      %v2195 = vmul.f32 %v2192, 0.35355338
      %v2196 = vadd.f32 %v2195, %v1861
      %v2197 = vsel %vm865, %v2196, -inf
      %2198 = vmax.xlane.f32.xlu0 %v2197
      %v2199 = vpop.xlane.xlu0 %2198
      %v2200 = vsub.f32 %v2196, %v2199
      %v2201 = vmul.f32 %v2200, 1.442695
      %v2202 = vpow.pop %v2201
      %v2203 = vsel %vm865, %v2202, 0.0
      %2204 = vadd.xlane.f32.xlu0 %v2203
      %v2205 = vpop.xlane.xlu0 %2204
      %v2206 = vrcp.pop %v2205
      %v2207 = vmul.f32 %v2202, %v2206
      %2208 = vrot.lane.b32.xlu0 %v1948, 56
      %v2209 = vpop.permute.xlu0 %2208
      %v2212 = vsel %vm865, %v2207, 0
      %2214 = vmatprep.subr.mxu0 0.0
      %2215 = vmatpush1.msra.mxu0 0.0
      %2216 = vmatprep.subr.mxu0 0.0
      %2217 = vmatpush1.msra.mxu0 0.0
      %2218 = vmatprep.subr.mxu0 0.0
      %2219 = vmatpush1.msra.mxu0 0.0
      %2220 = vmatprep.subr.mxu0 0.0
      %2221 = vmatpush1.msra.mxu0 0.0
      %2222 = vmatprep.subr.mxu0 0.0
      %2223 = vmatpush1.msra.mxu0 0.0
      %2224 = vmatprep.subr.mxu0 0.0
      %2225 = vmatpush1.msra.mxu0 0.0
      %2226 = vmatprep.subr.mxu0 0.0
      %2227 = vmatpush1.msra.mxu0 0.0
      %2228 = vmatprep.subr.mxu0 0.0
      %2229 = vmatpush1.msra.mxu0 0.0
      %2230 = vmatprep.subr.mxu0 0.0
      %2231 = vmatpush1.msra.mxu0 0.0
      %2232 = vmatprep.subr.mxu0 0.0
      %2233 = vmatpush1.msra.mxu0 0.0
      %2234 = vmatprep.subr.mxu0 0.0
      %2235 = vmatpush1.msra.mxu0 0.0
      %2236 = vmatprep.subr.mxu0 0.0
      %2237 = vmatpush1.msra.mxu0 0.0
      %2238 = vmatprep.subr.mxu0 0.0
      %2239 = vmatpush1.msra.mxu0 0.0
      %2240 = vmatprep.subr.mxu0 0.0
      %2241 = vmatpush1.msra.mxu0 0.0
      %2242 = vmatprep.subr.mxu0 0.0
      %2243 = vmatpush1.msra.mxu0 0.0
      %2244 = vmatprep.subr.mxu0 0.0
      %2245 = vmatpush1.msra.mxu0 %v2209
      %2246 = vmatprep.subr.mxu0 0.0
      %2247 = vmatpush2.msra.mxu0 0.0
      %2248 = vmatprep.subr.mxu0 0.0
      %2249 = vmatpush2.msra.mxu0 0.0
      %2250 = vmatprep.subr.mxu0 0.0
      %2251 = vmatpush2.msra.mxu0 0.0
      %2252 = vmatprep.subr.mxu0 0.0
      %2253 = vmatpush2.msra.mxu0 0.0
      %2254 = vmatprep.subr.mxu0 0.0
      %2255 = vmatpush2.msra.mxu0 0.0
      %2256 = vmatprep.subr.mxu0 0.0
      %2257 = vmatpush2.msra.mxu0 0.0
      %2258 = vmatprep.subr.mxu0 0.0
      %2259 = vmatpush2.msra.mxu0 0.0
      %2260 = vmatprep.subr.mxu0 0.0
      %2261 = vmatpush2.msra.mxu0 0.0
      %2262 = vmatprep.subr.mxu0 0.0
      %2263 = vmatpush2.msra.mxu0 0.0
      %2264 = vmatprep.subr.mxu0 0.0
      %2265 = vmatpush2.msra.mxu0 0.0
      %2266 = vmatprep.subr.mxu0 0.0
      %2267 = vmatpush2.msra.mxu0 0.0
      %2268 = vmatprep.subr.mxu0 0.0
      %2269 = vmatpush2.msra.mxu0 0.0
      %2270 = vmatprep.subr.mxu0 0.0
      %2271 = vmatpush2.msra.mxu0 0.0
      %2272 = vmatprep.subr.mxu0 0.0
      %2273 = vmatpush2.msra.mxu0 0.0
      %2274 = vmatprep.subr.mxu0 0.0
      %2275 = vmatpush2.msra.mxu0 0.0
      %2276 = vmatprep.subr.mxu0 0.0
      %2277 = vmatpush2.msra.mxu0 0.0
      %2278 = vmatprep.mubr.f32.mxu0 0.0
      %2279 = vmatmul.mubr.f32.gmra.mxu0 %v2212
      %v2280 = vpop.f32.mrf.mxu0
      %v2281 = vadd.f32 0.0, %v2280
      %v2282 = vpop.f32.mrf.mxu0
      %2283 = vdwg.mxu0
      %v2285 = vsel %vm865, %v2281, 0
      %2287 = vmatprep.subr.mxu0 0.0
      %2288 = vmatpush1.msra.mxu0 0.0
      %2289 = vmatprep.subr.mxu0 0.0
      %2290 = vmatpush1.msra.mxu0 0.0
      %2291 = vmatprep.subr.mxu0 0.0
      %2292 = vmatpush1.msra.mxu0 0.0
      %2293 = vmatprep.subr.mxu0 0.0
      %2294 = vmatpush1.msra.mxu0 0.0
      %2295 = vmatprep.subr.mxu0 0.0
      %2296 = vmatpush1.msra.mxu0 0.0
      %2297 = vmatprep.subr.mxu0 0.0
      %2298 = vmatpush1.msra.mxu0 0.0
      %2299 = vmatprep.subr.mxu0 0.0
      %2300 = vmatpush1.msra.mxu0 0.0
      %2301 = vmatprep.subr.mxu0 0.0
      %2302 = vmatpush1.msra.mxu0 0.0
      %2303 = vmatprep.subr.mxu0 0.0
      %2304 = vmatpush1.msra.mxu0 0.0
      %2305 = vmatprep.subr.mxu0 0.0
      %2306 = vmatpush1.msra.mxu0 0.0
      %2307 = vmatprep.subr.mxu0 0.0
      %2308 = vmatpush1.msra.mxu0 0.0
      %2309 = vmatprep.subr.mxu0 0.0
      %2310 = vmatpush1.msra.mxu0 0.0
      %2311 = vmatprep.subr.mxu0 0.0
      %2312 = vmatpush1.msra.mxu0 0.0
      %2313 = vmatprep.subr.mxu0 0.0
      %2314 = vmatpush1.msra.mxu0 0.0
      %2315 = vmatprep.subr.mxu0 0.0
      %2316 = vmatpush1.msra.mxu0 0.0
      %2317 = vmatprep.subr.mxu0 0.0
      %2318 = vmatpush1.msra.mxu0 %v1868
      %2319 = vmatprep.subr.mxu0 0.0
      %2320 = vmatpush2.msra.mxu0 0.0
      %2321 = vmatprep.subr.mxu0 0.0
      %2322 = vmatpush2.msra.mxu0 0.0
      %2323 = vmatprep.subr.mxu0 0.0
      %2324 = vmatpush2.msra.mxu0 0.0
      %2325 = vmatprep.subr.mxu0 0.0
      %2326 = vmatpush2.msra.mxu0 0.0
      %2327 = vmatprep.subr.mxu0 0.0
      %2328 = vmatpush2.msra.mxu0 0.0
      %2329 = vmatprep.subr.mxu0 0.0
      %2330 = vmatpush2.msra.mxu0 0.0
      %2331 = vmatprep.subr.mxu0 0.0
      %2332 = vmatpush2.msra.mxu0 0.0
      %2333 = vmatprep.subr.mxu0 0.0
      %2334 = vmatpush2.msra.mxu0 0.0
      %2335 = vmatprep.subr.mxu0 0.0
      %2336 = vmatpush2.msra.mxu0 0.0
      %2337 = vmatprep.subr.mxu0 0.0
      %2338 = vmatpush2.msra.mxu0 0.0
      %2339 = vmatprep.subr.mxu0 0.0
      %2340 = vmatpush2.msra.mxu0 0.0
      %2341 = vmatprep.subr.mxu0 0.0
      %2342 = vmatpush2.msra.mxu0 0.0
      %2343 = vmatprep.subr.mxu0 0.0
      %2344 = vmatpush2.msra.mxu0 0.0
      %2345 = vmatprep.subr.mxu0 0.0
      %2346 = vmatpush2.msra.mxu0 0.0
      %2347 = vmatprep.subr.mxu0 0.0
      %2348 = vmatpush2.msra.mxu0 0.0
      %2349 = vmatprep.subr.mxu0 0.0
      %2350 = vmatpush2.msra.mxu0 0.0
      %2351 = vmatprep.mubr.f32.mxu0 0.0
      %2352 = vmatmul.mubr.f32.gmra.mxu0 %v2285
      %v2353 = vpop.f32.mrf.mxu0
      %v2354 = vadd.f32 0.0, %v2353
      %v2355 = vpop.f32.mrf.mxu0
      %2356 = vdwg.mxu0
      %v2358 = vsel %vm865, %v2114, 0
      %2360 = vmatprep.subr.mxu0 0.0
      %2361 = vmatpush1.msra.mxu0 0.0
      %2362 = vmatprep.subr.mxu0 0.0
      %2363 = vmatpush1.msra.mxu0 0.0
      %2364 = vmatprep.subr.mxu0 0.0
      %2365 = vmatpush1.msra.mxu0 0.0
      %2366 = vmatprep.subr.mxu0 0.0
      %2367 = vmatpush1.msra.mxu0 0.0
      %2368 = vmatprep.subr.mxu0 0.0
      %2369 = vmatpush1.msra.mxu0 0.0
      %2370 = vmatprep.subr.mxu0 0.0
      %2371 = vmatpush1.msra.mxu0 0.0
      %2372 = vmatprep.subr.mxu0 0.0
      %2373 = vmatpush1.msra.mxu0 0.0
      %2374 = vmatprep.subr.mxu0 0.0
      %2375 = vmatpush1.msra.mxu0 0.0
      %2376 = vmatprep.subr.mxu0 0.0
      %2377 = vmatpush1.msra.mxu0 0.0
      %2378 = vmatprep.subr.mxu0 0.0
      %2379 = vmatpush1.msra.mxu0 0.0
      %2380 = vmatprep.subr.mxu0 0.0
      %2381 = vmatpush1.msra.mxu0 0.0
      %2382 = vmatprep.subr.mxu0 0.0
      %2383 = vmatpush1.msra.mxu0 0.0
      %2384 = vmatprep.subr.mxu0 0.0
      %2385 = vmatpush1.msra.mxu0 0.0
      %2386 = vmatprep.subr.mxu0 0.0
      %2387 = vmatpush1.msra.mxu0 0.0
      %2388 = vmatprep.subr.mxu0 0.0
      %2389 = vmatpush1.msra.mxu0 0.0
      %2390 = vmatprep.subr.mxu0 0.0
      %2391 = vmatpush1.msra.mxu0 %v1867
      %2392 = vmatprep.subr.mxu0 0.0
      %2393 = vmatpush2.msra.mxu0 0.0
      %2394 = vmatprep.subr.mxu0 0.0
      %2395 = vmatpush2.msra.mxu0 0.0
      %2396 = vmatprep.subr.mxu0 0.0
      %2397 = vmatpush2.msra.mxu0 0.0
      %2398 = vmatprep.subr.mxu0 0.0
      %2399 = vmatpush2.msra.mxu0 0.0
      %2400 = vmatprep.subr.mxu0 0.0
      %2401 = vmatpush2.msra.mxu0 0.0
      %2402 = vmatprep.subr.mxu0 0.0
      %2403 = vmatpush2.msra.mxu0 0.0
      %2404 = vmatprep.subr.mxu0 0.0
      %2405 = vmatpush2.msra.mxu0 0.0
      %2406 = vmatprep.subr.mxu0 0.0
      %2407 = vmatpush2.msra.mxu0 0.0
      %2408 = vmatprep.subr.mxu0 0.0
      %2409 = vmatpush2.msra.mxu0 0.0
      %2410 = vmatprep.subr.mxu0 0.0
      %2411 = vmatpush2.msra.mxu0 0.0
      %2412 = vmatprep.subr.mxu0 0.0
      %2413 = vmatpush2.msra.mxu0 0.0
      %2414 = vmatprep.subr.mxu0 0.0
      %2415 = vmatpush2.msra.mxu0 0.0
      %2416 = vmatprep.subr.mxu0 0.0
      %2417 = vmatpush2.msra.mxu0 0.0
      %2418 = vmatprep.subr.mxu0 0.0
      %2419 = vmatpush2.msra.mxu0 0.0
      %2420 = vmatprep.subr.mxu0 0.0
      %2421 = vmatpush2.msra.mxu0 0.0
      %2422 = vmatprep.subr.mxu0 0.0
      %2423 = vmatpush2.msra.mxu0 0.0
      %2424 = vmatprep.mubr.f32.mxu0 0.0
      %2425 = vmatmul.mubr.f32.gmra.mxu0 %v2358
      %v2426 = vpop.f32.mrf.mxu0
      %v2427 = vadd.f32 %v2354, %v2426
      %v2428 = vpop.f32.mrf.mxu0
      %2429 = vdwg.mxu0
      %2430 = vrot.lane.b32.xlu0 %v1948, 112
      %v2431 = vpop.permute.xlu0 %2430
      %2432 = vrot.lane.b32.xlu0 %v1948, 80
      %v2433 = vpop.permute.xlu0 %2432
      %v2434 = vsel %vm865, %v2431, 0
      %v2436 = vsel %vm865, %v2433, 0
      %2438 = vmatprep.subr.mxu0 0.0
      %2439 = vmatpush1.xpose.msra.mxu0 0.0
      %2440 = vmatprep.subr.mxu0 0.0
      %2441 = vmatpush1.xpose.msra.mxu0 0.0
      %2442 = vmatprep.subr.mxu0 0.0
      %2443 = vmatpush1.xpose.msra.mxu0 0.0
      %2444 = vmatprep.subr.mxu0 0.0
      %2445 = vmatpush1.xpose.msra.mxu0 0.0
      %2446 = vmatprep.subr.mxu0 0.0
      %2447 = vmatpush1.xpose.msra.mxu0 0.0
      %2448 = vmatprep.subr.mxu0 0.0
      %2449 = vmatpush1.xpose.msra.mxu0 0.0
      %2450 = vmatprep.subr.mxu0 0.0
      %2451 = vmatpush1.xpose.msra.mxu0 0.0
      %2452 = vmatprep.subr.mxu0 0.0
      %2453 = vmatpush1.xpose.msra.mxu0 0.0
      %2454 = vmatprep.subr.mxu0 0.0
      %2455 = vmatpush1.xpose.msra.mxu0 0.0
      %2456 = vmatprep.subr.mxu0 0.0
      %2457 = vmatpush1.xpose.msra.mxu0 0.0
      %2458 = vmatprep.subr.mxu0 0.0
      %2459 = vmatpush1.xpose.msra.mxu0 0.0
      %2460 = vmatprep.subr.mxu0 0.0
      %2461 = vmatpush1.xpose.msra.mxu0 0.0
      %2462 = vmatprep.subr.mxu0 0.0
      %2463 = vmatpush1.xpose.msra.mxu0 0.0
      %2464 = vmatprep.subr.mxu0 0.0
      %2465 = vmatpush1.xpose.msra.mxu0 0.0
      %2466 = vmatprep.subr.mxu0 0.0
      %2467 = vmatpush1.xpose.msra.mxu0 0.0
      %2468 = vmatprep.subr.mxu0 0.0
      %2469 = vmatpush1.xpose.msra.mxu0 %v2436
      %2470 = vmatprep.subr.mxu0 0.0
      %2471 = vmatpush2.xpose.msra.mxu0 0.0
      %2472 = vmatprep.subr.mxu0 0.0
      %2473 = vmatpush2.xpose.msra.mxu0 0.0
      %2474 = vmatprep.subr.mxu0 0.0
      %2475 = vmatpush2.xpose.msra.mxu0 0.0
      %2476 = vmatprep.subr.mxu0 0.0
      %2477 = vmatpush2.xpose.msra.mxu0 0.0
      %2478 = vmatprep.subr.mxu0 0.0
      %2479 = vmatpush2.xpose.msra.mxu0 0.0
      %2480 = vmatprep.subr.mxu0 0.0
      %2481 = vmatpush2.xpose.msra.mxu0 0.0
      %2482 = vmatprep.subr.mxu0 0.0
      %2483 = vmatpush2.xpose.msra.mxu0 0.0
      %2484 = vmatprep.subr.mxu0 0.0
      %2485 = vmatpush2.xpose.msra.mxu0 0.0
      %2486 = vmatprep.subr.mxu0 0.0
      %2487 = vmatpush2.xpose.msra.mxu0 0.0
      %2488 = vmatprep.subr.mxu0 0.0
      %2489 = vmatpush2.xpose.msra.mxu0 0.0
      %2490 = vmatprep.subr.mxu0 0.0
      %2491 = vmatpush2.xpose.msra.mxu0 0.0
      %2492 = vmatprep.subr.mxu0 0.0
      %2493 = vmatpush2.xpose.msra.mxu0 0.0
      %2494 = vmatprep.subr.mxu0 0.0
      %2495 = vmatpush2.xpose.msra.mxu0 0.0
      %2496 = vmatprep.subr.mxu0 0.0
      %2497 = vmatpush2.xpose.msra.mxu0 0.0
      %2498 = vmatprep.subr.mxu0 0.0
      %2499 = vmatpush2.xpose.msra.mxu0 0.0
      %2500 = vmatprep.subr.mxu0 0.0
      %2501 = vmatpush2.xpose.msra.mxu0 0.0
      %2502 = vmatprep.mubr.f32.mxu0 0.0
      %2503 = vmatmul.mubr.f32.gmra.mxu0 %v2434
      %v2504 = vpop.f32.mrf.mxu0
      %v2505 = vadd.f32 0.0, %v2504
      %v2506 = vpop.f32.mrf.mxu0
      %2507 = vdwg.mxu0
      %v2508 = vmul.f32 %v2505, 0.35355338
      %v2509 = vadd.f32 %v2508, %v1861
      %v2510 = vsel %vm865, %v2509, -inf
      %2511 = vmax.xlane.f32.xlu0 %v2510
      %v2512 = vpop.xlane.xlu0 %2511
      %v2513 = vsub.f32 %v2509, %v2512
      %v2514 = vmul.f32 %v2513, 1.442695
      %v2515 = vpow.pop %v2514
      %v2516 = vsel %vm865, %v2515, 0.0
      %2517 = vadd.xlane.f32.xlu0 %v2516
      %v2518 = vpop.xlane.xlu0 %2517
      %v2519 = vrcp.pop %v2518
      %v2520 = vmul.f32 %v2515, %v2519
      %2521 = vrot.lane.b32.xlu0 %v1948, 48
      %v2522 = vpop.permute.xlu0 %2521
      %v2525 = vsel %vm865, %v2520, 0
      %2527 = vmatprep.subr.mxu0 0.0
      %2528 = vmatpush1.msra.mxu0 0.0
      %2529 = vmatprep.subr.mxu0 0.0
      %2530 = vmatpush1.msra.mxu0 0.0
      %2531 = vmatprep.subr.mxu0 0.0
      %2532 = vmatpush1.msra.mxu0 0.0
      %2533 = vmatprep.subr.mxu0 0.0
      %2534 = vmatpush1.msra.mxu0 0.0
      %2535 = vmatprep.subr.mxu0 0.0
      %2536 = vmatpush1.msra.mxu0 0.0
      %2537 = vmatprep.subr.mxu0 0.0
      %2538 = vmatpush1.msra.mxu0 0.0
      %2539 = vmatprep.subr.mxu0 0.0
      %2540 = vmatpush1.msra.mxu0 0.0
      %2541 = vmatprep.subr.mxu0 0.0
      %2542 = vmatpush1.msra.mxu0 0.0
      %2543 = vmatprep.subr.mxu0 0.0
      %2544 = vmatpush1.msra.mxu0 0.0
      %2545 = vmatprep.subr.mxu0 0.0
      %2546 = vmatpush1.msra.mxu0 0.0
      %2547 = vmatprep.subr.mxu0 0.0
      %2548 = vmatpush1.msra.mxu0 0.0
      %2549 = vmatprep.subr.mxu0 0.0
      %2550 = vmatpush1.msra.mxu0 0.0
      %2551 = vmatprep.subr.mxu0 0.0
      %2552 = vmatpush1.msra.mxu0 0.0
      %2553 = vmatprep.subr.mxu0 0.0
      %2554 = vmatpush1.msra.mxu0 0.0
      %2555 = vmatprep.subr.mxu0 0.0
      %2556 = vmatpush1.msra.mxu0 0.0
      %2557 = vmatprep.subr.mxu0 0.0
      %2558 = vmatpush1.msra.mxu0 %v2522
      %2559 = vmatprep.subr.mxu0 0.0
      %2560 = vmatpush2.msra.mxu0 0.0
      %2561 = vmatprep.subr.mxu0 0.0
      %2562 = vmatpush2.msra.mxu0 0.0
      %2563 = vmatprep.subr.mxu0 0.0
      %2564 = vmatpush2.msra.mxu0 0.0
      %2565 = vmatprep.subr.mxu0 0.0
      %2566 = vmatpush2.msra.mxu0 0.0
      %2567 = vmatprep.subr.mxu0 0.0
      %2568 = vmatpush2.msra.mxu0 0.0
      %2569 = vmatprep.subr.mxu0 0.0
      %2570 = vmatpush2.msra.mxu0 0.0
      %2571 = vmatprep.subr.mxu0 0.0
      %2572 = vmatpush2.msra.mxu0 0.0
      %2573 = vmatprep.subr.mxu0 0.0
      %2574 = vmatpush2.msra.mxu0 0.0
      %2575 = vmatprep.subr.mxu0 0.0
      %2576 = vmatpush2.msra.mxu0 0.0
      %2577 = vmatprep.subr.mxu0 0.0
      %2578 = vmatpush2.msra.mxu0 0.0
      %2579 = vmatprep.subr.mxu0 0.0
      %2580 = vmatpush2.msra.mxu0 0.0
      %2581 = vmatprep.subr.mxu0 0.0
      %2582 = vmatpush2.msra.mxu0 0.0
      %2583 = vmatprep.subr.mxu0 0.0
      %2584 = vmatpush2.msra.mxu0 0.0
      %2585 = vmatprep.subr.mxu0 0.0
      %2586 = vmatpush2.msra.mxu0 0.0
      %2587 = vmatprep.subr.mxu0 0.0
      %2588 = vmatpush2.msra.mxu0 0.0
      %2589 = vmatprep.subr.mxu0 0.0
      %2590 = vmatpush2.msra.mxu0 0.0
      %2591 = vmatprep.mubr.f32.mxu0 0.0
      %2592 = vmatmul.mubr.f32.gmra.mxu0 %v2525
      %v2593 = vpop.f32.mrf.mxu0
      %v2594 = vadd.f32 0.0, %v2593
      %v2595 = vpop.f32.mrf.mxu0
      %2596 = vdwg.mxu0
      %v2598 = vsel %vm865, %v2594, 0
      %2600 = vmatprep.subr.mxu0 0.0
      %2601 = vmatpush1.msra.mxu0 0.0
      %2602 = vmatprep.subr.mxu0 0.0
      %2603 = vmatpush1.msra.mxu0 0.0
      %2604 = vmatprep.subr.mxu0 0.0
      %2605 = vmatpush1.msra.mxu0 0.0
      %2606 = vmatprep.subr.mxu0 0.0
      %2607 = vmatpush1.msra.mxu0 0.0
      %2608 = vmatprep.subr.mxu0 0.0
      %2609 = vmatpush1.msra.mxu0 0.0
      %2610 = vmatprep.subr.mxu0 0.0
      %2611 = vmatpush1.msra.mxu0 0.0
      %2612 = vmatprep.subr.mxu0 0.0
      %2613 = vmatpush1.msra.mxu0 0.0
      %2614 = vmatprep.subr.mxu0 0.0
      %2615 = vmatpush1.msra.mxu0 0.0
      %2616 = vmatprep.subr.mxu0 0.0
      %2617 = vmatpush1.msra.mxu0 0.0
      %2618 = vmatprep.subr.mxu0 0.0
      %2619 = vmatpush1.msra.mxu0 0.0
      %2620 = vmatprep.subr.mxu0 0.0
      %2621 = vmatpush1.msra.mxu0 0.0
      %2622 = vmatprep.subr.mxu0 0.0
      %2623 = vmatpush1.msra.mxu0 0.0
      %2624 = vmatprep.subr.mxu0 0.0
      %2625 = vmatpush1.msra.mxu0 0.0
      %2626 = vmatprep.subr.mxu0 0.0
      %2627 = vmatpush1.msra.mxu0 0.0
      %2628 = vmatprep.subr.mxu0 0.0
      %2629 = vmatpush1.msra.mxu0 0.0
      %2630 = vmatprep.subr.mxu0 0.0
      %2631 = vmatpush1.msra.mxu0 %v1869
      %2632 = vmatprep.subr.mxu0 0.0
      %2633 = vmatpush2.msra.mxu0 0.0
      %2634 = vmatprep.subr.mxu0 0.0
      %2635 = vmatpush2.msra.mxu0 0.0
      %2636 = vmatprep.subr.mxu0 0.0
      %2637 = vmatpush2.msra.mxu0 0.0
      %2638 = vmatprep.subr.mxu0 0.0
      %2639 = vmatpush2.msra.mxu0 0.0
      %2640 = vmatprep.subr.mxu0 0.0
      %2641 = vmatpush2.msra.mxu0 0.0
      %2642 = vmatprep.subr.mxu0 0.0
      %2643 = vmatpush2.msra.mxu0 0.0
      %2644 = vmatprep.subr.mxu0 0.0
      %2645 = vmatpush2.msra.mxu0 0.0
      %2646 = vmatprep.subr.mxu0 0.0
      %2647 = vmatpush2.msra.mxu0 0.0
      %2648 = vmatprep.subr.mxu0 0.0
      %2649 = vmatpush2.msra.mxu0 0.0
      %2650 = vmatprep.subr.mxu0 0.0
      %2651 = vmatpush2.msra.mxu0 0.0
      %2652 = vmatprep.subr.mxu0 0.0
      %2653 = vmatpush2.msra.mxu0 0.0
      %2654 = vmatprep.subr.mxu0 0.0
      %2655 = vmatpush2.msra.mxu0 0.0
      %2656 = vmatprep.subr.mxu0 0.0
      %2657 = vmatpush2.msra.mxu0 0.0
      %2658 = vmatprep.subr.mxu0 0.0
      %2659 = vmatpush2.msra.mxu0 0.0
      %2660 = vmatprep.subr.mxu0 0.0
      %2661 = vmatpush2.msra.mxu0 0.0
      %2662 = vmatprep.subr.mxu0 0.0
      %2663 = vmatpush2.msra.mxu0 0.0
      %2664 = vmatprep.mubr.f32.mxu0 0.0
      %2665 = vmatmul.mubr.f32.gmra.mxu0 %v2598
      %v2666 = vpop.f32.mrf.mxu0
      %v2667 = vadd.f32 0.0, %v2666
      %v2668 = vpop.f32.mrf.mxu0
      %2669 = vdwg.mxu0
      %v2670 = vadd.f32 %v2427, %v2667
      %2671 = vrot.lane.b32.xlu0 %v1948, 104
      %v2672 = vpop.permute.xlu0 %2671
      %2673 = vrot.lane.b32.xlu0 %v1948, 72
      %v2674 = vpop.permute.xlu0 %2673
      %v2675 = vsel %vm865, %v2672, 0
      %v2677 = vsel %vm865, %v2674, 0
      %2679 = vmatprep.subr.mxu0 0.0
      %2680 = vmatpush1.xpose.msra.mxu0 0.0
      %2681 = vmatprep.subr.mxu0 0.0
      %2682 = vmatpush1.xpose.msra.mxu0 0.0
      %2683 = vmatprep.subr.mxu0 0.0
      %2684 = vmatpush1.xpose.msra.mxu0 0.0
      %2685 = vmatprep.subr.mxu0 0.0
      %2686 = vmatpush1.xpose.msra.mxu0 0.0
      %2687 = vmatprep.subr.mxu0 0.0
      %2688 = vmatpush1.xpose.msra.mxu0 0.0
      %2689 = vmatprep.subr.mxu0 0.0
      %2690 = vmatpush1.xpose.msra.mxu0 0.0
      %2691 = vmatprep.subr.mxu0 0.0
      %2692 = vmatpush1.xpose.msra.mxu0 0.0
      %2693 = vmatprep.subr.mxu0 0.0
      %2694 = vmatpush1.xpose.msra.mxu0 0.0
      %2695 = vmatprep.subr.mxu0 0.0
      %2696 = vmatpush1.xpose.msra.mxu0 0.0
      %2697 = vmatprep.subr.mxu0 0.0
      %2698 = vmatpush1.xpose.msra.mxu0 0.0
      %2699 = vmatprep.subr.mxu0 0.0
      %2700 = vmatpush1.xpose.msra.mxu0 0.0
      %2701 = vmatprep.subr.mxu0 0.0
      %2702 = vmatpush1.xpose.msra.mxu0 0.0
      %2703 = vmatprep.subr.mxu0 0.0
      %2704 = vmatpush1.xpose.msra.mxu0 0.0
      %2705 = vmatprep.subr.mxu0 0.0
      %2706 = vmatpush1.xpose.msra.mxu0 0.0
      %2707 = vmatprep.subr.mxu0 0.0
      %2708 = vmatpush1.xpose.msra.mxu0 0.0
      %2709 = vmatprep.subr.mxu0 0.0
      %2710 = vmatpush1.xpose.msra.mxu0 %v2677
      %2711 = vmatprep.subr.mxu0 0.0
      %2712 = vmatpush2.xpose.msra.mxu0 0.0
      %2713 = vmatprep.subr.mxu0 0.0
      %2714 = vmatpush2.xpose.msra.mxu0 0.0
      %2715 = vmatprep.subr.mxu0 0.0
      %2716 = vmatpush2.xpose.msra.mxu0 0.0
      %2717 = vmatprep.subr.mxu0 0.0
      %2718 = vmatpush2.xpose.msra.mxu0 0.0
      %2719 = vmatprep.subr.mxu0 0.0
      %2720 = vmatpush2.xpose.msra.mxu0 0.0
      %2721 = vmatprep.subr.mxu0 0.0
      %2722 = vmatpush2.xpose.msra.mxu0 0.0
      %2723 = vmatprep.subr.mxu0 0.0
      %2724 = vmatpush2.xpose.msra.mxu0 0.0
      %2725 = vmatprep.subr.mxu0 0.0
      %2726 = vmatpush2.xpose.msra.mxu0 0.0
      %2727 = vmatprep.subr.mxu0 0.0
      %2728 = vmatpush2.xpose.msra.mxu0 0.0
      %2729 = vmatprep.subr.mxu0 0.0
      %2730 = vmatpush2.xpose.msra.mxu0 0.0
      %2731 = vmatprep.subr.mxu0 0.0
      %2732 = vmatpush2.xpose.msra.mxu0 0.0
      %2733 = vmatprep.subr.mxu0 0.0
      %2734 = vmatpush2.xpose.msra.mxu0 0.0
      %2735 = vmatprep.subr.mxu0 0.0
      %2736 = vmatpush2.xpose.msra.mxu0 0.0
      %2737 = vmatprep.subr.mxu0 0.0
      %2738 = vmatpush2.xpose.msra.mxu0 0.0
      %2739 = vmatprep.subr.mxu0 0.0
      %2740 = vmatpush2.xpose.msra.mxu0 0.0
      %2741 = vmatprep.subr.mxu0 0.0
      %2742 = vmatpush2.xpose.msra.mxu0 0.0
      %2743 = vmatprep.mubr.f32.mxu0 0.0
      %2744 = vmatmul.mubr.f32.gmra.mxu0 %v2675
      %v2745 = vpop.f32.mrf.mxu0
      %v2746 = vadd.f32 0.0, %v2745
      %v2747 = vpop.f32.mrf.mxu0
      %2748 = vdwg.mxu0
      %v2749 = vmul.f32 %v2746, 0.35355338
      %v2750 = vadd.f32 %v2749, %v1861
      %v2751 = vsel %vm865, %v2750, -inf
      %2752 = vmax.xlane.f32.xlu0 %v2751
      %v2753 = vpop.xlane.xlu0 %2752
      %v2754 = vsub.f32 %v2750, %v2753
      %v2755 = vmul.f32 %v2754, 1.442695
      %v2756 = vpow.pop %v2755
      %v2757 = vsel %vm865, %v2756, 0.0
      %2758 = vadd.xlane.f32.xlu0 %v2757
      %v2759 = vpop.xlane.xlu0 %2758
      %v2760 = vrcp.pop %v2759
      %v2761 = vmul.f32 %v2756, %v2760
      %2762 = vrot.lane.b32.xlu0 %v1948, 40
      %v2763 = vpop.permute.xlu0 %2762
      %v2766 = vsel %vm865, %v2761, 0
      %2768 = vmatprep.subr.mxu0 0.0
      %2769 = vmatpush1.msra.mxu0 0.0
      %2770 = vmatprep.subr.mxu0 0.0
      %2771 = vmatpush1.msra.mxu0 0.0
      %2772 = vmatprep.subr.mxu0 0.0
      %2773 = vmatpush1.msra.mxu0 0.0
      %2774 = vmatprep.subr.mxu0 0.0
      %2775 = vmatpush1.msra.mxu0 0.0
      %2776 = vmatprep.subr.mxu0 0.0
      %2777 = vmatpush1.msra.mxu0 0.0
      %2778 = vmatprep.subr.mxu0 0.0
      %2779 = vmatpush1.msra.mxu0 0.0
      %2780 = vmatprep.subr.mxu0 0.0
      %2781 = vmatpush1.msra.mxu0 0.0
      %2782 = vmatprep.subr.mxu0 0.0
      %2783 = vmatpush1.msra.mxu0 0.0
      %2784 = vmatprep.subr.mxu0 0.0
      %2785 = vmatpush1.msra.mxu0 0.0
      %2786 = vmatprep.subr.mxu0 0.0
      %2787 = vmatpush1.msra.mxu0 0.0
      %2788 = vmatprep.subr.mxu0 0.0
      %2789 = vmatpush1.msra.mxu0 0.0
      %2790 = vmatprep.subr.mxu0 0.0
      %2791 = vmatpush1.msra.mxu0 0.0
      %2792 = vmatprep.subr.mxu0 0.0
      %2793 = vmatpush1.msra.mxu0 0.0
      %2794 = vmatprep.subr.mxu0 0.0
      %2795 = vmatpush1.msra.mxu0 0.0
      %2796 = vmatprep.subr.mxu0 0.0
      %2797 = vmatpush1.msra.mxu0 0.0
      %2798 = vmatprep.subr.mxu0 0.0
      %2799 = vmatpush1.msra.mxu0 %v2763
      %2800 = vmatprep.subr.mxu0 0.0
      %2801 = vmatpush2.msra.mxu0 0.0
      %2802 = vmatprep.subr.mxu0 0.0
      %2803 = vmatpush2.msra.mxu0 0.0
      %2804 = vmatprep.subr.mxu0 0.0
      %2805 = vmatpush2.msra.mxu0 0.0
      %2806 = vmatprep.subr.mxu0 0.0
      %2807 = vmatpush2.msra.mxu0 0.0
      %2808 = vmatprep.subr.mxu0 0.0
      %2809 = vmatpush2.msra.mxu0 0.0
      %2810 = vmatprep.subr.mxu0 0.0
      %2811 = vmatpush2.msra.mxu0 0.0
      %2812 = vmatprep.subr.mxu0 0.0
      %2813 = vmatpush2.msra.mxu0 0.0
      %2814 = vmatprep.subr.mxu0 0.0
      %2815 = vmatpush2.msra.mxu0 0.0
      %2816 = vmatprep.subr.mxu0 0.0
      %2817 = vmatpush2.msra.mxu0 0.0
      %2818 = vmatprep.subr.mxu0 0.0
      %2819 = vmatpush2.msra.mxu0 0.0
      %2820 = vmatprep.subr.mxu0 0.0
      %2821 = vmatpush2.msra.mxu0 0.0
      %2822 = vmatprep.subr.mxu0 0.0
      %2823 = vmatpush2.msra.mxu0 0.0
      %2824 = vmatprep.subr.mxu0 0.0
      %2825 = vmatpush2.msra.mxu0 0.0
      %2826 = vmatprep.subr.mxu0 0.0
      %2827 = vmatpush2.msra.mxu0 0.0
      %2828 = vmatprep.subr.mxu0 0.0
      %2829 = vmatpush2.msra.mxu0 0.0
      %2830 = vmatprep.subr.mxu0 0.0
      %2831 = vmatpush2.msra.mxu0 0.0
      %2832 = vmatprep.mubr.f32.mxu0 0.0
      %2833 = vmatmul.mubr.f32.gmra.mxu0 %v2766
      %v2834 = vpop.f32.mrf.mxu0
      %v2835 = vadd.f32 0.0, %v2834
      %v2836 = vpop.f32.mrf.mxu0
      %2837 = vdwg.mxu0
      %v2839 = vsel %vm865, %v2835, 0
      %2841 = vmatprep.subr.mxu0 0.0
      %2842 = vmatpush1.msra.mxu0 0.0
      %2843 = vmatprep.subr.mxu0 0.0
      %2844 = vmatpush1.msra.mxu0 0.0
      %2845 = vmatprep.subr.mxu0 0.0
      %2846 = vmatpush1.msra.mxu0 0.0
      %2847 = vmatprep.subr.mxu0 0.0
      %2848 = vmatpush1.msra.mxu0 0.0
      %2849 = vmatprep.subr.mxu0 0.0
      %2850 = vmatpush1.msra.mxu0 0.0
      %2851 = vmatprep.subr.mxu0 0.0
      %2852 = vmatpush1.msra.mxu0 0.0
      %2853 = vmatprep.subr.mxu0 0.0
      %2854 = vmatpush1.msra.mxu0 0.0
      %2855 = vmatprep.subr.mxu0 0.0
      %2856 = vmatpush1.msra.mxu0 0.0
      %2857 = vmatprep.subr.mxu0 0.0
      %2858 = vmatpush1.msra.mxu0 0.0
      %2859 = vmatprep.subr.mxu0 0.0
      %2860 = vmatpush1.msra.mxu0 0.0
      %2861 = vmatprep.subr.mxu0 0.0
      %2862 = vmatpush1.msra.mxu0 0.0
      %2863 = vmatprep.subr.mxu0 0.0
      %2864 = vmatpush1.msra.mxu0 0.0
      %2865 = vmatprep.subr.mxu0 0.0
      %2866 = vmatpush1.msra.mxu0 0.0
      %2867 = vmatprep.subr.mxu0 0.0
      %2868 = vmatpush1.msra.mxu0 0.0
      %2869 = vmatprep.subr.mxu0 0.0
      %2870 = vmatpush1.msra.mxu0 0.0
      %2871 = vmatprep.subr.mxu0 0.0
      %2872 = vmatpush1.msra.mxu0 %v1870
      %2873 = vmatprep.subr.mxu0 0.0
      %2874 = vmatpush2.msra.mxu0 0.0
      %2875 = vmatprep.subr.mxu0 0.0
      %2876 = vmatpush2.msra.mxu0 0.0
      %2877 = vmatprep.subr.mxu0 0.0
      %2878 = vmatpush2.msra.mxu0 0.0
      %2879 = vmatprep.subr.mxu0 0.0
      %2880 = vmatpush2.msra.mxu0 0.0
      %2881 = vmatprep.subr.mxu0 0.0
      %2882 = vmatpush2.msra.mxu0 0.0
      %2883 = vmatprep.subr.mxu0 0.0
      %2884 = vmatpush2.msra.mxu0 0.0
      %2885 = vmatprep.subr.mxu0 0.0
      %2886 = vmatpush2.msra.mxu0 0.0
      %2887 = vmatprep.subr.mxu0 0.0
      %2888 = vmatpush2.msra.mxu0 0.0
      %2889 = vmatprep.subr.mxu0 0.0
      %2890 = vmatpush2.msra.mxu0 0.0
      %2891 = vmatprep.subr.mxu0 0.0
      %2892 = vmatpush2.msra.mxu0 0.0
      %2893 = vmatprep.subr.mxu0 0.0
      %2894 = vmatpush2.msra.mxu0 0.0
      %2895 = vmatprep.subr.mxu0 0.0
      %2896 = vmatpush2.msra.mxu0 0.0
      %2897 = vmatprep.subr.mxu0 0.0
      %2898 = vmatpush2.msra.mxu0 0.0
      %2899 = vmatprep.subr.mxu0 0.0
      %2900 = vmatpush2.msra.mxu0 0.0
      %2901 = vmatprep.subr.mxu0 0.0
      %2902 = vmatpush2.msra.mxu0 0.0
      %2903 = vmatprep.subr.mxu0 0.0
      %2904 = vmatpush2.msra.mxu0 0.0
      %2905 = vmatprep.mubr.f32.mxu0 0.0
      %2906 = vmatmul.mubr.f32.gmra.mxu0 %v2839
      %v2907 = vpop.f32.mrf.mxu0
      %v2908 = vadd.f32 0.0, %v2907
      %v2909 = vpop.f32.mrf.mxu0
      %2910 = vdwg.mxu0
      %v2911 = vadd.f32 %v2670, %v2908
      %v2913 = vlaneseq
      %v2914 = vshrl.u32 %v2913, 7
      %v2915 = vsub.s32 0, %v2914
      %v2916 = vrot.slane %v1871, %v2915
      %v2918 = vadd.f32 %v2911, %v2916
      %v2919 = vadd.f32 %v1831, %v2918
      %v2920 = vld [vmem:[%s15] sm:$0x1]
      %v2921 = vld [vmem:[%s16] sm:$0x1]
      %v2922 = vsel %vm743, %v2919, 0.0
      %2923 = vadd.xlane.f32.xlu0 %v2922
      %v2924 = vpop.xlane.xlu0 %2923
      %v2925 = vmul.f32 %v2924, %v747
      %v2926 = vsub.f32 %v2919, %v2925
      %v2927 = vmul.f32 %v2926, %v2926
      %v2928 = vsel %vm743, %v2927, 0.0
      %2929 = vadd.xlane.f32.xlu0 %v2928
      %v2930 = vpop.xlane.xlu0 %2929
      %v2931 = vmul.f32 %v2930, %v747
      %v2932 = vadd.f32 %v2931, 1e-06
      %v2933 = vrsqrt.pop %v2932
      %v2934 = vmul.f32 %v2926, %v2933
      %v2936 = vlaneseq
      %v2937 = vshrl.u32 %v2936, 7
      %v2938 = vsub.s32 0, %v2937
      %v2939 = vrot.slane %v2920, %v2938
      %v2941 = vmul.f32 %v2934, %v2939
      %v2943 = vlaneseq
      %v2944 = vshrl.u32 %v2943, 7
      %v2945 = vsub.s32 0, %v2944
      %v2946 = vrot.slane %v2921, %v2945
      %v2948 = vadd.f32 %v2941, %v2946
      %v2949 = vld [vmem:[%s19] sm:$0xff]
      %v2950 = vld [vmem:[%s19 + $0x8] sm:$0xff]
      %v2951 = vld [vmem:[%s19 + $0x10] sm:$0xff]
      %v2952 = vld [vmem:[%s19 + $0x18] sm:$0xff]
      %v2953 = vld [vmem:[%s20] sm:$0x1]
      %v2954 = vld [vmem:[%s21] sm:$0xff]
      %v2955 = vld [vmem:[%s21 + $0x8] sm:$0xff]
      %v2956 = vld [vmem:[%s21 + $0x10] sm:$0xff]
      %v2957 = vld [vmem:[%s21 + $0x18] sm:$0xff]
      %v2958 = vld [vmem:[%s21 + $0x20] sm:$0xff]
      %v2959 = vld [vmem:[%s21 + $0x28] sm:$0xff]
      %v2960 = vld [vmem:[%s21 + $0x30] sm:$0xff]
      %v2961 = vld [vmem:[%s21 + $0x38] sm:$0xff]
      %v2962 = vld [vmem:[%s22] sm:$0x1]
      %v2964 = vlaneseq
      %v2965 = vshrl.u32 %v2964, 7
      %v2966 = vsub.s32 0, %v2965
      %v2967 = vrot.slane %v2953, %v2966
      %v2970 = vsel %vm743, %v2948, 0
      %2972 = vmatprep.subr.mxu0 0.0
      %2973 = vmatpush1.msra.mxu0 0.0
      %2974 = vmatprep.subr.mxu0 0.0
      %2975 = vmatpush1.msra.mxu0 0.0
      %2976 = vmatprep.subr.mxu0 0.0
      %2977 = vmatpush1.msra.mxu0 0.0
      %2978 = vmatprep.subr.mxu0 0.0
      %2979 = vmatpush1.msra.mxu0 0.0
      %2980 = vmatprep.subr.mxu0 0.0
      %2981 = vmatpush1.msra.mxu0 0.0
      %2982 = vmatprep.subr.mxu0 0.0
      %2983 = vmatpush1.msra.mxu0 0.0
      %2984 = vmatprep.subr.mxu0 0.0
      %2985 = vmatpush1.msra.mxu0 0.0
      %2986 = vmatprep.subr.mxu0 0.0
      %2987 = vmatpush1.msra.mxu0 0.0
      %2988 = vmatprep.subr.mxu0 0.0
      %2989 = vmatpush1.msra.mxu0 0.0
      %2990 = vmatprep.subr.mxu0 0.0
      %2991 = vmatpush1.msra.mxu0 0.0
      %2992 = vmatprep.subr.mxu0 0.0
      %2993 = vmatpush1.msra.mxu0 0.0
      %2994 = vmatprep.subr.mxu0 0.0
      %2995 = vmatpush1.msra.mxu0 0.0
      %2996 = vmatprep.subr.mxu0 0.0
      %2997 = vmatpush1.msra.mxu0 %v2952
      %2998 = vmatprep.subr.mxu0 0.0
      %2999 = vmatpush1.msra.mxu0 %v2951
      %3000 = vmatprep.subr.mxu0 0.0
      %3001 = vmatpush1.msra.mxu0 %v2950
      %3002 = vmatprep.subr.mxu0 0.0
      %3003 = vmatpush1.msra.mxu0 %v2949
      %3004 = vmatprep.subr.mxu0 0.0
      %3005 = vmatpush2.msra.mxu0 0.0
      %3006 = vmatprep.subr.mxu0 0.0
      %3007 = vmatpush2.msra.mxu0 0.0
      %3008 = vmatprep.subr.mxu0 0.0
      %3009 = vmatpush2.msra.mxu0 0.0
      %3010 = vmatprep.subr.mxu0 0.0
      %3011 = vmatpush2.msra.mxu0 0.0
      %3012 = vmatprep.subr.mxu0 0.0
      %3013 = vmatpush2.msra.mxu0 0.0
      %3014 = vmatprep.subr.mxu0 0.0
      %3015 = vmatpush2.msra.mxu0 0.0
      %3016 = vmatprep.subr.mxu0 0.0
      %3017 = vmatpush2.msra.mxu0 0.0
      %3018 = vmatprep.subr.mxu0 0.0
      %3019 = vmatpush2.msra.mxu0 0.0
      %3020 = vmatprep.subr.mxu0 0.0
      %3021 = vmatpush2.msra.mxu0 0.0
      %3022 = vmatprep.subr.mxu0 0.0
      %3023 = vmatpush2.msra.mxu0 0.0
      %3024 = vmatprep.subr.mxu0 0.0
      %3025 = vmatpush2.msra.mxu0 0.0
      %3026 = vmatprep.subr.mxu0 0.0
      %3027 = vmatpush2.msra.mxu0 0.0
      %3028 = vmatprep.subr.mxu0 0.0
      %3029 = vmatpush2.msra.mxu0 0.0
      %3030 = vmatprep.subr.mxu0 0.0
      %3031 = vmatpush2.msra.mxu0 0.0
      %3032 = vmatprep.subr.mxu0 0.0
      %3033 = vmatpush2.msra.mxu0 0.0
      %3034 = vmatprep.subr.mxu0 0.0
      %3035 = vmatpush2.msra.mxu0 0.0
      %3036 = vmatprep.mubr.f32.mxu0 0.0
      %3037 = vmatmul.mubr.f32.gmra.mxu0 %v2970
      %v3038 = vpop.f32.mrf.mxu0
      %v3039 = vadd.f32 %v2967, %v3038
      %v3040 = vpop.f32.mrf.mxu0
      %3041 = vdwg.mxu0
      %v3042 = vmax.f32 %v3039, 0.0
      %v3044 = vlaneseq
      %v3045 = vshrl.u32 %v3044, 7
      %v3046 = vsub.s32 0, %v3045
      %v3047 = vrot.slane %v2962, %v3046
      %vm3049 = vcmask 523264
      %v3051 = vsel %vm3049, %v3042, 0
      %3053 = vmatprep.subr.mxu0 0.0
      %3054 = vmatpush1.msra.mxu0 0.0
      %3055 = vmatprep.subr.mxu0 0.0
      %3056 = vmatpush1.msra.mxu0 0.0
      %3057 = vmatprep.subr.mxu0 0.0
      %3058 = vmatpush1.msra.mxu0 0.0
      %3059 = vmatprep.subr.mxu0 0.0
      %3060 = vmatpush1.msra.mxu0 0.0
      %3061 = vmatprep.subr.mxu0 0.0
      %3062 = vmatpush1.msra.mxu0 0.0
      %3063 = vmatprep.subr.mxu0 0.0
      %3064 = vmatpush1.msra.mxu0 0.0
      %3065 = vmatprep.subr.mxu0 0.0
      %3066 = vmatpush1.msra.mxu0 0.0
      %3067 = vmatprep.subr.mxu0 0.0
      %3068 = vmatpush1.msra.mxu0 0.0
      %3069 = vmatprep.subr.mxu0 0.0
      %3070 = vmatpush1.msra.mxu0 %v2961
      %3071 = vmatprep.subr.mxu0 0.0
      %3072 = vmatpush1.msra.mxu0 %v2960
      %3073 = vmatprep.subr.mxu0 0.0
      %3074 = vmatpush1.msra.mxu0 %v2959
      %3075 = vmatprep.subr.mxu0 0.0
      %3076 = vmatpush1.msra.mxu0 %v2958
      %3077 = vmatprep.subr.mxu0 0.0
      %3078 = vmatpush1.msra.mxu0 %v2957
      %3079 = vmatprep.subr.mxu0 0.0
      %3080 = vmatpush1.msra.mxu0 %v2956
      %3081 = vmatprep.subr.mxu0 0.0
      %3082 = vmatpush1.msra.mxu0 %v2955
      %3083 = vmatprep.subr.mxu0 0.0
      %3084 = vmatpush1.msra.mxu0 %v2954
      %3085 = vmatprep.subr.mxu0 0.0
      %3086 = vmatpush2.msra.mxu0 0.0
      %3087 = vmatprep.subr.mxu0 0.0
      %3088 = vmatpush2.msra.mxu0 0.0
      %3089 = vmatprep.subr.mxu0 0.0
      %3090 = vmatpush2.msra.mxu0 0.0
      %3091 = vmatprep.subr.mxu0 0.0
      %3092 = vmatpush2.msra.mxu0 0.0
      %3093 = vmatprep.subr.mxu0 0.0
      %3094 = vmatpush2.msra.mxu0 0.0
      %3095 = vmatprep.subr.mxu0 0.0
      %3096 = vmatpush2.msra.mxu0 0.0
      %3097 = vmatprep.subr.mxu0 0.0
      %3098 = vmatpush2.msra.mxu0 0.0
      %3099 = vmatprep.subr.mxu0 0.0
      %3100 = vmatpush2.msra.mxu0 0.0
      %3101 = vmatprep.subr.mxu0 0.0
      %3102 = vmatpush2.msra.mxu0 0.0
      %3103 = vmatprep.subr.mxu0 0.0
      %3104 = vmatpush2.msra.mxu0 0.0
      %3105 = vmatprep.subr.mxu0 0.0
      %3106 = vmatpush2.msra.mxu0 0.0
      %3107 = vmatprep.subr.mxu0 0.0
      %3108 = vmatpush2.msra.mxu0 0.0
      %3109 = vmatprep.subr.mxu0 0.0
      %3110 = vmatpush2.msra.mxu0 0.0
      %3111 = vmatprep.subr.mxu0 0.0
      %3112 = vmatpush2.msra.mxu0 0.0
      %3113 = vmatprep.subr.mxu0 0.0
      %3114 = vmatpush2.msra.mxu0 0.0
      %3115 = vmatprep.subr.mxu0 0.0
      %3116 = vmatpush2.msra.mxu0 0.0
      %3117 = vmatprep.mubr.f32.mxu0 0.0
      %3118 = vmatmul.mubr.f32.gmra.mxu0 %v3051
      %v3119 = vpop.f32.mrf.mxu0
      %v3120 = vadd.f32 %v3047, %v3119
      %v3121 = vpop.f32.mrf.mxu0
      %3122 = vdwg.mxu0
      %v3123 = vadd.f32 %v2919, %v3120
      %v3124 = vld [vmem:[%s17] sm:$0x1]
      %v3125 = vld [vmem:[%s18] sm:$0x1]
      %v3126 = vsel %vm743, %v3123, 0.0
      %3127 = vadd.xlane.f32.xlu0 %v3126
      %v3128 = vpop.xlane.xlu0 %3127
      %v3129 = vmul.f32 %v3128, %v747
      %v3130 = vsub.f32 %v3123, %v3129
      %v3131 = vmul.f32 %v3130, %v3130
      %v3132 = vsel %vm743, %v3131, 0.0
      %3133 = vadd.xlane.f32.xlu0 %v3132
      %v3134 = vpop.xlane.xlu0 %3133
      %v3135 = vmul.f32 %v3134, %v747
      %v3136 = vadd.f32 %v3135, 1e-06
      %v3137 = vrsqrt.pop %v3136
      %v3138 = vmul.f32 %v3130, %v3137
      %v3140 = vlaneseq
      %v3141 = vshrl.u32 %v3140, 7
      %v3142 = vsub.s32 0, %v3141
      %v3143 = vrot.slane %v3124, %v3142
      %v3145 = vmul.f32 %v3138, %v3143
      %v3147 = vlaneseq
      %v3148 = vshrl.u32 %v3147, 7
      %v3149 = vsub.s32 0, %v3148
      %v3150 = vrot.slane %v3125, %v3149
      %v3152 = vadd.f32 %v3145, %v3150
      %3153 = vst.msk [vmem:[%s739] sm:$0xff] %vm743, %v3152
      %p3154 = scmp.lt.s32.totalorder %s34, 1
      %s3155 = scalar_select %p3154, %s34, 1
      %s3156 = smul.addr %s3155, 8
      %s3157 = scalar_lea.vmem %s23, %s3156
      // Predicated region
      $region113: #{forward.2} parent=111 // pred_check
        %p3158 = pneg %p550
      $region114: #{forward.2} parent=111 // pred_check_branch
        %3160 = sbr.rel (%p3158) target = $region116
      $region115: #{forward.2} parent=111 // pred_region
        _
      $region116: #{forward.2} parent=111 // pred_fallthru
        _
    $region112: #{forward.2} parent=5 // pred_fallthru
      _
    %p3161 = scmp.le.s32.totalorder 2, %s29
    // Predicated region
    $region117: #{forward.2} parent=5 // pred_check
      %p3162 = pneg %p3161
    $region118: #{forward.2} parent=5 // pred_check_branch
      %3164 = sbr.rel (%p3162) target = $region120
    $region119: #{forward.2} parent=5 // pred_region
      %s3165 = ssub.s32 %s29, 2
      // Predicated region
      $region121: #{forward.2} parent=119 // pred_check
        %p3166 = pneg %p556
      $region122: #{forward.2} parent=119 // pred_check_branch
        %3168 = sbr.rel (%p3166) target = $region124
      $region123: #{forward.2} parent=119 // pred_region
        %p3169 = scmp.lt.s32.totalorder %s35, 1
        %s3170 = scalar_select %p3169, %s35, 1
        %s3171 = smul.addr %s3170, 8
        %s3172 = scalar_lea.vmem %s23, %s3171
      $region124: #{forward.2} parent=119 // pred_fallthru
        _
    $region120: #{forward.2} parent=5 // pred_fallthru
      _
  $region6: #{forward.2} parent=0 // loop_footer
    %s33 = sadd.s32 1, %s29
  $region7: #{forward.2} parent=0 // loop_footer_branch
    %28 = sbr.rel target = $region3
  $region8: #{forward.2} parent=0 // loop_exit
    _

</llo_original>
